<compile_context>
chip_gen: v6e
topology: v6e:2x2x1
jax: 0.10.0
libtpu: 0.0.40
codegen_flags: <defaults>
</compile_context>

<pallas_src>
import jax
import jax.numpy as jnp
from jax.experimental import pallas as pl
from jax.experimental.pallas import tpu as pltpu

EPS = 1e-5


# ---------------------------------------------------------------------------
# Fused GCEA block kernel: mean-var norm -> conv_mask softmax -> context ->
# (content + context).view(HW, C) -> mk -> softmax -> renorm -> mv
# ---------------------------------------------------------------------------
def _gcea_fused_kernel(style_ref, content_ref, cmw_ref, cmb_ref,
                       mk_ref, mv_ref, g0_ref, g1_ref, blend_ref, out_ref):
    s = style_ref[0]                                      # (C, HWs) raw style
    hw_s = s.shape[1]

    # mean_variance_norm(style): per-channel stats, unbiased var (torch.var)
    mean = jnp.mean(s, axis=1, keepdims=True)             # (C, 1)
    diff = s - mean
    var = jnp.sum(diff * diff, axis=1, keepdims=True) * (1.0 / (hw_s - 1)) + EPS
    ns = diff * jax.lax.rsqrt(var)                        # EUP rsqrt, no divide

    # conv_mask (Conv2d(C,1,1)) on the normalized style: VPU mul + sublane
    # reduce instead of a wasteful 1-output-row MXU matmul.
    logits = jnp.sum(ns * cmw_ref[...], axis=0, keepdims=True) + cmb_ref[0]  # (1, HWs)

    # softmax over the spatial axis (exact divide: error here is not cancelled
    # downstream, keep full fidelity for the context weights).
    mmax = jnp.max(logits, axis=1, keepdims=True)
    p = jnp.exp(logits - mmax)
    mask = p / jnp.sum(p, axis=1, keepdims=True)          # (1, HWs)

    # context = style @ mask  -> per-channel scalar (C, 1)
    ctx = jnp.sum(s * mask, axis=1, keepdims=True)

    # Reproduce torch's raw `.view(B, H*W, C)` of (content + broadcast ctx):
    # reinterpreted element (r, k) reads channel (r*C + k)//HW, which touches
    # at most two channels per row (c0(r), c0(r)+1) since HW >= C.  g0/g1 are
    # constant one-hot gather matrices, `blend` the constant per-(r,k) select.
    low = jnp.dot(g0_ref[...], ctx, preferred_element_type=jnp.float32)   # (HW, 1)
    high = jnp.dot(g1_ref[...], ctx, preferred_element_type=jnp.float32)  # (HW, 1)
    w = blend_ref[...]                                                    # (HW, C)
    x = content_ref[0] + w * low + (1.0 - w) * high       # (HW, C) viewed map

    # attention MLP: mk -> softmax(dim=-1) -> renorm -> mv
    a = jnp.dot(x, mk_ref[...], preferred_element_type=jnp.float32)       # (HW, 64)
    amax = jnp.max(a, axis=1, keepdims=True)
    e = jnp.exp(a - amax)
    attn = e * pl.reciprocal(jnp.sum(e, axis=1, keepdims=True), approx=True)
    # torch's extra renorm (kept for semantics); the exact divide here also
    # cancels the approx-reciprocal error above.
    attn = attn / jnp.sum(attn, axis=1, keepdims=True)
    out_ref[0] = jnp.dot(attn, mv_ref[...], preferred_element_type=jnp.float32)


def _view_blend_consts(HW, C):
    """Constants reproducing the raw row-major view (C,HW)->(HW,C) of a
    per-channel broadcast: element (r, k) reads channel (r*C + k) // HW."""
    r = jnp.arange(HW, dtype=jnp.int32)[:, None]          # (HW, 1)
    k = jnp.arange(C, dtype=jnp.int32)[None, :]           # (1, C)
    chan = (r * C + k) // HW                              # (HW, C)
    c0 = (r * C) // HW                                    # (HW, 1)
    cid = jnp.arange(C, dtype=jnp.int32)[None, :]         # (1, C)
    g0 = (cid == c0).astype(jnp.float32)                  # one-hot(c0)
    g1 = (cid == jnp.minimum(c0 + 1, C - 1)).astype(jnp.float32)
    blend = (chan == c0).astype(jnp.float32)              # 1 -> c0, 0 -> c0+1
    return g0, g1, blend


def gcea_block(content, style, p):
    """Fused GCEA_Block forward (fusion_types=('channel_add',), pooling 'att')."""
    B, C, H, W = content.shape
    Hs, Ws = style.shape[2], style.shape[3]
    HW, HWs = H * W, Hs * Ws
    # TODO(synk): constant-matrix view trick assumes HW >= C (true for SANet
    # feature maps); a 2-kernel split would be needed otherwise.
    assert HW >= C

    content_r = content.reshape(B, HW, C)    # torch .view: free reinterpretation
    style_f = style.reshape(B, C, HWs)
    g0, g1, blend = _view_blend_consts(HW, C)
    cmw = p["cm_w"].reshape(C, 1)
    cmb = p["cm_b"].reshape(1)

    out = pl.pallas_call(
        _gcea_fused_kernel,
        out_shape=jax.ShapeDtypeStruct((B, HW, C), jnp.float32),
        grid=(B,),
        in_specs=[
            pl.BlockSpec((1, C, HWs), lambda b: (b, 0, 0)),        # style
            pl.BlockSpec((1, HW, C), lambda b: (b, 0, 0)),         # content (viewed)
            pl.BlockSpec((C, 1), lambda b: (0, 0)),                # conv_mask weight
            pl.BlockSpec(memory_space=pltpu.MemorySpace.SMEM),     # conv_mask bias
            pl.BlockSpec((C, 64), lambda b: (0, 0)),               # mk weight^T
            pl.BlockSpec((64, C), lambda b: (0, 0)),               # mv weight^T
            pl.BlockSpec((HW, C), lambda b: (0, 0)),               # g0
            pl.BlockSpec((HW, C), lambda b: (0, 0)),               # g1
            pl.BlockSpec((HW, C), lambda b: (0, 0)),               # blend
        ],
        out_specs=pl.BlockSpec((1, HW, C), lambda b: (b, 0, 0)),
        compiler_params=pltpu.CompilerParams(
            dimension_semantics=("parallel",)),        # v7x megacore over batch
    )(style_f, content_r, cmw, cmb, p["mk_wT"], p["mv_wT"], g0, g1, blend)

    # torch: out.view(B, C, H, W) -> raw reshape back (free).
    return out.reshape(B, C, H, W)


# ---------------------------------------------------------------------------
# 3x3 merge conv: 9 accumulated (C,C)@(C, H*(W+2)) matmuls over shifted views
# of the flattened reflection-padded map (no im2col).  Output keeps a wide
# (W+2)-period row layout; the 2 junk columns per row are dropped in XLA.
# ---------------------------------------------------------------------------
def _merge_conv(flat, w_taps, b_col, H, Wp):
    B, C, L = flat.shape
    HWp = H * Wp

    def kernel(flat_ref, w_ref, b_ref, out_ref):
        pp = flat_ref[0]                                 # (C, L)
        acc = None
        for t in range(9):                               # static unroll: 9 taps
            dy, dx = divmod(t, 3)
            start = dy * Wp + dx
            contrib = jnp.dot(w_ref[t], pp[:, start:start + HWp],
                              preferred_element_type=jnp.float32)
            acc = contrib if acc is None else acc + contrib
        out_ref[0] = acc + b_ref[...]

    return pl.pallas_call(
        kernel,
        out_shape=jax.ShapeDtypeStruct((B, C, HWp), jnp.float32),
        grid=(B,),
        in_specs=[
            pl.BlockSpec((1, C, L), lambda b: (b, 0, 0)),
            pl.BlockSpec((9, C, C), lambda b: (0, 0, 0)),
            pl.BlockSpec((C, 1), lambda b: (0, 0)),
        ],
        out_specs=pl.BlockSpec((1, C, HWp), lambda b: (b, 0, 0)),
        compiler_params=pltpu.CompilerParams(
            dimension_semantics=("parallel",)),
    )(flat, w_taps, b_col)


# ---------------------------------------------------------------------------
# Transform forward
# ---------------------------------------------------------------------------
def transform_forward(content4_1, style4_1, content5_1, style5_1, params):
    B, C, H4, W4 = content4_1.shape
    H5, W5 = content5_1.shape[2], content5_1.shape[3]

    f4 = gcea_block(content4_1, style4_1, params["sanet4_1"])
    f5 = gcea_block(content5_1, style5_1, params["sanet5_1"])

    # nn.Upsample(size=(H4, W4), mode='nearest')
    if H4 % H5 == 0 and W4 % W5 == 0:
        fh, fw = H4 // H5, W4 // W5
        f5_up = jnp.broadcast_to(
            f5[:, :, :, None, :, None], (B, C, H5, fh, W5, fw)
        ).reshape(B, C, H4, W4)
    else:
        # general nearest: src = floor(dst * in / out)
        rows = (jnp.arange(H4) * H5) // H4
        cols = (jnp.arange(W4) * W5) // W4
        f5_up = f5[:, :, rows][:, :, :, cols]

    merged = f4 + f5_up

    # ReflectionPad2d((1,1,1,1)), flatten, and append a zero guard row so the
    # in-kernel shifted tap views stay in bounds.
    padded = jnp.pad(merged, ((0, 0), (0, 0), (1, 1), (1, 1)), mode="reflect")
    Wp = W4 + 2
    flat = padded.reshape(B, C, (H4 + 2) * Wp)
    flat = jnp.pad(flat, ((0, 0), (0, 0), (0, Wp)))

    # weight (C, C, 3, 3) -> (9, C_out, C_in), tap t = dy*3 + dx
    w_taps = jnp.transpose(params["merge_w"], (2, 3, 0, 1)).reshape(9, C, C)
    b_col = params["merge_b"].reshape(C, 1)

    out_wide = _merge_conv(flat, w_taps, b_col, H4, Wp)   # (B, C, H4*Wp)
    # drop the 2 junk columns per row carried by the wide layout
    return out_wide.reshape(B, C, H4, Wp)[:, :, :, :W4]


# ---------------------------------------------------------------------------
# Deterministic parameter init (shapes from the module __init__)
# ---------------------------------------------------------------------------
def init_gcea_params(key, C):
    k1, k2, k3, k4 = jax.random.split(key, 4)
    return {
        # conv_mask: Conv2d(C, 1, 1) -> weight (1, C, 1, 1) stored as (1, C), bias (1,)
        "cm_w": jax.random.normal(k1, (1, C), jnp.float32) / jnp.sqrt(C),
        "cm_b": jax.random.normal(k2, (1, 1), jnp.float32) * 0.01,
        # mk: Linear(C, 64, bias=False) weight (64, C) -> stored transposed (C, 64)
        "mk_wT": jax.random.normal(k3, (C, 64), jnp.float32) / jnp.sqrt(C),
        # mv: Linear(64, C, bias=False) weight (C, 64) -> stored transposed (64, C)
        "mv_wT": jax.random.normal(k4, (64, C), jnp.float32) / jnp.sqrt(64.0),
        # NOTE: channel_add_conv exists in __init__ but is never used in the
        # reference forward pass, so it is omitted here.
    }


def init_params(key, C):
    k1, k2, k3, k4 = jax.random.split(key, 4)
    return {
        "sanet4_1": init_gcea_params(k1, C),
        "sanet5_1": init_gcea_params(k2, C),
        "merge_w": jax.random.normal(k3, (C, C, 3, 3), jnp.float32) / jnp.sqrt(C * 9.0),
        "merge_b": jax.random.normal(k4, (C,), jnp.float32) * 0.01,
    }


if __name__ == "__main__":
    key = jax.random.PRNGKey(0)
    B, C = 2, 32            # in_planes = 32
    H4 = W4 = 16
    H5 = W5 = 8

    ks = jax.random.split(key, 5)
    content4_1 = jax.random.normal(ks[0], (B, C, H4, W4), jnp.float32)
    style4_1 = jax.random.normal(ks[1], (B, C, H4, W4), jnp.float32)
    content5_1 = jax.random.normal(ks[2], (B, C, H5, W5), jnp.float32)
    style5_1 = jax.random.normal(ks[3], (B, C, H5, W5), jnp.float32)
    params = init_params(ks[4], C)

    out = jax.jit(transform_forward)(content4_1, style4_1, content5_1, style5_1, params)
    out = jax.block_until_ready(out)
    assert out.shape == (B, C, H4, W4) and out.dtype == jnp.float32
    print("KERNEL_OK")
</pallas_src>

<mosaic_0001>
module attributes {stable_mosaic.version = 11 : i64} {
  func.func @_gcea_fused_kernel(%arg0: i32, %arg1: memref<1x32x256xf32, #tpu.memory_space<vmem>>, %arg2: memref<1x256x32xf32, #tpu.memory_space<vmem>>, %arg3: memref<32x1xf32, #tpu.memory_space<vmem>>, %arg4: memref<1xf32, #tpu.memory_space<smem>>, %arg5: memref<32x64xf32, #tpu.memory_space<vmem>>, %arg6: memref<64x32xf32, #tpu.memory_space<vmem>>, %arg7: memref<256x32xf32, #tpu.memory_space<vmem>>, %arg8: memref<256x32xf32, #tpu.memory_space<vmem>>, %arg9: memref<256x32xf32, #tpu.memory_space<vmem>>, %arg10: memref<1x256x32xf32, #tpu.memory_space<vmem>>) attributes {dimension_semantics = [#tpu.dimension_semantics<parallel>], iteration_bounds = array<i64: 2>, scalar_prefetch = 0 : i64, scratch_operands = 0 : i64, tpu.core_type = #tpu.core_type<tc>, window_params = [{transform_indices = @transform_0, window_bounds = array<i64: 1, 32, 256>}, {transform_indices = @transform_1, window_bounds = array<i64: 1, 256, 32>}, {pipeline_mode = #tpu.pipeline_mode<synchronous>, transform_indices = @transform_2, window_bounds = array<i64: 32, 1>}, {transform_indices = @transform_3, window_bounds = array<i64: 1>}, {pipeline_mode = #tpu.pipeline_mode<synchronous>, transform_indices = @transform_4, window_bounds = array<i64: 32, 64>}, {pipeline_mode = #tpu.pipeline_mode<synchronous>, transform_indices = @transform_5, window_bounds = array<i64: 64, 32>}, {pipeline_mode = #tpu.pipeline_mode<synchronous>, transform_indices = @transform_6, window_bounds = array<i64: 256, 32>}, {pipeline_mode = #tpu.pipeline_mode<synchronous>, transform_indices = @transform_7, window_bounds = array<i64: 256, 32>}, {pipeline_mode = #tpu.pipeline_mode<synchronous>, transform_indices = @transform_8, window_bounds = array<i64: 256, 32>}, {transform_indices = @transform_9, window_bounds = array<i64: 1, 256, 32>}]} {
    %c0 = arith.constant 0 : index
    %c0_0 = arith.constant 0 : index
    %c0_1 = arith.constant 0 : index
    %0 = vector.load %arg1[%c0, %c0_0, %c0_1] : memref<1x32x256xf32, #tpu.memory_space<vmem>>, vector<1x32x256xf32>
    %1 = vector.shape_cast %0 : vector<1x32x256xf32> to vector<32x256xf32>
    %cst = arith.constant dense<0.000000e+00> : vector<32xf32>
    %2 = vector.multi_reduction <add>, %1, %cst [1] : vector<32x256xf32> to vector<32xf32>
    %3 = vector.shape_cast %2 : vector<32xf32> to vector<32x1xf32>
    %cst_2 = arith.constant 2.560000e+02 : f32
    %4 = vector.broadcast %cst_2 : f32 to vector<32x1xf32>
    %5 = arith.divf %3, %4 : vector<32x1xf32>
    %6 = vector.broadcast %5 : vector<32x1xf32> to vector<32x256xf32>
    %7 = arith.subf %1, %6 : vector<32x256xf32>
    %8 = arith.mulf %7, %7 : vector<32x256xf32>
    %cst_3 = arith.constant dense<0.000000e+00> : vector<32xf32>
    %9 = vector.multi_reduction <add>, %8, %cst_3 [1] : vector<32x256xf32> to vector<32xf32>
    %10 = vector.shape_cast %9 : vector<32xf32> to vector<32x1xf32>
    %cst_4 = arith.constant 0.00392156886 : f32
    %11 = vector.broadcast %cst_4 : f32 to vector<32x1xf32>
    %12 = arith.mulf %10, %11 : vector<32x1xf32>
    %cst_5 = arith.constant 9.99999974E-6 : f32
    %13 = vector.broadcast %cst_5 : f32 to vector<32x1xf32>
    %14 = arith.addf %12, %13 : vector<32x1xf32>
    %15 = math.rsqrt %14 : vector<32x1xf32>
    %16 = vector.broadcast %15 : vector<32x1xf32> to vector<32x256xf32>
    %17 = arith.mulf %7, %16 : vector<32x256xf32>
    %c0_6 = arith.constant 0 : index
    %c0_7 = arith.constant 0 : index
    %18 = vector.load %arg3[%c0_6, %c0_7] : memref<32x1xf32, #tpu.memory_space<vmem>>, vector<32x1xf32>
    %19 = vector.broadcast %18 : vector<32x1xf32> to vector<32x256xf32>
    %20 = arith.mulf %17, %19 : vector<32x256xf32>
    %cst_8 = arith.constant dense<0.000000e+00> : vector<256xf32>
    %21 = vector.multi_reduction <add>, %20, %cst_8 [0] : vector<32x256xf32> to vector<256xf32>
    %22 = vector.shape_cast %21 : vector<256xf32> to vector<1x256xf32>
    %c0_9 = arith.constant 0 : index
    %23 = memref.load %arg4[%c0_9] : memref<1xf32, #tpu.memory_space<smem>>
    %24 = vector.broadcast %23 : f32 to vector<1x256xf32>
    %25 = arith.addf %22, %24 : vector<1x256xf32>
    %cst_10 = arith.constant dense<0xFF800000> : vector<1xf32>
    %26 = vector.multi_reduction <maximumf>, %25, %cst_10 [1] : vector<1x256xf32> to vector<1xf32>
    %27 = vector.shape_cast %26 : vector<1xf32> to vector<1x1xf32>
    %28 = vector.broadcast %27 : vector<1x1xf32> to vector<1x256xf32>
    %29 = arith.subf %25, %28 : vector<1x256xf32>
    %30 = math.exp %29 : vector<1x256xf32>
    %cst_11 = arith.constant dense<0.000000e+00> : vector<1xf32>
    %31 = vector.multi_reduction <add>, %30, %cst_11 [1] : vector<1x256xf32> to vector<1xf32>
    %32 = vector.shape_cast %31 : vector<1xf32> to vector<1x1xf32>
    %33 = vector.broadcast %32 : vector<1x1xf32> to vector<1x256xf32>
    %34 = arith.divf %30, %33 : vector<1x256xf32>
    %35 = vector.broadcast %34 : vector<1x256xf32> to vector<32x256xf32>
    %36 = arith.mulf %1, %35 : vector<32x256xf32>
    %cst_12 = arith.constant dense<0.000000e+00> : vector<32xf32>
    %37 = vector.multi_reduction <add>, %36, %cst_12 [1] : vector<32x256xf32> to vector<32xf32>
    %38 = vector.shape_cast %37 : vector<32xf32> to vector<32x1xf32>
    %c0_13 = arith.constant 0 : index
    %c0_14 = arith.constant 0 : index
    %39 = vector.load %arg7[%c0_13, %c0_14] : memref<256x32xf32, #tpu.memory_space<vmem>>, vector<256x32xf32>
    %cst_15 = arith.constant dense<0.000000e+00> : vector<256x1xf32>
    %40 = tpu.matmul %39, %38, %cst_15 {dimension_numbers = #tpu.dot_dimension_numbers<[1], [0], [0], [1], [0, 0, 1, 1], [], []>} : vector<256x32xf32>, vector<32x1xf32>, vector<256x1xf32> -> vector<256x1xf32>
    %c0_16 = arith.constant 0 : index
    %c0_17 = arith.constant 0 : index
    %41 = vector.load %arg8[%c0_16, %c0_17] : memref<256x32xf32, #tpu.memory_space<vmem>>, vector<256x32xf32>
    %cst_18 = arith.constant dense<0.000000e+00> : vector<256x1xf32>
    %42 = tpu.matmul %41, %38, %cst_18 {dimension_numbers = #tpu.dot_dimension_numbers<[1], [0], [0], [1], [0, 0, 1, 1], [], []>} : vector<256x32xf32>, vector<32x1xf32>, vector<256x1xf32> -> vector<256x1xf32>
    %c0_19 = arith.constant 0 : index
    %c0_20 = arith.constant 0 : index
    %43 = vector.load %arg9[%c0_19, %c0_20] : memref<256x32xf32, #tpu.memory_space<vmem>>, vector<256x32xf32>
    %c0_21 = arith.constant 0 : index
    %c0_22 = arith.constant 0 : index
    %c0_23 = arith.constant 0 : index
    %44 = vector.load %arg2[%c0_21, %c0_22, %c0_23] : memref<1x256x32xf32, #tpu.memory_space<vmem>>, vector<1x256x32xf32>
    %45 = vector.shape_cast %44 : vector<1x256x32xf32> to vector<256x32xf32>
    %46 = vector.broadcast %40 : vector<256x1xf32> to vector<256x32xf32>
    %47 = arith.mulf %43, %46 : vector<256x32xf32>
    %48 = arith.addf %45, %47 : vector<256x32xf32>
    %cst_24 = arith.constant 1.000000e+00 : f32
    %49 = vector.broadcast %cst_24 : f32 to vector<256x32xf32>
    %50 = arith.subf %49, %43 : vector<256x32xf32>
    %51 = vector.broadcast %42 : vector<256x1xf32> to vector<256x32xf32>
    %52 = arith.mulf %50, %51 : vector<256x32xf32>
    %53 = arith.addf %48, %52 : vector<256x32xf32>
    %c0_25 = arith.constant 0 : index
    %c0_26 = arith.constant 0 : index
    %54 = vector.load %arg5[%c0_25, %c0_26] : memref<32x64xf32, #tpu.memory_space<vmem>>, vector<32x64xf32>
    %cst_27 = arith.constant dense<0.000000e+00> : vector<256x64xf32>
    %55 = tpu.matmul %53, %54, %cst_27 {dimension_numbers = #tpu.dot_dimension_numbers<[1], [0], [0], [1], [0, 0, 1, 1], [], []>} : vector<256x32xf32>, vector<32x64xf32>, vector<256x64xf32> -> vector<256x64xf32>
    %cst_28 = arith.constant dense<0xFF800000> : vector<256xf32>
    %56 = vector.multi_reduction <maximumf>, %55, %cst_28 [1] : vector<256x64xf32> to vector<256xf32>
    %57 = vector.shape_cast %56 : vector<256xf32> to vector<256x1xf32>
    %58 = vector.broadcast %57 : vector<256x1xf32> to vector<256x64xf32>
    %59 = arith.subf %55, %58 : vector<256x64xf32>
    %60 = math.exp %59 : vector<256x64xf32>
    %cst_29 = arith.constant dense<0.000000e+00> : vector<256xf32>
    %61 = vector.multi_reduction <add>, %60, %cst_29 [1] : vector<256x64xf32> to vector<256xf32>
    %62 = vector.shape_cast %61 : vector<256xf32> to vector<256x1xf32>
    %63 = tpu.reciprocal %62 {approx = true} : vector<256x1xf32> -> vector<256x1xf32>
    %64 = vector.broadcast %63 : vector<256x1xf32> to vector<256x64xf32>
    %65 = arith.mulf %60, %64 : vector<256x64xf32>
    %cst_30 = arith.constant dense<0.000000e+00> : vector<256xf32>
    %66 = vector.multi_reduction <add>, %65, %cst_30 [1] : vector<256x64xf32> to vector<256xf32>
    %67 = vector.shape_cast %66 : vector<256xf32> to vector<256x1xf32>
    %68 = vector.broadcast %67 : vector<256x1xf32> to vector<256x64xf32>
    %69 = arith.divf %65, %68 : vector<256x64xf32>
    %c0_31 = arith.constant 0 : index
    %c0_32 = arith.constant 0 : index
    %70 = vector.load %arg6[%c0_31, %c0_32] : memref<64x32xf32, #tpu.memory_space<vmem>>, vector<64x32xf32>
    %cst_33 = arith.constant dense<0.000000e+00> : vector<256x32xf32>
    %71 = tpu.matmul %69, %70, %cst_33 {dimension_numbers = #tpu.dot_dimension_numbers<[1], [0], [0], [1], [0, 0, 1, 1], [], []>} : vector<256x64xf32>, vector<64x32xf32>, vector<256x32xf32> -> vector<256x32xf32>
    %c0_34 = arith.constant 0 : index
    %c0_35 = arith.constant 0 : index
    %c0_36 = arith.constant 0 : index
    %72 = vector.load %arg10[%c0_34, %c0_35, %c0_36] : memref<1x256x32xf32, #tpu.memory_space<vmem>>, vector<1x256x32xf32>
    %73 = vector.shape_cast %72 : vector<1x256x32xf32> to vector<256x32xf32>
    %74 = vector.shape_cast %71 : vector<256x32xf32> to vector<1x256x32xf32>
    tpu.vector_store %arg10[%c0_34, %c0_35, %c0_36], %74 {strides = array<i32>} : memref<1x256x32xf32, #tpu.memory_space<vmem>>, vector<1x256x32xf32>,
    return
  }
  func.func @transform_0(%arg0: i32) -> (i32, i32, i32) {
    %c0_i32 = arith.constant 0 : i32
    %c0_i32_0 = arith.constant 0 : i32
    %c0_i32_1 = arith.constant 0 : i32
    return %arg0, %c0_i32, %c0_i32_0 : i32, i32, i32
  }
  func.func @transform_1(%arg0: i32) -> (i32, i32, i32) {
    %c0_i32 = arith.constant 0 : i32
    %c0_i32_0 = arith.constant 0 : i32
    %c0_i32_1 = arith.constant 0 : i32
    return %arg0, %c0_i32, %c0_i32_0 : i32, i32, i32
  }
  func.func @transform_2(%arg0: i32) -> (i32, i32) {
    %c0_i32 = arith.constant 0 : i32
    %c0_i32_0 = arith.constant 0 : i32
    %c0_i32_1 = arith.constant 0 : i32
    return %c0_i32, %c0_i32_0 : i32, i32
  }
  func.func @transform_3(%arg0: i32) -> i32 {
    %c0_i32 = arith.constant 0 : i32
    %c0_i32_0 = arith.constant 0 : i32
    return %c0_i32 : i32
  }
  func.func @transform_4(%arg0: i32) -> (i32, i32) {
    %c0_i32 = arith.constant 0 : i32
    %c0_i32_0 = arith.constant 0 : i32
    %c0_i32_1 = arith.constant 0 : i32
    return %c0_i32, %c0_i32_0 : i32, i32
  }
  func.func @transform_5(%arg0: i32) -> (i32, i32) {
    %c0_i32 = arith.constant 0 : i32
    %c0_i32_0 = arith.constant 0 : i32
    %c0_i32_1 = arith.constant 0 : i32
    return %c0_i32, %c0_i32_0 : i32, i32
  }
  func.func @transform_6(%arg0: i32) -> (i32, i32) {
    %c0_i32 = arith.constant 0 : i32
    %c0_i32_0 = arith.constant 0 : i32
    %c0_i32_1 = arith.constant 0 : i32
    return %c0_i32, %c0_i32_0 : i32, i32
  }
  func.func @transform_7(%arg0: i32) -> (i32, i32) {
    %c0_i32 = arith.constant 0 : i32
    %c0_i32_0 = arith.constant 0 : i32
    %c0_i32_1 = arith.constant 0 : i32
    return %c0_i32, %c0_i32_0 : i32, i32
  }
  func.func @transform_8(%arg0: i32) -> (i32, i32) {
    %c0_i32 = arith.constant 0 : i32
    %c0_i32_0 = arith.constant 0 : i32
    %c0_i32_1 = arith.constant 0 : i32
    return %c0_i32, %c0_i32_0 : i32, i32
  }
  func.func @transform_9(%arg0: i32) -> (i32, i32, i32) {
    %c0_i32 = arith.constant 0 : i32
    %c0_i32_0 = arith.constant 0 : i32
    %c0_i32_1 = arith.constant 0 : i32
    return %arg0, %c0_i32, %c0_i32_0 : i32, i32, i32
  }
}

module attributes {stable_mosaic.version = 11 : i64} {
  func.func @_gcea_fused_kernel(%arg0: i32, %arg1: memref<1x32x64xf32, #tpu.memory_space<vmem>>, %arg2: memref<1x64x32xf32, #tpu.memory_space<vmem>>, %arg3: memref<32x1xf32, #tpu.memory_space<vmem>>, %arg4: memref<1xf32, #tpu.memory_space<smem>>, %arg5: memref<32x64xf32, #tpu.memory_space<vmem>>, %arg6: memref<64x32xf32, #tpu.memory_space<vmem>>, %arg7: memref<64x32xf32, #tpu.memory_space<vmem>>, %arg8: memref<64x32xf32, #tpu.memory_space<vmem>>, %arg9: memref<64x32xf32, #tpu.memory_space<vmem>>, %arg10: memref<1x64x32xf32, #tpu.memory_space<vmem>>) attributes {dimension_semantics = [#tpu.dimension_semantics<parallel>], iteration_bounds = array<i64: 2>, scalar_prefetch = 0 : i64, scratch_operands = 0 : i64, tpu.core_type = #tpu.core_type<tc>, window_params = [{transform_indices = @transform_0, window_bounds = array<i64: 1, 32, 64>}, {transform_indices = @transform_1, window_bounds = array<i64: 1, 64, 32>}, {pipeline_mode = #tpu.pipeline_mode<synchronous>, transform_indices = @transform_2, window_bounds = array<i64: 32, 1>}, {transform_indices = @transform_3, window_bounds = array<i64: 1>}, {pipeline_mode = #tpu.pipeline_mode<synchronous>, transform_indices = @transform_4, window_bounds = array<i64: 32, 64>}, {pipeline_mode = #tpu.pipeline_mode<synchronous>, transform_indices = @transform_5, window_bounds = array<i64: 64, 32>}, {pipeline_mode = #tpu.pipeline_mode<synchronous>, transform_indices = @transform_6, window_bounds = array<i64: 64, 32>}, {pipeline_mode = #tpu.pipeline_mode<synchronous>, transform_indices = @transform_7, window_bounds = array<i64: 64, 32>}, {pipeline_mode = #tpu.pipeline_mode<synchronous>, transform_indices = @transform_8, window_bounds = array<i64: 64, 32>}, {transform_indices = @transform_9, window_bounds = array<i64: 1, 64, 32>}]} {
    %c0 = arith.constant 0 : index
    %c0_0 = arith.constant 0 : index
    %c0_1 = arith.constant 0 : index
    %0 = vector.load %arg1[%c0, %c0_0, %c0_1] : memref<1x32x64xf32, #tpu.memory_space<vmem>>, vector<1x32x64xf32>
    %1 = vector.shape_cast %0 : vector<1x32x64xf32> to vector<32x64xf32>
    %cst = arith.constant dense<0.000000e+00> : vector<32xf32>
    %2 = vector.multi_reduction <add>, %1, %cst [1] : vector<32x64xf32> to vector<32xf32>
    %3 = vector.shape_cast %2 : vector<32xf32> to vector<32x1xf32>
    %cst_2 = arith.constant 6.400000e+01 : f32
    %4 = vector.broadcast %cst_2 : f32 to vector<32x1xf32>
    %5 = arith.divf %3, %4 : vector<32x1xf32>
    %6 = vector.broadcast %5 : vector<32x1xf32> to vector<32x64xf32>
    %7 = arith.subf %1, %6 : vector<32x64xf32>
    %8 = arith.mulf %7, %7 : vector<32x64xf32>
    %cst_3 = arith.constant dense<0.000000e+00> : vector<32xf32>
    %9 = vector.multi_reduction <add>, %8, %cst_3 [1] : vector<32x64xf32> to vector<32xf32>
    %10 = vector.shape_cast %9 : vector<32xf32> to vector<32x1xf32>
    %cst_4 = arith.constant 0.0158730168 : f32
    %11 = vector.broadcast %cst_4 : f32 to vector<32x1xf32>
    %12 = arith.mulf %10, %11 : vector<32x1xf32>
    %cst_5 = arith.constant 9.99999974E-6 : f32
    %13 = vector.broadcast %cst_5 : f32 to vector<32x1xf32>
    %14 = arith.addf %12, %13 : vector<32x1xf32>
    %15 = math.rsqrt %14 : vector<32x1xf32>
    %16 = vector.broadcast %15 : vector<32x1xf32> to vector<32x64xf32>
    %17 = arith.mulf %7, %16 : vector<32x64xf32>
    %c0_6 = arith.constant 0 : index
    %c0_7 = arith.constant 0 : index
    %18 = vector.load %arg3[%c0_6, %c0_7] : memref<32x1xf32, #tpu.memory_space<vmem>>, vector<32x1xf32>
    %19 = vector.broadcast %18 : vector<32x1xf32> to vector<32x64xf32>
    %20 = arith.mulf %17, %19 : vector<32x64xf32>
    %cst_8 = arith.constant dense<0.000000e+00> : vector<64xf32>
    %21 = vector.multi_reduction <add>, %20, %cst_8 [0] : vector<32x64xf32> to vector<64xf32>
    %22 = vector.shape_cast %21 : vector<64xf32> to vector<1x64xf32>
    %c0_9 = arith.constant 0 : index
    %23 = memref.load %arg4[%c0_9] : memref<1xf32, #tpu.memory_space<smem>>
    %24 = vector.broadcast %23 : f32 to vector<1x64xf32>
    %25 = arith.addf %22, %24 : vector<1x64xf32>
    %cst_10 = arith.constant dense<0xFF800000> : vector<1xf32>
    %26 = vector.multi_reduction <maximumf>, %25, %cst_10 [1] : vector<1x64xf32> to vector<1xf32>
    %27 = vector.shape_cast %26 : vector<1xf32> to vector<1x1xf32>
    %28 = vector.broadcast %27 : vector<1x1xf32> to vector<1x64xf32>
    %29 = arith.subf %25, %28 : vector<1x64xf32>
    %30 = math.exp %29 : vector<1x64xf32>
    %cst_11 = arith.constant dense<0.000000e+00> : vector<1xf32>
    %31 = vector.multi_reduction <add>, %30, %cst_11 [1] : vector<1x64xf32> to vector<1xf32>
    %32 = vector.shape_cast %31 : vector<1xf32> to vector<1x1xf32>
    %33 = vector.broadcast %32 : vector<1x1xf32> to vector<1x64xf32>
    %34 = arith.divf %30, %33 : vector<1x64xf32>
    %35 = vector.broadcast %34 : vector<1x64xf32> to vector<32x64xf32>
    %36 = arith.mulf %1, %35 : vector<32x64xf32>
    %cst_12 = arith.constant dense<0.000000e+00> : vector<32xf32>
    %37 = vector.multi_reduction <add>, %36, %cst_12 [1] : vector<32x64xf32> to vector<32xf32>
    %38 = vector.shape_cast %37 : vector<32xf32> to vector<32x1xf32>
    %c0_13 = arith.constant 0 : index
    %c0_14 = arith.constant 0 : index
    %39 = vector.load %arg7[%c0_13, %c0_14] : memref<64x32xf32, #tpu.memory_space<vmem>>, vector<64x32xf32>
    %cst_15 = arith.constant dense<0.000000e+00> : vector<64x1xf32>
    %40 = tpu.matmul %39, %38, %cst_15 {dimension_numbers = #tpu.dot_dimension_numbers<[1], [0], [0], [1], [0, 0, 1, 1], [], []>} : vector<64x32xf32>, vector<32x1xf32>, vector<64x1xf32> -> vector<64x1xf32>
    %c0_16 = arith.constant 0 : index
    %c0_17 = arith.constant 0 : index
    %41 = vector.load %arg8[%c0_16, %c0_17] : memref<64x32xf32, #tpu.memory_space<vmem>>, vector<64x32xf32>
    %cst_18 = arith.constant dense<0.000000e+00> : vector<64x1xf32>
    %42 = tpu.matmul %41, %38, %cst_18 {dimension_numbers = #tpu.dot_dimension_numbers<[1], [0], [0], [1], [0, 0, 1, 1], [], []>} : vector<64x32xf32>, vector<32x1xf32>, vector<64x1xf32> -> vector<64x1xf32>
    %c0_19 = arith.constant 0 : index
    %c0_20 = arith.constant 0 : index
    %43 = vector.load %arg9[%c0_19, %c0_20] : memref<64x32xf32, #tpu.memory_space<vmem>>, vector<64x32xf32>
    %c0_21 = arith.constant 0 : index
    %c0_22 = arith.constant 0 : index
    %c0_23 = arith.constant 0 : index
    %44 = vector.load %arg2[%c0_21, %c0_22, %c0_23] : memref<1x64x32xf32, #tpu.memory_space<vmem>>, vector<1x64x32xf32>
    %45 = vector.shape_cast %44 : vector<1x64x32xf32> to vector<64x32xf32>
    %46 = vector.broadcast %40 : vector<64x1xf32> to vector<64x32xf32>
    %47 = arith.mulf %43, %46 : vector<64x32xf32>
    %48 = arith.addf %45, %47 : vector<64x32xf32>
    %cst_24 = arith.constant 1.000000e+00 : f32
    %49 = vector.broadcast %cst_24 : f32 to vector<64x32xf32>
    %50 = arith.subf %49, %43 : vector<64x32xf32>
    %51 = vector.broadcast %42 : vector<64x1xf32> to vector<64x32xf32>
    %52 = arith.mulf %50, %51 : vector<64x32xf32>
    %53 = arith.addf %48, %52 : vector<64x32xf32>
    %c0_25 = arith.constant 0 : index
    %c0_26 = arith.constant 0 : index
    %54 = vector.load %arg5[%c0_25, %c0_26] : memref<32x64xf32, #tpu.memory_space<vmem>>, vector<32x64xf32>
    %cst_27 = arith.constant dense<0.000000e+00> : vector<64x64xf32>
    %55 = tpu.matmul %53, %54, %cst_27 {dimension_numbers = #tpu.dot_dimension_numbers<[1], [0], [0], [1], [0, 0, 1, 1], [], []>} : vector<64x32xf32>, vector<32x64xf32>, vector<64x64xf32> -> vector<64x64xf32>
    %cst_28 = arith.constant dense<0xFF800000> : vector<64xf32>
    %56 = vector.multi_reduction <maximumf>, %55, %cst_28 [1] : vector<64x64xf32> to vector<64xf32>
    %57 = vector.shape_cast %56 : vector<64xf32> to vector<64x1xf32>
    %58 = vector.broadcast %57 : vector<64x1xf32> to vector<64x64xf32>
    %59 = arith.subf %55, %58 : vector<64x64xf32>
    %60 = math.exp %59 : vector<64x64xf32>
    %cst_29 = arith.constant dense<0.000000e+00> : vector<64xf32>
    %61 = vector.multi_reduction <add>, %60, %cst_29 [1] : vector<64x64xf32> to vector<64xf32>
    %62 = vector.shape_cast %61 : vector<64xf32> to vector<64x1xf32>
    %63 = tpu.reciprocal %62 {approx = true} : vector<64x1xf32> -> vector<64x1xf32>
    %64 = vector.broadcast %63 : vector<64x1xf32> to vector<64x64xf32>
    %65 = arith.mulf %60, %64 : vector<64x64xf32>
    %cst_30 = arith.constant dense<0.000000e+00> : vector<64xf32>
    %66 = vector.multi_reduction <add>, %65, %cst_30 [1] : vector<64x64xf32> to vector<64xf32>
    %67 = vector.shape_cast %66 : vector<64xf32> to vector<64x1xf32>
    %68 = vector.broadcast %67 : vector<64x1xf32> to vector<64x64xf32>
    %69 = arith.divf %65, %68 : vector<64x64xf32>
    %c0_31 = arith.constant 0 : index
    %c0_32 = arith.constant 0 : index
    %70 = vector.load %arg6[%c0_31, %c0_32] : memref<64x32xf32, #tpu.memory_space<vmem>>, vector<64x32xf32>
    %cst_33 = arith.constant dense<0.000000e+00> : vector<64x32xf32>
    %71 = tpu.matmul %69, %70, %cst_33 {dimension_numbers = #tpu.dot_dimension_numbers<[1], [0], [0], [1], [0, 0, 1, 1], [], []>} : vector<64x64xf32>, vector<64x32xf32>, vector<64x32xf32> -> vector<64x32xf32>
    %c0_34 = arith.constant 0 : index
    %c0_35 = arith.constant 0 : index
    %c0_36 = arith.constant 0 : index
    %72 = vector.load %arg10[%c0_34, %c0_35, %c0_36] : memref<1x64x32xf32, #tpu.memory_space<vmem>>, vector<1x64x32xf32>
    %73 = vector.shape_cast %72 : vector<1x64x32xf32> to vector<64x32xf32>
    %74 = vector.shape_cast %71 : vector<64x32xf32> to vector<1x64x32xf32>
    tpu.vector_store %arg10[%c0_34, %c0_35, %c0_36], %74 {strides = array<i32>} : memref<1x64x32xf32, #tpu.memory_space<vmem>>, vector<1x64x32xf32>,
    return
  }
  func.func @transform_0(%arg0: i32) -> (i32, i32, i32) {
    %c0_i32 = arith.constant 0 : i32
    %c0_i32_0 = arith.constant 0 : i32
    %c0_i32_1 = arith.constant 0 : i32
    return %arg0, %c0_i32, %c0_i32_0 : i32, i32, i32
  }
  func.func @transform_1(%arg0: i32) -> (i32, i32, i32) {
    %c0_i32 = arith.constant 0 : i32
    %c0_i32_0 = arith.constant 0 : i32
    %c0_i32_1 = arith.constant 0 : i32
    return %arg0, %c0_i32, %c0_i32_0 : i32, i32, i32
  }
  func.func @transform_2(%arg0: i32) -> (i32, i32) {
    %c0_i32 = arith.constant 0 : i32
    %c0_i32_0 = arith.constant 0 : i32
    %c0_i32_1 = arith.constant 0 : i32
    return %c0_i32, %c0_i32_0 : i32, i32
  }
  func.func @transform_3(%arg0: i32) -> i32 {
    %c0_i32 = arith.constant 0 : i32
    %c0_i32_0 = arith.constant 0 : i32
    return %c0_i32 : i32
  }
  func.func @transform_4(%arg0: i32) -> (i32, i32) {
    %c0_i32 = arith.constant 0 : i32
    %c0_i32_0 = arith.constant 0 : i32
    %c0_i32_1 = arith.constant 0 : i32
    return %c0_i32, %c0_i32_0 : i32, i32
  }
  func.func @transform_5(%arg0: i32) -> (i32, i32) {
    %c0_i32 = arith.constant 0 : i32
    %c0_i32_0 = arith.constant 0 : i32
    %c0_i32_1 = arith.constant 0 : i32
    return %c0_i32, %c0_i32_0 : i32, i32
  }
  func.func @transform_6(%arg0: i32) -> (i32, i32) {
    %c0_i32 = arith.constant 0 : i32
    %c0_i32_0 = arith.constant 0 : i32
    %c0_i32_1 = arith.constant 0 : i32
    return %c0_i32, %c0_i32_0 : i32, i32
  }
  func.func @transform_7(%arg0: i32) -> (i32, i32) {
    %c0_i32 = arith.constant 0 : i32
    %c0_i32_0 = arith.constant 0 : i32
    %c0_i32_1 = arith.constant 0 : i32
    return %c0_i32, %c0_i32_0 : i32, i32
  }
  func.func @transform_8(%arg0: i32) -> (i32, i32) {
    %c0_i32 = arith.constant 0 : i32
    %c0_i32_0 = arith.constant 0 : i32
    %c0_i32_1 = arith.constant 0 : i32
    return %c0_i32, %c0_i32_0 : i32, i32
  }
  func.func @transform_9(%arg0: i32) -> (i32, i32, i32) {
    %c0_i32 = arith.constant 0 : i32
    %c0_i32_0 = arith.constant 0 : i32
    %c0_i32_1 = arith.constant 0 : i32
    return %arg0, %c0_i32, %c0_i32_0 : i32, i32, i32
  }
}

module attributes {stable_mosaic.version = 11 : i64} {
  func.func @kernel(%arg0: i32, %arg1: memref<1x32x342xf32, #tpu.memory_space<vmem>>, %arg2: memref<9x32x32xf32, #tpu.memory_space<vmem>>, %arg3: memref<32x1xf32, #tpu.memory_space<vmem>>, %arg4: memref<1x32x288xf32, #tpu.memory_space<vmem>>) attributes {dimension_semantics = [#tpu.dimension_semantics<parallel>], iteration_bounds = array<i64: 2>, scalar_prefetch = 0 : i64, scratch_operands = 0 : i64, tpu.core_type = #tpu.core_type<tc>, window_params = [{transform_indices = @transform_0, window_bounds = array<i64: 1, 32, 342>}, {pipeline_mode = #tpu.pipeline_mode<synchronous>, transform_indices = @transform_1, window_bounds = array<i64: 9, 32, 32>}, {pipeline_mode = #tpu.pipeline_mode<synchronous>, transform_indices = @transform_2, window_bounds = array<i64: 32, 1>}, {transform_indices = @transform_3, window_bounds = array<i64: 1, 32, 288>}]} {
    %c0 = arith.constant 0 : index
    %c0_0 = arith.constant 0 : index
    %c0_1 = arith.constant 0 : index
    %0 = vector.load %arg1[%c0, %c0_0, %c0_1] : memref<1x32x342xf32, #tpu.memory_space<vmem>>, vector<1x32x342xf32>
    %1 = vector.shape_cast %0 : vector<1x32x342xf32> to vector<32x342xf32>
    %c0_2 = arith.constant 0 : index
    %c0_3 = arith.constant 0 : index
    %c0_4 = arith.constant 0 : index
    %2 = vector.load %arg2[%c0_2, %c0_3, %c0_4] : memref<9x32x32xf32, #tpu.memory_space<vmem>>, vector<1x32x32xf32>
    %3 = vector.shape_cast %2 : vector<1x32x32xf32> to vector<32x32xf32>
    %4 = vector.extract_strided_slice %1 {offsets = [0, 0], sizes = [32, 288], strides = [1, 1]} : vector<32x342xf32> to vector<32x288xf32>
    %cst = arith.constant dense<0.000000e+00> : vector<32x288xf32>
    %5 = tpu.matmul %3, %4, %cst {dimension_numbers = #tpu.dot_dimension_numbers<[1], [0], [0], [1], [0, 0, 1, 1], [], []>} : vector<32x32xf32>, vector<32x288xf32>, vector<32x288xf32> -> vector<32x288xf32>
    %c1 = arith.constant 1 : index
    %c0_5 = arith.constant 0 : index
    %c0_6 = arith.constant 0 : index
    %6 = vector.load %arg2[%c1, %c0_5, %c0_6] : memref<9x32x32xf32, #tpu.memory_space<vmem>>, vector<1x32x32xf32>
    %7 = vector.shape_cast %6 : vector<1x32x32xf32> to vector<32x32xf32>
    %8 = vector.extract_strided_slice %1 {offsets = [0, 1], sizes = [32, 288], strides = [1, 1]} : vector<32x342xf32> to vector<32x288xf32>
    %cst_7 = arith.constant dense<0.000000e+00> : vector<32x288xf32>
    %9 = tpu.matmul %7, %8, %cst_7 {dimension_numbers = #tpu.dot_dimension_numbers<[1], [0], [0], [1], [0, 0, 1, 1], [], []>} : vector<32x32xf32>, vector<32x288xf32>, vector<32x288xf32> -> vector<32x288xf32>
    %10 = arith.addf %5, %9 : vector<32x288xf32>
    %c2 = arith.constant 2 : index
    %c0_8 = arith.constant 0 : index
    %c0_9 = arith.constant 0 : index
    %11 = vector.load %arg2[%c2, %c0_8, %c0_9] : memref<9x32x32xf32, #tpu.memory_space<vmem>>, vector<1x32x32xf32>
    %12 = vector.shape_cast %11 : vector<1x32x32xf32> to vector<32x32xf32>
    %13 = vector.extract_strided_slice %1 {offsets = [0, 2], sizes = [32, 288], strides = [1, 1]} : vector<32x342xf32> to vector<32x288xf32>
    %cst_10 = arith.constant dense<0.000000e+00> : vector<32x288xf32>
    %14 = tpu.matmul %12, %13, %cst_10 {dimension_numbers = #tpu.dot_dimension_numbers<[1], [0], [0], [1], [0, 0, 1, 1], [], []>} : vector<32x32xf32>, vector<32x288xf32>, vector<32x288xf32> -> vector<32x288xf32>
    %15 = arith.addf %10, %14 : vector<32x288xf32>
    %c3 = arith.constant 3 : index
    %c0_11 = arith.constant 0 : index
    %c0_12 = arith.constant 0 : index
    %16 = vector.load %arg2[%c3, %c0_11, %c0_12] : memref<9x32x32xf32, #tpu.memory_space<vmem>>, vector<1x32x32xf32>
    %17 = vector.shape_cast %16 : vector<1x32x32xf32> to vector<32x32xf32>
    %18 = vector.extract_strided_slice %1 {offsets = [0, 18], sizes = [32, 288], strides = [1, 1]} : vector<32x342xf32> to vector<32x288xf32>
    %cst_13 = arith.constant dense<0.000000e+00> : vector<32x288xf32>
    %19 = tpu.matmul %17, %18, %cst_13 {dimension_numbers = #tpu.dot_dimension_numbers<[1], [0], [0], [1], [0, 0, 1, 1], [], []>} : vector<32x32xf32>, vector<32x288xf32>, vector<32x288xf32> -> vector<32x288xf32>
    %20 = arith.addf %15, %19 : vector<32x288xf32>
    %c4 = arith.constant 4 : index
    %c0_14 = arith.constant 0 : index
    %c0_15 = arith.constant 0 : index
    %21 = vector.load %arg2[%c4, %c0_14, %c0_15] : memref<9x32x32xf32, #tpu.memory_space<vmem>>, vector<1x32x32xf32>
    %22 = vector.shape_cast %21 : vector<1x32x32xf32> to vector<32x32xf32>
    %23 = vector.extract_strided_slice %1 {offsets = [0, 19], sizes = [32, 288], strides = [1, 1]} : vector<32x342xf32> to vector<32x288xf32>
    %cst_16 = arith.constant dense<0.000000e+00> : vector<32x288xf32>
    %24 = tpu.matmul %22, %23, %cst_16 {dimension_numbers = #tpu.dot_dimension_numbers<[1], [0], [0], [1], [0, 0, 1, 1], [], []>} : vector<32x32xf32>, vector<32x288xf32>, vector<32x288xf32> -> vector<32x288xf32>
    %25 = arith.addf %20, %24 : vector<32x288xf32>
    %c5 = arith.constant 5 : index
    %c0_17 = arith.constant 0 : index
    %c0_18 = arith.constant 0 : index
    %26 = vector.load %arg2[%c5, %c0_17, %c0_18] : memref<9x32x32xf32, #tpu.memory_space<vmem>>, vector<1x32x32xf32>
    %27 = vector.shape_cast %26 : vector<1x32x32xf32> to vector<32x32xf32>
    %28 = vector.extract_strided_slice %1 {offsets = [0, 20], sizes = [32, 288], strides = [1, 1]} : vector<32x342xf32> to vector<32x288xf32>
    %cst_19 = arith.constant dense<0.000000e+00> : vector<32x288xf32>
    %29 = tpu.matmul %27, %28, %cst_19 {dimension_numbers = #tpu.dot_dimension_numbers<[1], [0], [0], [1], [0, 0, 1, 1], [], []>} : vector<32x32xf32>, vector<32x288xf32>, vector<32x288xf32> -> vector<32x288xf32>
    %30 = arith.addf %25, %29 : vector<32x288xf32>
    %c6 = arith.constant 6 : index
    %c0_20 = arith.constant 0 : index
    %c0_21 = arith.constant 0 : index
    %31 = vector.load %arg2[%c6, %c0_20, %c0_21] : memref<9x32x32xf32, #tpu.memory_space<vmem>>, vector<1x32x32xf32>
    %32 = vector.shape_cast %31 : vector<1x32x32xf32> to vector<32x32xf32>
    %33 = vector.extract_strided_slice %1 {offsets = [0, 36], sizes = [32, 288], strides = [1, 1]} : vector<32x342xf32> to vector<32x288xf32>
    %cst_22 = arith.constant dense<0.000000e+00> : vector<32x288xf32>
    %34 = tpu.matmul %32, %33, %cst_22 {dimension_numbers = #tpu.dot_dimension_numbers<[1], [0], [0], [1], [0, 0, 1, 1], [], []>} : vector<32x32xf32>, vector<32x288xf32>, vector<32x288xf32> -> vector<32x288xf32>
    %35 = arith.addf %30, %34 : vector<32x288xf32>
    %c7 = arith.constant 7 : index
    %c0_23 = arith.constant 0 : index
    %c0_24 = arith.constant 0 : index
    %36 = vector.load %arg2[%c7, %c0_23, %c0_24] : memref<9x32x32xf32, #tpu.memory_space<vmem>>, vector<1x32x32xf32>
    %37 = vector.shape_cast %36 : vector<1x32x32xf32> to vector<32x32xf32>
    %38 = vector.extract_strided_slice %1 {offsets = [0, 37], sizes = [32, 288], strides = [1, 1]} : vector<32x342xf32> to vector<32x288xf32>
    %cst_25 = arith.constant dense<0.000000e+00> : vector<32x288xf32>
    %39 = tpu.matmul %37, %38, %cst_25 {dimension_numbers = #tpu.dot_dimension_numbers<[1], [0], [0], [1], [0, 0, 1, 1], [], []>} : vector<32x32xf32>, vector<32x288xf32>, vector<32x288xf32> -> vector<32x288xf32>
    %40 = arith.addf %35, %39 : vector<32x288xf32>
    %c8 = arith.constant 8 : index
    %c0_26 = arith.constant 0 : index
    %c0_27 = arith.constant 0 : index
    %41 = vector.load %arg2[%c8, %c0_26, %c0_27] : memref<9x32x32xf32, #tpu.memory_space<vmem>>, vector<1x32x32xf32>
    %42 = vector.shape_cast %41 : vector<1x32x32xf32> to vector<32x32xf32>
    %43 = vector.extract_strided_slice %1 {offsets = [0, 38], sizes = [32, 288], strides = [1, 1]} : vector<32x342xf32> to vector<32x288xf32>
    %cst_28 = arith.constant dense<0.000000e+00> : vector<32x288xf32>
    %44 = tpu.matmul %42, %43, %cst_28 {dimension_numbers = #tpu.dot_dimension_numbers<[1], [0], [0], [1], [0, 0, 1, 1], [], []>} : vector<32x32xf32>, vector<32x288xf32>, vector<32x288xf32> -> vector<32x288xf32>
    %45 = arith.addf %40, %44 : vector<32x288xf32>
    %c0_29 = arith.constant 0 : index
    %c0_30 = arith.constant 0 : index
    %46 = vector.load %arg3[%c0_29, %c0_30] : memref<32x1xf32, #tpu.memory_space<vmem>>, vector<32x1xf32>
    %47 = vector.broadcast %46 : vector<32x1xf32> to vector<32x288xf32>
    %48 = arith.addf %45, %47 : vector<32x288xf32>
    %c0_31 = arith.constant 0 : index
    %c0_32 = arith.constant 0 : index
    %c0_33 = arith.constant 0 : index
    %49 = vector.load %arg4[%c0_31, %c0_32, %c0_33] : memref<1x32x288xf32, #tpu.memory_space<vmem>>, vector<1x32x288xf32>
    %50 = vector.shape_cast %49 : vector<1x32x288xf32> to vector<32x288xf32>
    %51 = vector.shape_cast %48 : vector<32x288xf32> to vector<1x32x288xf32>
    tpu.vector_store %arg4[%c0_31, %c0_32, %c0_33], %51 {strides = array<i32>} : memref<1x32x288xf32, #tpu.memory_space<vmem>>, vector<1x32x288xf32>,
    return
  }
  func.func @transform_0(%arg0: i32) -> (i32, i32, i32) {
    %c0_i32 = arith.constant 0 : i32
    %c0_i32_0 = arith.constant 0 : i32
    %c0_i32_1 = arith.constant 0 : i32
    return %arg0, %c0_i32, %c0_i32_0 : i32, i32, i32
  }
  func.func @transform_1(%arg0: i32) -> (i32, i32, i32) {
    %c0_i32 = arith.constant 0 : i32
    %c0_i32_0 = arith.constant 0 : i32
    %c0_i32_1 = arith.constant 0 : i32
    %c0_i32_2 = arith.constant 0 : i32
    return %c0_i32, %c0_i32_0, %c0_i32_1 : i32, i32, i32
  }
  func.func @transform_2(%arg0: i32) -> (i32, i32) {
    %c0_i32 = arith.constant 0 : i32
    %c0_i32_0 = arith.constant 0 : i32
    %c0_i32_1 = arith.constant 0 : i32
    return %c0_i32, %c0_i32_0 : i32, i32
  }
  func.func @transform_3(%arg0: i32) -> (i32, i32, i32) {
    %c0_i32 = arith.constant 0 : i32
    %c0_i32_0 = arith.constant 0 : i32
    %c0_i32_1 = arith.constant 0 : i32
    return %arg0, %c0_i32, %c0_i32_0 : i32, i32, i32
  }
}

</mosaic_0001>

<llo_original>
// kernel: transform_forward.3
$region0: #{transform_forward.3}
  #allocation0 [shape = 'u32[]', space=smem, size = 0x4, offset = 0x4, fixed_abs, tag = 'smem constant byte address 0x4 - core index']
  #allocation1 [shape = 'u32[144,128]{1,0:T(1,128)}', space=vmem, size = 0x12000, scoped, tag = 'internal scratch']
  #allocation2 [shape = 'f32[1]{0:T(128)S(6)}', space=smem, size = 0x200, scoped, tag = 'scoped memory for transform_forward.3']
  %s0 = inlined_call_operand.vmem [shape: f32[2,32,256], index: 0, kind: input, shape index: {}]
  %s1 = inlined_call_operand.vmem [shape: f32[2,256,32], index: 1, kind: input, shape index: {}]
  %s2 = inlined_call_operand.vmem [shape: f32[32,1], index: 2, kind: input, shape index: {}]
  %s3 = inlined_call_operand.<no memory space> [shape: f32[1], index: 3, kind: input, shape index: {}]
  %s4 = inlined_call_operand.vmem [shape: f32[32,64], index: 4, kind: input, shape index: {}]
  %s5 = inlined_call_operand.vmem [shape: f32[64,32], index: 5, kind: input, shape index: {}]
  %s6 = inlined_call_operand.vmem [shape: f32[256,32], index: 6, kind: input, shape index: {}]
  %s7 = inlined_call_operand.vmem [shape: f32[256,32], index: 7, kind: input, shape index: {}]
  %s8 = inlined_call_operand.vmem [shape: f32[256,32], index: 8, kind: input, shape index: {}]
  %s9 = inlined_call_operand.vmem [shape: f32[2,256,32], index: 9, kind: output, shape index: {}]
  %s10 = sld [smem:[#allocation0]]
  $region69: #{transform_forward.3} parent=0
    _
  %s12 = ssub.s32 1, %s10
  %s13 = scalar_select 0, %s12, %s10
  %14 = sst [smem:[#allocation2]] %s3
  loop: start=0, step=1, limit=4
  $region2: #{transform_forward.3} parent=0 // loop_pre_header
    _
  $region3: #{transform_forward.3} parent=0 // loop_header
    %s16 = sphi 0, %s20
    %p17 = scmp.ge.s32.totalorder %s16, 4
    %s26 = sphi 0, %s28
    %s29 = sphi 0, %s26
    %s30 = sphi 0, %s29
    %s46 = sphi 0, %s30
    %s52 = sphi 0, %s54
    %s55 = sphi 0, %s52
    %s56 = sphi 0, %s55
    %s72 = sphi 0, %s56
    %s76 = sphi 0, %s76
    %s78 = sphi 0, %s76
    %s79 = sphi 0, %s78
    %s93 = sphi 0, %s79
    %s97 = sphi 0, %s97
    %s99 = sphi 0, %s97
    %s100 = sphi 0, %s99
    %s114 = sphi 0, %s100
    %s118 = sphi 0, %s118
    %s120 = sphi 0, %s118
    %s121 = sphi 0, %s120
    %s135 = sphi 0, %s121
    %s139 = sphi 0, %s139
    %s141 = sphi 0, %s139
    %s142 = sphi 0, %s141
    %s156 = sphi 0, %s142
    %s160 = sphi 0, %s160
    %s162 = sphi 0, %s160
    %s163 = sphi 0, %s162
    %s177 = sphi 0, %s163
    %s181 = sphi 0, %s181
    %s183 = sphi 0, %s181
    %s184 = sphi 0, %s183
    %s198 = sphi 0, %s184
    %s202 = sphi 0, %s202
    %s204 = sphi 0, %s202
    %s205 = sphi 0, %s204
    %s219 = sphi 0, %s205
    %s225 = sphi 0, %s227
    %s228 = sphi 0, %s225
    %s229 = sphi 0, %s228
    %s245 = sphi 0, %s229
  $region4: #{transform_forward.3} parent=0 // loop_header_branch
    %19 = sbr.rel (%p17) target = $region8
  $region5: #{transform_forward.3} parent=0 // loop_body
    %s21 = ssub.s32 %s16, 1
    %s22 = ssub.s32 %s16, 2
    %s23 = sadd.s32 %s16, 1
    %s24 = ssub.s32 %s16, %s23
    %p25 = scmp.eq.s32.totalorder %s24, 0
    %s27 = sadd.s32 %s26, 1
    %s28 = scalar_select %p25, %s26, %s27
    %p31 = pneg %p25
    %p32 = scmp.eq.s32.totalorder %s16, 1
    %p33 = por %p31, %p32
    %p34 = scmp.ne.s32.totalorder %s26, %s29
    %p35 = scmp.eq.s32.totalorder %s16, 0
    %p36 = por %p34, %p35
    %p37 = scmp.ne.s32.totalorder %s26, %s29
    %p38 = scmp.eq.s32.totalorder %s21, 1
    %p39 = por %p37, %p38
    %p40 = scmp.ne.s32.totalorder %s29, %s30
    %p41 = scmp.eq.s32.totalorder %s21, 0
    %p42 = por %p40, %p41
    %p43 = scmp.ne.s32.totalorder %s29, %s30
    %p44 = scmp.eq.s32.totalorder %s22, 1
    %p45 = por %p43, %p44
    %p47 = scmp.ne.s32.totalorder %s30, %s46
    %p48 = scmp.eq.s32.totalorder %s22, 0
    %p49 = por %p47, %p48
    %s50 = ssub.s32 %s16, %s23
    %p51 = scmp.eq.s32.totalorder %s50, 0
    %s53 = sadd.s32 %s52, 1
    %s54 = scalar_select %p51, %s52, %s53
    %p57 = pneg %p51
    %p58 = scmp.eq.s32.totalorder %s16, 1
    %p59 = por %p57, %p58
    %p60 = scmp.ne.s32.totalorder %s52, %s55
    %p61 = scmp.eq.s32.totalorder %s16, 0
    %p62 = por %p60, %p61
    %p63 = scmp.ne.s32.totalorder %s52, %s55
    %p64 = scmp.eq.s32.totalorder %s21, 1
    %p65 = por %p63, %p64
    %p66 = scmp.ne.s32.totalorder %s55, %s56
    %p67 = scmp.eq.s32.totalorder %s21, 0
    %p68 = por %p66, %p67
    %p69 = scmp.ne.s32.totalorder %s55, %s56
    %p70 = scmp.eq.s32.totalorder %s22, 1
    %p71 = por %p69, %p70
    %p73 = scmp.ne.s32.totalorder %s56, %s72
    %p74 = scmp.eq.s32.totalorder %s22, 0
    %p75 = por %p73, %p74
    %s77 = sadd.s32 %s76, 1
    %p80 = scmp.eq.s32.totalorder %s16, 1
    %p81 = scmp.ne.s32.totalorder %s76, %s78
    %p82 = scmp.eq.s32.totalorder %s16, 0
    %p83 = por %p81, %p82
    %p84 = scmp.ne.s32.totalorder %s76, %s78
    %p85 = scmp.eq.s32.totalorder %s21, 1
    %p86 = por %p84, %p85
    %p87 = scmp.ne.s32.totalorder %s78, %s79
    %p88 = scmp.eq.s32.totalorder %s21, 0
    %p89 = por %p87, %p88
    %p90 = scmp.ne.s32.totalorder %s78, %s79
    %p91 = scmp.eq.s32.totalorder %s22, 1
    %p92 = por %p90, %p91
    %p94 = scmp.ne.s32.totalorder %s79, %s93
    %p95 = scmp.eq.s32.totalorder %s22, 0
    %p96 = por %p94, %p95
    %s98 = sadd.s32 %s97, 1
    %p101 = scmp.eq.s32.totalorder %s16, 1
    %p102 = scmp.ne.s32.totalorder %s97, %s99
    %p103 = scmp.eq.s32.totalorder %s16, 0
    %p104 = por %p102, %p103
    %p105 = scmp.ne.s32.totalorder %s97, %s99
    %p106 = scmp.eq.s32.totalorder %s21, 1
    %p107 = por %p105, %p106
    %p108 = scmp.ne.s32.totalorder %s99, %s100
    %p109 = scmp.eq.s32.totalorder %s21, 0
    %p110 = por %p108, %p109
    %p111 = scmp.ne.s32.totalorder %s99, %s100
    %p112 = scmp.eq.s32.totalorder %s22, 1
    %p113 = por %p111, %p112
    %p115 = scmp.ne.s32.totalorder %s100, %s114
    %p116 = scmp.eq.s32.totalorder %s22, 0
    %p117 = por %p115, %p116
    %s119 = sadd.s32 %s118, 1
    %p122 = scmp.eq.s32.totalorder %s16, 1
    %p123 = scmp.ne.s32.totalorder %s118, %s120
    %p124 = scmp.eq.s32.totalorder %s16, 0
    %p125 = por %p123, %p124
    %p126 = scmp.ne.s32.totalorder %s118, %s120
    %p127 = scmp.eq.s32.totalorder %s21, 1
    %p128 = por %p126, %p127
    %p129 = scmp.ne.s32.totalorder %s120, %s121
    %p130 = scmp.eq.s32.totalorder %s21, 0
    %p131 = por %p129, %p130
    %p132 = scmp.ne.s32.totalorder %s120, %s121
    %p133 = scmp.eq.s32.totalorder %s22, 1
    %p134 = por %p132, %p133
    %p136 = scmp.ne.s32.totalorder %s121, %s135
    %p137 = scmp.eq.s32.totalorder %s22, 0
    %p138 = por %p136, %p137
    %s140 = sadd.s32 %s139, 1
    %p143 = scmp.eq.s32.totalorder %s16, 1
    %p144 = scmp.ne.s32.totalorder %s139, %s141
    %p145 = scmp.eq.s32.totalorder %s16, 0
    %p146 = por %p144, %p145
    %p147 = scmp.ne.s32.totalorder %s139, %s141
    %p148 = scmp.eq.s32.totalorder %s21, 1
    %p149 = por %p147, %p148
    %p150 = scmp.ne.s32.totalorder %s141, %s142
    %p151 = scmp.eq.s32.totalorder %s21, 0
    %p152 = por %p150, %p151
    %p153 = scmp.ne.s32.totalorder %s141, %s142
    %p154 = scmp.eq.s32.totalorder %s22, 1
    %p155 = por %p153, %p154
    %p157 = scmp.ne.s32.totalorder %s142, %s156
    %p158 = scmp.eq.s32.totalorder %s22, 0
    %p159 = por %p157, %p158
    %s161 = sadd.s32 %s160, 1
    %p164 = scmp.eq.s32.totalorder %s16, 1
    %p165 = scmp.ne.s32.totalorder %s160, %s162
    %p166 = scmp.eq.s32.totalorder %s16, 0
    %p167 = por %p165, %p166
    %p168 = scmp.ne.s32.totalorder %s160, %s162
    %p169 = scmp.eq.s32.totalorder %s21, 1
    %p170 = por %p168, %p169
    %p171 = scmp.ne.s32.totalorder %s162, %s163
    %p172 = scmp.eq.s32.totalorder %s21, 0
    %p173 = por %p171, %p172
    %p174 = scmp.ne.s32.totalorder %s162, %s163
    %p175 = scmp.eq.s32.totalorder %s22, 1
    %p176 = por %p174, %p175
    %p178 = scmp.ne.s32.totalorder %s163, %s177
    %p179 = scmp.eq.s32.totalorder %s22, 0
    %p180 = por %p178, %p179
    %s182 = sadd.s32 %s181, 1
    %p185 = scmp.eq.s32.totalorder %s16, 1
    %p186 = scmp.ne.s32.totalorder %s181, %s183
    %p187 = scmp.eq.s32.totalorder %s16, 0
    %p188 = por %p186, %p187
    %p189 = scmp.ne.s32.totalorder %s181, %s183
    %p190 = scmp.eq.s32.totalorder %s21, 1
    %p191 = por %p189, %p190
    %p192 = scmp.ne.s32.totalorder %s183, %s184
    %p193 = scmp.eq.s32.totalorder %s21, 0
    %p194 = por %p192, %p193
    %p195 = scmp.ne.s32.totalorder %s183, %s184
    %p196 = scmp.eq.s32.totalorder %s22, 1
    %p197 = por %p195, %p196
    %p199 = scmp.ne.s32.totalorder %s184, %s198
    %p200 = scmp.eq.s32.totalorder %s22, 0
    %p201 = por %p199, %p200
    %s203 = sadd.s32 %s202, 1
    %p206 = scmp.eq.s32.totalorder %s16, 1
    %p207 = scmp.ne.s32.totalorder %s202, %s204
    %p208 = scmp.eq.s32.totalorder %s16, 0
    %p209 = por %p207, %p208
    %p210 = scmp.ne.s32.totalorder %s202, %s204
    %p211 = scmp.eq.s32.totalorder %s21, 1
    %p212 = por %p210, %p211
    %p213 = scmp.ne.s32.totalorder %s204, %s205
    %p214 = scmp.eq.s32.totalorder %s21, 0
    %p215 = por %p213, %p214
    %p216 = scmp.ne.s32.totalorder %s204, %s205
    %p217 = scmp.eq.s32.totalorder %s22, 1
    %p218 = por %p216, %p217
    %p220 = scmp.ne.s32.totalorder %s205, %s219
    %p221 = scmp.eq.s32.totalorder %s22, 0
    %p222 = por %p220, %p221
    %s223 = ssub.s32 %s16, %s23
    %p224 = scmp.eq.s32.totalorder %s223, 0
    %s226 = sadd.s32 %s225, 1
    %s227 = scalar_select %p224, %s225, %s226
    %p230 = pneg %p224
    %p231 = scmp.eq.s32.totalorder %s16, 1
    %p232 = por %p230, %p231
    %p233 = scmp.ne.s32.totalorder %s225, %s228
    %p234 = scmp.eq.s32.totalorder %s16, 0
    %p235 = por %p233, %p234
    %p236 = scmp.ne.s32.totalorder %s225, %s228
    %p237 = scmp.eq.s32.totalorder %s21, 1
    %p238 = por %p236, %p237
    %p239 = scmp.ne.s32.totalorder %s228, %s229
    %p240 = scmp.eq.s32.totalorder %s21, 0
    %p241 = por %p239, %p240
    %p242 = scmp.ne.s32.totalorder %s228, %s229
    %p243 = scmp.eq.s32.totalorder %s22, 1
    %p244 = por %p242, %p243
    %p246 = scmp.ne.s32.totalorder %s229, %s245
    %p247 = scmp.eq.s32.totalorder %s22, 0
    %p248 = por %p246, %p247
    %p249 = scmp.le.s32.totalorder 1, %s16
    %p250 = scmp.lt.s32.totalorder %s16, 3
    %p251 = pnand %p249, %p250
    %p252 = pneg %p251
    // Predicated region
    $region9: #{transform_forward.3} parent=5 // pred_check
      _
    $region10: #{transform_forward.3} parent=5 // pred_check_branch
      %254 = sbr.rel (%p251) target = $region12
    $region11: #{transform_forward.3} parent=5 // pred_region
      %s255 = ssub.s32 %s16, 1
      // Predicated region
      $region13: #{transform_forward.3} parent=11 // pred_check
        %p256 = pneg %p89
      $region14: #{transform_forward.3} parent=11 // pred_check_branch
        %258 = sbr.rel (%p256) target = $region16
      $region15: #{transform_forward.3} parent=11 // pred_region
        _
      $region16: #{transform_forward.3} parent=11 // pred_fallthru
        _
      // Predicated region
      $region17: #{transform_forward.3} parent=11 // pred_check
        %p259 = pneg %p110
      $region18: #{transform_forward.3} parent=11 // pred_check_branch
        %261 = sbr.rel (%p259) target = $region20
      $region19: #{transform_forward.3} parent=11 // pred_region
        _
      $region20: #{transform_forward.3} parent=11 // pred_fallthru
        _
      // Predicated region
      $region21: #{transform_forward.3} parent=11 // pred_check
        %p262 = pneg %p131
      $region22: #{transform_forward.3} parent=11 // pred_check_branch
        %264 = sbr.rel (%p262) target = $region24
      $region23: #{transform_forward.3} parent=11 // pred_region
        _
      $region24: #{transform_forward.3} parent=11 // pred_fallthru
        _
      // Predicated region
      $region25: #{transform_forward.3} parent=11 // pred_check
        %p265 = pneg %p152
      $region26: #{transform_forward.3} parent=11 // pred_check_branch
        %267 = sbr.rel (%p265) target = $region28
      $region27: #{transform_forward.3} parent=11 // pred_region
        _
      $region28: #{transform_forward.3} parent=11 // pred_fallthru
        _
      // Predicated region
      $region29: #{transform_forward.3} parent=11 // pred_check
        %p268 = pneg %p173
      $region30: #{transform_forward.3} parent=11 // pred_check_branch
        %270 = sbr.rel (%p268) target = $region32
      $region31: #{transform_forward.3} parent=11 // pred_region
        _
      $region32: #{transform_forward.3} parent=11 // pred_fallthru
        _
      // Predicated region
      $region33: #{transform_forward.3} parent=11 // pred_check
        %p271 = pneg %p194
      $region34: #{transform_forward.3} parent=11 // pred_check_branch
        %273 = sbr.rel (%p271) target = $region36
      $region35: #{transform_forward.3} parent=11 // pred_region
        _
      $region36: #{transform_forward.3} parent=11 // pred_fallthru
        _
      // Predicated region
      $region37: #{transform_forward.3} parent=11 // pred_check
        %p274 = pneg %p215
      $region38: #{transform_forward.3} parent=11 // pred_check_branch
        %276 = sbr.rel (%p274) target = $region40
      $region39: #{transform_forward.3} parent=11 // pred_region
        _
      $region40: #{transform_forward.3} parent=11 // pred_fallthru
        _
    $region12: #{transform_forward.3} parent=5 // pred_fallthru
      _
    %p277 = scmp.lt.s32.totalorder %s16, 2
    // Predicated region
    $region41: #{transform_forward.3} parent=5 // pred_check
      %p278 = pneg %p277
    $region42: #{transform_forward.3} parent=5 // pred_check_branch
      %280 = sbr.rel (%p278) target = $region44
    $region43: #{transform_forward.3} parent=5 // pred_region
      // Predicated region
      $region45: #{transform_forward.3} parent=43 // pred_check
        %p281 = pneg %p36
      $region46: #{transform_forward.3} parent=43 // pred_check_branch
        %283 = sbr.rel (%p281) target = $region48
      $region47: #{transform_forward.3} parent=43 // pred_region
        %p284 = scmp.lt.s32.totalorder %s16, 1
        %s285 = scalar_select %p284, %s16, 1
        %s286 = smul.addr %s285, 8
        %s287 = smul.addr %s286, 8
        %s288 = scalar_lea.vmem %s0, %s287
      $region48: #{transform_forward.3} parent=43 // pred_fallthru
        _
      // Predicated region
      $region49: #{transform_forward.3} parent=43 // pred_check
        %p289 = pneg %p62
      $region50: #{transform_forward.3} parent=43 // pred_check_branch
        %291 = sbr.rel (%p289) target = $region52
      $region51: #{transform_forward.3} parent=43 // pred_region
        %p292 = scmp.lt.s32.totalorder %s16, 1
        %s293 = scalar_select %p292, %s16, 1
        %s294 = smul.addr %s293, 32
        %s295 = smul.addr %s294, 8
        %s296 = scalar_lea.vmem %s1, %s295
      $region52: #{transform_forward.3} parent=43 // pred_fallthru
        _
    $region44: #{transform_forward.3} parent=5 // pred_fallthru
      _
    %p297 = scmp.le.s32.totalorder 1, %s16
    %p298 = scmp.lt.s32.totalorder %s16, 3
    %p299 = pnand %p297, %p298
    %p300 = pneg %p299
    // Predicated region
    $region53: #{transform_forward.3} parent=5 // pred_check
      _
    $region54: #{transform_forward.3} parent=5 // pred_check_branch
      %302 = sbr.rel (%p299) target = $region56
    $region55: #{transform_forward.3} parent=5 // pred_region
      %s303 = ssub.s32 %s16, 1
      %p304 = scmp.lt.s32.totalorder %s21, 1
      %s305 = scalar_select %p304, %s21, 1
      %s306 = smul.addr %s305, 8
      %s307 = smul.addr %s306, 8
      %s308 = scalar_lea.vmem %s0, %s307
      %p309 = pneg %p42
      %p310 = pneg %p39
      %p311 = scmp.lt.s32.totalorder %s21, 1
      %s312 = scalar_select %p311, %s21, 1
      %s313 = smul.addr %s312, 32
      %s314 = smul.addr %s313, 8
      %s315 = scalar_lea.vmem %s1, %s314
      %p316 = pneg %p68
      %p317 = pneg %p65
      %p318 = pneg %p89
      %p319 = pneg %p86
      %p320 = pneg %p110
      %p321 = pneg %p107
      %p322 = pneg %p131
      %p323 = pneg %p128
      %p324 = pneg %p152
      %p325 = pneg %p149
      %p326 = pneg %p173
      %p327 = pneg %p170
      %p328 = pneg %p194
      %p329 = pneg %p191
      %p330 = pneg %p215
      %p331 = pneg %p212
      %p332 = pneg %p241
      %p333 = pneg %p238
      %p334 = scmp.lt.s32.totalorder %s21, 1
      %s335 = scalar_select %p334, %s21, 1
      %s336 = smul.addr %s335, 32
      %s337 = smul.addr %s336, 8
      %s338 = scalar_lea.vmem %s9, %s337
      %p339 = scmp.lt.s32.totalorder %s21, 1
      %s340 = scalar_select %p339, %s21, 1
      %s341 = smul.addr %s340, 8
      %s342 = smul.addr %s341, 8
      %s343 = scalar_lea.vmem %s0, %s342
      %p344 = scmp.lt.s32.totalorder %s21, 1
      %s345 = scalar_select %p344, %s21, 1
      %s346 = smul.addr %s345, 32
      %s347 = smul.addr %s346, 8
      %s348 = scalar_lea.vmem %s1, %s347
      %p349 = scmp.lt.s32.totalorder %s21, 1
      %s350 = scalar_select %p349, %s21, 1
      %s351 = smul.addr %s350, 32
      %s352 = smul.addr %s351, 8
      %s353 = scalar_lea.vmem %s9, %s352
      %v354 = vld [vmem:[%s343] sm:$0xff]
      %v355 = vld [vmem:[%s343 + $0x8] sm:$0xff]
      %v356 = vld [vmem:[%s343 + $0x10] sm:$0xff]
      %v357 = vld [vmem:[%s343 + $0x18] sm:$0xff]
      %v358 = vld [vmem:[%s343 + $0x20] sm:$0xff]
      %v359 = vld [vmem:[%s343 + $0x28] sm:$0xff]
      %v360 = vld [vmem:[%s343 + $0x30] sm:$0xff]
      %v361 = vld [vmem:[%s343 + $0x38] sm:$0xff]
      %v362 = vadd.f32 %v354, %v355
      %363 = vadd.xlane.f32.xlu0 %v362
      %v364 = vpop.xlane.xlu0 %363
      %v365 = vadd.f32 %v356, %v357
      %366 = vadd.xlane.f32.xlu0 %v365
      %v367 = vpop.xlane.xlu0 %366
      %v368 = vadd.f32 %v358, %v359
      %369 = vadd.xlane.f32.xlu0 %v368
      %v370 = vpop.xlane.xlu0 %369
      %v371 = vadd.f32 %v360, %v361
      %372 = vadd.xlane.f32.xlu0 %v371
      %v373 = vpop.xlane.xlu0 %372
      %v374 = vrcp.pop 256.0
      %v375 = vmul.f32 %v364, %v374
      %v376 = vmul.f32 %v367, %v374
      %v377 = vmul.f32 %v370, %v374
      %v378 = vmul.f32 %v373, %v374
      %v379 = vsub.f32 %v354, %v375
      %v380 = vsub.f32 %v355, %v375
      %v381 = vsub.f32 %v356, %v376
      %v382 = vsub.f32 %v357, %v376
      %v383 = vsub.f32 %v358, %v377
      %v384 = vsub.f32 %v359, %v377
      %v385 = vsub.f32 %v360, %v378
      %v386 = vsub.f32 %v361, %v378
      %v387 = vmul.f32 %v379, %v379
      %v388 = vmul.f32 %v380, %v380
      %v389 = vmul.f32 %v381, %v381
      %v390 = vmul.f32 %v382, %v382
      %v391 = vmul.f32 %v383, %v383
      %v392 = vmul.f32 %v384, %v384
      %v393 = vmul.f32 %v385, %v385
      %v394 = vmul.f32 %v386, %v386
      %v395 = vadd.f32 %v387, %v388
      %396 = vadd.xlane.f32.xlu0 %v395
      %v397 = vpop.xlane.xlu0 %396
      %v398 = vadd.f32 %v389, %v390
      %399 = vadd.xlane.f32.xlu0 %v398
      %v400 = vpop.xlane.xlu0 %399
      %v401 = vadd.f32 %v391, %v392
      %402 = vadd.xlane.f32.xlu0 %v401
      %v403 = vpop.xlane.xlu0 %402
      %v404 = vadd.f32 %v393, %v394
      %405 = vadd.xlane.f32.xlu0 %v404
      %v406 = vpop.xlane.xlu0 %405
      %v407 = vmul.f32 %v397, 0.003921569
      %v408 = vmul.f32 %v400, 0.003921569
      %v409 = vmul.f32 %v403, 0.003921569
      %v410 = vmul.f32 %v406, 0.003921569
      %v411 = vadd.f32 %v407, 1e-05
      %v412 = vadd.f32 %v408, 1e-05
      %v413 = vadd.f32 %v409, 1e-05
      %v414 = vadd.f32 %v410, 1e-05
      %v415 = vrsqrt.pop %v411
      %v416 = vrsqrt.pop %v412
      %v417 = vrsqrt.pop %v413
      %v418 = vrsqrt.pop %v414
      %v419 = vmul.f32 %v379, %v415
      %v420 = vmul.f32 %v380, %v415
      %v421 = vmul.f32 %v381, %v416
      %v422 = vmul.f32 %v382, %v416
      %v423 = vmul.f32 %v383, %v417
      %v424 = vmul.f32 %v384, %v417
      %v425 = vmul.f32 %v385, %v418
      %v426 = vmul.f32 %v386, %v418
      %v427 = vld [vmem:[%s2] sm:$0xff]
      %v428 = vld [vmem:[%s2 + $0x8] sm:$0xff]
      %v429 = vld [vmem:[%s2 + $0x10] sm:$0xff]
      %v430 = vld [vmem:[%s2 + $0x18] sm:$0xff]
      %432 = vset.pattern.permute.xlu0 0
      %433 = vperm.xlu0 %432, %v427
      %v434 = vpop.permute.xlu0 %433
      %437 = vset.pattern.permute.xlu0 0
      %438 = vperm.xlu0 %437, %v428
      %v439 = vpop.permute.xlu0 %438
      %442 = vset.pattern.permute.xlu0 0
      %443 = vperm.xlu0 %442, %v429
      %v444 = vpop.permute.xlu0 %443
      %447 = vset.pattern.permute.xlu0 0
      %448 = vperm.xlu0 %447, %v430
      %v449 = vpop.permute.xlu0 %448
      %v451 = vmul.f32 %v419, %v434
      %v452 = vmul.f32 %v420, %v434
      %v453 = vmul.f32 %v421, %v439
      %v454 = vmul.f32 %v422, %v439
      %v455 = vmul.f32 %v423, %v444
      %v456 = vmul.f32 %v424, %v444
      %v457 = vmul.f32 %v425, %v449
      %v458 = vmul.f32 %v426, %v449
      %v459 = vadd.f32 %v451, %v453
      %v460 = vadd.f32 %v459, %v455
      %v461 = vadd.f32 %v460, %v457
      %v462 = vrot.slane %v461, 4
      %v463 = vadd.f32 %v461, %v462
      %v464 = vrot.slane %v463, 2
      %v465 = vadd.f32 %v463, %v464
      %v466 = vrot.slane %v465, 1
      %v467 = vadd.f32 %v465, %v466
      %v468 = vadd.f32 %v452, %v454
      %v469 = vadd.f32 %v468, %v456
      %v470 = vadd.f32 %v469, %v458
      %v471 = vrot.slane %v470, 4
      %v472 = vadd.f32 %v470, %v471
      %v473 = vrot.slane %v472, 2
      %v474 = vadd.f32 %v472, %v473
      %v475 = vrot.slane %v474, 1
      %v476 = vadd.f32 %v474, %v475
      %s477 = sld [smem:[#allocation2]]
      %v478 = vstv %s477
      %v479 = vadd.f32 %v467, %v478
      %v480 = vadd.f32 %v476, %v478
      %v481 = vmax.f32 %v479, %v480
      %482 = vmax.xlane.f32.xlu0 %v481
      %v483 = vpop.xlane.xlu0 %482
      %v484 = vsub.f32 %v479, %v483
      %v485 = vsub.f32 %v480, %v483
      %v486 = vmul.f32 %v484, 1.442695
      %v487 = vpow.pop %v486
      %v488 = vmul.f32 %v485, 1.442695
      %v489 = vpow.pop %v488
      %v490 = vadd.f32 %v487, %v489
      %491 = vadd.xlane.f32.xlu0 %v490
      %v492 = vpop.xlane.xlu0 %491
      %v493 = vrcp.pop %v492
      %v494 = vmul.f32 %v487, %v493
      %v495 = vmul.f32 %v489, %v493
      %v496 = vmul.f32 %v354, %v494
      %v497 = vmul.f32 %v355, %v495
      %v498 = vmul.f32 %v356, %v494
      %v499 = vmul.f32 %v357, %v495
      %v500 = vmul.f32 %v358, %v494
      %v501 = vmul.f32 %v359, %v495
      %v502 = vmul.f32 %v360, %v494
      %v503 = vmul.f32 %v361, %v495
      %v504 = vadd.f32 %v496, %v497
      %505 = vadd.xlane.f32.xlu0 %v504
      %v506 = vpop.xlane.xlu0 %505
      %v507 = vadd.f32 %v498, %v499
      %508 = vadd.xlane.f32.xlu0 %v507
      %v509 = vpop.xlane.xlu0 %508
      %v510 = vadd.f32 %v500, %v501
      %511 = vadd.xlane.f32.xlu0 %v510
      %v512 = vpop.xlane.xlu0 %511
      %v513 = vadd.f32 %v502, %v503
      %514 = vadd.xlane.f32.xlu0 %v513
      %v515 = vpop.xlane.xlu0 %514
      %v516 = vld [vmem:[%s6] sm:$0xff]
      %v517 = vld [vmem:[%s6 + $0x8] sm:$0xff]
      %v518 = vld [vmem:[%s6 + $0x10] sm:$0xff]
      %v519 = vld [vmem:[%s6 + $0x18] sm:$0xff]
      %v520 = vld [vmem:[%s6 + $0x20] sm:$0xff]
      %v521 = vld [vmem:[%s6 + $0x28] sm:$0xff]
      %v522 = vld [vmem:[%s6 + $0x30] sm:$0xff]
      %v523 = vld [vmem:[%s6 + $0x38] sm:$0xff]
      %v524 = vld [vmem:[%s6 + $0x40] sm:$0xff]
      %v525 = vld [vmem:[%s6 + $0x48] sm:$0xff]
      %v526 = vld [vmem:[%s6 + $0x50] sm:$0xff]
      %v527 = vld [vmem:[%s6 + $0x58] sm:$0xff]
      %v528 = vld [vmem:[%s6 + $0x60] sm:$0xff]
      %v529 = vld [vmem:[%s6 + $0x68] sm:$0xff]
      %v530 = vld [vmem:[%s6 + $0x70] sm:$0xff]
      %v531 = vld [vmem:[%s6 + $0x78] sm:$0xff]
      %v532 = vld [vmem:[%s6 + $0x80] sm:$0xff]
      %v533 = vld [vmem:[%s6 + $0x88] sm:$0xff]
      %v534 = vld [vmem:[%s6 + $0x90] sm:$0xff]
      %v535 = vld [vmem:[%s6 + $0x98] sm:$0xff]
      %v536 = vld [vmem:[%s6 + $0xa0] sm:$0xff]
      %v537 = vld [vmem:[%s6 + $0xa8] sm:$0xff]
      %v538 = vld [vmem:[%s6 + $0xb0] sm:$0xff]
      %v539 = vld [vmem:[%s6 + $0xb8] sm:$0xff]
      %v540 = vld [vmem:[%s6 + $0xc0] sm:$0xff]
      %v541 = vld [vmem:[%s6 + $0xc8] sm:$0xff]
      %v542 = vld [vmem:[%s6 + $0xd0] sm:$0xff]
      %v543 = vld [vmem:[%s6 + $0xd8] sm:$0xff]
      %v544 = vld [vmem:[%s6 + $0xe0] sm:$0xff]
      %v545 = vld [vmem:[%s6 + $0xe8] sm:$0xff]
      %v546 = vld [vmem:[%s6 + $0xf0] sm:$0xff]
      %v547 = vld [vmem:[%s6 + $0xf8] sm:$0xff]
      %vm548 = vcmask 261120
      %v550 = vsel %vm548, %v516, 0
      %v553 = vsel %vm548, %v517, 0
      %v556 = vsel %vm548, %v518, 0
      %v559 = vsel %vm548, %v519, 0
      %v562 = vsel %vm548, %v520, 0
      %v565 = vsel %vm548, %v521, 0
      %v568 = vsel %vm548, %v522, 0
      %v571 = vsel %vm548, %v523, 0
      %v574 = vsel %vm548, %v524, 0
      %v577 = vsel %vm548, %v525, 0
      %v580 = vsel %vm548, %v526, 0
      %v583 = vsel %vm548, %v527, 0
      %v586 = vsel %vm548, %v528, 0
      %v589 = vsel %vm548, %v529, 0
      %v592 = vsel %vm548, %v530, 0
      %v595 = vsel %vm548, %v531, 0
      %v598 = vsel %vm548, %v532, 0
      %v601 = vsel %vm548, %v533, 0
      %v604 = vsel %vm548, %v534, 0
      %v607 = vsel %vm548, %v535, 0
      %v610 = vsel %vm548, %v536, 0
      %v613 = vsel %vm548, %v537, 0
      %v616 = vsel %vm548, %v538, 0
      %v619 = vsel %vm548, %v539, 0
      %v622 = vsel %vm548, %v540, 0
      %v625 = vsel %vm548, %v541, 0
      %v628 = vsel %vm548, %v542, 0
      %v631 = vsel %vm548, %v543, 0
      %v634 = vsel %vm548, %v544, 0
      %v637 = vsel %vm548, %v545, 0
      %v640 = vsel %vm548, %v546, 0
      %v643 = vsel %vm548, %v547, 0
      %645 = vmatprep.subr.mxu0 0.0
      %646 = vmatpush1.msra.mxu0 0.0
      %647 = vmatprep.subr.mxu0 0.0
      %648 = vmatpush1.msra.mxu0 0.0
      %649 = vmatprep.subr.mxu0 0.0
      %650 = vmatpush1.msra.mxu0 0.0
      %651 = vmatprep.subr.mxu0 0.0
      %652 = vmatpush1.msra.mxu0 0.0
      %653 = vmatprep.subr.mxu0 0.0
      %654 = vmatpush1.msra.mxu0 0.0
      %655 = vmatprep.subr.mxu0 0.0
      %656 = vmatpush1.msra.mxu0 0.0
      %657 = vmatprep.subr.mxu0 0.0
      %658 = vmatpush1.msra.mxu0 0.0
      %659 = vmatprep.subr.mxu0 0.0
      %660 = vmatpush1.msra.mxu0 0.0
      %661 = vmatprep.subr.mxu0 0.0
      %662 = vmatpush1.msra.mxu0 0.0
      %663 = vmatprep.subr.mxu0 0.0
      %664 = vmatpush1.msra.mxu0 0.0
      %665 = vmatprep.subr.mxu0 0.0
      %666 = vmatpush1.msra.mxu0 0.0
      %667 = vmatprep.subr.mxu0 0.0
      %668 = vmatpush1.msra.mxu0 0.0
      %669 = vmatprep.subr.mxu0 0.0
      %670 = vmatpush1.msra.mxu0 %v515
      %671 = vmatprep.subr.mxu0 0.0
      %672 = vmatpush1.msra.mxu0 %v512
      %673 = vmatprep.subr.mxu0 0.0
      %674 = vmatpush1.msra.mxu0 %v509
      %675 = vmatprep.subr.mxu0 0.0
      %676 = vmatpush1.msra.mxu0 %v506
      %677 = vmatprep.subr.mxu0 0.0
      %678 = vmatpush2.msra.mxu0 0.0
      %679 = vmatprep.subr.mxu0 0.0
      %680 = vmatpush2.msra.mxu0 0.0
      %681 = vmatprep.subr.mxu0 0.0
      %682 = vmatpush2.msra.mxu0 0.0
      %683 = vmatprep.subr.mxu0 0.0
      %684 = vmatpush2.msra.mxu0 0.0
      %685 = vmatprep.subr.mxu0 0.0
      %686 = vmatpush2.msra.mxu0 0.0
      %687 = vmatprep.subr.mxu0 0.0
      %688 = vmatpush2.msra.mxu0 0.0
      %689 = vmatprep.subr.mxu0 0.0
      %690 = vmatpush2.msra.mxu0 0.0
      %691 = vmatprep.subr.mxu0 0.0
      %692 = vmatpush2.msra.mxu0 0.0
      %693 = vmatprep.subr.mxu0 0.0
      %694 = vmatpush2.msra.mxu0 0.0
      %695 = vmatprep.subr.mxu0 0.0
      %696 = vmatpush2.msra.mxu0 0.0
      %697 = vmatprep.subr.mxu0 0.0
      %698 = vmatpush2.msra.mxu0 0.0
      %699 = vmatprep.subr.mxu0 0.0
      %700 = vmatpush2.msra.mxu0 0.0
      %701 = vmatprep.subr.mxu0 0.0
      %702 = vmatpush2.msra.mxu0 0.0
      %703 = vmatprep.subr.mxu0 0.0
      %704 = vmatpush2.msra.mxu0 0.0
      %705 = vmatprep.subr.mxu0 0.0
      %706 = vmatpush2.msra.mxu0 0.0
      %707 = vmatprep.subr.mxu0 0.0
      %708 = vmatpush2.msra.mxu0 0.0
      %709 = vmatprep.mubr.f32.mxu0 0.0
      %710 = vmatmul.mubr.f32.gmra.mxu0 %v550
      %v711 = vpop.f32.mrf.mxu0
      %v712 = vadd.f32 0.0, %v711
      %v713 = vpop.f32.mrf.mxu0
      %714 = vmatprep.mubr.f32.mxu0 0.0
      %715 = vmatmul.mubr.f32.gmra.mxu0 %v553
      %v716 = vpop.f32.mrf.mxu0
      %v717 = vadd.f32 0.0, %v716
      %v718 = vpop.f32.mrf.mxu0
      %719 = vmatprep.mubr.f32.mxu0 0.0
      %720 = vmatmul.mubr.f32.gmra.mxu0 %v556
      %v721 = vpop.f32.mrf.mxu0
      %v722 = vadd.f32 0.0, %v721
      %v723 = vpop.f32.mrf.mxu0
      %724 = vmatprep.mubr.f32.mxu0 0.0
      %725 = vmatmul.mubr.f32.gmra.mxu0 %v559
      %v726 = vpop.f32.mrf.mxu0
      %v727 = vadd.f32 0.0, %v726
      %v728 = vpop.f32.mrf.mxu0
      %729 = vmatprep.mubr.f32.mxu0 0.0
      %730 = vmatmul.mubr.f32.gmra.mxu0 %v562
      %v731 = vpop.f32.mrf.mxu0
      %v732 = vadd.f32 0.0, %v731
      %v733 = vpop.f32.mrf.mxu0
      %734 = vmatprep.mubr.f32.mxu0 0.0
      %735 = vmatmul.mubr.f32.gmra.mxu0 %v565
      %v736 = vpop.f32.mrf.mxu0
      %v737 = vadd.f32 0.0, %v736
      %v738 = vpop.f32.mrf.mxu0
      %739 = vmatprep.mubr.f32.mxu0 0.0
      %740 = vmatmul.mubr.f32.gmra.mxu0 %v568
      %v741 = vpop.f32.mrf.mxu0
      %v742 = vadd.f32 0.0, %v741
      %v743 = vpop.f32.mrf.mxu0
      %744 = vmatprep.mubr.f32.mxu0 0.0
      %745 = vmatmul.mubr.f32.gmra.mxu0 %v571
      %v746 = vpop.f32.mrf.mxu0
      %v747 = vadd.f32 0.0, %v746
      %v748 = vpop.f32.mrf.mxu0
      %749 = vmatprep.mubr.f32.mxu0 0.0
      %750 = vmatmul.mubr.f32.gmra.mxu0 %v574
      %v751 = vpop.f32.mrf.mxu0
      %v752 = vadd.f32 0.0, %v751
      %v753 = vpop.f32.mrf.mxu0
      %754 = vmatprep.mubr.f32.mxu0 0.0
      %755 = vmatmul.mubr.f32.gmra.mxu0 %v577
      %v756 = vpop.f32.mrf.mxu0
      %v757 = vadd.f32 0.0, %v756
      %v758 = vpop.f32.mrf.mxu0
      %759 = vmatprep.mubr.f32.mxu0 0.0
      %760 = vmatmul.mubr.f32.gmra.mxu0 %v580
      %v761 = vpop.f32.mrf.mxu0
      %v762 = vadd.f32 0.0, %v761
      %v763 = vpop.f32.mrf.mxu0
      %764 = vmatprep.mubr.f32.mxu0 0.0
      %765 = vmatmul.mubr.f32.gmra.mxu0 %v583
      %v766 = vpop.f32.mrf.mxu0
      %v767 = vadd.f32 0.0, %v766
      %v768 = vpop.f32.mrf.mxu0
      %769 = vmatprep.mubr.f32.mxu0 0.0
      %770 = vmatmul.mubr.f32.gmra.mxu0 %v586
      %v771 = vpop.f32.mrf.mxu0
      %v772 = vadd.f32 0.0, %v771
      %v773 = vpop.f32.mrf.mxu0
      %774 = vmatprep.mubr.f32.mxu0 0.0
      %775 = vmatmul.mubr.f32.gmra.mxu0 %v589
      %v776 = vpop.f32.mrf.mxu0
      %v777 = vadd.f32 0.0, %v776
      %v778 = vpop.f32.mrf.mxu0
      %779 = vmatprep.mubr.f32.mxu0 0.0
      %780 = vmatmul.mubr.f32.gmra.mxu0 %v592
      %v781 = vpop.f32.mrf.mxu0
      %v782 = vadd.f32 0.0, %v781
      %v783 = vpop.f32.mrf.mxu0
      %784 = vmatprep.mubr.f32.mxu0 0.0
      %785 = vmatmul.mubr.f32.gmra.mxu0 %v595
      %v786 = vpop.f32.mrf.mxu0
      %v787 = vadd.f32 0.0, %v786
      %v788 = vpop.f32.mrf.mxu0
      %789 = vmatprep.mubr.f32.mxu0 0.0
      %790 = vmatmul.mubr.f32.gmra.mxu0 %v598
      %v791 = vpop.f32.mrf.mxu0
      %v792 = vadd.f32 0.0, %v791
      %v793 = vpop.f32.mrf.mxu0
      %794 = vmatprep.mubr.f32.mxu0 0.0
      %795 = vmatmul.mubr.f32.gmra.mxu0 %v601
      %v796 = vpop.f32.mrf.mxu0
      %v797 = vadd.f32 0.0, %v796
      %v798 = vpop.f32.mrf.mxu0
      %799 = vmatprep.mubr.f32.mxu0 0.0
      %800 = vmatmul.mubr.f32.gmra.mxu0 %v604
      %v801 = vpop.f32.mrf.mxu0
      %v802 = vadd.f32 0.0, %v801
      %v803 = vpop.f32.mrf.mxu0
      %804 = vmatprep.mubr.f32.mxu0 0.0
      %805 = vmatmul.mubr.f32.gmra.mxu0 %v607
      %v806 = vpop.f32.mrf.mxu0
      %v807 = vadd.f32 0.0, %v806
      %v808 = vpop.f32.mrf.mxu0
      %809 = vmatprep.mubr.f32.mxu0 0.0
      %810 = vmatmul.mubr.f32.gmra.mxu0 %v610
      %v811 = vpop.f32.mrf.mxu0
      %v812 = vadd.f32 0.0, %v811
      %v813 = vpop.f32.mrf.mxu0
      %814 = vmatprep.mubr.f32.mxu0 0.0
      %815 = vmatmul.mubr.f32.gmra.mxu0 %v613
      %v816 = vpop.f32.mrf.mxu0
      %v817 = vadd.f32 0.0, %v816
      %v818 = vpop.f32.mrf.mxu0
      %819 = vmatprep.mubr.f32.mxu0 0.0
      %820 = vmatmul.mubr.f32.gmra.mxu0 %v616
      %v821 = vpop.f32.mrf.mxu0
      %v822 = vadd.f32 0.0, %v821
      %v823 = vpop.f32.mrf.mxu0
      %824 = vmatprep.mubr.f32.mxu0 0.0
      %825 = vmatmul.mubr.f32.gmra.mxu0 %v619
      %v826 = vpop.f32.mrf.mxu0
      %v827 = vadd.f32 0.0, %v826
      %v828 = vpop.f32.mrf.mxu0
      %829 = vmatprep.mubr.f32.mxu0 0.0
      %830 = vmatmul.mubr.f32.gmra.mxu0 %v622
      %v831 = vpop.f32.mrf.mxu0
      %v832 = vadd.f32 0.0, %v831
      %v833 = vpop.f32.mrf.mxu0
      %834 = vmatprep.mubr.f32.mxu0 0.0
      %835 = vmatmul.mubr.f32.gmra.mxu0 %v625
      %v836 = vpop.f32.mrf.mxu0
      %v837 = vadd.f32 0.0, %v836
      %v838 = vpop.f32.mrf.mxu0
      %839 = vmatprep.mubr.f32.mxu0 0.0
      %840 = vmatmul.mubr.f32.gmra.mxu0 %v628
      %v841 = vpop.f32.mrf.mxu0
      %v842 = vadd.f32 0.0, %v841
      %v843 = vpop.f32.mrf.mxu0
      %844 = vmatprep.mubr.f32.mxu0 0.0
      %845 = vmatmul.mubr.f32.gmra.mxu0 %v631
      %v846 = vpop.f32.mrf.mxu0
      %v847 = vadd.f32 0.0, %v846
      %v848 = vpop.f32.mrf.mxu0
      %849 = vmatprep.mubr.f32.mxu0 0.0
      %850 = vmatmul.mubr.f32.gmra.mxu0 %v634
      %v851 = vpop.f32.mrf.mxu0
      %v852 = vadd.f32 0.0, %v851
      %v853 = vpop.f32.mrf.mxu0
      %854 = vmatprep.mubr.f32.mxu0 0.0
      %855 = vmatmul.mubr.f32.gmra.mxu0 %v637
      %v856 = vpop.f32.mrf.mxu0
      %v857 = vadd.f32 0.0, %v856
      %v858 = vpop.f32.mrf.mxu0
      %859 = vmatprep.mubr.f32.mxu0 0.0
      %860 = vmatmul.mubr.f32.gmra.mxu0 %v640
      %v861 = vpop.f32.mrf.mxu0
      %v862 = vadd.f32 0.0, %v861
      %v863 = vpop.f32.mrf.mxu0
      %864 = vmatprep.mubr.f32.mxu0 0.0
      %865 = vmatmul.mubr.f32.gmra.mxu0 %v643
      %v866 = vpop.f32.mrf.mxu0
      %v867 = vadd.f32 0.0, %v866
      %v868 = vpop.f32.mrf.mxu0
      %869 = vdwg.mxu0
      %v870 = vld [vmem:[%s7] sm:$0xff]
      %v871 = vld [vmem:[%s7 + $0x8] sm:$0xff]
      %v872 = vld [vmem:[%s7 + $0x10] sm:$0xff]
      %v873 = vld [vmem:[%s7 + $0x18] sm:$0xff]
      %v874 = vld [vmem:[%s7 + $0x20] sm:$0xff]
      %v875 = vld [vmem:[%s7 + $0x28] sm:$0xff]
      %v876 = vld [vmem:[%s7 + $0x30] sm:$0xff]
      %v877 = vld [vmem:[%s7 + $0x38] sm:$0xff]
      %v878 = vld [vmem:[%s7 + $0x40] sm:$0xff]
      %v879 = vld [vmem:[%s7 + $0x48] sm:$0xff]
      %v880 = vld [vmem:[%s7 + $0x50] sm:$0xff]
      %v881 = vld [vmem:[%s7 + $0x58] sm:$0xff]
      %v882 = vld [vmem:[%s7 + $0x60] sm:$0xff]
      %v883 = vld [vmem:[%s7 + $0x68] sm:$0xff]
      %v884 = vld [vmem:[%s7 + $0x70] sm:$0xff]
      %v885 = vld [vmem:[%s7 + $0x78] sm:$0xff]
      %v886 = vld [vmem:[%s7 + $0x80] sm:$0xff]
      %v887 = vld [vmem:[%s7 + $0x88] sm:$0xff]
      %v888 = vld [vmem:[%s7 + $0x90] sm:$0xff]
      %v889 = vld [vmem:[%s7 + $0x98] sm:$0xff]
      %v890 = vld [vmem:[%s7 + $0xa0] sm:$0xff]
      %v891 = vld [vmem:[%s7 + $0xa8] sm:$0xff]
      %v892 = vld [vmem:[%s7 + $0xb0] sm:$0xff]
      %v893 = vld [vmem:[%s7 + $0xb8] sm:$0xff]
      %v894 = vld [vmem:[%s7 + $0xc0] sm:$0xff]
      %v895 = vld [vmem:[%s7 + $0xc8] sm:$0xff]
      %v896 = vld [vmem:[%s7 + $0xd0] sm:$0xff]
      %v897 = vld [vmem:[%s7 + $0xd8] sm:$0xff]
      %v898 = vld [vmem:[%s7 + $0xe0] sm:$0xff]
      %v899 = vld [vmem:[%s7 + $0xe8] sm:$0xff]
      %v900 = vld [vmem:[%s7 + $0xf0] sm:$0xff]
      %v901 = vld [vmem:[%s7 + $0xf8] sm:$0xff]
      %v903 = vsel %vm548, %v870, 0
      %v906 = vsel %vm548, %v871, 0
      %v909 = vsel %vm548, %v872, 0
      %v912 = vsel %vm548, %v873, 0
      %v915 = vsel %vm548, %v874, 0
      %v918 = vsel %vm548, %v875, 0
      %v921 = vsel %vm548, %v876, 0
      %v924 = vsel %vm548, %v877, 0
      %v927 = vsel %vm548, %v878, 0
      %v930 = vsel %vm548, %v879, 0
      %v933 = vsel %vm548, %v880, 0
      %v936 = vsel %vm548, %v881, 0
      %v939 = vsel %vm548, %v882, 0
      %v942 = vsel %vm548, %v883, 0
      %v945 = vsel %vm548, %v884, 0
      %v948 = vsel %vm548, %v885, 0
      %v951 = vsel %vm548, %v886, 0
      %v954 = vsel %vm548, %v887, 0
      %v957 = vsel %vm548, %v888, 0
      %v960 = vsel %vm548, %v889, 0
      %v963 = vsel %vm548, %v890, 0
      %v966 = vsel %vm548, %v891, 0
      %v969 = vsel %vm548, %v892, 0
      %v972 = vsel %vm548, %v893, 0
      %v975 = vsel %vm548, %v894, 0
      %v978 = vsel %vm548, %v895, 0
      %v981 = vsel %vm548, %v896, 0
      %v984 = vsel %vm548, %v897, 0
      %v987 = vsel %vm548, %v898, 0
      %v990 = vsel %vm548, %v899, 0
      %v993 = vsel %vm548, %v900, 0
      %v996 = vsel %vm548, %v901, 0
      %998 = vmatprep.subr.mxu0 0.0
      %999 = vmatpush1.msra.mxu0 0.0
      %1000 = vmatprep.subr.mxu0 0.0
      %1001 = vmatpush1.msra.mxu0 0.0
      %1002 = vmatprep.subr.mxu0 0.0
      %1003 = vmatpush1.msra.mxu0 0.0
      %1004 = vmatprep.subr.mxu0 0.0
      %1005 = vmatpush1.msra.mxu0 0.0
      %1006 = vmatprep.subr.mxu0 0.0
      %1007 = vmatpush1.msra.mxu0 0.0
      %1008 = vmatprep.subr.mxu0 0.0
      %1009 = vmatpush1.msra.mxu0 0.0
      %1010 = vmatprep.subr.mxu0 0.0
      %1011 = vmatpush1.msra.mxu0 0.0
      %1012 = vmatprep.subr.mxu0 0.0
      %1013 = vmatpush1.msra.mxu0 0.0
      %1014 = vmatprep.subr.mxu0 0.0
      %1015 = vmatpush1.msra.mxu0 0.0
      %1016 = vmatprep.subr.mxu0 0.0
      %1017 = vmatpush1.msra.mxu0 0.0
      %1018 = vmatprep.subr.mxu0 0.0
      %1019 = vmatpush1.msra.mxu0 0.0
      %1020 = vmatprep.subr.mxu0 0.0
      %1021 = vmatpush1.msra.mxu0 0.0
      %1022 = vmatprep.subr.mxu0 0.0
      %1023 = vmatpush1.msra.mxu0 %v515
      %1024 = vmatprep.subr.mxu0 0.0
      %1025 = vmatpush1.msra.mxu0 %v512
      %1026 = vmatprep.subr.mxu0 0.0
      %1027 = vmatpush1.msra.mxu0 %v509
      %1028 = vmatprep.subr.mxu0 0.0
      %1029 = vmatpush1.msra.mxu0 %v506
      %1030 = vmatprep.subr.mxu0 0.0
      %1031 = vmatpush2.msra.mxu0 0.0
      %1032 = vmatprep.subr.mxu0 0.0
      %1033 = vmatpush2.msra.mxu0 0.0
      %1034 = vmatprep.subr.mxu0 0.0
      %1035 = vmatpush2.msra.mxu0 0.0
      %1036 = vmatprep.subr.mxu0 0.0
      %1037 = vmatpush2.msra.mxu0 0.0
      %1038 = vmatprep.subr.mxu0 0.0
      %1039 = vmatpush2.msra.mxu0 0.0
      %1040 = vmatprep.subr.mxu0 0.0
      %1041 = vmatpush2.msra.mxu0 0.0
      %1042 = vmatprep.subr.mxu0 0.0
      %1043 = vmatpush2.msra.mxu0 0.0
      %1044 = vmatprep.subr.mxu0 0.0
      %1045 = vmatpush2.msra.mxu0 0.0
      %1046 = vmatprep.subr.mxu0 0.0
      %1047 = vmatpush2.msra.mxu0 0.0
      %1048 = vmatprep.subr.mxu0 0.0
      %1049 = vmatpush2.msra.mxu0 0.0
      %1050 = vmatprep.subr.mxu0 0.0
      %1051 = vmatpush2.msra.mxu0 0.0
      %1052 = vmatprep.subr.mxu0 0.0
      %1053 = vmatpush2.msra.mxu0 0.0
      %1054 = vmatprep.subr.mxu0 0.0
      %1055 = vmatpush2.msra.mxu0 0.0
      %1056 = vmatprep.subr.mxu0 0.0
      %1057 = vmatpush2.msra.mxu0 0.0
      %1058 = vmatprep.subr.mxu0 0.0
      %1059 = vmatpush2.msra.mxu0 0.0
      %1060 = vmatprep.subr.mxu0 0.0
      %1061 = vmatpush2.msra.mxu0 0.0
      %1062 = vmatprep.mubr.f32.mxu0 0.0
      %1063 = vmatmul.mubr.f32.gmra.mxu0 %v903
      %v1064 = vpop.f32.mrf.mxu0
      %v1065 = vadd.f32 0.0, %v1064
      %v1066 = vpop.f32.mrf.mxu0
      %1067 = vmatprep.mubr.f32.mxu0 0.0
      %1068 = vmatmul.mubr.f32.gmra.mxu0 %v906
      %v1069 = vpop.f32.mrf.mxu0
      %v1070 = vadd.f32 0.0, %v1069
      %v1071 = vpop.f32.mrf.mxu0
      %1072 = vmatprep.mubr.f32.mxu0 0.0
      %1073 = vmatmul.mubr.f32.gmra.mxu0 %v909
      %v1074 = vpop.f32.mrf.mxu0
      %v1075 = vadd.f32 0.0, %v1074
      %v1076 = vpop.f32.mrf.mxu0
      %1077 = vmatprep.mubr.f32.mxu0 0.0
      %1078 = vmatmul.mubr.f32.gmra.mxu0 %v912
      %v1079 = vpop.f32.mrf.mxu0
      %v1080 = vadd.f32 0.0, %v1079
      %v1081 = vpop.f32.mrf.mxu0
      %1082 = vmatprep.mubr.f32.mxu0 0.0
      %1083 = vmatmul.mubr.f32.gmra.mxu0 %v915
      %v1084 = vpop.f32.mrf.mxu0
      %v1085 = vadd.f32 0.0, %v1084
      %v1086 = vpop.f32.mrf.mxu0
      %1087 = vmatprep.mubr.f32.mxu0 0.0
      %1088 = vmatmul.mubr.f32.gmra.mxu0 %v918
      %v1089 = vpop.f32.mrf.mxu0
      %v1090 = vadd.f32 0.0, %v1089
      %v1091 = vpop.f32.mrf.mxu0
      %1092 = vmatprep.mubr.f32.mxu0 0.0
      %1093 = vmatmul.mubr.f32.gmra.mxu0 %v921
      %v1094 = vpop.f32.mrf.mxu0
      %v1095 = vadd.f32 0.0, %v1094
      %v1096 = vpop.f32.mrf.mxu0
      %1097 = vmatprep.mubr.f32.mxu0 0.0
      %1098 = vmatmul.mubr.f32.gmra.mxu0 %v924
      %v1099 = vpop.f32.mrf.mxu0
      %v1100 = vadd.f32 0.0, %v1099
      %v1101 = vpop.f32.mrf.mxu0
      %1102 = vmatprep.mubr.f32.mxu0 0.0
      %1103 = vmatmul.mubr.f32.gmra.mxu0 %v927
      %v1104 = vpop.f32.mrf.mxu0
      %v1105 = vadd.f32 0.0, %v1104
      %v1106 = vpop.f32.mrf.mxu0
      %1107 = vmatprep.mubr.f32.mxu0 0.0
      %1108 = vmatmul.mubr.f32.gmra.mxu0 %v930
      %v1109 = vpop.f32.mrf.mxu0
      %v1110 = vadd.f32 0.0, %v1109
      %v1111 = vpop.f32.mrf.mxu0
      %1112 = vmatprep.mubr.f32.mxu0 0.0
      %1113 = vmatmul.mubr.f32.gmra.mxu0 %v933
      %v1114 = vpop.f32.mrf.mxu0
      %v1115 = vadd.f32 0.0, %v1114
      %v1116 = vpop.f32.mrf.mxu0
      %1117 = vmatprep.mubr.f32.mxu0 0.0
      %1118 = vmatmul.mubr.f32.gmra.mxu0 %v936
      %v1119 = vpop.f32.mrf.mxu0
      %v1120 = vadd.f32 0.0, %v1119
      %v1121 = vpop.f32.mrf.mxu0
      %1122 = vmatprep.mubr.f32.mxu0 0.0
      %1123 = vmatmul.mubr.f32.gmra.mxu0 %v939
      %v1124 = vpop.f32.mrf.mxu0
      %v1125 = vadd.f32 0.0, %v1124
      %v1126 = vpop.f32.mrf.mxu0
      %1127 = vmatprep.mubr.f32.mxu0 0.0
      %1128 = vmatmul.mubr.f32.gmra.mxu0 %v942
      %v1129 = vpop.f32.mrf.mxu0
      %v1130 = vadd.f32 0.0, %v1129
      %v1131 = vpop.f32.mrf.mxu0
      %1132 = vmatprep.mubr.f32.mxu0 0.0
      %1133 = vmatmul.mubr.f32.gmra.mxu0 %v945
      %v1134 = vpop.f32.mrf.mxu0
      %v1135 = vadd.f32 0.0, %v1134
      %v1136 = vpop.f32.mrf.mxu0
      %1137 = vmatprep.mubr.f32.mxu0 0.0
      %1138 = vmatmul.mubr.f32.gmra.mxu0 %v948
      %v1139 = vpop.f32.mrf.mxu0
      %v1140 = vadd.f32 0.0, %v1139
      %v1141 = vpop.f32.mrf.mxu0
      %1142 = vmatprep.mubr.f32.mxu0 0.0
      %1143 = vmatmul.mubr.f32.gmra.mxu0 %v951
      %v1144 = vpop.f32.mrf.mxu0
      %v1145 = vadd.f32 0.0, %v1144
      %v1146 = vpop.f32.mrf.mxu0
      %1147 = vmatprep.mubr.f32.mxu0 0.0
      %1148 = vmatmul.mubr.f32.gmra.mxu0 %v954
      %v1149 = vpop.f32.mrf.mxu0
      %v1150 = vadd.f32 0.0, %v1149
      %v1151 = vpop.f32.mrf.mxu0
      %1152 = vmatprep.mubr.f32.mxu0 0.0
      %1153 = vmatmul.mubr.f32.gmra.mxu0 %v957
      %v1154 = vpop.f32.mrf.mxu0
      %v1155 = vadd.f32 0.0, %v1154
      %v1156 = vpop.f32.mrf.mxu0
      %1157 = vmatprep.mubr.f32.mxu0 0.0
      %1158 = vmatmul.mubr.f32.gmra.mxu0 %v960
      %v1159 = vpop.f32.mrf.mxu0
      %v1160 = vadd.f32 0.0, %v1159
      %v1161 = vpop.f32.mrf.mxu0
      %1162 = vmatprep.mubr.f32.mxu0 0.0
      %1163 = vmatmul.mubr.f32.gmra.mxu0 %v963
      %v1164 = vpop.f32.mrf.mxu0
      %v1165 = vadd.f32 0.0, %v1164
      %v1166 = vpop.f32.mrf.mxu0
      %1167 = vmatprep.mubr.f32.mxu0 0.0
      %1168 = vmatmul.mubr.f32.gmra.mxu0 %v966
      %v1169 = vpop.f32.mrf.mxu0
      %v1170 = vadd.f32 0.0, %v1169
      %v1171 = vpop.f32.mrf.mxu0
      %1172 = vmatprep.mubr.f32.mxu0 0.0
      %1173 = vmatmul.mubr.f32.gmra.mxu0 %v969
      %v1174 = vpop.f32.mrf.mxu0
      %v1175 = vadd.f32 0.0, %v1174
      %v1176 = vpop.f32.mrf.mxu0
      %1177 = vmatprep.mubr.f32.mxu0 0.0
      %1178 = vmatmul.mubr.f32.gmra.mxu0 %v972
      %v1179 = vpop.f32.mrf.mxu0
      %v1180 = vadd.f32 0.0, %v1179
      %v1181 = vpop.f32.mrf.mxu0
      %1182 = vmatprep.mubr.f32.mxu0 0.0
      %1183 = vmatmul.mubr.f32.gmra.mxu0 %v975
      %v1184 = vpop.f32.mrf.mxu0
      %v1185 = vadd.f32 0.0, %v1184
      %v1186 = vpop.f32.mrf.mxu0
      %1187 = vmatprep.mubr.f32.mxu0 0.0
      %1188 = vmatmul.mubr.f32.gmra.mxu0 %v978
      %v1189 = vpop.f32.mrf.mxu0
      %v1190 = vadd.f32 0.0, %v1189
      %v1191 = vpop.f32.mrf.mxu0
      %1192 = vmatprep.mubr.f32.mxu0 0.0
      %1193 = vmatmul.mubr.f32.gmra.mxu0 %v981
      %v1194 = vpop.f32.mrf.mxu0
      %v1195 = vadd.f32 0.0, %v1194
      %v1196 = vpop.f32.mrf.mxu0
      %1197 = vmatprep.mubr.f32.mxu0 0.0
      %1198 = vmatmul.mubr.f32.gmra.mxu0 %v984
      %v1199 = vpop.f32.mrf.mxu0
      %v1200 = vadd.f32 0.0, %v1199
      %v1201 = vpop.f32.mrf.mxu0
      %1202 = vmatprep.mubr.f32.mxu0 0.0
      %1203 = vmatmul.mubr.f32.gmra.mxu0 %v987
      %v1204 = vpop.f32.mrf.mxu0
      %v1205 = vadd.f32 0.0, %v1204
      %v1206 = vpop.f32.mrf.mxu0
      %1207 = vmatprep.mubr.f32.mxu0 0.0
      %1208 = vmatmul.mubr.f32.gmra.mxu0 %v990
      %v1209 = vpop.f32.mrf.mxu0
      %v1210 = vadd.f32 0.0, %v1209
      %v1211 = vpop.f32.mrf.mxu0
      %1212 = vmatprep.mubr.f32.mxu0 0.0
      %1213 = vmatmul.mubr.f32.gmra.mxu0 %v993
      %v1214 = vpop.f32.mrf.mxu0
      %v1215 = vadd.f32 0.0, %v1214
      %v1216 = vpop.f32.mrf.mxu0
      %1217 = vmatprep.mubr.f32.mxu0 0.0
      %1218 = vmatmul.mubr.f32.gmra.mxu0 %v996
      %v1219 = vpop.f32.mrf.mxu0
      %v1220 = vadd.f32 0.0, %v1219
      %v1221 = vpop.f32.mrf.mxu0
      %1222 = vdwg.mxu0
      %v1223 = vld [vmem:[%s8] sm:$0xff]
      %v1224 = vld [vmem:[%s8 + $0x8] sm:$0xff]
      %v1225 = vld [vmem:[%s8 + $0x10] sm:$0xff]
      %v1226 = vld [vmem:[%s8 + $0x18] sm:$0xff]
      %v1227 = vld [vmem:[%s8 + $0x20] sm:$0xff]
      %v1228 = vld [vmem:[%s8 + $0x28] sm:$0xff]
      %v1229 = vld [vmem:[%s8 + $0x30] sm:$0xff]
      %v1230 = vld [vmem:[%s8 + $0x38] sm:$0xff]
      %v1231 = vld [vmem:[%s8 + $0x40] sm:$0xff]
      %v1232 = vld [vmem:[%s8 + $0x48] sm:$0xff]
      %v1233 = vld [vmem:[%s8 + $0x50] sm:$0xff]
      %v1234 = vld [vmem:[%s8 + $0x58] sm:$0xff]
      %v1235 = vld [vmem:[%s8 + $0x60] sm:$0xff]
      %v1236 = vld [vmem:[%s8 + $0x68] sm:$0xff]
      %v1237 = vld [vmem:[%s8 + $0x70] sm:$0xff]
      %v1238 = vld [vmem:[%s8 + $0x78] sm:$0xff]
      %v1239 = vld [vmem:[%s8 + $0x80] sm:$0xff]
      %v1240 = vld [vmem:[%s8 + $0x88] sm:$0xff]
      %v1241 = vld [vmem:[%s8 + $0x90] sm:$0xff]
      %v1242 = vld [vmem:[%s8 + $0x98] sm:$0xff]
      %v1243 = vld [vmem:[%s8 + $0xa0] sm:$0xff]
      %v1244 = vld [vmem:[%s8 + $0xa8] sm:$0xff]
      %v1245 = vld [vmem:[%s8 + $0xb0] sm:$0xff]
      %v1246 = vld [vmem:[%s8 + $0xb8] sm:$0xff]
      %v1247 = vld [vmem:[%s8 + $0xc0] sm:$0xff]
      %v1248 = vld [vmem:[%s8 + $0xc8] sm:$0xff]
      %v1249 = vld [vmem:[%s8 + $0xd0] sm:$0xff]
      %v1250 = vld [vmem:[%s8 + $0xd8] sm:$0xff]
      %v1251 = vld [vmem:[%s8 + $0xe0] sm:$0xff]
      %v1252 = vld [vmem:[%s8 + $0xe8] sm:$0xff]
      %v1253 = vld [vmem:[%s8 + $0xf0] sm:$0xff]
      %v1254 = vld [vmem:[%s8 + $0xf8] sm:$0xff]
      %v1255 = vld [vmem:[%s348] sm:$0xff]
      %v1256 = vld [vmem:[%s348 + $0x8] sm:$0xff]
      %v1257 = vld [vmem:[%s348 + $0x10] sm:$0xff]
      %v1258 = vld [vmem:[%s348 + $0x18] sm:$0xff]
      %v1259 = vld [vmem:[%s348 + $0x20] sm:$0xff]
      %v1260 = vld [vmem:[%s348 + $0x28] sm:$0xff]
      %v1261 = vld [vmem:[%s348 + $0x30] sm:$0xff]
      %v1262 = vld [vmem:[%s348 + $0x38] sm:$0xff]
      %v1263 = vld [vmem:[%s348 + $0x40] sm:$0xff]
      %v1264 = vld [vmem:[%s348 + $0x48] sm:$0xff]
      %v1265 = vld [vmem:[%s348 + $0x50] sm:$0xff]
      %v1266 = vld [vmem:[%s348 + $0x58] sm:$0xff]
      %v1267 = vld [vmem:[%s348 + $0x60] sm:$0xff]
      %v1268 = vld [vmem:[%s348 + $0x68] sm:$0xff]
      %v1269 = vld [vmem:[%s348 + $0x70] sm:$0xff]
      %v1270 = vld [vmem:[%s348 + $0x78] sm:$0xff]
      %v1271 = vld [vmem:[%s348 + $0x80] sm:$0xff]
      %v1272 = vld [vmem:[%s348 + $0x88] sm:$0xff]
      %v1273 = vld [vmem:[%s348 + $0x90] sm:$0xff]
      %v1274 = vld [vmem:[%s348 + $0x98] sm:$0xff]
      %v1275 = vld [vmem:[%s348 + $0xa0] sm:$0xff]
      %v1276 = vld [vmem:[%s348 + $0xa8] sm:$0xff]
      %v1277 = vld [vmem:[%s348 + $0xb0] sm:$0xff]
      %v1278 = vld [vmem:[%s348 + $0xb8] sm:$0xff]
      %v1279 = vld [vmem:[%s348 + $0xc0] sm:$0xff]
      %v1280 = vld [vmem:[%s348 + $0xc8] sm:$0xff]
      %v1281 = vld [vmem:[%s348 + $0xd0] sm:$0xff]
      %v1282 = vld [vmem:[%s348 + $0xd8] sm:$0xff]
      %v1283 = vld [vmem:[%s348 + $0xe0] sm:$0xff]
      %v1284 = vld [vmem:[%s348 + $0xe8] sm:$0xff]
      %v1285 = vld [vmem:[%s348 + $0xf0] sm:$0xff]
      %v1286 = vld [vmem:[%s348 + $0xf8] sm:$0xff]
      %1288 = vset.pattern.permute.xlu0 0
      %1289 = vperm.xlu0 %1288, %v712
      %v1290 = vpop.permute.xlu0 %1289
      %1293 = vset.pattern.permute.xlu0 0
      %1294 = vperm.xlu0 %1293, %v717
      %v1295 = vpop.permute.xlu0 %1294
      %1298 = vset.pattern.permute.xlu0 0
      %1299 = vperm.xlu0 %1298, %v722
      %v1300 = vpop.permute.xlu0 %1299
      %1303 = vset.pattern.permute.xlu0 0
      %1304 = vperm.xlu0 %1303, %v727
      %v1305 = vpop.permute.xlu0 %1304
      %1308 = vset.pattern.permute.xlu0 0
      %1309 = vperm.xlu0 %1308, %v732
      %v1310 = vpop.permute.xlu0 %1309
      %1313 = vset.pattern.permute.xlu0 0
      %1314 = vperm.xlu0 %1313, %v737
      %v1315 = vpop.permute.xlu0 %1314
      %1318 = vset.pattern.permute.xlu0 0
      %1319 = vperm.xlu0 %1318, %v742
      %v1320 = vpop.permute.xlu0 %1319
      %1323 = vset.pattern.permute.xlu0 0
      %1324 = vperm.xlu0 %1323, %v747
      %v1325 = vpop.permute.xlu0 %1324
      %1328 = vset.pattern.permute.xlu0 0
      %1329 = vperm.xlu0 %1328, %v752
      %v1330 = vpop.permute.xlu0 %1329
      %1333 = vset.pattern.permute.xlu0 0
      %1334 = vperm.xlu0 %1333, %v757
      %v1335 = vpop.permute.xlu0 %1334
      %1338 = vset.pattern.permute.xlu0 0
      %1339 = vperm.xlu0 %1338, %v762
      %v1340 = vpop.permute.xlu0 %1339
      %1343 = vset.pattern.permute.xlu0 0
      %1344 = vperm.xlu0 %1343, %v767
      %v1345 = vpop.permute.xlu0 %1344
      %1348 = vset.pattern.permute.xlu0 0
      %1349 = vperm.xlu0 %1348, %v772
      %v1350 = vpop.permute.xlu0 %1349
      %1353 = vset.pattern.permute.xlu0 0
      %1354 = vperm.xlu0 %1353, %v777
      %v1355 = vpop.permute.xlu0 %1354
      %1358 = vset.pattern.permute.xlu0 0
      %1359 = vperm.xlu0 %1358, %v782
      %v1360 = vpop.permute.xlu0 %1359
      %1363 = vset.pattern.permute.xlu0 0
      %1364 = vperm.xlu0 %1363, %v787
      %v1365 = vpop.permute.xlu0 %1364
      %1368 = vset.pattern.permute.xlu0 0
      %1369 = vperm.xlu0 %1368, %v792
      %v1370 = vpop.permute.xlu0 %1369
      %1373 = vset.pattern.permute.xlu0 0
      %1374 = vperm.xlu0 %1373, %v797
      %v1375 = vpop.permute.xlu0 %1374
      %1378 = vset.pattern.permute.xlu0 0
      %1379 = vperm.xlu0 %1378, %v802
      %v1380 = vpop.permute.xlu0 %1379
      %1383 = vset.pattern.permute.xlu0 0
      %1384 = vperm.xlu0 %1383, %v807
      %v1385 = vpop.permute.xlu0 %1384
      %1388 = vset.pattern.permute.xlu0 0
      %1389 = vperm.xlu0 %1388, %v812
      %v1390 = vpop.permute.xlu0 %1389
      %1393 = vset.pattern.permute.xlu0 0
      %1394 = vperm.xlu0 %1393, %v817
      %v1395 = vpop.permute.xlu0 %1394
      %1398 = vset.pattern.permute.xlu0 0
      %1399 = vperm.xlu0 %1398, %v822
      %v1400 = vpop.permute.xlu0 %1399
      %1403 = vset.pattern.permute.xlu0 0
      %1404 = vperm.xlu0 %1403, %v827
      %v1405 = vpop.permute.xlu0 %1404
      %1408 = vset.pattern.permute.xlu0 0
      %1409 = vperm.xlu0 %1408, %v832
      %v1410 = vpop.permute.xlu0 %1409
      %1413 = vset.pattern.permute.xlu0 0
      %1414 = vperm.xlu0 %1413, %v837
      %v1415 = vpop.permute.xlu0 %1414
      %1418 = vset.pattern.permute.xlu0 0
      %1419 = vperm.xlu0 %1418, %v842
      %v1420 = vpop.permute.xlu0 %1419
      %1423 = vset.pattern.permute.xlu0 0
      %1424 = vperm.xlu0 %1423, %v847
      %v1425 = vpop.permute.xlu0 %1424
      %1428 = vset.pattern.permute.xlu0 0
      %1429 = vperm.xlu0 %1428, %v852
      %v1430 = vpop.permute.xlu0 %1429
      %1433 = vset.pattern.permute.xlu0 0
      %1434 = vperm.xlu0 %1433, %v857
      %v1435 = vpop.permute.xlu0 %1434
      %1438 = vset.pattern.permute.xlu0 0
      %1439 = vperm.xlu0 %1438, %v862
      %v1440 = vpop.permute.xlu0 %1439
      %1443 = vset.pattern.permute.xlu0 0
      %1444 = vperm.xlu0 %1443, %v867
      %v1445 = vpop.permute.xlu0 %1444
      %v1447 = vmul.f32 %v1223, %v1290
      %v1448 = vmul.f32 %v1224, %v1295
      %v1449 = vmul.f32 %v1225, %v1300
      %v1450 = vmul.f32 %v1226, %v1305
      %v1451 = vmul.f32 %v1227, %v1310
      %v1452 = vmul.f32 %v1228, %v1315
      %v1453 = vmul.f32 %v1229, %v1320
      %v1454 = vmul.f32 %v1230, %v1325
      %v1455 = vmul.f32 %v1231, %v1330
      %v1456 = vmul.f32 %v1232, %v1335
      %v1457 = vmul.f32 %v1233, %v1340
      %v1458 = vmul.f32 %v1234, %v1345
      %v1459 = vmul.f32 %v1235, %v1350
      %v1460 = vmul.f32 %v1236, %v1355
      %v1461 = vmul.f32 %v1237, %v1360
      %v1462 = vmul.f32 %v1238, %v1365
      %v1463 = vmul.f32 %v1239, %v1370
      %v1464 = vmul.f32 %v1240, %v1375
      %v1465 = vmul.f32 %v1241, %v1380
      %v1466 = vmul.f32 %v1242, %v1385
      %v1467 = vmul.f32 %v1243, %v1390
      %v1468 = vmul.f32 %v1244, %v1395
      %v1469 = vmul.f32 %v1245, %v1400
      %v1470 = vmul.f32 %v1246, %v1405
      %v1471 = vmul.f32 %v1247, %v1410
      %v1472 = vmul.f32 %v1248, %v1415
      %v1473 = vmul.f32 %v1249, %v1420
      %v1474 = vmul.f32 %v1250, %v1425
      %v1475 = vmul.f32 %v1251, %v1430
      %v1476 = vmul.f32 %v1252, %v1435
      %v1477 = vmul.f32 %v1253, %v1440
      %v1478 = vmul.f32 %v1254, %v1445
      %v1479 = vadd.f32 %v1255, %v1447
      %v1480 = vadd.f32 %v1256, %v1448
      %v1481 = vadd.f32 %v1257, %v1449
      %v1482 = vadd.f32 %v1258, %v1450
      %v1483 = vadd.f32 %v1259, %v1451
      %v1484 = vadd.f32 %v1260, %v1452
      %v1485 = vadd.f32 %v1261, %v1453
      %v1486 = vadd.f32 %v1262, %v1454
      %v1487 = vadd.f32 %v1263, %v1455
      %v1488 = vadd.f32 %v1264, %v1456
      %v1489 = vadd.f32 %v1265, %v1457
      %v1490 = vadd.f32 %v1266, %v1458
      %v1491 = vadd.f32 %v1267, %v1459
      %v1492 = vadd.f32 %v1268, %v1460
      %v1493 = vadd.f32 %v1269, %v1461
      %v1494 = vadd.f32 %v1270, %v1462
      %v1495 = vadd.f32 %v1271, %v1463
      %v1496 = vadd.f32 %v1272, %v1464
      %v1497 = vadd.f32 %v1273, %v1465
      %v1498 = vadd.f32 %v1274, %v1466
      %v1499 = vadd.f32 %v1275, %v1467
      %v1500 = vadd.f32 %v1276, %v1468
      %v1501 = vadd.f32 %v1277, %v1469
      %v1502 = vadd.f32 %v1278, %v1470
      %v1503 = vadd.f32 %v1279, %v1471
      %v1504 = vadd.f32 %v1280, %v1472
      %v1505 = vadd.f32 %v1281, %v1473
      %v1506 = vadd.f32 %v1282, %v1474
      %v1507 = vadd.f32 %v1283, %v1475
      %v1508 = vadd.f32 %v1284, %v1476
      %v1509 = vadd.f32 %v1285, %v1477
      %v1510 = vadd.f32 %v1286, %v1478
      %v1511 = vsub.f32 1.0, %v1223
      %v1512 = vsub.f32 1.0, %v1224
      %v1513 = vsub.f32 1.0, %v1225
      %v1514 = vsub.f32 1.0, %v1226
      %v1515 = vsub.f32 1.0, %v1227
      %v1516 = vsub.f32 1.0, %v1228
      %v1517 = vsub.f32 1.0, %v1229
      %v1518 = vsub.f32 1.0, %v1230
      %v1519 = vsub.f32 1.0, %v1231
      %v1520 = vsub.f32 1.0, %v1232
      %v1521 = vsub.f32 1.0, %v1233
      %v1522 = vsub.f32 1.0, %v1234
      %v1523 = vsub.f32 1.0, %v1235
      %v1524 = vsub.f32 1.0, %v1236
      %v1525 = vsub.f32 1.0, %v1237
      %v1526 = vsub.f32 1.0, %v1238
      %v1527 = vsub.f32 1.0, %v1239
      %v1528 = vsub.f32 1.0, %v1240
      %v1529 = vsub.f32 1.0, %v1241
      %v1530 = vsub.f32 1.0, %v1242
      %v1531 = vsub.f32 1.0, %v1243
      %v1532 = vsub.f32 1.0, %v1244
      %v1533 = vsub.f32 1.0, %v1245
      %v1534 = vsub.f32 1.0, %v1246
      %v1535 = vsub.f32 1.0, %v1247
      %v1536 = vsub.f32 1.0, %v1248
      %v1537 = vsub.f32 1.0, %v1249
      %v1538 = vsub.f32 1.0, %v1250
      %v1539 = vsub.f32 1.0, %v1251
      %v1540 = vsub.f32 1.0, %v1252
      %v1541 = vsub.f32 1.0, %v1253
      %v1542 = vsub.f32 1.0, %v1254
      %1544 = vset.pattern.permute.xlu0 0
      %1545 = vperm.xlu0 %1544, %v1065
      %v1546 = vpop.permute.xlu0 %1545
      %1549 = vset.pattern.permute.xlu0 0
      %1550 = vperm.xlu0 %1549, %v1070
      %v1551 = vpop.permute.xlu0 %1550
      %1554 = vset.pattern.permute.xlu0 0
      %1555 = vperm.xlu0 %1554, %v1075
      %v1556 = vpop.permute.xlu0 %1555
      %1559 = vset.pattern.permute.xlu0 0
      %1560 = vperm.xlu0 %1559, %v1080
      %v1561 = vpop.permute.xlu0 %1560
      %1564 = vset.pattern.permute.xlu0 0
      %1565 = vperm.xlu0 %1564, %v1085
      %v1566 = vpop.permute.xlu0 %1565
      %1569 = vset.pattern.permute.xlu0 0
      %1570 = vperm.xlu0 %1569, %v1090
      %v1571 = vpop.permute.xlu0 %1570
      %1574 = vset.pattern.permute.xlu0 0
      %1575 = vperm.xlu0 %1574, %v1095
      %v1576 = vpop.permute.xlu0 %1575
      %1579 = vset.pattern.permute.xlu0 0
      %1580 = vperm.xlu0 %1579, %v1100
      %v1581 = vpop.permute.xlu0 %1580
      %1584 = vset.pattern.permute.xlu0 0
      %1585 = vperm.xlu0 %1584, %v1105
      %v1586 = vpop.permute.xlu0 %1585
      %1589 = vset.pattern.permute.xlu0 0
      %1590 = vperm.xlu0 %1589, %v1110
      %v1591 = vpop.permute.xlu0 %1590
      %1594 = vset.pattern.permute.xlu0 0
      %1595 = vperm.xlu0 %1594, %v1115
      %v1596 = vpop.permute.xlu0 %1595
      %1599 = vset.pattern.permute.xlu0 0
      %1600 = vperm.xlu0 %1599, %v1120
      %v1601 = vpop.permute.xlu0 %1600
      %1604 = vset.pattern.permute.xlu0 0
      %1605 = vperm.xlu0 %1604, %v1125
      %v1606 = vpop.permute.xlu0 %1605
      %1609 = vset.pattern.permute.xlu0 0
      %1610 = vperm.xlu0 %1609, %v1130
      %v1611 = vpop.permute.xlu0 %1610
      %1614 = vset.pattern.permute.xlu0 0
      %1615 = vperm.xlu0 %1614, %v1135
      %v1616 = vpop.permute.xlu0 %1615
      %1619 = vset.pattern.permute.xlu0 0
      %1620 = vperm.xlu0 %1619, %v1140
      %v1621 = vpop.permute.xlu0 %1620
      %1624 = vset.pattern.permute.xlu0 0
      %1625 = vperm.xlu0 %1624, %v1145
      %v1626 = vpop.permute.xlu0 %1625
      %1629 = vset.pattern.permute.xlu0 0
      %1630 = vperm.xlu0 %1629, %v1150
      %v1631 = vpop.permute.xlu0 %1630
      %1634 = vset.pattern.permute.xlu0 0
      %1635 = vperm.xlu0 %1634, %v1155
      %v1636 = vpop.permute.xlu0 %1635
      %1639 = vset.pattern.permute.xlu0 0
      %1640 = vperm.xlu0 %1639, %v1160
      %v1641 = vpop.permute.xlu0 %1640
      %1644 = vset.pattern.permute.xlu0 0
      %1645 = vperm.xlu0 %1644, %v1165
      %v1646 = vpop.permute.xlu0 %1645
      %1649 = vset.pattern.permute.xlu0 0
      %1650 = vperm.xlu0 %1649, %v1170
      %v1651 = vpop.permute.xlu0 %1650
      %1654 = vset.pattern.permute.xlu0 0
      %1655 = vperm.xlu0 %1654, %v1175
      %v1656 = vpop.permute.xlu0 %1655
      %1659 = vset.pattern.permute.xlu0 0
      %1660 = vperm.xlu0 %1659, %v1180
      %v1661 = vpop.permute.xlu0 %1660
      %1664 = vset.pattern.permute.xlu0 0
      %1665 = vperm.xlu0 %1664, %v1185
      %v1666 = vpop.permute.xlu0 %1665
      %1669 = vset.pattern.permute.xlu0 0
      %1670 = vperm.xlu0 %1669, %v1190
      %v1671 = vpop.permute.xlu0 %1670
      %1674 = vset.pattern.permute.xlu0 0
      %1675 = vperm.xlu0 %1674, %v1195
      %v1676 = vpop.permute.xlu0 %1675
      %1679 = vset.pattern.permute.xlu0 0
      %1680 = vperm.xlu0 %1679, %v1200
      %v1681 = vpop.permute.xlu0 %1680
      %1684 = vset.pattern.permute.xlu0 0
      %1685 = vperm.xlu0 %1684, %v1205
      %v1686 = vpop.permute.xlu0 %1685
      %1689 = vset.pattern.permute.xlu0 0
      %1690 = vperm.xlu0 %1689, %v1210
      %v1691 = vpop.permute.xlu0 %1690
      %1694 = vset.pattern.permute.xlu0 0
      %1695 = vperm.xlu0 %1694, %v1215
      %v1696 = vpop.permute.xlu0 %1695
      %1699 = vset.pattern.permute.xlu0 0
      %1700 = vperm.xlu0 %1699, %v1220
      %v1701 = vpop.permute.xlu0 %1700
      %v1703 = vmul.f32 %v1511, %v1546
      %v1704 = vmul.f32 %v1512, %v1551
      %v1705 = vmul.f32 %v1513, %v1556
      %v1706 = vmul.f32 %v1514, %v1561
      %v1707 = vmul.f32 %v1515, %v1566
      %v1708 = vmul.f32 %v1516, %v1571
      %v1709 = vmul.f32 %v1517, %v1576
      %v1710 = vmul.f32 %v1518, %v1581
      %v1711 = vmul.f32 %v1519, %v1586
      %v1712 = vmul.f32 %v1520, %v1591
      %v1713 = vmul.f32 %v1521, %v1596
      %v1714 = vmul.f32 %v1522, %v1601
      %v1715 = vmul.f32 %v1523, %v1606
      %v1716 = vmul.f32 %v1524, %v1611
      %v1717 = vmul.f32 %v1525, %v1616
      %v1718 = vmul.f32 %v1526, %v1621
      %v1719 = vmul.f32 %v1527, %v1626
      %v1720 = vmul.f32 %v1528, %v1631
      %v1721 = vmul.f32 %v1529, %v1636
      %v1722 = vmul.f32 %v1530, %v1641
      %v1723 = vmul.f32 %v1531, %v1646
      %v1724 = vmul.f32 %v1532, %v1651
      %v1725 = vmul.f32 %v1533, %v1656
      %v1726 = vmul.f32 %v1534, %v1661
      %v1727 = vmul.f32 %v1535, %v1666
      %v1728 = vmul.f32 %v1536, %v1671
      %v1729 = vmul.f32 %v1537, %v1676
      %v1730 = vmul.f32 %v1538, %v1681
      %v1731 = vmul.f32 %v1539, %v1686
      %v1732 = vmul.f32 %v1540, %v1691
      %v1733 = vmul.f32 %v1541, %v1696
      %v1734 = vmul.f32 %v1542, %v1701
      %v1735 = vadd.f32 %v1479, %v1703
      %v1736 = vadd.f32 %v1480, %v1704
      %v1737 = vadd.f32 %v1481, %v1705
      %v1738 = vadd.f32 %v1482, %v1706
      %v1739 = vadd.f32 %v1483, %v1707
      %v1740 = vadd.f32 %v1484, %v1708
      %v1741 = vadd.f32 %v1485, %v1709
      %v1742 = vadd.f32 %v1486, %v1710
      %v1743 = vadd.f32 %v1487, %v1711
      %v1744 = vadd.f32 %v1488, %v1712
      %v1745 = vadd.f32 %v1489, %v1713
      %v1746 = vadd.f32 %v1490, %v1714
      %v1747 = vadd.f32 %v1491, %v1715
      %v1748 = vadd.f32 %v1492, %v1716
      %v1749 = vadd.f32 %v1493, %v1717
      %v1750 = vadd.f32 %v1494, %v1718
      %v1751 = vadd.f32 %v1495, %v1719
      %v1752 = vadd.f32 %v1496, %v1720
      %v1753 = vadd.f32 %v1497, %v1721
      %v1754 = vadd.f32 %v1498, %v1722
      %v1755 = vadd.f32 %v1499, %v1723
      %v1756 = vadd.f32 %v1500, %v1724
      %v1757 = vadd.f32 %v1501, %v1725
      %v1758 = vadd.f32 %v1502, %v1726
      %v1759 = vadd.f32 %v1503, %v1727
      %v1760 = vadd.f32 %v1504, %v1728
      %v1761 = vadd.f32 %v1505, %v1729
      %v1762 = vadd.f32 %v1506, %v1730
      %v1763 = vadd.f32 %v1507, %v1731
      %v1764 = vadd.f32 %v1508, %v1732
      %v1765 = vadd.f32 %v1509, %v1733
      %v1766 = vadd.f32 %v1510, %v1734
      %v1767 = vld [vmem:[%s4] sm:$0xff]
      %v1768 = vld [vmem:[%s4 + $0x8] sm:$0xff]
      %v1769 = vld [vmem:[%s4 + $0x10] sm:$0xff]
      %v1770 = vld [vmem:[%s4 + $0x18] sm:$0xff]
      %v1772 = vsel %vm548, %v1735, 0
      %v1775 = vsel %vm548, %v1736, 0
      %v1778 = vsel %vm548, %v1737, 0
      %v1781 = vsel %vm548, %v1738, 0
      %v1784 = vsel %vm548, %v1739, 0
      %v1787 = vsel %vm548, %v1740, 0
      %v1790 = vsel %vm548, %v1741, 0
      %v1793 = vsel %vm548, %v1742, 0
      %v1796 = vsel %vm548, %v1743, 0
      %v1799 = vsel %vm548, %v1744, 0
      %v1802 = vsel %vm548, %v1745, 0
      %v1805 = vsel %vm548, %v1746, 0
      %v1808 = vsel %vm548, %v1747, 0
      %v1811 = vsel %vm548, %v1748, 0
      %v1814 = vsel %vm548, %v1749, 0
      %v1817 = vsel %vm548, %v1750, 0
      %v1820 = vsel %vm548, %v1751, 0
      %v1823 = vsel %vm548, %v1752, 0
      %v1826 = vsel %vm548, %v1753, 0
      %v1829 = vsel %vm548, %v1754, 0
      %v1832 = vsel %vm548, %v1755, 0
      %v1835 = vsel %vm548, %v1756, 0
      %v1838 = vsel %vm548, %v1757, 0
      %v1841 = vsel %vm548, %v1758, 0
      %v1844 = vsel %vm548, %v1759, 0
      %v1847 = vsel %vm548, %v1760, 0
      %v1850 = vsel %vm548, %v1761, 0
      %v1853 = vsel %vm548, %v1762, 0
      %v1856 = vsel %vm548, %v1763, 0
      %v1859 = vsel %vm548, %v1764, 0
      %v1862 = vsel %vm548, %v1765, 0
      %v1865 = vsel %vm548, %v1766, 0
      %1867 = vmatprep.subr.mxu0 0.0
      %1868 = vmatpush1.msra.mxu0 0.0
      %1869 = vmatprep.subr.mxu0 0.0
      %1870 = vmatpush1.msra.mxu0 0.0
      %1871 = vmatprep.subr.mxu0 0.0
      %1872 = vmatpush1.msra.mxu0 0.0
      %1873 = vmatprep.subr.mxu0 0.0
      %1874 = vmatpush1.msra.mxu0 0.0
      %1875 = vmatprep.subr.mxu0 0.0
      %1876 = vmatpush1.msra.mxu0 0.0
      %1877 = vmatprep.subr.mxu0 0.0
      %1878 = vmatpush1.msra.mxu0 0.0
      %1879 = vmatprep.subr.mxu0 0.0
      %1880 = vmatpush1.msra.mxu0 0.0
      %1881 = vmatprep.subr.mxu0 0.0
      %1882 = vmatpush1.msra.mxu0 0.0
      %1883 = vmatprep.subr.mxu0 0.0
      %1884 = vmatpush1.msra.mxu0 0.0
      %1885 = vmatprep.subr.mxu0 0.0
      %1886 = vmatpush1.msra.mxu0 0.0
      %1887 = vmatprep.subr.mxu0 0.0
      %1888 = vmatpush1.msra.mxu0 0.0
      %1889 = vmatprep.subr.mxu0 0.0
      %1890 = vmatpush1.msra.mxu0 0.0
      %1891 = vmatprep.subr.mxu0 0.0
      %1892 = vmatpush1.msra.mxu0 %v1770
      %1893 = vmatprep.subr.mxu0 0.0
      %1894 = vmatpush1.msra.mxu0 %v1769
      %1895 = vmatprep.subr.mxu0 0.0
      %1896 = vmatpush1.msra.mxu0 %v1768
      %1897 = vmatprep.subr.mxu0 0.0
      %1898 = vmatpush1.msra.mxu0 %v1767
      %1899 = vmatprep.subr.mxu0 0.0
      %1900 = vmatpush2.msra.mxu0 0.0
      %1901 = vmatprep.subr.mxu0 0.0
      %1902 = vmatpush2.msra.mxu0 0.0
      %1903 = vmatprep.subr.mxu0 0.0
      %1904 = vmatpush2.msra.mxu0 0.0
      %1905 = vmatprep.subr.mxu0 0.0
      %1906 = vmatpush2.msra.mxu0 0.0
      %1907 = vmatprep.subr.mxu0 0.0
      %1908 = vmatpush2.msra.mxu0 0.0
      %1909 = vmatprep.subr.mxu0 0.0
      %1910 = vmatpush2.msra.mxu0 0.0
      %1911 = vmatprep.subr.mxu0 0.0
      %1912 = vmatpush2.msra.mxu0 0.0
      %1913 = vmatprep.subr.mxu0 0.0
      %1914 = vmatpush2.msra.mxu0 0.0
      %1915 = vmatprep.subr.mxu0 0.0
      %1916 = vmatpush2.msra.mxu0 0.0
      %1917 = vmatprep.subr.mxu0 0.0
      %1918 = vmatpush2.msra.mxu0 0.0
      %1919 = vmatprep.subr.mxu0 0.0
      %1920 = vmatpush2.msra.mxu0 0.0
      %1921 = vmatprep.subr.mxu0 0.0
      %1922 = vmatpush2.msra.mxu0 0.0
      %1923 = vmatprep.subr.mxu0 0.0
      %1924 = vmatpush2.msra.mxu0 0.0
      %1925 = vmatprep.subr.mxu0 0.0
      %1926 = vmatpush2.msra.mxu0 0.0
      %1927 = vmatprep.subr.mxu0 0.0
      %1928 = vmatpush2.msra.mxu0 0.0
      %1929 = vmatprep.subr.mxu0 0.0
      %1930 = vmatpush2.msra.mxu0 0.0
      %1931 = vmatprep.mubr.f32.mxu0 0.0
      %1932 = vmatmul.mubr.f32.gmra.mxu0 %v1772
      %v1933 = vpop.f32.mrf.mxu0
      %v1934 = vadd.f32 0.0, %v1933
      %v1935 = vpop.f32.mrf.mxu0
      %1936 = vmatprep.mubr.f32.mxu0 0.0
      %1937 = vmatmul.mubr.f32.gmra.mxu0 %v1775
      %v1938 = vpop.f32.mrf.mxu0
      %v1939 = vadd.f32 0.0, %v1938
      %v1940 = vpop.f32.mrf.mxu0
      %1941 = vmatprep.mubr.f32.mxu0 0.0
      %1942 = vmatmul.mubr.f32.gmra.mxu0 %v1778
      %v1943 = vpop.f32.mrf.mxu0
      %v1944 = vadd.f32 0.0, %v1943
      %v1945 = vpop.f32.mrf.mxu0
      %1946 = vmatprep.mubr.f32.mxu0 0.0
      %1947 = vmatmul.mubr.f32.gmra.mxu0 %v1781
      %v1948 = vpop.f32.mrf.mxu0
      %v1949 = vadd.f32 0.0, %v1948
      %v1950 = vpop.f32.mrf.mxu0
      %1951 = vmatprep.mubr.f32.mxu0 0.0
      %1952 = vmatmul.mubr.f32.gmra.mxu0 %v1784
      %v1953 = vpop.f32.mrf.mxu0
      %v1954 = vadd.f32 0.0, %v1953
      %v1955 = vpop.f32.mrf.mxu0
      %1956 = vmatprep.mubr.f32.mxu0 0.0
      %1957 = vmatmul.mubr.f32.gmra.mxu0 %v1787
      %v1958 = vpop.f32.mrf.mxu0
      %v1959 = vadd.f32 0.0, %v1958
      %v1960 = vpop.f32.mrf.mxu0
      %1961 = vmatprep.mubr.f32.mxu0 0.0
      %1962 = vmatmul.mubr.f32.gmra.mxu0 %v1790
      %v1963 = vpop.f32.mrf.mxu0
      %v1964 = vadd.f32 0.0, %v1963
      %v1965 = vpop.f32.mrf.mxu0
      %1966 = vmatprep.mubr.f32.mxu0 0.0
      %1967 = vmatmul.mubr.f32.gmra.mxu0 %v1793
      %v1968 = vpop.f32.mrf.mxu0
      %v1969 = vadd.f32 0.0, %v1968
      %v1970 = vpop.f32.mrf.mxu0
      %1971 = vmatprep.mubr.f32.mxu0 0.0
      %1972 = vmatmul.mubr.f32.gmra.mxu0 %v1796
      %v1973 = vpop.f32.mrf.mxu0
      %v1974 = vadd.f32 0.0, %v1973
      %v1975 = vpop.f32.mrf.mxu0
      %1976 = vmatprep.mubr.f32.mxu0 0.0
      %1977 = vmatmul.mubr.f32.gmra.mxu0 %v1799
      %v1978 = vpop.f32.mrf.mxu0
      %v1979 = vadd.f32 0.0, %v1978
      %v1980 = vpop.f32.mrf.mxu0
      %1981 = vmatprep.mubr.f32.mxu0 0.0
      %1982 = vmatmul.mubr.f32.gmra.mxu0 %v1802
      %v1983 = vpop.f32.mrf.mxu0
      %v1984 = vadd.f32 0.0, %v1983
      %v1985 = vpop.f32.mrf.mxu0
      %1986 = vmatprep.mubr.f32.mxu0 0.0
      %1987 = vmatmul.mubr.f32.gmra.mxu0 %v1805
      %v1988 = vpop.f32.mrf.mxu0
      %v1989 = vadd.f32 0.0, %v1988
      %v1990 = vpop.f32.mrf.mxu0
      %1991 = vmatprep.mubr.f32.mxu0 0.0
      %1992 = vmatmul.mubr.f32.gmra.mxu0 %v1808
      %v1993 = vpop.f32.mrf.mxu0
      %v1994 = vadd.f32 0.0, %v1993
      %v1995 = vpop.f32.mrf.mxu0
      %1996 = vmatprep.mubr.f32.mxu0 0.0
      %1997 = vmatmul.mubr.f32.gmra.mxu0 %v1811
      %v1998 = vpop.f32.mrf.mxu0
      %v1999 = vadd.f32 0.0, %v1998
      %v2000 = vpop.f32.mrf.mxu0
      %2001 = vmatprep.mubr.f32.mxu0 0.0
      %2002 = vmatmul.mubr.f32.gmra.mxu0 %v1814
      %v2003 = vpop.f32.mrf.mxu0
      %v2004 = vadd.f32 0.0, %v2003
      %v2005 = vpop.f32.mrf.mxu0
      %2006 = vmatprep.mubr.f32.mxu0 0.0
      %2007 = vmatmul.mubr.f32.gmra.mxu0 %v1817
      %v2008 = vpop.f32.mrf.mxu0
      %v2009 = vadd.f32 0.0, %v2008
      %v2010 = vpop.f32.mrf.mxu0
      %2011 = vmatprep.mubr.f32.mxu0 0.0
      %2012 = vmatmul.mubr.f32.gmra.mxu0 %v1820
      %v2013 = vpop.f32.mrf.mxu0
      %v2014 = vadd.f32 0.0, %v2013
      %v2015 = vpop.f32.mrf.mxu0
      %2016 = vmatprep.mubr.f32.mxu0 0.0
      %2017 = vmatmul.mubr.f32.gmra.mxu0 %v1823
      %v2018 = vpop.f32.mrf.mxu0
      %v2019 = vadd.f32 0.0, %v2018
      %v2020 = vpop.f32.mrf.mxu0
      %2021 = vmatprep.mubr.f32.mxu0 0.0
      %2022 = vmatmul.mubr.f32.gmra.mxu0 %v1826
      %v2023 = vpop.f32.mrf.mxu0
      %v2024 = vadd.f32 0.0, %v2023
      %v2025 = vpop.f32.mrf.mxu0
      %2026 = vmatprep.mubr.f32.mxu0 0.0
      %2027 = vmatmul.mubr.f32.gmra.mxu0 %v1829
      %v2028 = vpop.f32.mrf.mxu0
      %v2029 = vadd.f32 0.0, %v2028
      %v2030 = vpop.f32.mrf.mxu0
      %2031 = vmatprep.mubr.f32.mxu0 0.0
      %2032 = vmatmul.mubr.f32.gmra.mxu0 %v1832
      %v2033 = vpop.f32.mrf.mxu0
      %v2034 = vadd.f32 0.0, %v2033
      %v2035 = vpop.f32.mrf.mxu0
      %2036 = vmatprep.mubr.f32.mxu0 0.0
      %2037 = vmatmul.mubr.f32.gmra.mxu0 %v1835
      %v2038 = vpop.f32.mrf.mxu0
      %v2039 = vadd.f32 0.0, %v2038
      %v2040 = vpop.f32.mrf.mxu0
      %2041 = vmatprep.mubr.f32.mxu0 0.0
      %2042 = vmatmul.mubr.f32.gmra.mxu0 %v1838
      %v2043 = vpop.f32.mrf.mxu0
      %v2044 = vadd.f32 0.0, %v2043
      %v2045 = vpop.f32.mrf.mxu0
      %2046 = vmatprep.mubr.f32.mxu0 0.0
      %2047 = vmatmul.mubr.f32.gmra.mxu0 %v1841
      %v2048 = vpop.f32.mrf.mxu0
      %v2049 = vadd.f32 0.0, %v2048
      %v2050 = vpop.f32.mrf.mxu0
      %2051 = vmatprep.mubr.f32.mxu0 0.0
      %2052 = vmatmul.mubr.f32.gmra.mxu0 %v1844
      %v2053 = vpop.f32.mrf.mxu0
      %v2054 = vadd.f32 0.0, %v2053
      %v2055 = vpop.f32.mrf.mxu0
      %2056 = vmatprep.mubr.f32.mxu0 0.0
      %2057 = vmatmul.mubr.f32.gmra.mxu0 %v1847
      %v2058 = vpop.f32.mrf.mxu0
      %v2059 = vadd.f32 0.0, %v2058
      %v2060 = vpop.f32.mrf.mxu0
      %2061 = vmatprep.mubr.f32.mxu0 0.0
      %2062 = vmatmul.mubr.f32.gmra.mxu0 %v1850
      %v2063 = vpop.f32.mrf.mxu0
      %v2064 = vadd.f32 0.0, %v2063
      %v2065 = vpop.f32.mrf.mxu0
      %2066 = vmatprep.mubr.f32.mxu0 0.0
      %2067 = vmatmul.mubr.f32.gmra.mxu0 %v1853
      %v2068 = vpop.f32.mrf.mxu0
      %v2069 = vadd.f32 0.0, %v2068
      %v2070 = vpop.f32.mrf.mxu0
      %2071 = vmatprep.mubr.f32.mxu0 0.0
      %2072 = vmatmul.mubr.f32.gmra.mxu0 %v1856
      %v2073 = vpop.f32.mrf.mxu0
      %v2074 = vadd.f32 0.0, %v2073
      %v2075 = vpop.f32.mrf.mxu0
      %2076 = vmatprep.mubr.f32.mxu0 0.0
      %2077 = vmatmul.mubr.f32.gmra.mxu0 %v1859
      %v2078 = vpop.f32.mrf.mxu0
      %v2079 = vadd.f32 0.0, %v2078
      %v2080 = vpop.f32.mrf.mxu0
      %2081 = vmatprep.mubr.f32.mxu0 0.0
      %2082 = vmatmul.mubr.f32.gmra.mxu0 %v1862
      %v2083 = vpop.f32.mrf.mxu0
      %v2084 = vadd.f32 0.0, %v2083
      %v2085 = vpop.f32.mrf.mxu0
      %2086 = vmatprep.mubr.f32.mxu0 0.0
      %2087 = vmatmul.mubr.f32.gmra.mxu0 %v1865
      %v2088 = vpop.f32.mrf.mxu0
      %v2089 = vadd.f32 0.0, %v2088
      %v2090 = vpop.f32.mrf.mxu0
      %2091 = vdwg.mxu0
      %vm2092 = vcmask 523264
      %v2093 = vsel %vm2092, %v1934, -inf
      %2094 = vmax.xlane.f32.xlu0 %v2093
      %v2095 = vpop.xlane.xlu0 %2094
      %v2096 = vsel %vm2092, %v1939, -inf
      %2097 = vmax.xlane.f32.xlu0 %v2096
      %v2098 = vpop.xlane.xlu0 %2097
      %v2099 = vsel %vm2092, %v1944, -inf
      %2100 = vmax.xlane.f32.xlu0 %v2099
      %v2101 = vpop.xlane.xlu0 %2100
      %v2102 = vsel %vm2092, %v1949, -inf
      %2103 = vmax.xlane.f32.xlu0 %v2102
      %v2104 = vpop.xlane.xlu0 %2103
      %v2105 = vsel %vm2092, %v1954, -inf
      %2106 = vmax.xlane.f32.xlu0 %v2105
      %v2107 = vpop.xlane.xlu0 %2106
      %v2108 = vsel %vm2092, %v1959, -inf
      %2109 = vmax.xlane.f32.xlu0 %v2108
      %v2110 = vpop.xlane.xlu0 %2109
      %v2111 = vsel %vm2092, %v1964, -inf
      %2112 = vmax.xlane.f32.xlu0 %v2111
      %v2113 = vpop.xlane.xlu0 %2112
      %v2114 = vsel %vm2092, %v1969, -inf
      %2115 = vmax.xlane.f32.xlu0 %v2114
      %v2116 = vpop.xlane.xlu0 %2115
      %v2117 = vsel %vm2092, %v1974, -inf
      %2118 = vmax.xlane.f32.xlu0 %v2117
      %v2119 = vpop.xlane.xlu0 %2118
      %v2120 = vsel %vm2092, %v1979, -inf
      %2121 = vmax.xlane.f32.xlu0 %v2120
      %v2122 = vpop.xlane.xlu0 %2121
      %v2123 = vsel %vm2092, %v1984, -inf
      %2124 = vmax.xlane.f32.xlu0 %v2123
      %v2125 = vpop.xlane.xlu0 %2124
      %v2126 = vsel %vm2092, %v1989, -inf
      %2127 = vmax.xlane.f32.xlu0 %v2126
      %v2128 = vpop.xlane.xlu0 %2127
      %v2129 = vsel %vm2092, %v1994, -inf
      %2130 = vmax.xlane.f32.xlu0 %v2129
      %v2131 = vpop.xlane.xlu0 %2130
      %v2132 = vsel %vm2092, %v1999, -inf
      %2133 = vmax.xlane.f32.xlu0 %v2132
      %v2134 = vpop.xlane.xlu0 %2133
      %v2135 = vsel %vm2092, %v2004, -inf
      %2136 = vmax.xlane.f32.xlu0 %v2135
      %v2137 = vpop.xlane.xlu0 %2136
      %v2138 = vsel %vm2092, %v2009, -inf
      %2139 = vmax.xlane.f32.xlu0 %v2138
      %v2140 = vpop.xlane.xlu0 %2139
      %v2141 = vsel %vm2092, %v2014, -inf
      %2142 = vmax.xlane.f32.xlu0 %v2141
      %v2143 = vpop.xlane.xlu0 %2142
      %v2144 = vsel %vm2092, %v2019, -inf
      %2145 = vmax.xlane.f32.xlu0 %v2144
      %v2146 = vpop.xlane.xlu0 %2145
      %v2147 = vsel %vm2092, %v2024, -inf
      %2148 = vmax.xlane.f32.xlu0 %v2147
      %v2149 = vpop.xlane.xlu0 %2148
      %v2150 = vsel %vm2092, %v2029, -inf
      %2151 = vmax.xlane.f32.xlu0 %v2150
      %v2152 = vpop.xlane.xlu0 %2151
      %v2153 = vsel %vm2092, %v2034, -inf
      %2154 = vmax.xlane.f32.xlu0 %v2153
      %v2155 = vpop.xlane.xlu0 %2154
      %v2156 = vsel %vm2092, %v2039, -inf
      %2157 = vmax.xlane.f32.xlu0 %v2156
      %v2158 = vpop.xlane.xlu0 %2157
      %v2159 = vsel %vm2092, %v2044, -inf
      %2160 = vmax.xlane.f32.xlu0 %v2159
      %v2161 = vpop.xlane.xlu0 %2160
      %v2162 = vsel %vm2092, %v2049, -inf
      %2163 = vmax.xlane.f32.xlu0 %v2162
      %v2164 = vpop.xlane.xlu0 %2163
      %v2165 = vsel %vm2092, %v2054, -inf
      %2166 = vmax.xlane.f32.xlu0 %v2165
      %v2167 = vpop.xlane.xlu0 %2166
      %v2168 = vsel %vm2092, %v2059, -inf
      %2169 = vmax.xlane.f32.xlu0 %v2168
      %v2170 = vpop.xlane.xlu0 %2169
      %v2171 = vsel %vm2092, %v2064, -inf
      %2172 = vmax.xlane.f32.xlu0 %v2171
      %v2173 = vpop.xlane.xlu0 %2172
      %v2174 = vsel %vm2092, %v2069, -inf
      %2175 = vmax.xlane.f32.xlu0 %v2174
      %v2176 = vpop.xlane.xlu0 %2175
      %v2177 = vsel %vm2092, %v2074, -inf
      %2178 = vmax.xlane.f32.xlu0 %v2177
      %v2179 = vpop.xlane.xlu0 %2178
      %v2180 = vsel %vm2092, %v2079, -inf
      %2181 = vmax.xlane.f32.xlu0 %v2180
      %v2182 = vpop.xlane.xlu0 %2181
      %v2183 = vsel %vm2092, %v2084, -inf
      %2184 = vmax.xlane.f32.xlu0 %v2183
      %v2185 = vpop.xlane.xlu0 %2184
      %v2186 = vsel %vm2092, %v2089, -inf
      %2187 = vmax.xlane.f32.xlu0 %v2186
      %v2188 = vpop.xlane.xlu0 %2187
      %v2189 = vsub.f32 %v1934, %v2095
      %v2190 = vsub.f32 %v1939, %v2098
      %v2191 = vsub.f32 %v1944, %v2101
      %v2192 = vsub.f32 %v1949, %v2104
      %v2193 = vsub.f32 %v1954, %v2107
      %v2194 = vsub.f32 %v1959, %v2110
      %v2195 = vsub.f32 %v1964, %v2113
      %v2196 = vsub.f32 %v1969, %v2116
      %v2197 = vsub.f32 %v1974, %v2119
      %v2198 = vsub.f32 %v1979, %v2122
      %v2199 = vsub.f32 %v1984, %v2125
      %v2200 = vsub.f32 %v1989, %v2128
      %v2201 = vsub.f32 %v1994, %v2131
      %v2202 = vsub.f32 %v1999, %v2134
      %v2203 = vsub.f32 %v2004, %v2137
      %v2204 = vsub.f32 %v2009, %v2140
      %v2205 = vsub.f32 %v2014, %v2143
      %v2206 = vsub.f32 %v2019, %v2146
      %v2207 = vsub.f32 %v2024, %v2149
      %v2208 = vsub.f32 %v2029, %v2152
      %v2209 = vsub.f32 %v2034, %v2155
      %v2210 = vsub.f32 %v2039, %v2158
      %v2211 = vsub.f32 %v2044, %v2161
      %v2212 = vsub.f32 %v2049, %v2164
      %v2213 = vsub.f32 %v2054, %v2167
      %v2214 = vsub.f32 %v2059, %v2170
      %v2215 = vsub.f32 %v2064, %v2173
      %v2216 = vsub.f32 %v2069, %v2176
      %v2217 = vsub.f32 %v2074, %v2179
      %v2218 = vsub.f32 %v2079, %v2182
      %v2219 = vsub.f32 %v2084, %v2185
      %v2220 = vsub.f32 %v2089, %v2188
      %v2221 = vmul.f32 %v2189, 1.442695
      %v2222 = vpow.pop %v2221
      %v2223 = vmul.f32 %v2190, 1.442695
      %v2224 = vpow.pop %v2223
      %v2225 = vmul.f32 %v2191, 1.442695
      %v2226 = vpow.pop %v2225
      %v2227 = vmul.f32 %v2192, 1.442695
      %v2228 = vpow.pop %v2227
      %v2229 = vmul.f32 %v2193, 1.442695
      %v2230 = vpow.pop %v2229
      %v2231 = vmul.f32 %v2194, 1.442695
      %v2232 = vpow.pop %v2231
      %v2233 = vmul.f32 %v2195, 1.442695
      %v2234 = vpow.pop %v2233
      %v2235 = vmul.f32 %v2196, 1.442695
      %v2236 = vpow.pop %v2235
      %v2237 = vmul.f32 %v2197, 1.442695
      %v2238 = vpow.pop %v2237
      %v2239 = vmul.f32 %v2198, 1.442695
      %v2240 = vpow.pop %v2239
      %v2241 = vmul.f32 %v2199, 1.442695
      %v2242 = vpow.pop %v2241
      %v2243 = vmul.f32 %v2200, 1.442695
      %v2244 = vpow.pop %v2243
      %v2245 = vmul.f32 %v2201, 1.442695
      %v2246 = vpow.pop %v2245
      %v2247 = vmul.f32 %v2202, 1.442695
      %v2248 = vpow.pop %v2247
      %v2249 = vmul.f32 %v2203, 1.442695
      %v2250 = vpow.pop %v2249
      %v2251 = vmul.f32 %v2204, 1.442695
      %v2252 = vpow.pop %v2251
      %v2253 = vmul.f32 %v2205, 1.442695
      %v2254 = vpow.pop %v2253
      %v2255 = vmul.f32 %v2206, 1.442695
      %v2256 = vpow.pop %v2255
      %v2257 = vmul.f32 %v2207, 1.442695
      %v2258 = vpow.pop %v2257
      %v2259 = vmul.f32 %v2208, 1.442695
      %v2260 = vpow.pop %v2259
      %v2261 = vmul.f32 %v2209, 1.442695
      %v2262 = vpow.pop %v2261
      %v2263 = vmul.f32 %v2210, 1.442695
      %v2264 = vpow.pop %v2263
      %v2265 = vmul.f32 %v2211, 1.442695
      %v2266 = vpow.pop %v2265
      %v2267 = vmul.f32 %v2212, 1.442695
      %v2268 = vpow.pop %v2267
      %v2269 = vmul.f32 %v2213, 1.442695
      %v2270 = vpow.pop %v2269
      %v2271 = vmul.f32 %v2214, 1.442695
      %v2272 = vpow.pop %v2271
      %v2273 = vmul.f32 %v2215, 1.442695
      %v2274 = vpow.pop %v2273
      %v2275 = vmul.f32 %v2216, 1.442695
      %v2276 = vpow.pop %v2275
      %v2277 = vmul.f32 %v2217, 1.442695
      %v2278 = vpow.pop %v2277
      %v2279 = vmul.f32 %v2218, 1.442695
      %v2280 = vpow.pop %v2279
      %v2281 = vmul.f32 %v2219, 1.442695
      %v2282 = vpow.pop %v2281
      %v2283 = vmul.f32 %v2220, 1.442695
      %v2284 = vpow.pop %v2283
      %v2285 = vsel %vm2092, %v2222, 0.0
      %2286 = vadd.xlane.f32.xlu0 %v2285
      %v2287 = vpop.xlane.xlu0 %2286
      %v2288 = vsel %vm2092, %v2224, 0.0
      %2289 = vadd.xlane.f32.xlu0 %v2288
      %v2290 = vpop.xlane.xlu0 %2289
      %v2291 = vsel %vm2092, %v2226, 0.0
      %2292 = vadd.xlane.f32.xlu0 %v2291
      %v2293 = vpop.xlane.xlu0 %2292
      %v2294 = vsel %vm2092, %v2228, 0.0
      %2295 = vadd.xlane.f32.xlu0 %v2294
      %v2296 = vpop.xlane.xlu0 %2295
      %v2297 = vsel %vm2092, %v2230, 0.0
      %2298 = vadd.xlane.f32.xlu0 %v2297
      %v2299 = vpop.xlane.xlu0 %2298
      %v2300 = vsel %vm2092, %v2232, 0.0
      %2301 = vadd.xlane.f32.xlu0 %v2300
      %v2302 = vpop.xlane.xlu0 %2301
      %v2303 = vsel %vm2092, %v2234, 0.0
      %2304 = vadd.xlane.f32.xlu0 %v2303
      %v2305 = vpop.xlane.xlu0 %2304
      %v2306 = vsel %vm2092, %v2236, 0.0
      %2307 = vadd.xlane.f32.xlu0 %v2306
      %v2308 = vpop.xlane.xlu0 %2307
      %v2309 = vsel %vm2092, %v2238, 0.0
      %2310 = vadd.xlane.f32.xlu0 %v2309
      %v2311 = vpop.xlane.xlu0 %2310
      %v2312 = vsel %vm2092, %v2240, 0.0
      %2313 = vadd.xlane.f32.xlu0 %v2312
      %v2314 = vpop.xlane.xlu0 %2313
      %v2315 = vsel %vm2092, %v2242, 0.0
      %2316 = vadd.xlane.f32.xlu0 %v2315
      %v2317 = vpop.xlane.xlu0 %2316
      %v2318 = vsel %vm2092, %v2244, 0.0
      %2319 = vadd.xlane.f32.xlu0 %v2318
      %v2320 = vpop.xlane.xlu0 %2319
      %v2321 = vsel %vm2092, %v2246, 0.0
      %2322 = vadd.xlane.f32.xlu0 %v2321
      %v2323 = vpop.xlane.xlu0 %2322
      %v2324 = vsel %vm2092, %v2248, 0.0
      %2325 = vadd.xlane.f32.xlu0 %v2324
      %v2326 = vpop.xlane.xlu0 %2325
      %v2327 = vsel %vm2092, %v2250, 0.0
      %2328 = vadd.xlane.f32.xlu0 %v2327
      %v2329 = vpop.xlane.xlu0 %2328
      %v2330 = vsel %vm2092, %v2252, 0.0
      %2331 = vadd.xlane.f32.xlu0 %v2330
      %v2332 = vpop.xlane.xlu0 %2331
      %v2333 = vsel %vm2092, %v2254, 0.0
      %2334 = vadd.xlane.f32.xlu0 %v2333
      %v2335 = vpop.xlane.xlu0 %2334
      %v2336 = vsel %vm2092, %v2256, 0.0
      %2337 = vadd.xlane.f32.xlu0 %v2336
      %v2338 = vpop.xlane.xlu0 %2337
      %v2339 = vsel %vm2092, %v2258, 0.0
      %2340 = vadd.xlane.f32.xlu0 %v2339
      %v2341 = vpop.xlane.xlu0 %2340
      %v2342 = vsel %vm2092, %v2260, 0.0
      %2343 = vadd.xlane.f32.xlu0 %v2342
      %v2344 = vpop.xlane.xlu0 %2343
      %v2345 = vsel %vm2092, %v2262, 0.0
      %2346 = vadd.xlane.f32.xlu0 %v2345
      %v2347 = vpop.xlane.xlu0 %2346
      %v2348 = vsel %vm2092, %v2264, 0.0
      %2349 = vadd.xlane.f32.xlu0 %v2348
      %v2350 = vpop.xlane.xlu0 %2349
      %v2351 = vsel %vm2092, %v2266, 0.0
      %2352 = vadd.xlane.f32.xlu0 %v2351
      %v2353 = vpop.xlane.xlu0 %2352
      %v2354 = vsel %vm2092, %v2268, 0.0
      %2355 = vadd.xlane.f32.xlu0 %v2354
      %v2356 = vpop.xlane.xlu0 %2355
      %v2357 = vsel %vm2092, %v2270, 0.0
      %2358 = vadd.xlane.f32.xlu0 %v2357
      %v2359 = vpop.xlane.xlu0 %2358
      %v2360 = vsel %vm2092, %v2272, 0.0
      %2361 = vadd.xlane.f32.xlu0 %v2360
      %v2362 = vpop.xlane.xlu0 %2361
      %v2363 = vsel %vm2092, %v2274, 0.0
      %2364 = vadd.xlane.f32.xlu0 %v2363
      %v2365 = vpop.xlane.xlu0 %2364
      %v2366 = vsel %vm2092, %v2276, 0.0
      %2367 = vadd.xlane.f32.xlu0 %v2366
      %v2368 = vpop.xlane.xlu0 %2367
      %v2369 = vsel %vm2092, %v2278, 0.0
      %2370 = vadd.xlane.f32.xlu0 %v2369
      %v2371 = vpop.xlane.xlu0 %2370
      %v2372 = vsel %vm2092, %v2280, 0.0
      %2373 = vadd.xlane.f32.xlu0 %v2372
      %v2374 = vpop.xlane.xlu0 %2373
      %v2375 = vsel %vm2092, %v2282, 0.0
      %2376 = vadd.xlane.f32.xlu0 %v2375
      %v2377 = vpop.xlane.xlu0 %2376
      %v2378 = vsel %vm2092, %v2284, 0.0
      %2379 = vadd.xlane.f32.xlu0 %v2378
      %v2380 = vpop.xlane.xlu0 %2379
      %v2381 = vrcp.pop %v2287
      %v2382 = vrcp.pop %v2290
      %v2383 = vrcp.pop %v2293
      %v2384 = vrcp.pop %v2296
      %v2385 = vrcp.pop %v2299
      %v2386 = vrcp.pop %v2302
      %v2387 = vrcp.pop %v2305
      %v2388 = vrcp.pop %v2308
      %v2389 = vrcp.pop %v2311
      %v2390 = vrcp.pop %v2314
      %v2391 = vrcp.pop %v2317
      %v2392 = vrcp.pop %v2320
      %v2393 = vrcp.pop %v2323
      %v2394 = vrcp.pop %v2326
      %v2395 = vrcp.pop %v2329
      %v2396 = vrcp.pop %v2332
      %v2397 = vrcp.pop %v2335
      %v2398 = vrcp.pop %v2338
      %v2399 = vrcp.pop %v2341
      %v2400 = vrcp.pop %v2344
      %v2401 = vrcp.pop %v2347
      %v2402 = vrcp.pop %v2350
      %v2403 = vrcp.pop %v2353
      %v2404 = vrcp.pop %v2356
      %v2405 = vrcp.pop %v2359
      %v2406 = vrcp.pop %v2362
      %v2407 = vrcp.pop %v2365
      %v2408 = vrcp.pop %v2368
      %v2409 = vrcp.pop %v2371
      %v2410 = vrcp.pop %v2374
      %v2411 = vrcp.pop %v2377
      %v2412 = vrcp.pop %v2380
      %v2413 = vmul.f32 %v2222, %v2381
      %v2414 = vmul.f32 %v2224, %v2382
      %v2415 = vmul.f32 %v2226, %v2383
      %v2416 = vmul.f32 %v2228, %v2384
      %v2417 = vmul.f32 %v2230, %v2385
      %v2418 = vmul.f32 %v2232, %v2386
      %v2419 = vmul.f32 %v2234, %v2387
      %v2420 = vmul.f32 %v2236, %v2388
      %v2421 = vmul.f32 %v2238, %v2389
      %v2422 = vmul.f32 %v2240, %v2390
      %v2423 = vmul.f32 %v2242, %v2391
      %v2424 = vmul.f32 %v2244, %v2392
      %v2425 = vmul.f32 %v2246, %v2393
      %v2426 = vmul.f32 %v2248, %v2394
      %v2427 = vmul.f32 %v2250, %v2395
      %v2428 = vmul.f32 %v2252, %v2396
      %v2429 = vmul.f32 %v2254, %v2397
      %v2430 = vmul.f32 %v2256, %v2398
      %v2431 = vmul.f32 %v2258, %v2399
      %v2432 = vmul.f32 %v2260, %v2400
      %v2433 = vmul.f32 %v2262, %v2401
      %v2434 = vmul.f32 %v2264, %v2402
      %v2435 = vmul.f32 %v2266, %v2403
      %v2436 = vmul.f32 %v2268, %v2404
      %v2437 = vmul.f32 %v2270, %v2405
      %v2438 = vmul.f32 %v2272, %v2406
      %v2439 = vmul.f32 %v2274, %v2407
      %v2440 = vmul.f32 %v2276, %v2408
      %v2441 = vmul.f32 %v2278, %v2409
      %v2442 = vmul.f32 %v2280, %v2410
      %v2443 = vmul.f32 %v2282, %v2411
      %v2444 = vmul.f32 %v2284, %v2412
      %v2445 = vsel %vm2092, %v2413, 0.0
      %2446 = vadd.xlane.f32.xlu0 %v2445
      %v2447 = vpop.xlane.xlu0 %2446
      %v2448 = vsel %vm2092, %v2414, 0.0
      %2449 = vadd.xlane.f32.xlu0 %v2448
      %v2450 = vpop.xlane.xlu0 %2449
      %v2451 = vsel %vm2092, %v2415, 0.0
      %2452 = vadd.xlane.f32.xlu0 %v2451
      %v2453 = vpop.xlane.xlu0 %2452
      %v2454 = vsel %vm2092, %v2416, 0.0
      %2455 = vadd.xlane.f32.xlu0 %v2454
      %v2456 = vpop.xlane.xlu0 %2455
      %v2457 = vsel %vm2092, %v2417, 0.0
      %2458 = vadd.xlane.f32.xlu0 %v2457
      %v2459 = vpop.xlane.xlu0 %2458
      %v2460 = vsel %vm2092, %v2418, 0.0
      %2461 = vadd.xlane.f32.xlu0 %v2460
      %v2462 = vpop.xlane.xlu0 %2461
      %v2463 = vsel %vm2092, %v2419, 0.0
      %2464 = vadd.xlane.f32.xlu0 %v2463
      %v2465 = vpop.xlane.xlu0 %2464
      %v2466 = vsel %vm2092, %v2420, 0.0
      %2467 = vadd.xlane.f32.xlu0 %v2466
      %v2468 = vpop.xlane.xlu0 %2467
      %v2469 = vsel %vm2092, %v2421, 0.0
      %2470 = vadd.xlane.f32.xlu0 %v2469
      %v2471 = vpop.xlane.xlu0 %2470
      %v2472 = vsel %vm2092, %v2422, 0.0
      %2473 = vadd.xlane.f32.xlu0 %v2472
      %v2474 = vpop.xlane.xlu0 %2473
      %v2475 = vsel %vm2092, %v2423, 0.0
      %2476 = vadd.xlane.f32.xlu0 %v2475
      %v2477 = vpop.xlane.xlu0 %2476
      %v2478 = vsel %vm2092, %v2424, 0.0
      %2479 = vadd.xlane.f32.xlu0 %v2478
      %v2480 = vpop.xlane.xlu0 %2479
      %v2481 = vsel %vm2092, %v2425, 0.0
      %2482 = vadd.xlane.f32.xlu0 %v2481
      %v2483 = vpop.xlane.xlu0 %2482
      %v2484 = vsel %vm2092, %v2426, 0.0
      %2485 = vadd.xlane.f32.xlu0 %v2484
      %v2486 = vpop.xlane.xlu0 %2485
      %v2487 = vsel %vm2092, %v2427, 0.0
      %2488 = vadd.xlane.f32.xlu0 %v2487
      %v2489 = vpop.xlane.xlu0 %2488
      %v2490 = vsel %vm2092, %v2428, 0.0
      %2491 = vadd.xlane.f32.xlu0 %v2490
      %v2492 = vpop.xlane.xlu0 %2491
      %v2493 = vsel %vm2092, %v2429, 0.0
      %2494 = vadd.xlane.f32.xlu0 %v2493
      %v2495 = vpop.xlane.xlu0 %2494
      %v2496 = vsel %vm2092, %v2430, 0.0
      %2497 = vadd.xlane.f32.xlu0 %v2496
      %v2498 = vpop.xlane.xlu0 %2497
      %v2499 = vsel %vm2092, %v2431, 0.0
      %2500 = vadd.xlane.f32.xlu0 %v2499
      %v2501 = vpop.xlane.xlu0 %2500
      %v2502 = vsel %vm2092, %v2432, 0.0
      %2503 = vadd.xlane.f32.xlu0 %v2502
      %v2504 = vpop.xlane.xlu0 %2503
      %v2505 = vsel %vm2092, %v2433, 0.0
      %2506 = vadd.xlane.f32.xlu0 %v2505
      %v2507 = vpop.xlane.xlu0 %2506
      %v2508 = vsel %vm2092, %v2434, 0.0
      %2509 = vadd.xlane.f32.xlu0 %v2508
      %v2510 = vpop.xlane.xlu0 %2509
      %v2511 = vsel %vm2092, %v2435, 0.0
      %2512 = vadd.xlane.f32.xlu0 %v2511
      %v2513 = vpop.xlane.xlu0 %2512
      %v2514 = vsel %vm2092, %v2436, 0.0
      %2515 = vadd.xlane.f32.xlu0 %v2514
      %v2516 = vpop.xlane.xlu0 %2515
      %v2517 = vsel %vm2092, %v2437, 0.0
      %2518 = vadd.xlane.f32.xlu0 %v2517
      %v2519 = vpop.xlane.xlu0 %2518
      %v2520 = vsel %vm2092, %v2438, 0.0
      %2521 = vadd.xlane.f32.xlu0 %v2520
      %v2522 = vpop.xlane.xlu0 %2521
      %v2523 = vsel %vm2092, %v2439, 0.0
      %2524 = vadd.xlane.f32.xlu0 %v2523
      %v2525 = vpop.xlane.xlu0 %2524
      %v2526 = vsel %vm2092, %v2440, 0.0
      %2527 = vadd.xlane.f32.xlu0 %v2526
      %v2528 = vpop.xlane.xlu0 %2527
      %v2529 = vsel %vm2092, %v2441, 0.0
      %2530 = vadd.xlane.f32.xlu0 %v2529
      %v2531 = vpop.xlane.xlu0 %2530
      %v2532 = vsel %vm2092, %v2442, 0.0
      %2533 = vadd.xlane.f32.xlu0 %v2532
      %v2534 = vpop.xlane.xlu0 %2533
      %v2535 = vsel %vm2092, %v2443, 0.0
      %2536 = vadd.xlane.f32.xlu0 %v2535
      %v2537 = vpop.xlane.xlu0 %2536
      %v2538 = vsel %vm2092, %v2444, 0.0
      %2539 = vadd.xlane.f32.xlu0 %v2538
      %v2540 = vpop.xlane.xlu0 %2539
      %v2541 = vrcp.pop %v2447
      %v2542 = vmul.f32 %v2413, %v2541
      %v2543 = vrcp.pop %v2450
      %v2544 = vmul.f32 %v2414, %v2543
      %v2545 = vrcp.pop %v2453
      %v2546 = vmul.f32 %v2415, %v2545
      %v2547 = vrcp.pop %v2456
      %v2548 = vmul.f32 %v2416, %v2547
      %v2549 = vrcp.pop %v2459
      %v2550 = vmul.f32 %v2417, %v2549
      %v2551 = vrcp.pop %v2462
      %v2552 = vmul.f32 %v2418, %v2551
      %v2553 = vrcp.pop %v2465
      %v2554 = vmul.f32 %v2419, %v2553
      %v2555 = vrcp.pop %v2468
      %v2556 = vmul.f32 %v2420, %v2555
      %v2557 = vrcp.pop %v2471
      %v2558 = vmul.f32 %v2421, %v2557
      %v2559 = vrcp.pop %v2474
      %v2560 = vmul.f32 %v2422, %v2559
      %v2561 = vrcp.pop %v2477
      %v2562 = vmul.f32 %v2423, %v2561
      %v2563 = vrcp.pop %v2480
      %v2564 = vmul.f32 %v2424, %v2563
      %v2565 = vrcp.pop %v2483
      %v2566 = vmul.f32 %v2425, %v2565
      %v2567 = vrcp.pop %v2486
      %v2568 = vmul.f32 %v2426, %v2567
      %v2569 = vrcp.pop %v2489
      %v2570 = vmul.f32 %v2427, %v2569
      %v2571 = vrcp.pop %v2492
      %v2572 = vmul.f32 %v2428, %v2571
      %v2573 = vrcp.pop %v2495
      %v2574 = vmul.f32 %v2429, %v2573
      %v2575 = vrcp.pop %v2498
      %v2576 = vmul.f32 %v2430, %v2575
      %v2577 = vrcp.pop %v2501
      %v2578 = vmul.f32 %v2431, %v2577
      %v2579 = vrcp.pop %v2504
      %v2580 = vmul.f32 %v2432, %v2579
      %v2581 = vrcp.pop %v2507
      %v2582 = vmul.f32 %v2433, %v2581
      %v2583 = vrcp.pop %v2510
      %v2584 = vmul.f32 %v2434, %v2583
      %v2585 = vrcp.pop %v2513
      %v2586 = vmul.f32 %v2435, %v2585
      %v2587 = vrcp.pop %v2516
      %v2588 = vmul.f32 %v2436, %v2587
      %v2589 = vrcp.pop %v2519
      %v2590 = vmul.f32 %v2437, %v2589
      %v2591 = vrcp.pop %v2522
      %v2592 = vmul.f32 %v2438, %v2591
      %v2593 = vrcp.pop %v2525
      %v2594 = vmul.f32 %v2439, %v2593
      %v2595 = vrcp.pop %v2528
      %v2596 = vmul.f32 %v2440, %v2595
      %v2597 = vrcp.pop %v2531
      %v2598 = vmul.f32 %v2441, %v2597
      %v2599 = vrcp.pop %v2534
      %v2600 = vmul.f32 %v2442, %v2599
      %v2601 = vrcp.pop %v2537
      %v2602 = vmul.f32 %v2443, %v2601
      %v2603 = vrcp.pop %v2540
      %v2604 = vmul.f32 %v2444, %v2603
      %v2605 = vld [vmem:[%s5] sm:$0xff]
      %v2606 = vld [vmem:[%s5 + $0x8] sm:$0xff]
      %v2607 = vld [vmem:[%s5 + $0x10] sm:$0xff]
      %v2608 = vld [vmem:[%s5 + $0x18] sm:$0xff]
      %v2609 = vld [vmem:[%s5 + $0x20] sm:$0xff]
      %v2610 = vld [vmem:[%s5 + $0x28] sm:$0xff]
      %v2611 = vld [vmem:[%s5 + $0x30] sm:$0xff]
      %v2612 = vld [vmem:[%s5 + $0x38] sm:$0xff]
      %v2614 = vsel %vm2092, %v2542, 0
      %v2617 = vsel %vm2092, %v2544, 0
      %v2620 = vsel %vm2092, %v2546, 0
      %v2623 = vsel %vm2092, %v2548, 0
      %v2626 = vsel %vm2092, %v2550, 0
      %v2629 = vsel %vm2092, %v2552, 0
      %v2632 = vsel %vm2092, %v2554, 0
      %v2635 = vsel %vm2092, %v2556, 0
      %v2638 = vsel %vm2092, %v2558, 0
      %v2641 = vsel %vm2092, %v2560, 0
      %v2644 = vsel %vm2092, %v2562, 0
      %v2647 = vsel %vm2092, %v2564, 0
      %v2650 = vsel %vm2092, %v2566, 0
      %v2653 = vsel %vm2092, %v2568, 0
      %v2656 = vsel %vm2092, %v2570, 0
      %v2659 = vsel %vm2092, %v2572, 0
      %v2662 = vsel %vm2092, %v2574, 0
      %v2665 = vsel %vm2092, %v2576, 0
      %v2668 = vsel %vm2092, %v2578, 0
      %v2671 = vsel %vm2092, %v2580, 0
      %v2674 = vsel %vm2092, %v2582, 0
      %v2677 = vsel %vm2092, %v2584, 0
      %v2680 = vsel %vm2092, %v2586, 0
      %v2683 = vsel %vm2092, %v2588, 0
      %v2686 = vsel %vm2092, %v2590, 0
      %v2689 = vsel %vm2092, %v2592, 0
      %v2692 = vsel %vm2092, %v2594, 0
      %v2695 = vsel %vm2092, %v2596, 0
      %v2698 = vsel %vm2092, %v2598, 0
      %v2701 = vsel %vm2092, %v2600, 0
      %v2704 = vsel %vm2092, %v2602, 0
      %v2707 = vsel %vm2092, %v2604, 0
      %2709 = vmatprep.subr.mxu0 0.0
      %2710 = vmatpush1.msra.mxu0 0.0
      %2711 = vmatprep.subr.mxu0 0.0
      %2712 = vmatpush1.msra.mxu0 0.0
      %2713 = vmatprep.subr.mxu0 0.0
      %2714 = vmatpush1.msra.mxu0 0.0
      %2715 = vmatprep.subr.mxu0 0.0
      %2716 = vmatpush1.msra.mxu0 0.0
      %2717 = vmatprep.subr.mxu0 0.0
      %2718 = vmatpush1.msra.mxu0 0.0
      %2719 = vmatprep.subr.mxu0 0.0
      %2720 = vmatpush1.msra.mxu0 0.0
      %2721 = vmatprep.subr.mxu0 0.0
      %2722 = vmatpush1.msra.mxu0 0.0
      %2723 = vmatprep.subr.mxu0 0.0
      %2724 = vmatpush1.msra.mxu0 0.0
      %2725 = vmatprep.subr.mxu0 0.0
      %2726 = vmatpush1.msra.mxu0 %v2612
      %2727 = vmatprep.subr.mxu0 0.0
      %2728 = vmatpush1.msra.mxu0 %v2611
      %2729 = vmatprep.subr.mxu0 0.0
      %2730 = vmatpush1.msra.mxu0 %v2610
      %2731 = vmatprep.subr.mxu0 0.0
      %2732 = vmatpush1.msra.mxu0 %v2609
      %2733 = vmatprep.subr.mxu0 0.0
      %2734 = vmatpush1.msra.mxu0 %v2608
      %2735 = vmatprep.subr.mxu0 0.0
      %2736 = vmatpush1.msra.mxu0 %v2607
      %2737 = vmatprep.subr.mxu0 0.0
      %2738 = vmatpush1.msra.mxu0 %v2606
      %2739 = vmatprep.subr.mxu0 0.0
      %2740 = vmatpush1.msra.mxu0 %v2605
      %2741 = vmatprep.subr.mxu0 0.0
      %2742 = vmatpush2.msra.mxu0 0.0
      %2743 = vmatprep.subr.mxu0 0.0
      %2744 = vmatpush2.msra.mxu0 0.0
      %2745 = vmatprep.subr.mxu0 0.0
      %2746 = vmatpush2.msra.mxu0 0.0
      %2747 = vmatprep.subr.mxu0 0.0
      %2748 = vmatpush2.msra.mxu0 0.0
      %2749 = vmatprep.subr.mxu0 0.0
      %2750 = vmatpush2.msra.mxu0 0.0
      %2751 = vmatprep.subr.mxu0 0.0
      %2752 = vmatpush2.msra.mxu0 0.0
      %2753 = vmatprep.subr.mxu0 0.0
      %2754 = vmatpush2.msra.mxu0 0.0
      %2755 = vmatprep.subr.mxu0 0.0
      %2756 = vmatpush2.msra.mxu0 0.0
      %2757 = vmatprep.subr.mxu0 0.0
      %2758 = vmatpush2.msra.mxu0 0.0
      %2759 = vmatprep.subr.mxu0 0.0
      %2760 = vmatpush2.msra.mxu0 0.0
      %2761 = vmatprep.subr.mxu0 0.0
      %2762 = vmatpush2.msra.mxu0 0.0
      %2763 = vmatprep.subr.mxu0 0.0
      %2764 = vmatpush2.msra.mxu0 0.0
      %2765 = vmatprep.subr.mxu0 0.0
      %2766 = vmatpush2.msra.mxu0 0.0
      %2767 = vmatprep.subr.mxu0 0.0
      %2768 = vmatpush2.msra.mxu0 0.0
      %2769 = vmatprep.subr.mxu0 0.0
      %2770 = vmatpush2.msra.mxu0 0.0
      %2771 = vmatprep.subr.mxu0 0.0
      %2772 = vmatpush2.msra.mxu0 0.0
      %2773 = vmatprep.mubr.f32.mxu0 0.0
      %2774 = vmatmul.mubr.f32.gmra.mxu0 %v2614
      %v2775 = vpop.f32.mrf.mxu0
      %v2776 = vadd.f32 0.0, %v2775
      %v2777 = vpop.f32.mrf.mxu0
      %2778 = vmatprep.mubr.f32.mxu0 0.0
      %2779 = vmatmul.mubr.f32.gmra.mxu0 %v2617
      %v2780 = vpop.f32.mrf.mxu0
      %v2781 = vadd.f32 0.0, %v2780
      %v2782 = vpop.f32.mrf.mxu0
      %2783 = vmatprep.mubr.f32.mxu0 0.0
      %2784 = vmatmul.mubr.f32.gmra.mxu0 %v2620
      %v2785 = vpop.f32.mrf.mxu0
      %v2786 = vadd.f32 0.0, %v2785
      %v2787 = vpop.f32.mrf.mxu0
      %2788 = vmatprep.mubr.f32.mxu0 0.0
      %2789 = vmatmul.mubr.f32.gmra.mxu0 %v2623
      %v2790 = vpop.f32.mrf.mxu0
      %v2791 = vadd.f32 0.0, %v2790
      %v2792 = vpop.f32.mrf.mxu0
      %2793 = vmatprep.mubr.f32.mxu0 0.0
      %2794 = vmatmul.mubr.f32.gmra.mxu0 %v2626
      %v2795 = vpop.f32.mrf.mxu0
      %v2796 = vadd.f32 0.0, %v2795
      %v2797 = vpop.f32.mrf.mxu0
      %2798 = vmatprep.mubr.f32.mxu0 0.0
      %2799 = vmatmul.mubr.f32.gmra.mxu0 %v2629
      %v2800 = vpop.f32.mrf.mxu0
      %v2801 = vadd.f32 0.0, %v2800
      %v2802 = vpop.f32.mrf.mxu0
      %2803 = vmatprep.mubr.f32.mxu0 0.0
      %2804 = vmatmul.mubr.f32.gmra.mxu0 %v2632
      %v2805 = vpop.f32.mrf.mxu0
      %v2806 = vadd.f32 0.0, %v2805
      %v2807 = vpop.f32.mrf.mxu0
      %2808 = vmatprep.mubr.f32.mxu0 0.0
      %2809 = vmatmul.mubr.f32.gmra.mxu0 %v2635
      %v2810 = vpop.f32.mrf.mxu0
      %v2811 = vadd.f32 0.0, %v2810
      %v2812 = vpop.f32.mrf.mxu0
      %2813 = vmatprep.mubr.f32.mxu0 0.0
      %2814 = vmatmul.mubr.f32.gmra.mxu0 %v2638
      %v2815 = vpop.f32.mrf.mxu0
      %v2816 = vadd.f32 0.0, %v2815
      %v2817 = vpop.f32.mrf.mxu0
      %2818 = vmatprep.mubr.f32.mxu0 0.0
      %2819 = vmatmul.mubr.f32.gmra.mxu0 %v2641
      %v2820 = vpop.f32.mrf.mxu0
      %v2821 = vadd.f32 0.0, %v2820
      %v2822 = vpop.f32.mrf.mxu0
      %2823 = vmatprep.mubr.f32.mxu0 0.0
      %2824 = vmatmul.mubr.f32.gmra.mxu0 %v2644
      %v2825 = vpop.f32.mrf.mxu0
      %v2826 = vadd.f32 0.0, %v2825
      %v2827 = vpop.f32.mrf.mxu0
      %2828 = vmatprep.mubr.f32.mxu0 0.0
      %2829 = vmatmul.mubr.f32.gmra.mxu0 %v2647
      %v2830 = vpop.f32.mrf.mxu0
      %v2831 = vadd.f32 0.0, %v2830
      %v2832 = vpop.f32.mrf.mxu0
      %2833 = vmatprep.mubr.f32.mxu0 0.0
      %2834 = vmatmul.mubr.f32.gmra.mxu0 %v2650
      %v2835 = vpop.f32.mrf.mxu0
      %v2836 = vadd.f32 0.0, %v2835
      %v2837 = vpop.f32.mrf.mxu0
      %2838 = vmatprep.mubr.f32.mxu0 0.0
      %2839 = vmatmul.mubr.f32.gmra.mxu0 %v2653
      %v2840 = vpop.f32.mrf.mxu0
      %v2841 = vadd.f32 0.0, %v2840
      %v2842 = vpop.f32.mrf.mxu0
      %2843 = vmatprep.mubr.f32.mxu0 0.0
      %2844 = vmatmul.mubr.f32.gmra.mxu0 %v2656
      %v2845 = vpop.f32.mrf.mxu0
      %v2846 = vadd.f32 0.0, %v2845
      %v2847 = vpop.f32.mrf.mxu0
      %2848 = vmatprep.mubr.f32.mxu0 0.0
      %2849 = vmatmul.mubr.f32.gmra.mxu0 %v2659
      %v2850 = vpop.f32.mrf.mxu0
      %v2851 = vadd.f32 0.0, %v2850
      %v2852 = vpop.f32.mrf.mxu0
      %2853 = vmatprep.mubr.f32.mxu0 0.0
      %2854 = vmatmul.mubr.f32.gmra.mxu0 %v2662
      %v2855 = vpop.f32.mrf.mxu0
      %v2856 = vadd.f32 0.0, %v2855
      %v2857 = vpop.f32.mrf.mxu0
      %2858 = vmatprep.mubr.f32.mxu0 0.0
      %2859 = vmatmul.mubr.f32.gmra.mxu0 %v2665
      %v2860 = vpop.f32.mrf.mxu0
      %v2861 = vadd.f32 0.0, %v2860
      %v2862 = vpop.f32.mrf.mxu0
      %2863 = vmatprep.mubr.f32.mxu0 0.0
      %2864 = vmatmul.mubr.f32.gmra.mxu0 %v2668
      %v2865 = vpop.f32.mrf.mxu0
      %v2866 = vadd.f32 0.0, %v2865
      %v2867 = vpop.f32.mrf.mxu0
      %2868 = vmatprep.mubr.f32.mxu0 0.0
      %2869 = vmatmul.mubr.f32.gmra.mxu0 %v2671
      %v2870 = vpop.f32.mrf.mxu0
      %v2871 = vadd.f32 0.0, %v2870
      %v2872 = vpop.f32.mrf.mxu0
      %2873 = vmatprep.mubr.f32.mxu0 0.0
      %2874 = vmatmul.mubr.f32.gmra.mxu0 %v2674
      %v2875 = vpop.f32.mrf.mxu0
      %v2876 = vadd.f32 0.0, %v2875
      %v2877 = vpop.f32.mrf.mxu0
      %2878 = vmatprep.mubr.f32.mxu0 0.0
      %2879 = vmatmul.mubr.f32.gmra.mxu0 %v2677
      %v2880 = vpop.f32.mrf.mxu0
      %v2881 = vadd.f32 0.0, %v2880
      %v2882 = vpop.f32.mrf.mxu0
      %2883 = vmatprep.mubr.f32.mxu0 0.0
      %2884 = vmatmul.mubr.f32.gmra.mxu0 %v2680
      %v2885 = vpop.f32.mrf.mxu0
      %v2886 = vadd.f32 0.0, %v2885
      %v2887 = vpop.f32.mrf.mxu0
      %2888 = vmatprep.mubr.f32.mxu0 0.0
      %2889 = vmatmul.mubr.f32.gmra.mxu0 %v2683
      %v2890 = vpop.f32.mrf.mxu0
      %v2891 = vadd.f32 0.0, %v2890
      %v2892 = vpop.f32.mrf.mxu0
      %2893 = vmatprep.mubr.f32.mxu0 0.0
      %2894 = vmatmul.mubr.f32.gmra.mxu0 %v2686
      %v2895 = vpop.f32.mrf.mxu0
      %v2896 = vadd.f32 0.0, %v2895
      %v2897 = vpop.f32.mrf.mxu0
      %2898 = vmatprep.mubr.f32.mxu0 0.0
      %2899 = vmatmul.mubr.f32.gmra.mxu0 %v2689
      %v2900 = vpop.f32.mrf.mxu0
      %v2901 = vadd.f32 0.0, %v2900
      %v2902 = vpop.f32.mrf.mxu0
      %2903 = vmatprep.mubr.f32.mxu0 0.0
      %2904 = vmatmul.mubr.f32.gmra.mxu0 %v2692
      %v2905 = vpop.f32.mrf.mxu0
      %v2906 = vadd.f32 0.0, %v2905
      %v2907 = vpop.f32.mrf.mxu0
      %2908 = vmatprep.mubr.f32.mxu0 0.0
      %2909 = vmatmul.mubr.f32.gmra.mxu0 %v2695
      %v2910 = vpop.f32.mrf.mxu0
      %v2911 = vadd.f32 0.0, %v2910
      %v2912 = vpop.f32.mrf.mxu0
      %2913 = vmatprep.mubr.f32.mxu0 0.0
      %2914 = vmatmul.mubr.f32.gmra.mxu0 %v2698
      %v2915 = vpop.f32.mrf.mxu0
      %v2916 = vadd.f32 0.0, %v2915
      %v2917 = vpop.f32.mrf.mxu0
      %2918 = vmatprep.mubr.f32.mxu0 0.0
      %2919 = vmatmul.mubr.f32.gmra.mxu0 %v2701
      %v2920 = vpop.f32.mrf.mxu0
      %v2921 = vadd.f32 0.0, %v2920
      %v2922 = vpop.f32.mrf.mxu0
      %2923 = vmatprep.mubr.f32.mxu0 0.0
      %2924 = vmatmul.mubr.f32.gmra.mxu0 %v2704
      %v2925 = vpop.f32.mrf.mxu0
      %v2926 = vadd.f32 0.0, %v2925
      %v2927 = vpop.f32.mrf.mxu0
      %2928 = vmatprep.mubr.f32.mxu0 0.0
      %2929 = vmatmul.mubr.f32.gmra.mxu0 %v2707
      %v2930 = vpop.f32.mrf.mxu0
      %v2931 = vadd.f32 0.0, %v2930
      %v2932 = vpop.f32.mrf.mxu0
      %2933 = vdwg.mxu0
      %2934 = vst.msk [vmem:[%s353] sm:$0xff] %vm548, %v2776
      %2935 = vst.msk [vmem:[%s353 + $0x8] sm:$0xff] %vm548, %v2781
      %2936 = vst.msk [vmem:[%s353 + $0x10] sm:$0xff] %vm548, %v2786
      %2937 = vst.msk [vmem:[%s353 + $0x18] sm:$0xff] %vm548, %v2791
      %2938 = vst.msk [vmem:[%s353 + $0x20] sm:$0xff] %vm548, %v2796
      %2939 = vst.msk [vmem:[%s353 + $0x28] sm:$0xff] %vm548, %v2801
      %2940 = vst.msk [vmem:[%s353 + $0x30] sm:$0xff] %vm548, %v2806
      %2941 = vst.msk [vmem:[%s353 + $0x38] sm:$0xff] %vm548, %v2811
      %2942 = vst.msk [vmem:[%s353 + $0x40] sm:$0xff] %vm548, %v2816
      %2943 = vst.msk [vmem:[%s353 + $0x48] sm:$0xff] %vm548, %v2821
      %2944 = vst.msk [vmem:[%s353 + $0x50] sm:$0xff] %vm548, %v2826
      %2945 = vst.msk [vmem:[%s353 + $0x58] sm:$0xff] %vm548, %v2831
      %2946 = vst.msk [vmem:[%s353 + $0x60] sm:$0xff] %vm548, %v2836
      %2947 = vst.msk [vmem:[%s353 + $0x68] sm:$0xff] %vm548, %v2841
      %2948 = vst.msk [vmem:[%s353 + $0x70] sm:$0xff] %vm548, %v2846
      %2949 = vst.msk [vmem:[%s353 + $0x78] sm:$0xff] %vm548, %v2851
      %2950 = vst.msk [vmem:[%s353 + $0x80] sm:$0xff] %vm548, %v2856
      %2951 = vst.msk [vmem:[%s353 + $0x88] sm:$0xff] %vm548, %v2861
      %2952 = vst.msk [vmem:[%s353 + $0x90] sm:$0xff] %vm548, %v2866
      %2953 = vst.msk [vmem:[%s353 + $0x98] sm:$0xff] %vm548, %v2871
      %2954 = vst.msk [vmem:[%s353 + $0xa0] sm:$0xff] %vm548, %v2876
      %2955 = vst.msk [vmem:[%s353 + $0xa8] sm:$0xff] %vm548, %v2881
      %2956 = vst.msk [vmem:[%s353 + $0xb0] sm:$0xff] %vm548, %v2886
      %2957 = vst.msk [vmem:[%s353 + $0xb8] sm:$0xff] %vm548, %v2891
      %2958 = vst.msk [vmem:[%s353 + $0xc0] sm:$0xff] %vm548, %v2896
      %2959 = vst.msk [vmem:[%s353 + $0xc8] sm:$0xff] %vm548, %v2901
      %2960 = vst.msk [vmem:[%s353 + $0xd0] sm:$0xff] %vm548, %v2906
      %2961 = vst.msk [vmem:[%s353 + $0xd8] sm:$0xff] %vm548, %v2911
      %2962 = vst.msk [vmem:[%s353 + $0xe0] sm:$0xff] %vm548, %v2916
      %2963 = vst.msk [vmem:[%s353 + $0xe8] sm:$0xff] %vm548, %v2921
      %2964 = vst.msk [vmem:[%s353 + $0xf0] sm:$0xff] %vm548, %v2926
      %2965 = vst.msk [vmem:[%s353 + $0xf8] sm:$0xff] %vm548, %v2931
      %p2966 = scmp.lt.s32.totalorder %s21, 1
      %s2967 = scalar_select %p2966, %s21, 1
      %s2968 = smul.addr %s2967, 32
      %s2969 = smul.addr %s2968, 8
      %s2970 = scalar_lea.vmem %s9, %s2969
      // Predicated region
      $region57: #{transform_forward.3} parent=55 // pred_check
        %p2971 = pneg %p238
      $region58: #{transform_forward.3} parent=55 // pred_check_branch
        %2973 = sbr.rel (%p2971) target = $region60
      $region59: #{transform_forward.3} parent=55 // pred_region
        _
      $region60: #{transform_forward.3} parent=55 // pred_fallthru
        _
    $region56: #{transform_forward.3} parent=5 // pred_fallthru
      _
    %p2974 = scmp.le.s32.totalorder 2, %s16
    // Predicated region
    $region61: #{transform_forward.3} parent=5 // pred_check
      %p2975 = pneg %p2974
    $region62: #{transform_forward.3} parent=5 // pred_check_branch
      %2977 = sbr.rel (%p2975) target = $region64
    $region63: #{transform_forward.3} parent=5 // pred_region
      %s2978 = ssub.s32 %s16, 2
      // Predicated region
      $region65: #{transform_forward.3} parent=63 // pred_check
        %p2979 = pneg %p244
      $region66: #{transform_forward.3} parent=63 // pred_check_branch
        %2981 = sbr.rel (%p2979) target = $region68
      $region67: #{transform_forward.3} parent=63 // pred_region
        %p2982 = scmp.lt.s32.totalorder %s22, 1
        %s2983 = scalar_select %p2982, %s22, 1
        %s2984 = smul.addr %s2983, 32
        %s2985 = smul.addr %s2984, 8
        %s2986 = scalar_lea.vmem %s9, %s2985
      $region68: #{transform_forward.3} parent=63 // pred_fallthru
        _
    $region64: #{transform_forward.3} parent=5 // pred_fallthru
      _
  $region6: #{transform_forward.3} parent=0 // loop_footer
    %s20 = sadd.s32 1, %s16
  $region7: #{transform_forward.3} parent=0 // loop_footer_branch
    %15 = sbr.rel target = $region3
  $region8: #{transform_forward.3} parent=0 // loop_exit
    _

// kernel: transform_forward.4
$region0: #{transform_forward.4}
  #allocation0 [shape = 'u32[]', space=smem, size = 0x4, offset = 0x4, fixed_abs, tag = 'smem constant byte address 0x4 - core index']
  #allocation1 [shape = 'u32[144,128]{1,0:T(1,128)}', space=vmem, size = 0x12000, scoped, tag = 'internal scratch']
  #allocation2 [shape = 'f32[1]{0:T(128)S(6)}', space=smem, size = 0x200, scoped, tag = 'scoped memory for transform_forward.4']
  %s0 = inlined_call_operand.vmem [shape: f32[2,32,64], index: 0, kind: input, shape index: {}]
  %s1 = inlined_call_operand.vmem [shape: f32[2,64,32], index: 1, kind: input, shape index: {}]
  %s2 = inlined_call_operand.vmem [shape: f32[32,1], index: 2, kind: input, shape index: {}]
  %s3 = inlined_call_operand.<no memory space> [shape: f32[1], index: 3, kind: input, shape index: {}]
  %s4 = inlined_call_operand.vmem [shape: f32[32,64], index: 4, kind: input, shape index: {}]
  %s5 = inlined_call_operand.vmem [shape: f32[64,32], index: 5, kind: input, shape index: {}]
  %s6 = inlined_call_operand.vmem [shape: f32[64,32], index: 6, kind: input, shape index: {}]
  %s7 = inlined_call_operand.vmem [shape: f32[64,32], index: 7, kind: input, shape index: {}]
  %s8 = inlined_call_operand.vmem [shape: f32[64,32], index: 8, kind: input, shape index: {}]
  %s9 = inlined_call_operand.vmem [shape: f32[2,64,32], index: 9, kind: output, shape index: {}]
  %s10 = sld [smem:[#allocation0]]
  $region69: #{transform_forward.4} parent=0
    _
  %s12 = ssub.s32 1, %s10
  %s13 = scalar_select 0, %s12, %s10
  %14 = sst [smem:[#allocation2]] %s3
  loop: start=0, step=1, limit=4
  $region2: #{transform_forward.4} parent=0 // loop_pre_header
    _
  $region3: #{transform_forward.4} parent=0 // loop_header
    %s16 = sphi 0, %s20
    %p17 = scmp.ge.s32.totalorder %s16, 4
    %s26 = sphi 0, %s28
    %s29 = sphi 0, %s26
    %s30 = sphi 0, %s29
    %s46 = sphi 0, %s30
    %s52 = sphi 0, %s54
    %s55 = sphi 0, %s52
    %s56 = sphi 0, %s55
    %s72 = sphi 0, %s56
    %s76 = sphi 0, %s76
    %s78 = sphi 0, %s76
    %s79 = sphi 0, %s78
    %s93 = sphi 0, %s79
    %s97 = sphi 0, %s97
    %s99 = sphi 0, %s97
    %s100 = sphi 0, %s99
    %s114 = sphi 0, %s100
    %s118 = sphi 0, %s118
    %s120 = sphi 0, %s118
    %s121 = sphi 0, %s120
    %s135 = sphi 0, %s121
    %s139 = sphi 0, %s139
    %s141 = sphi 0, %s139
    %s142 = sphi 0, %s141
    %s156 = sphi 0, %s142
    %s160 = sphi 0, %s160
    %s162 = sphi 0, %s160
    %s163 = sphi 0, %s162
    %s177 = sphi 0, %s163
    %s181 = sphi 0, %s181
    %s183 = sphi 0, %s181
    %s184 = sphi 0, %s183
    %s198 = sphi 0, %s184
    %s202 = sphi 0, %s202
    %s204 = sphi 0, %s202
    %s205 = sphi 0, %s204
    %s219 = sphi 0, %s205
    %s225 = sphi 0, %s227
    %s228 = sphi 0, %s225
    %s229 = sphi 0, %s228
    %s245 = sphi 0, %s229
  $region4: #{transform_forward.4} parent=0 // loop_header_branch
    %19 = sbr.rel (%p17) target = $region8
  $region5: #{transform_forward.4} parent=0 // loop_body
    %s21 = ssub.s32 %s16, 1
    %s22 = ssub.s32 %s16, 2
    %s23 = sadd.s32 %s16, 1
    %s24 = ssub.s32 %s16, %s23
    %p25 = scmp.eq.s32.totalorder %s24, 0
    %s27 = sadd.s32 %s26, 1
    %s28 = scalar_select %p25, %s26, %s27
    %p31 = pneg %p25
    %p32 = scmp.eq.s32.totalorder %s16, 1
    %p33 = por %p31, %p32
    %p34 = scmp.ne.s32.totalorder %s26, %s29
    %p35 = scmp.eq.s32.totalorder %s16, 0
    %p36 = por %p34, %p35
    %p37 = scmp.ne.s32.totalorder %s26, %s29
    %p38 = scmp.eq.s32.totalorder %s21, 1
    %p39 = por %p37, %p38
    %p40 = scmp.ne.s32.totalorder %s29, %s30
    %p41 = scmp.eq.s32.totalorder %s21, 0
    %p42 = por %p40, %p41
    %p43 = scmp.ne.s32.totalorder %s29, %s30
    %p44 = scmp.eq.s32.totalorder %s22, 1
    %p45 = por %p43, %p44
    %p47 = scmp.ne.s32.totalorder %s30, %s46
    %p48 = scmp.eq.s32.totalorder %s22, 0
    %p49 = por %p47, %p48
    %s50 = ssub.s32 %s16, %s23
    %p51 = scmp.eq.s32.totalorder %s50, 0
    %s53 = sadd.s32 %s52, 1
    %s54 = scalar_select %p51, %s52, %s53
    %p57 = pneg %p51
    %p58 = scmp.eq.s32.totalorder %s16, 1
    %p59 = por %p57, %p58
    %p60 = scmp.ne.s32.totalorder %s52, %s55
    %p61 = scmp.eq.s32.totalorder %s16, 0
    %p62 = por %p60, %p61
    %p63 = scmp.ne.s32.totalorder %s52, %s55
    %p64 = scmp.eq.s32.totalorder %s21, 1
    %p65 = por %p63, %p64
    %p66 = scmp.ne.s32.totalorder %s55, %s56
    %p67 = scmp.eq.s32.totalorder %s21, 0
    %p68 = por %p66, %p67
    %p69 = scmp.ne.s32.totalorder %s55, %s56
    %p70 = scmp.eq.s32.totalorder %s22, 1
    %p71 = por %p69, %p70
    %p73 = scmp.ne.s32.totalorder %s56, %s72
    %p74 = scmp.eq.s32.totalorder %s22, 0
    %p75 = por %p73, %p74
    %s77 = sadd.s32 %s76, 1
    %p80 = scmp.eq.s32.totalorder %s16, 1
    %p81 = scmp.ne.s32.totalorder %s76, %s78
    %p82 = scmp.eq.s32.totalorder %s16, 0
    %p83 = por %p81, %p82
    %p84 = scmp.ne.s32.totalorder %s76, %s78
    %p85 = scmp.eq.s32.totalorder %s21, 1
    %p86 = por %p84, %p85
    %p87 = scmp.ne.s32.totalorder %s78, %s79
    %p88 = scmp.eq.s32.totalorder %s21, 0
    %p89 = por %p87, %p88
    %p90 = scmp.ne.s32.totalorder %s78, %s79
    %p91 = scmp.eq.s32.totalorder %s22, 1
    %p92 = por %p90, %p91
    %p94 = scmp.ne.s32.totalorder %s79, %s93
    %p95 = scmp.eq.s32.totalorder %s22, 0
    %p96 = por %p94, %p95
    %s98 = sadd.s32 %s97, 1
    %p101 = scmp.eq.s32.totalorder %s16, 1
    %p102 = scmp.ne.s32.totalorder %s97, %s99
    %p103 = scmp.eq.s32.totalorder %s16, 0
    %p104 = por %p102, %p103
    %p105 = scmp.ne.s32.totalorder %s97, %s99
    %p106 = scmp.eq.s32.totalorder %s21, 1
    %p107 = por %p105, %p106
    %p108 = scmp.ne.s32.totalorder %s99, %s100
    %p109 = scmp.eq.s32.totalorder %s21, 0
    %p110 = por %p108, %p109
    %p111 = scmp.ne.s32.totalorder %s99, %s100
    %p112 = scmp.eq.s32.totalorder %s22, 1
    %p113 = por %p111, %p112
    %p115 = scmp.ne.s32.totalorder %s100, %s114
    %p116 = scmp.eq.s32.totalorder %s22, 0
    %p117 = por %p115, %p116
    %s119 = sadd.s32 %s118, 1
    %p122 = scmp.eq.s32.totalorder %s16, 1
    %p123 = scmp.ne.s32.totalorder %s118, %s120
    %p124 = scmp.eq.s32.totalorder %s16, 0
    %p125 = por %p123, %p124
    %p126 = scmp.ne.s32.totalorder %s118, %s120
    %p127 = scmp.eq.s32.totalorder %s21, 1
    %p128 = por %p126, %p127
    %p129 = scmp.ne.s32.totalorder %s120, %s121
    %p130 = scmp.eq.s32.totalorder %s21, 0
    %p131 = por %p129, %p130
    %p132 = scmp.ne.s32.totalorder %s120, %s121
    %p133 = scmp.eq.s32.totalorder %s22, 1
    %p134 = por %p132, %p133
    %p136 = scmp.ne.s32.totalorder %s121, %s135
    %p137 = scmp.eq.s32.totalorder %s22, 0
    %p138 = por %p136, %p137
    %s140 = sadd.s32 %s139, 1
    %p143 = scmp.eq.s32.totalorder %s16, 1
    %p144 = scmp.ne.s32.totalorder %s139, %s141
    %p145 = scmp.eq.s32.totalorder %s16, 0
    %p146 = por %p144, %p145
    %p147 = scmp.ne.s32.totalorder %s139, %s141
    %p148 = scmp.eq.s32.totalorder %s21, 1
    %p149 = por %p147, %p148
    %p150 = scmp.ne.s32.totalorder %s141, %s142
    %p151 = scmp.eq.s32.totalorder %s21, 0
    %p152 = por %p150, %p151
    %p153 = scmp.ne.s32.totalorder %s141, %s142
    %p154 = scmp.eq.s32.totalorder %s22, 1
    %p155 = por %p153, %p154
    %p157 = scmp.ne.s32.totalorder %s142, %s156
    %p158 = scmp.eq.s32.totalorder %s22, 0
    %p159 = por %p157, %p158
    %s161 = sadd.s32 %s160, 1
    %p164 = scmp.eq.s32.totalorder %s16, 1
    %p165 = scmp.ne.s32.totalorder %s160, %s162
    %p166 = scmp.eq.s32.totalorder %s16, 0
    %p167 = por %p165, %p166
    %p168 = scmp.ne.s32.totalorder %s160, %s162
    %p169 = scmp.eq.s32.totalorder %s21, 1
    %p170 = por %p168, %p169
    %p171 = scmp.ne.s32.totalorder %s162, %s163
    %p172 = scmp.eq.s32.totalorder %s21, 0
    %p173 = por %p171, %p172
    %p174 = scmp.ne.s32.totalorder %s162, %s163
    %p175 = scmp.eq.s32.totalorder %s22, 1
    %p176 = por %p174, %p175
    %p178 = scmp.ne.s32.totalorder %s163, %s177
    %p179 = scmp.eq.s32.totalorder %s22, 0
    %p180 = por %p178, %p179
    %s182 = sadd.s32 %s181, 1
    %p185 = scmp.eq.s32.totalorder %s16, 1
    %p186 = scmp.ne.s32.totalorder %s181, %s183
    %p187 = scmp.eq.s32.totalorder %s16, 0
    %p188 = por %p186, %p187
    %p189 = scmp.ne.s32.totalorder %s181, %s183
    %p190 = scmp.eq.s32.totalorder %s21, 1
    %p191 = por %p189, %p190
    %p192 = scmp.ne.s32.totalorder %s183, %s184
    %p193 = scmp.eq.s32.totalorder %s21, 0
    %p194 = por %p192, %p193
    %p195 = scmp.ne.s32.totalorder %s183, %s184
    %p196 = scmp.eq.s32.totalorder %s22, 1
    %p197 = por %p195, %p196
    %p199 = scmp.ne.s32.totalorder %s184, %s198
    %p200 = scmp.eq.s32.totalorder %s22, 0
    %p201 = por %p199, %p200
    %s203 = sadd.s32 %s202, 1
    %p206 = scmp.eq.s32.totalorder %s16, 1
    %p207 = scmp.ne.s32.totalorder %s202, %s204
    %p208 = scmp.eq.s32.totalorder %s16, 0
    %p209 = por %p207, %p208
    %p210 = scmp.ne.s32.totalorder %s202, %s204
    %p211 = scmp.eq.s32.totalorder %s21, 1
    %p212 = por %p210, %p211
    %p213 = scmp.ne.s32.totalorder %s204, %s205
    %p214 = scmp.eq.s32.totalorder %s21, 0
    %p215 = por %p213, %p214
    %p216 = scmp.ne.s32.totalorder %s204, %s205
    %p217 = scmp.eq.s32.totalorder %s22, 1
    %p218 = por %p216, %p217
    %p220 = scmp.ne.s32.totalorder %s205, %s219
    %p221 = scmp.eq.s32.totalorder %s22, 0
    %p222 = por %p220, %p221
    %s223 = ssub.s32 %s16, %s23
    %p224 = scmp.eq.s32.totalorder %s223, 0
    %s226 = sadd.s32 %s225, 1
    %s227 = scalar_select %p224, %s225, %s226
    %p230 = pneg %p224
    %p231 = scmp.eq.s32.totalorder %s16, 1
    %p232 = por %p230, %p231
    %p233 = scmp.ne.s32.totalorder %s225, %s228
    %p234 = scmp.eq.s32.totalorder %s16, 0
    %p235 = por %p233, %p234
    %p236 = scmp.ne.s32.totalorder %s225, %s228
    %p237 = scmp.eq.s32.totalorder %s21, 1
    %p238 = por %p236, %p237
    %p239 = scmp.ne.s32.totalorder %s228, %s229
    %p240 = scmp.eq.s32.totalorder %s21, 0
    %p241 = por %p239, %p240
    %p242 = scmp.ne.s32.totalorder %s228, %s229
    %p243 = scmp.eq.s32.totalorder %s22, 1
    %p244 = por %p242, %p243
    %p246 = scmp.ne.s32.totalorder %s229, %s245
    %p247 = scmp.eq.s32.totalorder %s22, 0
    %p248 = por %p246, %p247
    %p249 = scmp.le.s32.totalorder 1, %s16
    %p250 = scmp.lt.s32.totalorder %s16, 3
    %p251 = pnand %p249, %p250
    %p252 = pneg %p251
    // Predicated region
    $region9: #{transform_forward.4} parent=5 // pred_check
      _
    $region10: #{transform_forward.4} parent=5 // pred_check_branch
      %254 = sbr.rel (%p251) target = $region12
    $region11: #{transform_forward.4} parent=5 // pred_region
      %s255 = ssub.s32 %s16, 1
      // Predicated region
      $region13: #{transform_forward.4} parent=11 // pred_check
        %p256 = pneg %p89
      $region14: #{transform_forward.4} parent=11 // pred_check_branch
        %258 = sbr.rel (%p256) target = $region16
      $region15: #{transform_forward.4} parent=11 // pred_region
        _
      $region16: #{transform_forward.4} parent=11 // pred_fallthru
        _
      // Predicated region
      $region17: #{transform_forward.4} parent=11 // pred_check
        %p259 = pneg %p110
      $region18: #{transform_forward.4} parent=11 // pred_check_branch
        %261 = sbr.rel (%p259) target = $region20
      $region19: #{transform_forward.4} parent=11 // pred_region
        _
      $region20: #{transform_forward.4} parent=11 // pred_fallthru
        _
      // Predicated region
      $region21: #{transform_forward.4} parent=11 // pred_check
        %p262 = pneg %p131
      $region22: #{transform_forward.4} parent=11 // pred_check_branch
        %264 = sbr.rel (%p262) target = $region24
      $region23: #{transform_forward.4} parent=11 // pred_region
        _
      $region24: #{transform_forward.4} parent=11 // pred_fallthru
        _
      // Predicated region
      $region25: #{transform_forward.4} parent=11 // pred_check
        %p265 = pneg %p152
      $region26: #{transform_forward.4} parent=11 // pred_check_branch
        %267 = sbr.rel (%p265) target = $region28
      $region27: #{transform_forward.4} parent=11 // pred_region
        _
      $region28: #{transform_forward.4} parent=11 // pred_fallthru
        _
      // Predicated region
      $region29: #{transform_forward.4} parent=11 // pred_check
        %p268 = pneg %p173
      $region30: #{transform_forward.4} parent=11 // pred_check_branch
        %270 = sbr.rel (%p268) target = $region32
      $region31: #{transform_forward.4} parent=11 // pred_region
        _
      $region32: #{transform_forward.4} parent=11 // pred_fallthru
        _
      // Predicated region
      $region33: #{transform_forward.4} parent=11 // pred_check
        %p271 = pneg %p194
      $region34: #{transform_forward.4} parent=11 // pred_check_branch
        %273 = sbr.rel (%p271) target = $region36
      $region35: #{transform_forward.4} parent=11 // pred_region
        _
      $region36: #{transform_forward.4} parent=11 // pred_fallthru
        _
      // Predicated region
      $region37: #{transform_forward.4} parent=11 // pred_check
        %p274 = pneg %p215
      $region38: #{transform_forward.4} parent=11 // pred_check_branch
        %276 = sbr.rel (%p274) target = $region40
      $region39: #{transform_forward.4} parent=11 // pred_region
        _
      $region40: #{transform_forward.4} parent=11 // pred_fallthru
        _
    $region12: #{transform_forward.4} parent=5 // pred_fallthru
      _
    %p277 = scmp.lt.s32.totalorder %s16, 2
    // Predicated region
    $region41: #{transform_forward.4} parent=5 // pred_check
      %p278 = pneg %p277
    $region42: #{transform_forward.4} parent=5 // pred_check_branch
      %280 = sbr.rel (%p278) target = $region44
    $region43: #{transform_forward.4} parent=5 // pred_region
      // Predicated region
      $region45: #{transform_forward.4} parent=43 // pred_check
        %p281 = pneg %p36
      $region46: #{transform_forward.4} parent=43 // pred_check_branch
        %283 = sbr.rel (%p281) target = $region48
      $region47: #{transform_forward.4} parent=43 // pred_region
        %p284 = scmp.lt.s32.totalorder %s16, 1
        %s285 = scalar_select %p284, %s16, 1
        %s286 = smul.addr %s285, 4
        %s287 = smul.addr %s286, 8
        %s288 = scalar_lea.vmem %s0, %s287
      $region48: #{transform_forward.4} parent=43 // pred_fallthru
        _
      // Predicated region
      $region49: #{transform_forward.4} parent=43 // pred_check
        %p289 = pneg %p62
      $region50: #{transform_forward.4} parent=43 // pred_check_branch
        %291 = sbr.rel (%p289) target = $region52
      $region51: #{transform_forward.4} parent=43 // pred_region
        %p292 = scmp.lt.s32.totalorder %s16, 1
        %s293 = scalar_select %p292, %s16, 1
        %s294 = smul.addr %s293, 8
        %s295 = smul.addr %s294, 8
        %s296 = scalar_lea.vmem %s1, %s295
      $region52: #{transform_forward.4} parent=43 // pred_fallthru
        _
    $region44: #{transform_forward.4} parent=5 // pred_fallthru
      _
    %p297 = scmp.le.s32.totalorder 1, %s16
    %p298 = scmp.lt.s32.totalorder %s16, 3
    %p299 = pnand %p297, %p298
    %p300 = pneg %p299
    // Predicated region
    $region53: #{transform_forward.4} parent=5 // pred_check
      _
    $region54: #{transform_forward.4} parent=5 // pred_check_branch
      %302 = sbr.rel (%p299) target = $region56
    $region55: #{transform_forward.4} parent=5 // pred_region
      %s303 = ssub.s32 %s16, 1
      %p304 = scmp.lt.s32.totalorder %s21, 1
      %s305 = scalar_select %p304, %s21, 1
      %s306 = smul.addr %s305, 4
      %s307 = smul.addr %s306, 8
      %s308 = scalar_lea.vmem %s0, %s307
      %p309 = pneg %p42
      %p310 = pneg %p39
      %p311 = scmp.lt.s32.totalorder %s21, 1
      %s312 = scalar_select %p311, %s21, 1
      %s313 = smul.addr %s312, 8
      %s314 = smul.addr %s313, 8
      %s315 = scalar_lea.vmem %s1, %s314
      %p316 = pneg %p68
      %p317 = pneg %p65
      %p318 = pneg %p89
      %p319 = pneg %p86
      %p320 = pneg %p110
      %p321 = pneg %p107
      %p322 = pneg %p131
      %p323 = pneg %p128
      %p324 = pneg %p152
      %p325 = pneg %p149
      %p326 = pneg %p173
      %p327 = pneg %p170
      %p328 = pneg %p194
      %p329 = pneg %p191
      %p330 = pneg %p215
      %p331 = pneg %p212
      %p332 = pneg %p241
      %p333 = pneg %p238
      %p334 = scmp.lt.s32.totalorder %s21, 1
      %s335 = scalar_select %p334, %s21, 1
      %s336 = smul.addr %s335, 8
      %s337 = smul.addr %s336, 8
      %s338 = scalar_lea.vmem %s9, %s337
      %p339 = scmp.lt.s32.totalorder %s21, 1
      %s340 = scalar_select %p339, %s21, 1
      %s341 = smul.addr %s340, 4
      %s342 = smul.addr %s341, 8
      %s343 = scalar_lea.vmem %s0, %s342
      %p344 = scmp.lt.s32.totalorder %s21, 1
      %s345 = scalar_select %p344, %s21, 1
      %s346 = smul.addr %s345, 8
      %s347 = smul.addr %s346, 8
      %s348 = scalar_lea.vmem %s1, %s347
      %p349 = scmp.lt.s32.totalorder %s21, 1
      %s350 = scalar_select %p349, %s21, 1
      %s351 = smul.addr %s350, 8
      %s352 = smul.addr %s351, 8
      %s353 = scalar_lea.vmem %s9, %s352
      %v354 = vld [vmem:[%s343] sm:$0xff]
      %v355 = vld [vmem:[%s343 + $0x8] sm:$0xff]
      %v356 = vld [vmem:[%s343 + $0x10] sm:$0xff]
      %v357 = vld [vmem:[%s343 + $0x18] sm:$0xff]
      %vm358 = vcmask 523264
      %v359 = vsel %vm358, %v354, 0.0
      %360 = vadd.xlane.f32.xlu0 %v359
      %v361 = vpop.xlane.xlu0 %360
      %v362 = vsel %vm358, %v355, 0.0
      %363 = vadd.xlane.f32.xlu0 %v362
      %v364 = vpop.xlane.xlu0 %363
      %v365 = vsel %vm358, %v356, 0.0
      %366 = vadd.xlane.f32.xlu0 %v365
      %v367 = vpop.xlane.xlu0 %366
      %v368 = vsel %vm358, %v357, 0.0
      %369 = vadd.xlane.f32.xlu0 %v368
      %v370 = vpop.xlane.xlu0 %369
      %v371 = vrcp.pop 64.0
      %v372 = vmul.f32 %v361, %v371
      %v373 = vmul.f32 %v364, %v371
      %v374 = vmul.f32 %v367, %v371
      %v375 = vmul.f32 %v370, %v371
      %v376 = vsub.f32 %v354, %v372
      %v377 = vsub.f32 %v355, %v373
      %v378 = vsub.f32 %v356, %v374
      %v379 = vsub.f32 %v357, %v375
      %v380 = vmul.f32 %v376, %v376
      %v381 = vmul.f32 %v377, %v377
      %v382 = vmul.f32 %v378, %v378
      %v383 = vmul.f32 %v379, %v379
      %v384 = vsel %vm358, %v380, 0.0
      %385 = vadd.xlane.f32.xlu0 %v384
      %v386 = vpop.xlane.xlu0 %385
      %v387 = vsel %vm358, %v381, 0.0
      %388 = vadd.xlane.f32.xlu0 %v387
      %v389 = vpop.xlane.xlu0 %388
      %v390 = vsel %vm358, %v382, 0.0
      %391 = vadd.xlane.f32.xlu0 %v390
      %v392 = vpop.xlane.xlu0 %391
      %v393 = vsel %vm358, %v383, 0.0
      %394 = vadd.xlane.f32.xlu0 %v393
      %v395 = vpop.xlane.xlu0 %394
      %v396 = vmul.f32 %v386, 0.015873017
      %v397 = vmul.f32 %v389, 0.015873017
      %v398 = vmul.f32 %v392, 0.015873017
      %v399 = vmul.f32 %v395, 0.015873017
      %v400 = vadd.f32 %v396, 1e-05
      %v401 = vadd.f32 %v397, 1e-05
      %v402 = vadd.f32 %v398, 1e-05
      %v403 = vadd.f32 %v399, 1e-05
      %v404 = vrsqrt.pop %v400
      %v405 = vrsqrt.pop %v401
      %v406 = vrsqrt.pop %v402
      %v407 = vrsqrt.pop %v403
      %v408 = vmul.f32 %v376, %v404
      %v409 = vmul.f32 %v377, %v405
      %v410 = vmul.f32 %v378, %v406
      %v411 = vmul.f32 %v379, %v407
      %v412 = vld [vmem:[%s2] sm:$0xff]
      %v413 = vld [vmem:[%s2 + $0x8] sm:$0xff]
      %v414 = vld [vmem:[%s2 + $0x10] sm:$0xff]
      %v415 = vld [vmem:[%s2 + $0x18] sm:$0xff]
      %417 = vset.pattern.permute.xlu0 0
      %418 = vperm.xlu0 %417, %v412
      %v419 = vpop.permute.xlu0 %418
      %422 = vset.pattern.permute.xlu0 0
      %423 = vperm.xlu0 %422, %v413
      %v424 = vpop.permute.xlu0 %423
      %427 = vset.pattern.permute.xlu0 0
      %428 = vperm.xlu0 %427, %v414
      %v429 = vpop.permute.xlu0 %428
      %432 = vset.pattern.permute.xlu0 0
      %433 = vperm.xlu0 %432, %v415
      %v434 = vpop.permute.xlu0 %433
      %v436 = vmul.f32 %v408, %v419
      %v437 = vmul.f32 %v409, %v424
      %v438 = vmul.f32 %v410, %v429
      %v439 = vmul.f32 %v411, %v434
      %v440 = vsel %vm358, %v436, 0.0
      %v441 = vsel %vm358, %v437, 0.0
      %v442 = vadd.f32 %v440, %v441
      %v443 = vsel %vm358, %v438, 0.0
      %v444 = vadd.f32 %v442, %v443
      %v445 = vsel %vm358, %v439, 0.0
      %v446 = vadd.f32 %v444, %v445
      %v447 = vrot.slane %v446, 4
      %v448 = vadd.f32 %v446, %v447
      %v449 = vrot.slane %v448, 2
      %v450 = vadd.f32 %v448, %v449
      %v451 = vrot.slane %v450, 1
      %v452 = vadd.f32 %v450, %v451
      %s453 = sld [smem:[#allocation2]]
      %v454 = vstv %s453
      %v455 = vadd.f32 %v452, %v454
      %v456 = vsel %vm358, %v455, -inf
      %457 = vmax.xlane.f32.xlu0 %v456
      %v458 = vpop.xlane.xlu0 %457
      %v459 = vsub.f32 %v455, %v458
      %v460 = vmul.f32 %v459, 1.442695
      %v461 = vpow.pop %v460
      %v462 = vsel %vm358, %v461, 0.0
      %463 = vadd.xlane.f32.xlu0 %v462
      %v464 = vpop.xlane.xlu0 %463
      %v465 = vrcp.pop %v464
      %v466 = vmul.f32 %v461, %v465
      %v467 = vmul.f32 %v354, %v466
      %v468 = vmul.f32 %v355, %v466
      %v469 = vmul.f32 %v356, %v466
      %v470 = vmul.f32 %v357, %v466
      %v471 = vsel %vm358, %v467, 0.0
      %472 = vadd.xlane.f32.xlu0 %v471
      %v473 = vpop.xlane.xlu0 %472
      %v474 = vsel %vm358, %v468, 0.0
      %475 = vadd.xlane.f32.xlu0 %v474
      %v476 = vpop.xlane.xlu0 %475
      %v477 = vsel %vm358, %v469, 0.0
      %478 = vadd.xlane.f32.xlu0 %v477
      %v479 = vpop.xlane.xlu0 %478
      %v480 = vsel %vm358, %v470, 0.0
      %481 = vadd.xlane.f32.xlu0 %v480
      %v482 = vpop.xlane.xlu0 %481
      %v483 = vld [vmem:[%s6] sm:$0xff]
      %v484 = vld [vmem:[%s6 + $0x8] sm:$0xff]
      %v485 = vld [vmem:[%s6 + $0x10] sm:$0xff]
      %v486 = vld [vmem:[%s6 + $0x18] sm:$0xff]
      %v487 = vld [vmem:[%s6 + $0x20] sm:$0xff]
      %v488 = vld [vmem:[%s6 + $0x28] sm:$0xff]
      %v489 = vld [vmem:[%s6 + $0x30] sm:$0xff]
      %v490 = vld [vmem:[%s6 + $0x38] sm:$0xff]
      %vm491 = vcmask 261120
      %v493 = vsel %vm491, %v483, 0
      %v496 = vsel %vm491, %v484, 0
      %v499 = vsel %vm491, %v485, 0
      %v502 = vsel %vm491, %v486, 0
      %v505 = vsel %vm491, %v487, 0
      %v508 = vsel %vm491, %v488, 0
      %v511 = vsel %vm491, %v489, 0
      %v514 = vsel %vm491, %v490, 0
      %516 = vmatprep.subr.mxu0 0.0
      %517 = vmatpush1.msra.mxu0 0.0
      %518 = vmatprep.subr.mxu0 0.0
      %519 = vmatpush1.msra.mxu0 0.0
      %520 = vmatprep.subr.mxu0 0.0
      %521 = vmatpush1.msra.mxu0 0.0
      %522 = vmatprep.subr.mxu0 0.0
      %523 = vmatpush1.msra.mxu0 0.0
      %524 = vmatprep.subr.mxu0 0.0
      %525 = vmatpush1.msra.mxu0 0.0
      %526 = vmatprep.subr.mxu0 0.0
      %527 = vmatpush1.msra.mxu0 0.0
      %528 = vmatprep.subr.mxu0 0.0
      %529 = vmatpush1.msra.mxu0 0.0
      %530 = vmatprep.subr.mxu0 0.0
      %531 = vmatpush1.msra.mxu0 0.0
      %532 = vmatprep.subr.mxu0 0.0
      %533 = vmatpush1.msra.mxu0 0.0
      %534 = vmatprep.subr.mxu0 0.0
      %535 = vmatpush1.msra.mxu0 0.0
      %536 = vmatprep.subr.mxu0 0.0
      %537 = vmatpush1.msra.mxu0 0.0
      %538 = vmatprep.subr.mxu0 0.0
      %539 = vmatpush1.msra.mxu0 0.0
      %540 = vmatprep.subr.mxu0 0.0
      %541 = vmatpush1.msra.mxu0 %v482
      %542 = vmatprep.subr.mxu0 0.0
      %543 = vmatpush1.msra.mxu0 %v479
      %544 = vmatprep.subr.mxu0 0.0
      %545 = vmatpush1.msra.mxu0 %v476
      %546 = vmatprep.subr.mxu0 0.0
      %547 = vmatpush1.msra.mxu0 %v473
      %548 = vmatprep.subr.mxu0 0.0
      %549 = vmatpush2.msra.mxu0 0.0
      %550 = vmatprep.subr.mxu0 0.0
      %551 = vmatpush2.msra.mxu0 0.0
      %552 = vmatprep.subr.mxu0 0.0
      %553 = vmatpush2.msra.mxu0 0.0
      %554 = vmatprep.subr.mxu0 0.0
      %555 = vmatpush2.msra.mxu0 0.0
      %556 = vmatprep.subr.mxu0 0.0
      %557 = vmatpush2.msra.mxu0 0.0
      %558 = vmatprep.subr.mxu0 0.0
      %559 = vmatpush2.msra.mxu0 0.0
      %560 = vmatprep.subr.mxu0 0.0
      %561 = vmatpush2.msra.mxu0 0.0
      %562 = vmatprep.subr.mxu0 0.0
      %563 = vmatpush2.msra.mxu0 0.0
      %564 = vmatprep.subr.mxu0 0.0
      %565 = vmatpush2.msra.mxu0 0.0
      %566 = vmatprep.subr.mxu0 0.0
      %567 = vmatpush2.msra.mxu0 0.0
      %568 = vmatprep.subr.mxu0 0.0
      %569 = vmatpush2.msra.mxu0 0.0
      %570 = vmatprep.subr.mxu0 0.0
      %571 = vmatpush2.msra.mxu0 0.0
      %572 = vmatprep.subr.mxu0 0.0
      %573 = vmatpush2.msra.mxu0 0.0
      %574 = vmatprep.subr.mxu0 0.0
      %575 = vmatpush2.msra.mxu0 0.0
      %576 = vmatprep.subr.mxu0 0.0
      %577 = vmatpush2.msra.mxu0 0.0
      %578 = vmatprep.subr.mxu0 0.0
      %579 = vmatpush2.msra.mxu0 0.0
      %580 = vmatprep.mubr.f32.mxu0 0.0
      %581 = vmatmul.mubr.f32.gmra.mxu0 %v493
      %v582 = vpop.f32.mrf.mxu0
      %v583 = vadd.f32 0.0, %v582
      %v584 = vpop.f32.mrf.mxu0
      %585 = vmatprep.mubr.f32.mxu0 0.0
      %586 = vmatmul.mubr.f32.gmra.mxu0 %v496
      %v587 = vpop.f32.mrf.mxu0
      %v588 = vadd.f32 0.0, %v587
      %v589 = vpop.f32.mrf.mxu0
      %590 = vmatprep.mubr.f32.mxu0 0.0
      %591 = vmatmul.mubr.f32.gmra.mxu0 %v499
      %v592 = vpop.f32.mrf.mxu0
      %v593 = vadd.f32 0.0, %v592
      %v594 = vpop.f32.mrf.mxu0
      %595 = vmatprep.mubr.f32.mxu0 0.0
      %596 = vmatmul.mubr.f32.gmra.mxu0 %v502
      %v597 = vpop.f32.mrf.mxu0
      %v598 = vadd.f32 0.0, %v597
      %v599 = vpop.f32.mrf.mxu0
      %600 = vmatprep.mubr.f32.mxu0 0.0
      %601 = vmatmul.mubr.f32.gmra.mxu0 %v505
      %v602 = vpop.f32.mrf.mxu0
      %v603 = vadd.f32 0.0, %v602
      %v604 = vpop.f32.mrf.mxu0
      %605 = vmatprep.mubr.f32.mxu0 0.0
      %606 = vmatmul.mubr.f32.gmra.mxu0 %v508
      %v607 = vpop.f32.mrf.mxu0
      %v608 = vadd.f32 0.0, %v607
      %v609 = vpop.f32.mrf.mxu0
      %610 = vmatprep.mubr.f32.mxu0 0.0
      %611 = vmatmul.mubr.f32.gmra.mxu0 %v511
      %v612 = vpop.f32.mrf.mxu0
      %v613 = vadd.f32 0.0, %v612
      %v614 = vpop.f32.mrf.mxu0
      %615 = vmatprep.mubr.f32.mxu0 0.0
      %616 = vmatmul.mubr.f32.gmra.mxu0 %v514
      %v617 = vpop.f32.mrf.mxu0
      %v618 = vadd.f32 0.0, %v617
      %v619 = vpop.f32.mrf.mxu0
      %620 = vdwg.mxu0
      %v621 = vld [vmem:[%s7] sm:$0xff]
      %v622 = vld [vmem:[%s7 + $0x8] sm:$0xff]
      %v623 = vld [vmem:[%s7 + $0x10] sm:$0xff]
      %v624 = vld [vmem:[%s7 + $0x18] sm:$0xff]
      %v625 = vld [vmem:[%s7 + $0x20] sm:$0xff]
      %v626 = vld [vmem:[%s7 + $0x28] sm:$0xff]
      %v627 = vld [vmem:[%s7 + $0x30] sm:$0xff]
      %v628 = vld [vmem:[%s7 + $0x38] sm:$0xff]
      %v630 = vsel %vm491, %v621, 0
      %v633 = vsel %vm491, %v622, 0
      %v636 = vsel %vm491, %v623, 0
      %v639 = vsel %vm491, %v624, 0
      %v642 = vsel %vm491, %v625, 0
      %v645 = vsel %vm491, %v626, 0
      %v648 = vsel %vm491, %v627, 0
      %v651 = vsel %vm491, %v628, 0
      %653 = vmatprep.subr.mxu0 0.0
      %654 = vmatpush1.msra.mxu0 0.0
      %655 = vmatprep.subr.mxu0 0.0
      %656 = vmatpush1.msra.mxu0 0.0
      %657 = vmatprep.subr.mxu0 0.0
      %658 = vmatpush1.msra.mxu0 0.0
      %659 = vmatprep.subr.mxu0 0.0
      %660 = vmatpush1.msra.mxu0 0.0
      %661 = vmatprep.subr.mxu0 0.0
      %662 = vmatpush1.msra.mxu0 0.0
      %663 = vmatprep.subr.mxu0 0.0
      %664 = vmatpush1.msra.mxu0 0.0
      %665 = vmatprep.subr.mxu0 0.0
      %666 = vmatpush1.msra.mxu0 0.0
      %667 = vmatprep.subr.mxu0 0.0
      %668 = vmatpush1.msra.mxu0 0.0
      %669 = vmatprep.subr.mxu0 0.0
      %670 = vmatpush1.msra.mxu0 0.0
      %671 = vmatprep.subr.mxu0 0.0
      %672 = vmatpush1.msra.mxu0 0.0
      %673 = vmatprep.subr.mxu0 0.0
      %674 = vmatpush1.msra.mxu0 0.0
      %675 = vmatprep.subr.mxu0 0.0
      %676 = vmatpush1.msra.mxu0 0.0
      %677 = vmatprep.subr.mxu0 0.0
      %678 = vmatpush1.msra.mxu0 %v482
      %679 = vmatprep.subr.mxu0 0.0
      %680 = vmatpush1.msra.mxu0 %v479
      %681 = vmatprep.subr.mxu0 0.0
      %682 = vmatpush1.msra.mxu0 %v476
      %683 = vmatprep.subr.mxu0 0.0
      %684 = vmatpush1.msra.mxu0 %v473
      %685 = vmatprep.subr.mxu0 0.0
      %686 = vmatpush2.msra.mxu0 0.0
      %687 = vmatprep.subr.mxu0 0.0
      %688 = vmatpush2.msra.mxu0 0.0
      %689 = vmatprep.subr.mxu0 0.0
      %690 = vmatpush2.msra.mxu0 0.0
      %691 = vmatprep.subr.mxu0 0.0
      %692 = vmatpush2.msra.mxu0 0.0
      %693 = vmatprep.subr.mxu0 0.0
      %694 = vmatpush2.msra.mxu0 0.0
      %695 = vmatprep.subr.mxu0 0.0
      %696 = vmatpush2.msra.mxu0 0.0
      %697 = vmatprep.subr.mxu0 0.0
      %698 = vmatpush2.msra.mxu0 0.0
      %699 = vmatprep.subr.mxu0 0.0
      %700 = vmatpush2.msra.mxu0 0.0
      %701 = vmatprep.subr.mxu0 0.0
      %702 = vmatpush2.msra.mxu0 0.0
      %703 = vmatprep.subr.mxu0 0.0
      %704 = vmatpush2.msra.mxu0 0.0
      %705 = vmatprep.subr.mxu0 0.0
      %706 = vmatpush2.msra.mxu0 0.0
      %707 = vmatprep.subr.mxu0 0.0
      %708 = vmatpush2.msra.mxu0 0.0
      %709 = vmatprep.subr.mxu0 0.0
      %710 = vmatpush2.msra.mxu0 0.0
      %711 = vmatprep.subr.mxu0 0.0
      %712 = vmatpush2.msra.mxu0 0.0
      %713 = vmatprep.subr.mxu0 0.0
      %714 = vmatpush2.msra.mxu0 0.0
      %715 = vmatprep.subr.mxu0 0.0
      %716 = vmatpush2.msra.mxu0 0.0
      %717 = vmatprep.mubr.f32.mxu0 0.0
      %718 = vmatmul.mubr.f32.gmra.mxu0 %v630
      %v719 = vpop.f32.mrf.mxu0
      %v720 = vadd.f32 0.0, %v719
      %v721 = vpop.f32.mrf.mxu0
      %722 = vmatprep.mubr.f32.mxu0 0.0
      %723 = vmatmul.mubr.f32.gmra.mxu0 %v633
      %v724 = vpop.f32.mrf.mxu0
      %v725 = vadd.f32 0.0, %v724
      %v726 = vpop.f32.mrf.mxu0
      %727 = vmatprep.mubr.f32.mxu0 0.0
      %728 = vmatmul.mubr.f32.gmra.mxu0 %v636
      %v729 = vpop.f32.mrf.mxu0
      %v730 = vadd.f32 0.0, %v729
      %v731 = vpop.f32.mrf.mxu0
      %732 = vmatprep.mubr.f32.mxu0 0.0
      %733 = vmatmul.mubr.f32.gmra.mxu0 %v639
      %v734 = vpop.f32.mrf.mxu0
      %v735 = vadd.f32 0.0, %v734
      %v736 = vpop.f32.mrf.mxu0
      %737 = vmatprep.mubr.f32.mxu0 0.0
      %738 = vmatmul.mubr.f32.gmra.mxu0 %v642
      %v739 = vpop.f32.mrf.mxu0
      %v740 = vadd.f32 0.0, %v739
      %v741 = vpop.f32.mrf.mxu0
      %742 = vmatprep.mubr.f32.mxu0 0.0
      %743 = vmatmul.mubr.f32.gmra.mxu0 %v645
      %v744 = vpop.f32.mrf.mxu0
      %v745 = vadd.f32 0.0, %v744
      %v746 = vpop.f32.mrf.mxu0
      %747 = vmatprep.mubr.f32.mxu0 0.0
      %748 = vmatmul.mubr.f32.gmra.mxu0 %v648
      %v749 = vpop.f32.mrf.mxu0
      %v750 = vadd.f32 0.0, %v749
      %v751 = vpop.f32.mrf.mxu0
      %752 = vmatprep.mubr.f32.mxu0 0.0
      %753 = vmatmul.mubr.f32.gmra.mxu0 %v651
      %v754 = vpop.f32.mrf.mxu0
      %v755 = vadd.f32 0.0, %v754
      %v756 = vpop.f32.mrf.mxu0
      %757 = vdwg.mxu0
      %v758 = vld [vmem:[%s8] sm:$0xff]
      %v759 = vld [vmem:[%s8 + $0x8] sm:$0xff]
      %v760 = vld [vmem:[%s8 + $0x10] sm:$0xff]
      %v761 = vld [vmem:[%s8 + $0x18] sm:$0xff]
      %v762 = vld [vmem:[%s8 + $0x20] sm:$0xff]
      %v763 = vld [vmem:[%s8 + $0x28] sm:$0xff]
      %v764 = vld [vmem:[%s8 + $0x30] sm:$0xff]
      %v765 = vld [vmem:[%s8 + $0x38] sm:$0xff]
      %v766 = vld [vmem:[%s348] sm:$0xff]
      %v767 = vld [vmem:[%s348 + $0x8] sm:$0xff]
      %v768 = vld [vmem:[%s348 + $0x10] sm:$0xff]
      %v769 = vld [vmem:[%s348 + $0x18] sm:$0xff]
      %v770 = vld [vmem:[%s348 + $0x20] sm:$0xff]
      %v771 = vld [vmem:[%s348 + $0x28] sm:$0xff]
      %v772 = vld [vmem:[%s348 + $0x30] sm:$0xff]
      %v773 = vld [vmem:[%s348 + $0x38] sm:$0xff]
      %775 = vset.pattern.permute.xlu0 0
      %776 = vperm.xlu0 %775, %v583
      %v777 = vpop.permute.xlu0 %776
      %780 = vset.pattern.permute.xlu0 0
      %781 = vperm.xlu0 %780, %v588
      %v782 = vpop.permute.xlu0 %781
      %785 = vset.pattern.permute.xlu0 0
      %786 = vperm.xlu0 %785, %v593
      %v787 = vpop.permute.xlu0 %786
      %790 = vset.pattern.permute.xlu0 0
      %791 = vperm.xlu0 %790, %v598
      %v792 = vpop.permute.xlu0 %791
      %795 = vset.pattern.permute.xlu0 0
      %796 = vperm.xlu0 %795, %v603
      %v797 = vpop.permute.xlu0 %796
      %800 = vset.pattern.permute.xlu0 0
      %801 = vperm.xlu0 %800, %v608
      %v802 = vpop.permute.xlu0 %801
      %805 = vset.pattern.permute.xlu0 0
      %806 = vperm.xlu0 %805, %v613
      %v807 = vpop.permute.xlu0 %806
      %810 = vset.pattern.permute.xlu0 0
      %811 = vperm.xlu0 %810, %v618
      %v812 = vpop.permute.xlu0 %811
      %v814 = vmul.f32 %v758, %v777
      %v815 = vmul.f32 %v759, %v782
      %v816 = vmul.f32 %v760, %v787
      %v817 = vmul.f32 %v761, %v792
      %v818 = vmul.f32 %v762, %v797
      %v819 = vmul.f32 %v763, %v802
      %v820 = vmul.f32 %v764, %v807
      %v821 = vmul.f32 %v765, %v812
      %v822 = vadd.f32 %v766, %v814
      %v823 = vadd.f32 %v767, %v815
      %v824 = vadd.f32 %v768, %v816
      %v825 = vadd.f32 %v769, %v817
      %v826 = vadd.f32 %v770, %v818
      %v827 = vadd.f32 %v771, %v819
      %v828 = vadd.f32 %v772, %v820
      %v829 = vadd.f32 %v773, %v821
      %v830 = vsub.f32 1.0, %v758
      %v831 = vsub.f32 1.0, %v759
      %v832 = vsub.f32 1.0, %v760
      %v833 = vsub.f32 1.0, %v761
      %v834 = vsub.f32 1.0, %v762
      %v835 = vsub.f32 1.0, %v763
      %v836 = vsub.f32 1.0, %v764
      %v837 = vsub.f32 1.0, %v765
      %839 = vset.pattern.permute.xlu0 0
      %840 = vperm.xlu0 %839, %v720
      %v841 = vpop.permute.xlu0 %840
      %844 = vset.pattern.permute.xlu0 0
      %845 = vperm.xlu0 %844, %v725
      %v846 = vpop.permute.xlu0 %845
      %849 = vset.pattern.permute.xlu0 0
      %850 = vperm.xlu0 %849, %v730
      %v851 = vpop.permute.xlu0 %850
      %854 = vset.pattern.permute.xlu0 0
      %855 = vperm.xlu0 %854, %v735
      %v856 = vpop.permute.xlu0 %855
      %859 = vset.pattern.permute.xlu0 0
      %860 = vperm.xlu0 %859, %v740
      %v861 = vpop.permute.xlu0 %860
      %864 = vset.pattern.permute.xlu0 0
      %865 = vperm.xlu0 %864, %v745
      %v866 = vpop.permute.xlu0 %865
      %869 = vset.pattern.permute.xlu0 0
      %870 = vperm.xlu0 %869, %v750
      %v871 = vpop.permute.xlu0 %870
      %874 = vset.pattern.permute.xlu0 0
      %875 = vperm.xlu0 %874, %v755
      %v876 = vpop.permute.xlu0 %875
      %v878 = vmul.f32 %v830, %v841
      %v879 = vmul.f32 %v831, %v846
      %v880 = vmul.f32 %v832, %v851
      %v881 = vmul.f32 %v833, %v856
      %v882 = vmul.f32 %v834, %v861
      %v883 = vmul.f32 %v835, %v866
      %v884 = vmul.f32 %v836, %v871
      %v885 = vmul.f32 %v837, %v876
      %v886 = vadd.f32 %v822, %v878
      %v887 = vadd.f32 %v823, %v879
      %v888 = vadd.f32 %v824, %v880
      %v889 = vadd.f32 %v825, %v881
      %v890 = vadd.f32 %v826, %v882
      %v891 = vadd.f32 %v827, %v883
      %v892 = vadd.f32 %v828, %v884
      %v893 = vadd.f32 %v829, %v885
      %v894 = vld [vmem:[%s4] sm:$0xff]
      %v895 = vld [vmem:[%s4 + $0x8] sm:$0xff]
      %v896 = vld [vmem:[%s4 + $0x10] sm:$0xff]
      %v897 = vld [vmem:[%s4 + $0x18] sm:$0xff]
      %v899 = vsel %vm491, %v886, 0
      %v902 = vsel %vm491, %v887, 0
      %v905 = vsel %vm491, %v888, 0
      %v908 = vsel %vm491, %v889, 0
      %v911 = vsel %vm491, %v890, 0
      %v914 = vsel %vm491, %v891, 0
      %v917 = vsel %vm491, %v892, 0
      %v920 = vsel %vm491, %v893, 0
      %922 = vmatprep.subr.mxu0 0.0
      %923 = vmatpush1.msra.mxu0 0.0
      %924 = vmatprep.subr.mxu0 0.0
      %925 = vmatpush1.msra.mxu0 0.0
      %926 = vmatprep.subr.mxu0 0.0
      %927 = vmatpush1.msra.mxu0 0.0
      %928 = vmatprep.subr.mxu0 0.0
      %929 = vmatpush1.msra.mxu0 0.0
      %930 = vmatprep.subr.mxu0 0.0
      %931 = vmatpush1.msra.mxu0 0.0
      %932 = vmatprep.subr.mxu0 0.0
      %933 = vmatpush1.msra.mxu0 0.0
      %934 = vmatprep.subr.mxu0 0.0
      %935 = vmatpush1.msra.mxu0 0.0
      %936 = vmatprep.subr.mxu0 0.0
      %937 = vmatpush1.msra.mxu0 0.0
      %938 = vmatprep.subr.mxu0 0.0
      %939 = vmatpush1.msra.mxu0 0.0
      %940 = vmatprep.subr.mxu0 0.0
      %941 = vmatpush1.msra.mxu0 0.0
      %942 = vmatprep.subr.mxu0 0.0
      %943 = vmatpush1.msra.mxu0 0.0
      %944 = vmatprep.subr.mxu0 0.0
      %945 = vmatpush1.msra.mxu0 0.0
      %946 = vmatprep.subr.mxu0 0.0
      %947 = vmatpush1.msra.mxu0 %v897
      %948 = vmatprep.subr.mxu0 0.0
      %949 = vmatpush1.msra.mxu0 %v896
      %950 = vmatprep.subr.mxu0 0.0
      %951 = vmatpush1.msra.mxu0 %v895
      %952 = vmatprep.subr.mxu0 0.0
      %953 = vmatpush1.msra.mxu0 %v894
      %954 = vmatprep.subr.mxu0 0.0
      %955 = vmatpush2.msra.mxu0 0.0
      %956 = vmatprep.subr.mxu0 0.0
      %957 = vmatpush2.msra.mxu0 0.0
      %958 = vmatprep.subr.mxu0 0.0
      %959 = vmatpush2.msra.mxu0 0.0
      %960 = vmatprep.subr.mxu0 0.0
      %961 = vmatpush2.msra.mxu0 0.0
      %962 = vmatprep.subr.mxu0 0.0
      %963 = vmatpush2.msra.mxu0 0.0
      %964 = vmatprep.subr.mxu0 0.0
      %965 = vmatpush2.msra.mxu0 0.0
      %966 = vmatprep.subr.mxu0 0.0
      %967 = vmatpush2.msra.mxu0 0.0
      %968 = vmatprep.subr.mxu0 0.0
      %969 = vmatpush2.msra.mxu0 0.0
      %970 = vmatprep.subr.mxu0 0.0
      %971 = vmatpush2.msra.mxu0 0.0
      %972 = vmatprep.subr.mxu0 0.0
      %973 = vmatpush2.msra.mxu0 0.0
      %974 = vmatprep.subr.mxu0 0.0
      %975 = vmatpush2.msra.mxu0 0.0
      %976 = vmatprep.subr.mxu0 0.0
      %977 = vmatpush2.msra.mxu0 0.0
      %978 = vmatprep.subr.mxu0 0.0
      %979 = vmatpush2.msra.mxu0 0.0
      %980 = vmatprep.subr.mxu0 0.0
      %981 = vmatpush2.msra.mxu0 0.0
      %982 = vmatprep.subr.mxu0 0.0
      %983 = vmatpush2.msra.mxu0 0.0
      %984 = vmatprep.subr.mxu0 0.0
      %985 = vmatpush2.msra.mxu0 0.0
      %986 = vmatprep.mubr.f32.mxu0 0.0
      %987 = vmatmul.mubr.f32.gmra.mxu0 %v899
      %v988 = vpop.f32.mrf.mxu0
      %v989 = vadd.f32 0.0, %v988
      %v990 = vpop.f32.mrf.mxu0
      %991 = vmatprep.mubr.f32.mxu0 0.0
      %992 = vmatmul.mubr.f32.gmra.mxu0 %v902
      %v993 = vpop.f32.mrf.mxu0
      %v994 = vadd.f32 0.0, %v993
      %v995 = vpop.f32.mrf.mxu0
      %996 = vmatprep.mubr.f32.mxu0 0.0
      %997 = vmatmul.mubr.f32.gmra.mxu0 %v905
      %v998 = vpop.f32.mrf.mxu0
      %v999 = vadd.f32 0.0, %v998
      %v1000 = vpop.f32.mrf.mxu0
      %1001 = vmatprep.mubr.f32.mxu0 0.0
      %1002 = vmatmul.mubr.f32.gmra.mxu0 %v908
      %v1003 = vpop.f32.mrf.mxu0
      %v1004 = vadd.f32 0.0, %v1003
      %v1005 = vpop.f32.mrf.mxu0
      %1006 = vmatprep.mubr.f32.mxu0 0.0
      %1007 = vmatmul.mubr.f32.gmra.mxu0 %v911
      %v1008 = vpop.f32.mrf.mxu0
      %v1009 = vadd.f32 0.0, %v1008
      %v1010 = vpop.f32.mrf.mxu0
      %1011 = vmatprep.mubr.f32.mxu0 0.0
      %1012 = vmatmul.mubr.f32.gmra.mxu0 %v914
      %v1013 = vpop.f32.mrf.mxu0
      %v1014 = vadd.f32 0.0, %v1013
      %v1015 = vpop.f32.mrf.mxu0
      %1016 = vmatprep.mubr.f32.mxu0 0.0
      %1017 = vmatmul.mubr.f32.gmra.mxu0 %v917
      %v1018 = vpop.f32.mrf.mxu0
      %v1019 = vadd.f32 0.0, %v1018
      %v1020 = vpop.f32.mrf.mxu0
      %1021 = vmatprep.mubr.f32.mxu0 0.0
      %1022 = vmatmul.mubr.f32.gmra.mxu0 %v920
      %v1023 = vpop.f32.mrf.mxu0
      %v1024 = vadd.f32 0.0, %v1023
      %v1025 = vpop.f32.mrf.mxu0
      %1026 = vdwg.mxu0
      %v1027 = vsel %vm358, %v989, -inf
      %1028 = vmax.xlane.f32.xlu0 %v1027
      %v1029 = vpop.xlane.xlu0 %1028
      %v1030 = vsel %vm358, %v994, -inf
      %1031 = vmax.xlane.f32.xlu0 %v1030
      %v1032 = vpop.xlane.xlu0 %1031
      %v1033 = vsel %vm358, %v999, -inf
      %1034 = vmax.xlane.f32.xlu0 %v1033
      %v1035 = vpop.xlane.xlu0 %1034
      %v1036 = vsel %vm358, %v1004, -inf
      %1037 = vmax.xlane.f32.xlu0 %v1036
      %v1038 = vpop.xlane.xlu0 %1037
      %v1039 = vsel %vm358, %v1009, -inf
      %1040 = vmax.xlane.f32.xlu0 %v1039
      %v1041 = vpop.xlane.xlu0 %1040
      %v1042 = vsel %vm358, %v1014, -inf
      %1043 = vmax.xlane.f32.xlu0 %v1042
      %v1044 = vpop.xlane.xlu0 %1043
      %v1045 = vsel %vm358, %v1019, -inf
      %1046 = vmax.xlane.f32.xlu0 %v1045
      %v1047 = vpop.xlane.xlu0 %1046
      %v1048 = vsel %vm358, %v1024, -inf
      %1049 = vmax.xlane.f32.xlu0 %v1048
      %v1050 = vpop.xlane.xlu0 %1049
      %v1051 = vsub.f32 %v989, %v1029
      %v1052 = vsub.f32 %v994, %v1032
      %v1053 = vsub.f32 %v999, %v1035
      %v1054 = vsub.f32 %v1004, %v1038
      %v1055 = vsub.f32 %v1009, %v1041
      %v1056 = vsub.f32 %v1014, %v1044
      %v1057 = vsub.f32 %v1019, %v1047
      %v1058 = vsub.f32 %v1024, %v1050
      %v1059 = vmul.f32 %v1051, 1.442695
      %v1060 = vpow.pop %v1059
      %v1061 = vmul.f32 %v1052, 1.442695
      %v1062 = vpow.pop %v1061
      %v1063 = vmul.f32 %v1053, 1.442695
      %v1064 = vpow.pop %v1063
      %v1065 = vmul.f32 %v1054, 1.442695
      %v1066 = vpow.pop %v1065
      %v1067 = vmul.f32 %v1055, 1.442695
      %v1068 = vpow.pop %v1067
      %v1069 = vmul.f32 %v1056, 1.442695
      %v1070 = vpow.pop %v1069
      %v1071 = vmul.f32 %v1057, 1.442695
      %v1072 = vpow.pop %v1071
      %v1073 = vmul.f32 %v1058, 1.442695
      %v1074 = vpow.pop %v1073
      %v1075 = vsel %vm358, %v1060, 0.0
      %1076 = vadd.xlane.f32.xlu0 %v1075
      %v1077 = vpop.xlane.xlu0 %1076
      %v1078 = vsel %vm358, %v1062, 0.0
      %1079 = vadd.xlane.f32.xlu0 %v1078
      %v1080 = vpop.xlane.xlu0 %1079
      %v1081 = vsel %vm358, %v1064, 0.0
      %1082 = vadd.xlane.f32.xlu0 %v1081
      %v1083 = vpop.xlane.xlu0 %1082
      %v1084 = vsel %vm358, %v1066, 0.0
      %1085 = vadd.xlane.f32.xlu0 %v1084
      %v1086 = vpop.xlane.xlu0 %1085
      %v1087 = vsel %vm358, %v1068, 0.0
      %1088 = vadd.xlane.f32.xlu0 %v1087
      %v1089 = vpop.xlane.xlu0 %1088
      %v1090 = vsel %vm358, %v1070, 0.0
      %1091 = vadd.xlane.f32.xlu0 %v1090
      %v1092 = vpop.xlane.xlu0 %1091
      %v1093 = vsel %vm358, %v1072, 0.0
      %1094 = vadd.xlane.f32.xlu0 %v1093
      %v1095 = vpop.xlane.xlu0 %1094
      %v1096 = vsel %vm358, %v1074, 0.0
      %1097 = vadd.xlane.f32.xlu0 %v1096
      %v1098 = vpop.xlane.xlu0 %1097
      %v1099 = vrcp.pop %v1077
      %v1100 = vrcp.pop %v1080
      %v1101 = vrcp.pop %v1083
      %v1102 = vrcp.pop %v1086
      %v1103 = vrcp.pop %v1089
      %v1104 = vrcp.pop %v1092
      %v1105 = vrcp.pop %v1095
      %v1106 = vrcp.pop %v1098
      %v1107 = vmul.f32 %v1060, %v1099
      %v1108 = vmul.f32 %v1062, %v1100
      %v1109 = vmul.f32 %v1064, %v1101
      %v1110 = vmul.f32 %v1066, %v1102
      %v1111 = vmul.f32 %v1068, %v1103
      %v1112 = vmul.f32 %v1070, %v1104
      %v1113 = vmul.f32 %v1072, %v1105
      %v1114 = vmul.f32 %v1074, %v1106
      %v1115 = vsel %vm358, %v1107, 0.0
      %1116 = vadd.xlane.f32.xlu0 %v1115
      %v1117 = vpop.xlane.xlu0 %1116
      %v1118 = vsel %vm358, %v1108, 0.0
      %1119 = vadd.xlane.f32.xlu0 %v1118
      %v1120 = vpop.xlane.xlu0 %1119
      %v1121 = vsel %vm358, %v1109, 0.0
      %1122 = vadd.xlane.f32.xlu0 %v1121
      %v1123 = vpop.xlane.xlu0 %1122
      %v1124 = vsel %vm358, %v1110, 0.0
      %1125 = vadd.xlane.f32.xlu0 %v1124
      %v1126 = vpop.xlane.xlu0 %1125
      %v1127 = vsel %vm358, %v1111, 0.0
      %1128 = vadd.xlane.f32.xlu0 %v1127
      %v1129 = vpop.xlane.xlu0 %1128
      %v1130 = vsel %vm358, %v1112, 0.0
      %1131 = vadd.xlane.f32.xlu0 %v1130
      %v1132 = vpop.xlane.xlu0 %1131
      %v1133 = vsel %vm358, %v1113, 0.0
      %1134 = vadd.xlane.f32.xlu0 %v1133
      %v1135 = vpop.xlane.xlu0 %1134
      %v1136 = vsel %vm358, %v1114, 0.0
      %1137 = vadd.xlane.f32.xlu0 %v1136
      %v1138 = vpop.xlane.xlu0 %1137
      %v1139 = vrcp.pop %v1117
      %v1140 = vmul.f32 %v1107, %v1139
      %v1141 = vrcp.pop %v1120
      %v1142 = vmul.f32 %v1108, %v1141
      %v1143 = vrcp.pop %v1123
      %v1144 = vmul.f32 %v1109, %v1143
      %v1145 = vrcp.pop %v1126
      %v1146 = vmul.f32 %v1110, %v1145
      %v1147 = vrcp.pop %v1129
      %v1148 = vmul.f32 %v1111, %v1147
      %v1149 = vrcp.pop %v1132
      %v1150 = vmul.f32 %v1112, %v1149
      %v1151 = vrcp.pop %v1135
      %v1152 = vmul.f32 %v1113, %v1151
      %v1153 = vrcp.pop %v1138
      %v1154 = vmul.f32 %v1114, %v1153
      %v1155 = vld [vmem:[%s5] sm:$0xff]
      %v1156 = vld [vmem:[%s5 + $0x8] sm:$0xff]
      %v1157 = vld [vmem:[%s5 + $0x10] sm:$0xff]
      %v1158 = vld [vmem:[%s5 + $0x18] sm:$0xff]
      %v1159 = vld [vmem:[%s5 + $0x20] sm:$0xff]
      %v1160 = vld [vmem:[%s5 + $0x28] sm:$0xff]
      %v1161 = vld [vmem:[%s5 + $0x30] sm:$0xff]
      %v1162 = vld [vmem:[%s5 + $0x38] sm:$0xff]
      %v1164 = vsel %vm358, %v1140, 0
      %v1167 = vsel %vm358, %v1142, 0
      %v1170 = vsel %vm358, %v1144, 0
      %v1173 = vsel %vm358, %v1146, 0
      %v1176 = vsel %vm358, %v1148, 0
      %v1179 = vsel %vm358, %v1150, 0
      %v1182 = vsel %vm358, %v1152, 0
      %v1185 = vsel %vm358, %v1154, 0
      %1187 = vmatprep.subr.mxu0 0.0
      %1188 = vmatpush1.msra.mxu0 0.0
      %1189 = vmatprep.subr.mxu0 0.0
      %1190 = vmatpush1.msra.mxu0 0.0
      %1191 = vmatprep.subr.mxu0 0.0
      %1192 = vmatpush1.msra.mxu0 0.0
      %1193 = vmatprep.subr.mxu0 0.0
      %1194 = vmatpush1.msra.mxu0 0.0
      %1195 = vmatprep.subr.mxu0 0.0
      %1196 = vmatpush1.msra.mxu0 0.0
      %1197 = vmatprep.subr.mxu0 0.0
      %1198 = vmatpush1.msra.mxu0 0.0
      %1199 = vmatprep.subr.mxu0 0.0
      %1200 = vmatpush1.msra.mxu0 0.0
      %1201 = vmatprep.subr.mxu0 0.0
      %1202 = vmatpush1.msra.mxu0 0.0
      %1203 = vmatprep.subr.mxu0 0.0
      %1204 = vmatpush1.msra.mxu0 %v1162
      %1205 = vmatprep.subr.mxu0 0.0
      %1206 = vmatpush1.msra.mxu0 %v1161
      %1207 = vmatprep.subr.mxu0 0.0
      %1208 = vmatpush1.msra.mxu0 %v1160
      %1209 = vmatprep.subr.mxu0 0.0
      %1210 = vmatpush1.msra.mxu0 %v1159
      %1211 = vmatprep.subr.mxu0 0.0
      %1212 = vmatpush1.msra.mxu0 %v1158
      %1213 = vmatprep.subr.mxu0 0.0
      %1214 = vmatpush1.msra.mxu0 %v1157
      %1215 = vmatprep.subr.mxu0 0.0
      %1216 = vmatpush1.msra.mxu0 %v1156
      %1217 = vmatprep.subr.mxu0 0.0
      %1218 = vmatpush1.msra.mxu0 %v1155
      %1219 = vmatprep.subr.mxu0 0.0
      %1220 = vmatpush2.msra.mxu0 0.0
      %1221 = vmatprep.subr.mxu0 0.0
      %1222 = vmatpush2.msra.mxu0 0.0
      %1223 = vmatprep.subr.mxu0 0.0
      %1224 = vmatpush2.msra.mxu0 0.0
      %1225 = vmatprep.subr.mxu0 0.0
      %1226 = vmatpush2.msra.mxu0 0.0
      %1227 = vmatprep.subr.mxu0 0.0
      %1228 = vmatpush2.msra.mxu0 0.0
      %1229 = vmatprep.subr.mxu0 0.0
      %1230 = vmatpush2.msra.mxu0 0.0
      %1231 = vmatprep.subr.mxu0 0.0
      %1232 = vmatpush2.msra.mxu0 0.0
      %1233 = vmatprep.subr.mxu0 0.0
      %1234 = vmatpush2.msra.mxu0 0.0
      %1235 = vmatprep.subr.mxu0 0.0
      %1236 = vmatpush2.msra.mxu0 0.0
      %1237 = vmatprep.subr.mxu0 0.0
      %1238 = vmatpush2.msra.mxu0 0.0
      %1239 = vmatprep.subr.mxu0 0.0
      %1240 = vmatpush2.msra.mxu0 0.0
      %1241 = vmatprep.subr.mxu0 0.0
      %1242 = vmatpush2.msra.mxu0 0.0
      %1243 = vmatprep.subr.mxu0 0.0
      %1244 = vmatpush2.msra.mxu0 0.0
      %1245 = vmatprep.subr.mxu0 0.0
      %1246 = vmatpush2.msra.mxu0 0.0
      %1247 = vmatprep.subr.mxu0 0.0
      %1248 = vmatpush2.msra.mxu0 0.0
      %1249 = vmatprep.subr.mxu0 0.0
      %1250 = vmatpush2.msra.mxu0 0.0
      %1251 = vmatprep.mubr.f32.mxu0 0.0
      %1252 = vmatmul.mubr.f32.gmra.mxu0 %v1164
      %v1253 = vpop.f32.mrf.mxu0
      %v1254 = vadd.f32 0.0, %v1253
      %v1255 = vpop.f32.mrf.mxu0
      %1256 = vmatprep.mubr.f32.mxu0 0.0
      %1257 = vmatmul.mubr.f32.gmra.mxu0 %v1167
      %v1258 = vpop.f32.mrf.mxu0
      %v1259 = vadd.f32 0.0, %v1258
      %v1260 = vpop.f32.mrf.mxu0
      %1261 = vmatprep.mubr.f32.mxu0 0.0
      %1262 = vmatmul.mubr.f32.gmra.mxu0 %v1170
      %v1263 = vpop.f32.mrf.mxu0
      %v1264 = vadd.f32 0.0, %v1263
      %v1265 = vpop.f32.mrf.mxu0
      %1266 = vmatprep.mubr.f32.mxu0 0.0
      %1267 = vmatmul.mubr.f32.gmra.mxu0 %v1173
      %v1268 = vpop.f32.mrf.mxu0
      %v1269 = vadd.f32 0.0, %v1268
      %v1270 = vpop.f32.mrf.mxu0
      %1271 = vmatprep.mubr.f32.mxu0 0.0
      %1272 = vmatmul.mubr.f32.gmra.mxu0 %v1176
      %v1273 = vpop.f32.mrf.mxu0
      %v1274 = vadd.f32 0.0, %v1273
      %v1275 = vpop.f32.mrf.mxu0
      %1276 = vmatprep.mubr.f32.mxu0 0.0
      %1277 = vmatmul.mubr.f32.gmra.mxu0 %v1179
      %v1278 = vpop.f32.mrf.mxu0
      %v1279 = vadd.f32 0.0, %v1278
      %v1280 = vpop.f32.mrf.mxu0
      %1281 = vmatprep.mubr.f32.mxu0 0.0
      %1282 = vmatmul.mubr.f32.gmra.mxu0 %v1182
      %v1283 = vpop.f32.mrf.mxu0
      %v1284 = vadd.f32 0.0, %v1283
      %v1285 = vpop.f32.mrf.mxu0
      %1286 = vmatprep.mubr.f32.mxu0 0.0
      %1287 = vmatmul.mubr.f32.gmra.mxu0 %v1185
      %v1288 = vpop.f32.mrf.mxu0
      %v1289 = vadd.f32 0.0, %v1288
      %v1290 = vpop.f32.mrf.mxu0
      %1291 = vdwg.mxu0
      %1292 = vst.msk [vmem:[%s353] sm:$0xff] %vm491, %v1254
      %1293 = vst.msk [vmem:[%s353 + $0x8] sm:$0xff] %vm491, %v1259
      %1294 = vst.msk [vmem:[%s353 + $0x10] sm:$0xff] %vm491, %v1264
      %1295 = vst.msk [vmem:[%s353 + $0x18] sm:$0xff] %vm491, %v1269
      %1296 = vst.msk [vmem:[%s353 + $0x20] sm:$0xff] %vm491, %v1274
      %1297 = vst.msk [vmem:[%s353 + $0x28] sm:$0xff] %vm491, %v1279
      %1298 = vst.msk [vmem:[%s353 + $0x30] sm:$0xff] %vm491, %v1284
      %1299 = vst.msk [vmem:[%s353 + $0x38] sm:$0xff] %vm491, %v1289
      %p1300 = scmp.lt.s32.totalorder %s21, 1
      %s1301 = scalar_select %p1300, %s21, 1
      %s1302 = smul.addr %s1301, 8
      %s1303 = smul.addr %s1302, 8
      %s1304 = scalar_lea.vmem %s9, %s1303
      // Predicated region
      $region57: #{transform_forward.4} parent=55 // pred_check
        %p1305 = pneg %p238
      $region58: #{transform_forward.4} parent=55 // pred_check_branch
        %1307 = sbr.rel (%p1305) target = $region60
      $region59: #{transform_forward.4} parent=55 // pred_region
        _
      $region60: #{transform_forward.4} parent=55 // pred_fallthru
        _
    $region56: #{transform_forward.4} parent=5 // pred_fallthru
      _
    %p1308 = scmp.le.s32.totalorder 2, %s16
    // Predicated region
    $region61: #{transform_forward.4} parent=5 // pred_check
      %p1309 = pneg %p1308
    $region62: #{transform_forward.4} parent=5 // pred_check_branch
      %1311 = sbr.rel (%p1309) target = $region64
    $region63: #{transform_forward.4} parent=5 // pred_region
      %s1312 = ssub.s32 %s16, 2
      // Predicated region
      $region65: #{transform_forward.4} parent=63 // pred_check
        %p1313 = pneg %p244
      $region66: #{transform_forward.4} parent=63 // pred_check_branch
        %1315 = sbr.rel (%p1313) target = $region68
      $region67: #{transform_forward.4} parent=63 // pred_region
        %p1316 = scmp.lt.s32.totalorder %s22, 1
        %s1317 = scalar_select %p1316, %s22, 1
        %s1318 = smul.addr %s1317, 8
        %s1319 = smul.addr %s1318, 8
        %s1320 = scalar_lea.vmem %s9, %s1319
      $region68: #{transform_forward.4} parent=63 // pred_fallthru
        _
    $region64: #{transform_forward.4} parent=5 // pred_fallthru
      _
  $region6: #{transform_forward.4} parent=0 // loop_footer
    %s20 = sadd.s32 1, %s16
  $region7: #{transform_forward.4} parent=0 // loop_footer_branch
    %15 = sbr.rel target = $region3
  $region8: #{transform_forward.4} parent=0 // loop_exit
    _

// kernel: transform_forward.5
$region0: #{transform_forward.5}
  #allocation0 [shape = 'u32[]', space=smem, size = 0x4, offset = 0x4, fixed_abs, tag = 'smem constant byte address 0x4 - core index']
  #allocation1 [shape = 'u32[144,128]{1,0:T(1,128)}', space=vmem, size = 0x12000, scoped, tag = 'internal scratch']
  %s0 = inlined_call_operand.vmem [shape: f32[2,32,342], index: 0, kind: input, shape index: {}]
  %s1 = inlined_call_operand.vmem [shape: f32[9,32,32], index: 1, kind: input, shape index: {}]
  %s2 = inlined_call_operand.vmem [shape: f32[32,1], index: 2, kind: input, shape index: {}]
  %s3 = inlined_call_operand.vmem [shape: f32[2,32,288], index: 3, kind: output, shape index: {}]
  %s4 = sld [smem:[#allocation0]]
  $region45: #{transform_forward.5} parent=0
    _
  %s6 = ssub.s32 1, %s4
  %s7 = scalar_select 0, %s6, %s4
  loop: start=0, step=1, limit=4
  $region2: #{transform_forward.5} parent=0 // loop_pre_header
    _
  $region3: #{transform_forward.5} parent=0 // loop_header
    %s9 = sphi 0, %s13
    %p10 = scmp.ge.s32.totalorder %s9, 4
    %s19 = sphi 0, %s21
    %s22 = sphi 0, %s19
    %s23 = sphi 0, %s22
    %s39 = sphi 0, %s23
    %s43 = sphi 0, %s43
    %s45 = sphi 0, %s43
    %s46 = sphi 0, %s45
    %s60 = sphi 0, %s46
    %s64 = sphi 0, %s64
    %s66 = sphi 0, %s64
    %s67 = sphi 0, %s66
    %s81 = sphi 0, %s67
    %s87 = sphi 0, %s89
    %s90 = sphi 0, %s87
    %s91 = sphi 0, %s90
    %s107 = sphi 0, %s91
  $region4: #{transform_forward.5} parent=0 // loop_header_branch
    %12 = sbr.rel (%p10) target = $region8
  $region5: #{transform_forward.5} parent=0 // loop_body
    %s14 = ssub.s32 %s9, 1
    %s15 = ssub.s32 %s9, 2
    %s16 = sadd.s32 %s9, 1
    %s17 = ssub.s32 %s9, %s16
    %p18 = scmp.eq.s32.totalorder %s17, 0
    %s20 = sadd.s32 %s19, 1
    %s21 = scalar_select %p18, %s19, %s20
    %p24 = pneg %p18
    %p25 = scmp.eq.s32.totalorder %s9, 1
    %p26 = por %p24, %p25
    %p27 = scmp.ne.s32.totalorder %s19, %s22
    %p28 = scmp.eq.s32.totalorder %s9, 0
    %p29 = por %p27, %p28
    %p30 = scmp.ne.s32.totalorder %s19, %s22
    %p31 = scmp.eq.s32.totalorder %s14, 1
    %p32 = por %p30, %p31
    %p33 = scmp.ne.s32.totalorder %s22, %s23
    %p34 = scmp.eq.s32.totalorder %s14, 0
    %p35 = por %p33, %p34
    %p36 = scmp.ne.s32.totalorder %s22, %s23
    %p37 = scmp.eq.s32.totalorder %s15, 1
    %p38 = por %p36, %p37
    %p40 = scmp.ne.s32.totalorder %s23, %s39
    %p41 = scmp.eq.s32.totalorder %s15, 0
    %p42 = por %p40, %p41
    %s44 = sadd.s32 %s43, 1
    %p47 = scmp.eq.s32.totalorder %s9, 1
    %p48 = scmp.ne.s32.totalorder %s43, %s45
    %p49 = scmp.eq.s32.totalorder %s9, 0
    %p50 = por %p48, %p49
    %p51 = scmp.ne.s32.totalorder %s43, %s45
    %p52 = scmp.eq.s32.totalorder %s14, 1
    %p53 = por %p51, %p52
    %p54 = scmp.ne.s32.totalorder %s45, %s46
    %p55 = scmp.eq.s32.totalorder %s14, 0
    %p56 = por %p54, %p55
    %p57 = scmp.ne.s32.totalorder %s45, %s46
    %p58 = scmp.eq.s32.totalorder %s15, 1
    %p59 = por %p57, %p58
    %p61 = scmp.ne.s32.totalorder %s46, %s60
    %p62 = scmp.eq.s32.totalorder %s15, 0
    %p63 = por %p61, %p62
    %s65 = sadd.s32 %s64, 1
    %p68 = scmp.eq.s32.totalorder %s9, 1
    %p69 = scmp.ne.s32.totalorder %s64, %s66
    %p70 = scmp.eq.s32.totalorder %s9, 0
    %p71 = por %p69, %p70
    %p72 = scmp.ne.s32.totalorder %s64, %s66
    %p73 = scmp.eq.s32.totalorder %s14, 1
    %p74 = por %p72, %p73
    %p75 = scmp.ne.s32.totalorder %s66, %s67
    %p76 = scmp.eq.s32.totalorder %s14, 0
    %p77 = por %p75, %p76
    %p78 = scmp.ne.s32.totalorder %s66, %s67
    %p79 = scmp.eq.s32.totalorder %s15, 1
    %p80 = por %p78, %p79
    %p82 = scmp.ne.s32.totalorder %s67, %s81
    %p83 = scmp.eq.s32.totalorder %s15, 0
    %p84 = por %p82, %p83
    %s85 = ssub.s32 %s9, %s16
    %p86 = scmp.eq.s32.totalorder %s85, 0
    %s88 = sadd.s32 %s87, 1
    %s89 = scalar_select %p86, %s87, %s88
    %p92 = pneg %p86
    %p93 = scmp.eq.s32.totalorder %s9, 1
    %p94 = por %p92, %p93
    %p95 = scmp.ne.s32.totalorder %s87, %s90
    %p96 = scmp.eq.s32.totalorder %s9, 0
    %p97 = por %p95, %p96
    %p98 = scmp.ne.s32.totalorder %s87, %s90
    %p99 = scmp.eq.s32.totalorder %s14, 1
    %p100 = por %p98, %p99
    %p101 = scmp.ne.s32.totalorder %s90, %s91
    %p102 = scmp.eq.s32.totalorder %s14, 0
    %p103 = por %p101, %p102
    %p104 = scmp.ne.s32.totalorder %s90, %s91
    %p105 = scmp.eq.s32.totalorder %s15, 1
    %p106 = por %p104, %p105
    %p108 = scmp.ne.s32.totalorder %s91, %s107
    %p109 = scmp.eq.s32.totalorder %s15, 0
    %p110 = por %p108, %p109
    %p111 = scmp.le.s32.totalorder 1, %s9
    %p112 = scmp.lt.s32.totalorder %s9, 3
    %p113 = pnand %p111, %p112
    %p114 = pneg %p113
    // Predicated region
    $region9: #{transform_forward.5} parent=5 // pred_check
      _
    $region10: #{transform_forward.5} parent=5 // pred_check_branch
      %116 = sbr.rel (%p113) target = $region12
    $region11: #{transform_forward.5} parent=5 // pred_region
      %s117 = ssub.s32 %s9, 1
      // Predicated region
      $region13: #{transform_forward.5} parent=11 // pred_check
        %p118 = pneg %p56
      $region14: #{transform_forward.5} parent=11 // pred_check_branch
        %120 = sbr.rel (%p118) target = $region16
      $region15: #{transform_forward.5} parent=11 // pred_region
        _
      $region16: #{transform_forward.5} parent=11 // pred_fallthru
        _
      // Predicated region
      $region17: #{transform_forward.5} parent=11 // pred_check
        %p121 = pneg %p77
      $region18: #{transform_forward.5} parent=11 // pred_check_branch
        %123 = sbr.rel (%p121) target = $region20
      $region19: #{transform_forward.5} parent=11 // pred_region
        _
      $region20: #{transform_forward.5} parent=11 // pred_fallthru
        _
    $region12: #{transform_forward.5} parent=5 // pred_fallthru
      _
    %p124 = scmp.lt.s32.totalorder %s9, 2
    // Predicated region
    $region21: #{transform_forward.5} parent=5 // pred_check
      %p125 = pneg %p124
    $region22: #{transform_forward.5} parent=5 // pred_check_branch
      %127 = sbr.rel (%p125) target = $region24
    $region23: #{transform_forward.5} parent=5 // pred_region
      // Predicated region
      $region25: #{transform_forward.5} parent=23 // pred_check
        %p128 = pneg %p29
      $region26: #{transform_forward.5} parent=23 // pred_check_branch
        %130 = sbr.rel (%p128) target = $region28
      $region27: #{transform_forward.5} parent=23 // pred_region
        %p131 = scmp.lt.s32.totalorder %s9, 1
        %s132 = scalar_select %p131, %s9, 1
        %s133 = smul.addr %s132, 12
        %s134 = smul.addr %s133, 8
        %s135 = scalar_lea.vmem %s0, %s134
      $region28: #{transform_forward.5} parent=23 // pred_fallthru
        _
    $region24: #{transform_forward.5} parent=5 // pred_fallthru
      _
    %p136 = scmp.le.s32.totalorder 1, %s9
    %p137 = scmp.lt.s32.totalorder %s9, 3
    %p138 = pnand %p136, %p137
    %p139 = pneg %p138
    // Predicated region
    $region29: #{transform_forward.5} parent=5 // pred_check
      _
    $region30: #{transform_forward.5} parent=5 // pred_check_branch
      %141 = sbr.rel (%p138) target = $region32
    $region31: #{transform_forward.5} parent=5 // pred_region
      %s142 = ssub.s32 %s9, 1
      %p143 = scmp.lt.s32.totalorder %s14, 1
      %s144 = scalar_select %p143, %s14, 1
      %s145 = smul.addr %s144, 12
      %s146 = smul.addr %s145, 8
      %s147 = scalar_lea.vmem %s0, %s146
      %p148 = pneg %p35
      %p149 = pneg %p32
      %p150 = pneg %p56
      %p151 = pneg %p53
      %p152 = pneg %p77
      %p153 = pneg %p74
      %p154 = pneg %p103
      %p155 = pneg %p100
      %p156 = scmp.lt.s32.totalorder %s14, 1
      %s157 = scalar_select %p156, %s14, 1
      %s158 = smul.addr %s157, 12
      %s159 = smul.addr %s158, 8
      %s160 = scalar_lea.vmem %s3, %s159
      %p161 = scmp.lt.s32.totalorder %s14, 1
      %s162 = scalar_select %p161, %s14, 1
      %s163 = smul.addr %s162, 12
      %s164 = smul.addr %s163, 8
      %s165 = scalar_lea.vmem %s0, %s164
      %p166 = scmp.lt.s32.totalorder %s14, 1
      %s167 = scalar_select %p166, %s14, 1
      %s168 = smul.addr %s167, 12
      %s169 = smul.addr %s168, 8
      %s170 = scalar_lea.vmem %s3, %s169
      %v171 = vld [vmem:[%s165] sm:$0xff]
      %v172 = vld [vmem:[%s165 + $0x8] sm:$0xff]
      %v173 = vld [vmem:[%s165 + $0x10] sm:$0xff]
      %v174 = vld [vmem:[%s165 + $0x18] sm:$0xff]
      %v175 = vld [vmem:[%s165 + $0x20] sm:$0xff]
      %v176 = vld [vmem:[%s165 + $0x28] sm:$0xff]
      %v177 = vld [vmem:[%s165 + $0x30] sm:$0xff]
      %v178 = vld [vmem:[%s165 + $0x38] sm:$0xff]
      %v179 = vld [vmem:[%s165 + $0x40] sm:$0xff]
      %v180 = vld [vmem:[%s165 + $0x48] sm:$0xff]
      %v181 = vld [vmem:[%s165 + $0x50] sm:$0xff]
      %v182 = vld [vmem:[%s165 + $0x58] sm:$0xff]
      %v183 = vld [vmem:[%s1] sm:$0xff]
      %v184 = vld [vmem:[%s1 + $0x8] sm:$0xff]
      %v185 = vld [vmem:[%s1 + $0x10] sm:$0xff]
      %v186 = vld [vmem:[%s1 + $0x18] sm:$0xff]
      %s187 = scalar_lea.vmem %s1, 32
      %v188 = vld [vmem:[%s187] sm:$0xff]
      %v189 = vld [vmem:[%s187 + $0x8] sm:$0xff]
      %v190 = vld [vmem:[%s187 + $0x10] sm:$0xff]
      %v191 = vld [vmem:[%s187 + $0x18] sm:$0xff]
      %204 = vrot.lane.b32.xlu0 %v171, 127
      %v205 = vpop.permute.xlu0 %204
      %206 = vrot.lane.b32.xlu0 %v172, 127
      %v207 = vpop.permute.xlu0 %206
      %208 = vrot.lane.b32.xlu0 %v173, 127
      %v209 = vpop.permute.xlu0 %208
      %210 = vrot.lane.b32.xlu0 %v174, 127
      %v211 = vpop.permute.xlu0 %210
      %212 = vrot.lane.b32.xlu0 %v175, 127
      %v213 = vpop.permute.xlu0 %212
      %214 = vrot.lane.b32.xlu0 %v176, 127
      %v215 = vpop.permute.xlu0 %214
      %216 = vrot.lane.b32.xlu0 %v177, 127
      %v217 = vpop.permute.xlu0 %216
      %218 = vrot.lane.b32.xlu0 %v178, 127
      %v219 = vpop.permute.xlu0 %218
      %220 = vrot.lane.b32.xlu0 %v179, 127
      %v221 = vpop.permute.xlu0 %220
      %222 = vrot.lane.b32.xlu0 %v180, 127
      %v223 = vpop.permute.xlu0 %222
      %224 = vrot.lane.b32.xlu0 %v181, 127
      %v225 = vpop.permute.xlu0 %224
      %226 = vrot.lane.b32.xlu0 %v182, 127
      %v227 = vpop.permute.xlu0 %226
      %vm228 = vcmask 1039360
      %v229 = vsel %vm228, %v205, %v207
      %v230 = vsel %vm228, %v207, %v209
      %v231 = vsel %vm228, %v211, %v213
      %v232 = vsel %vm228, %v213, %v215
      %v233 = vsel %vm228, %v217, %v219
      %v234 = vsel %vm228, %v219, %v221
      %v235 = vsel %vm228, %v223, %v225
      %v236 = vsel %vm228, %v225, %v227
      %vm249 = vcmask 261120
      %v251 = vsel %vm249, %v188, 0
      %v254 = vsel %vm249, %v189, 0
      %v257 = vsel %vm249, %v190, 0
      %v260 = vsel %vm249, %v191, 0
      %262 = vmatprep.subr.mxu0 0.0
      %263 = vmatpush1.msra.mxu0 0.0
      %264 = vmatprep.subr.mxu0 0.0
      %265 = vmatpush1.msra.mxu0 0.0
      %266 = vmatprep.subr.mxu0 0.0
      %267 = vmatpush1.msra.mxu0 0.0
      %268 = vmatprep.subr.mxu0 0.0
      %269 = vmatpush1.msra.mxu0 0.0
      %270 = vmatprep.subr.mxu0 0.0
      %271 = vmatpush1.msra.mxu0 0.0
      %272 = vmatprep.subr.mxu0 0.0
      %273 = vmatpush1.msra.mxu0 0.0
      %274 = vmatprep.subr.mxu0 0.0
      %275 = vmatpush1.msra.mxu0 0.0
      %276 = vmatprep.subr.mxu0 0.0
      %277 = vmatpush1.msra.mxu0 0.0
      %278 = vmatprep.subr.mxu0 0.0
      %279 = vmatpush1.msra.mxu0 0.0
      %280 = vmatprep.subr.mxu0 0.0
      %281 = vmatpush1.msra.mxu0 0.0
      %282 = vmatprep.subr.mxu0 0.0
      %283 = vmatpush1.msra.mxu0 0.0
      %284 = vmatprep.subr.mxu0 0.0
      %285 = vmatpush1.msra.mxu0 0.0
      %286 = vmatprep.subr.mxu0 %v236
      %287 = vmatpush1.msra.mxu0 %v235
      %288 = vmatprep.subr.mxu0 %v234
      %289 = vmatpush1.msra.mxu0 %v233
      %290 = vmatprep.subr.mxu0 %v232
      %291 = vmatpush1.msra.mxu0 %v231
      %292 = vmatprep.subr.mxu0 %v230
      %293 = vmatpush1.msra.mxu0 %v229
      %294 = vmatprep.subr.mxu0 0.0
      %295 = vmatpush2.msra.mxu0 0.0
      %296 = vmatprep.subr.mxu0 0.0
      %297 = vmatpush2.msra.mxu0 0.0
      %298 = vmatprep.subr.mxu0 0.0
      %299 = vmatpush2.msra.mxu0 0.0
      %300 = vmatprep.subr.mxu0 0.0
      %301 = vmatpush2.msra.mxu0 0.0
      %302 = vmatprep.subr.mxu0 0.0
      %303 = vmatpush2.msra.mxu0 0.0
      %304 = vmatprep.subr.mxu0 0.0
      %305 = vmatpush2.msra.mxu0 0.0
      %306 = vmatprep.subr.mxu0 0.0
      %307 = vmatpush2.msra.mxu0 0.0
      %308 = vmatprep.subr.mxu0 0.0
      %309 = vmatpush2.msra.mxu0 0.0
      %310 = vmatprep.subr.mxu0 0.0
      %311 = vmatpush2.msra.mxu0 0.0
      %312 = vmatprep.subr.mxu0 0.0
      %313 = vmatpush2.msra.mxu0 0.0
      %314 = vmatprep.subr.mxu0 0.0
      %315 = vmatpush2.msra.mxu0 0.0
      %316 = vmatprep.subr.mxu0 0.0
      %317 = vmatpush2.msra.mxu0 0.0
      %318 = vmatprep.subr.mxu0 0.0
      %319 = vmatpush2.msra.mxu0 0.0
      %320 = vmatprep.subr.mxu0 0.0
      %321 = vmatpush2.msra.mxu0 0.0
      %322 = vmatprep.subr.mxu0 0.0
      %323 = vmatpush2.msra.mxu0 0.0
      %324 = vmatprep.subr.mxu0 0.0
      %325 = vmatpush2.msra.mxu0 0.0
      %326 = vmatprep.mubr.f32.mxu0 0.0
      %327 = vmatmul.mubr.f32.gmra.mxu0 %v251
      %v328 = vpop.f32.mrf.mxu0
      %v329 = vadd.f32 0.0, %v328
      %v330 = vpop.f32.mrf.mxu0
      %v331 = vadd.f32 0.0, %v330
      %332 = vmatprep.mubr.f32.mxu0 0.0
      %333 = vmatmul.mubr.f32.gmra.mxu0 %v254
      %v334 = vpop.f32.mrf.mxu0
      %v335 = vadd.f32 0.0, %v334
      %v336 = vpop.f32.mrf.mxu0
      %v337 = vadd.f32 0.0, %v336
      %338 = vmatprep.mubr.f32.mxu0 0.0
      %339 = vmatmul.mubr.f32.gmra.mxu0 %v257
      %v340 = vpop.f32.mrf.mxu0
      %v341 = vadd.f32 0.0, %v340
      %v342 = vpop.f32.mrf.mxu0
      %v343 = vadd.f32 0.0, %v342
      %344 = vmatprep.mubr.f32.mxu0 0.0
      %345 = vmatmul.mubr.f32.gmra.mxu0 %v260
      %v346 = vpop.f32.mrf.mxu0
      %v347 = vadd.f32 0.0, %v346
      %v348 = vpop.f32.mrf.mxu0
      %v349 = vadd.f32 0.0, %v348
      %350 = vdwg.mxu0
      %351 = vmatprep.subr.mxu0 0.0
      %352 = vmatpush1.msra.mxu0 0.0
      %353 = vmatprep.subr.mxu0 0.0
      %354 = vmatpush1.msra.mxu0 0.0
      %355 = vmatprep.subr.mxu0 0.0
      %356 = vmatpush1.msra.mxu0 0.0
      %357 = vmatprep.subr.mxu0 0.0
      %358 = vmatpush1.msra.mxu0 0.0
      %359 = vmatprep.subr.mxu0 0.0
      %360 = vmatpush1.msra.mxu0 0.0
      %361 = vmatprep.subr.mxu0 0.0
      %362 = vmatpush1.msra.mxu0 0.0
      %363 = vmatprep.subr.mxu0 0.0
      %364 = vmatpush1.msra.mxu0 0.0
      %365 = vmatprep.subr.mxu0 0.0
      %366 = vmatpush1.msra.mxu0 0.0
      %367 = vmatprep.subr.mxu0 0.0
      %368 = vmatpush1.msra.mxu0 0.0
      %369 = vmatprep.subr.mxu0 0.0
      %370 = vmatpush1.msra.mxu0 0.0
      %371 = vmatprep.subr.mxu0 0.0
      %372 = vmatpush1.msra.mxu0 0.0
      %373 = vmatprep.subr.mxu0 0.0
      %374 = vmatpush1.msra.mxu0 0.0
      %375 = vmatprep.subr.mxu0 0.0
      %376 = vmatpush1.msra.mxu0 %v227
      %377 = vmatprep.subr.mxu0 0.0
      %378 = vmatpush1.msra.mxu0 %v221
      %379 = vmatprep.subr.mxu0 0.0
      %380 = vmatpush1.msra.mxu0 %v215
      %381 = vmatprep.subr.mxu0 0.0
      %382 = vmatpush1.msra.mxu0 %v209
      %383 = vmatprep.subr.mxu0 0.0
      %384 = vmatpush2.msra.mxu0 0.0
      %385 = vmatprep.subr.mxu0 0.0
      %386 = vmatpush2.msra.mxu0 0.0
      %387 = vmatprep.subr.mxu0 0.0
      %388 = vmatpush2.msra.mxu0 0.0
      %389 = vmatprep.subr.mxu0 0.0
      %390 = vmatpush2.msra.mxu0 0.0
      %391 = vmatprep.subr.mxu0 0.0
      %392 = vmatpush2.msra.mxu0 0.0
      %393 = vmatprep.subr.mxu0 0.0
      %394 = vmatpush2.msra.mxu0 0.0
      %395 = vmatprep.subr.mxu0 0.0
      %396 = vmatpush2.msra.mxu0 0.0
      %397 = vmatprep.subr.mxu0 0.0
      %398 = vmatpush2.msra.mxu0 0.0
      %399 = vmatprep.subr.mxu0 0.0
      %400 = vmatpush2.msra.mxu0 0.0
      %401 = vmatprep.subr.mxu0 0.0
      %402 = vmatpush2.msra.mxu0 0.0
      %403 = vmatprep.subr.mxu0 0.0
      %404 = vmatpush2.msra.mxu0 0.0
      %405 = vmatprep.subr.mxu0 0.0
      %406 = vmatpush2.msra.mxu0 0.0
      %407 = vmatprep.subr.mxu0 0.0
      %408 = vmatpush2.msra.mxu0 0.0
      %409 = vmatprep.subr.mxu0 0.0
      %410 = vmatpush2.msra.mxu0 0.0
      %411 = vmatprep.subr.mxu0 0.0
      %412 = vmatpush2.msra.mxu0 0.0
      %413 = vmatprep.subr.mxu0 0.0
      %414 = vmatpush2.msra.mxu0 0.0
      %415 = vmatprep.mubr.f32.mxu0 0.0
      %416 = vmatmul.mubr.f32.gmra.mxu0 %v251
      %v417 = vpop.f32.mrf.mxu0
      %v418 = vadd.f32 0.0, %v417
      %v419 = vpop.f32.mrf.mxu0
      %420 = vmatprep.mubr.f32.mxu0 0.0
      %421 = vmatmul.mubr.f32.gmra.mxu0 %v254
      %v422 = vpop.f32.mrf.mxu0
      %v423 = vadd.f32 0.0, %v422
      %v424 = vpop.f32.mrf.mxu0
      %425 = vmatprep.mubr.f32.mxu0 0.0
      %426 = vmatmul.mubr.f32.gmra.mxu0 %v257
      %v427 = vpop.f32.mrf.mxu0
      %v428 = vadd.f32 0.0, %v427
      %v429 = vpop.f32.mrf.mxu0
      %430 = vmatprep.mubr.f32.mxu0 0.0
      %431 = vmatmul.mubr.f32.gmra.mxu0 %v260
      %v432 = vpop.f32.mrf.mxu0
      %v433 = vadd.f32 0.0, %v432
      %v434 = vpop.f32.mrf.mxu0
      %435 = vdwg.mxu0
      %v437 = vsel %vm249, %v183, 0
      %v440 = vsel %vm249, %v184, 0
      %v443 = vsel %vm249, %v185, 0
      %v446 = vsel %vm249, %v186, 0
      %448 = vmatprep.subr.mxu0 0.0
      %449 = vmatpush1.msra.mxu0 0.0
      %450 = vmatprep.subr.mxu0 0.0
      %451 = vmatpush1.msra.mxu0 0.0
      %452 = vmatprep.subr.mxu0 0.0
      %453 = vmatpush1.msra.mxu0 0.0
      %454 = vmatprep.subr.mxu0 0.0
      %455 = vmatpush1.msra.mxu0 0.0
      %456 = vmatprep.subr.mxu0 0.0
      %457 = vmatpush1.msra.mxu0 0.0
      %458 = vmatprep.subr.mxu0 0.0
      %459 = vmatpush1.msra.mxu0 0.0
      %460 = vmatprep.subr.mxu0 0.0
      %461 = vmatpush1.msra.mxu0 0.0
      %462 = vmatprep.subr.mxu0 0.0
      %463 = vmatpush1.msra.mxu0 0.0
      %464 = vmatprep.subr.mxu0 0.0
      %465 = vmatpush1.msra.mxu0 0.0
      %466 = vmatprep.subr.mxu0 0.0
      %467 = vmatpush1.msra.mxu0 0.0
      %468 = vmatprep.subr.mxu0 0.0
      %469 = vmatpush1.msra.mxu0 0.0
      %470 = vmatprep.subr.mxu0 0.0
      %471 = vmatpush1.msra.mxu0 0.0
      %472 = vmatprep.subr.mxu0 %v181
      %473 = vmatpush1.msra.mxu0 %v180
      %474 = vmatprep.subr.mxu0 %v178
      %475 = vmatpush1.msra.mxu0 %v177
      %476 = vmatprep.subr.mxu0 %v175
      %477 = vmatpush1.msra.mxu0 %v174
      %478 = vmatprep.subr.mxu0 %v172
      %479 = vmatpush1.msra.mxu0 %v171
      %480 = vmatprep.subr.mxu0 0.0
      %481 = vmatpush2.msra.mxu0 0.0
      %482 = vmatprep.subr.mxu0 0.0
      %483 = vmatpush2.msra.mxu0 0.0
      %484 = vmatprep.subr.mxu0 0.0
      %485 = vmatpush2.msra.mxu0 0.0
      %486 = vmatprep.subr.mxu0 0.0
      %487 = vmatpush2.msra.mxu0 0.0
      %488 = vmatprep.subr.mxu0 0.0
      %489 = vmatpush2.msra.mxu0 0.0
      %490 = vmatprep.subr.mxu0 0.0
      %491 = vmatpush2.msra.mxu0 0.0
      %492 = vmatprep.subr.mxu0 0.0
      %493 = vmatpush2.msra.mxu0 0.0
      %494 = vmatprep.subr.mxu0 0.0
      %495 = vmatpush2.msra.mxu0 0.0
      %496 = vmatprep.subr.mxu0 0.0
      %497 = vmatpush2.msra.mxu0 0.0
      %498 = vmatprep.subr.mxu0 0.0
      %499 = vmatpush2.msra.mxu0 0.0
      %500 = vmatprep.subr.mxu0 0.0
      %501 = vmatpush2.msra.mxu0 0.0
      %502 = vmatprep.subr.mxu0 0.0
      %503 = vmatpush2.msra.mxu0 0.0
      %504 = vmatprep.subr.mxu0 0.0
      %505 = vmatpush2.msra.mxu0 0.0
      %506 = vmatprep.subr.mxu0 0.0
      %507 = vmatpush2.msra.mxu0 0.0
      %508 = vmatprep.subr.mxu0 0.0
      %509 = vmatpush2.msra.mxu0 0.0
      %510 = vmatprep.subr.mxu0 0.0
      %511 = vmatpush2.msra.mxu0 0.0
      %512 = vmatprep.mubr.f32.mxu0 0.0
      %513 = vmatmul.mubr.f32.gmra.mxu0 %v437
      %v514 = vpop.f32.mrf.mxu0
      %v515 = vadd.f32 %v329, %v514
      %v516 = vpop.f32.mrf.mxu0
      %v517 = vadd.f32 %v331, %v516
      %518 = vmatprep.mubr.f32.mxu0 0.0
      %519 = vmatmul.mubr.f32.gmra.mxu0 %v440
      %v520 = vpop.f32.mrf.mxu0
      %v521 = vadd.f32 %v335, %v520
      %v522 = vpop.f32.mrf.mxu0
      %v523 = vadd.f32 %v337, %v522
      %524 = vmatprep.mubr.f32.mxu0 0.0
      %525 = vmatmul.mubr.f32.gmra.mxu0 %v443
      %v526 = vpop.f32.mrf.mxu0
      %v527 = vadd.f32 %v341, %v526
      %v528 = vpop.f32.mrf.mxu0
      %v529 = vadd.f32 %v343, %v528
      %530 = vmatprep.mubr.f32.mxu0 0.0
      %531 = vmatmul.mubr.f32.gmra.mxu0 %v446
      %v532 = vpop.f32.mrf.mxu0
      %v533 = vadd.f32 %v347, %v532
      %v534 = vpop.f32.mrf.mxu0
      %v535 = vadd.f32 %v349, %v534
      %536 = vdwg.mxu0
      %537 = vmatprep.subr.mxu0 0.0
      %538 = vmatpush1.msra.mxu0 0.0
      %539 = vmatprep.subr.mxu0 0.0
      %540 = vmatpush1.msra.mxu0 0.0
      %541 = vmatprep.subr.mxu0 0.0
      %542 = vmatpush1.msra.mxu0 0.0
      %543 = vmatprep.subr.mxu0 0.0
      %544 = vmatpush1.msra.mxu0 0.0
      %545 = vmatprep.subr.mxu0 0.0
      %546 = vmatpush1.msra.mxu0 0.0
      %547 = vmatprep.subr.mxu0 0.0
      %548 = vmatpush1.msra.mxu0 0.0
      %549 = vmatprep.subr.mxu0 0.0
      %550 = vmatpush1.msra.mxu0 0.0
      %551 = vmatprep.subr.mxu0 0.0
      %552 = vmatpush1.msra.mxu0 0.0
      %553 = vmatprep.subr.mxu0 0.0
      %554 = vmatpush1.msra.mxu0 0.0
      %555 = vmatprep.subr.mxu0 0.0
      %556 = vmatpush1.msra.mxu0 0.0
      %557 = vmatprep.subr.mxu0 0.0
      %558 = vmatpush1.msra.mxu0 0.0
      %559 = vmatprep.subr.mxu0 0.0
      %560 = vmatpush1.msra.mxu0 0.0
      %561 = vmatprep.subr.mxu0 0.0
      %562 = vmatpush1.msra.mxu0 %v182
      %563 = vmatprep.subr.mxu0 0.0
      %564 = vmatpush1.msra.mxu0 %v179
      %565 = vmatprep.subr.mxu0 0.0
      %566 = vmatpush1.msra.mxu0 %v176
      %567 = vmatprep.subr.mxu0 0.0
      %568 = vmatpush1.msra.mxu0 %v173
      %569 = vmatprep.subr.mxu0 0.0
      %570 = vmatpush2.msra.mxu0 0.0
      %571 = vmatprep.subr.mxu0 0.0
      %572 = vmatpush2.msra.mxu0 0.0
      %573 = vmatprep.subr.mxu0 0.0
      %574 = vmatpush2.msra.mxu0 0.0
      %575 = vmatprep.subr.mxu0 0.0
      %576 = vmatpush2.msra.mxu0 0.0
      %577 = vmatprep.subr.mxu0 0.0
      %578 = vmatpush2.msra.mxu0 0.0
      %579 = vmatprep.subr.mxu0 0.0
      %580 = vmatpush2.msra.mxu0 0.0
      %581 = vmatprep.subr.mxu0 0.0
      %582 = vmatpush2.msra.mxu0 0.0
      %583 = vmatprep.subr.mxu0 0.0
      %584 = vmatpush2.msra.mxu0 0.0
      %585 = vmatprep.subr.mxu0 0.0
      %586 = vmatpush2.msra.mxu0 0.0
      %587 = vmatprep.subr.mxu0 0.0
      %588 = vmatpush2.msra.mxu0 0.0
      %589 = vmatprep.subr.mxu0 0.0
      %590 = vmatpush2.msra.mxu0 0.0
      %591 = vmatprep.subr.mxu0 0.0
      %592 = vmatpush2.msra.mxu0 0.0
      %593 = vmatprep.subr.mxu0 0.0
      %594 = vmatpush2.msra.mxu0 0.0
      %595 = vmatprep.subr.mxu0 0.0
      %596 = vmatpush2.msra.mxu0 0.0
      %597 = vmatprep.subr.mxu0 0.0
      %598 = vmatpush2.msra.mxu0 0.0
      %599 = vmatprep.subr.mxu0 0.0
      %600 = vmatpush2.msra.mxu0 0.0
      %601 = vmatprep.mubr.f32.mxu0 0.0
      %602 = vmatmul.mubr.f32.gmra.mxu0 %v437
      %v603 = vpop.f32.mrf.mxu0
      %v604 = vadd.f32 %v418, %v603
      %v605 = vpop.f32.mrf.mxu0
      %606 = vmatprep.mubr.f32.mxu0 0.0
      %607 = vmatmul.mubr.f32.gmra.mxu0 %v440
      %v608 = vpop.f32.mrf.mxu0
      %v609 = vadd.f32 %v423, %v608
      %v610 = vpop.f32.mrf.mxu0
      %611 = vmatprep.mubr.f32.mxu0 0.0
      %612 = vmatmul.mubr.f32.gmra.mxu0 %v443
      %v613 = vpop.f32.mrf.mxu0
      %v614 = vadd.f32 %v428, %v613
      %v615 = vpop.f32.mrf.mxu0
      %616 = vmatprep.mubr.f32.mxu0 0.0
      %617 = vmatmul.mubr.f32.gmra.mxu0 %v446
      %v618 = vpop.f32.mrf.mxu0
      %v619 = vadd.f32 %v433, %v618
      %v620 = vpop.f32.mrf.mxu0
      %621 = vdwg.mxu0
      %s622 = scalar_lea.vmem %s1, 64
      %v623 = vld [vmem:[%s622] sm:$0xff]
      %v624 = vld [vmem:[%s622 + $0x8] sm:$0xff]
      %v625 = vld [vmem:[%s622 + $0x10] sm:$0xff]
      %v626 = vld [vmem:[%s622 + $0x18] sm:$0xff]
      %627 = vrot.lane.b32.xlu0 %v171, 126
      %v628 = vpop.permute.xlu0 %627
      %629 = vrot.lane.b32.xlu0 %v172, 126
      %v630 = vpop.permute.xlu0 %629
      %631 = vrot.lane.b32.xlu0 %v173, 126
      %v632 = vpop.permute.xlu0 %631
      %633 = vrot.lane.b32.xlu0 %v174, 126
      %v634 = vpop.permute.xlu0 %633
      %635 = vrot.lane.b32.xlu0 %v175, 126
      %v636 = vpop.permute.xlu0 %635
      %637 = vrot.lane.b32.xlu0 %v176, 126
      %v638 = vpop.permute.xlu0 %637
      %639 = vrot.lane.b32.xlu0 %v177, 126
      %v640 = vpop.permute.xlu0 %639
      %641 = vrot.lane.b32.xlu0 %v178, 126
      %v642 = vpop.permute.xlu0 %641
      %643 = vrot.lane.b32.xlu0 %v179, 126
      %v644 = vpop.permute.xlu0 %643
      %645 = vrot.lane.b32.xlu0 %v180, 126
      %v646 = vpop.permute.xlu0 %645
      %647 = vrot.lane.b32.xlu0 %v181, 126
      %v648 = vpop.permute.xlu0 %647
      %649 = vrot.lane.b32.xlu0 %v182, 126
      %v650 = vpop.permute.xlu0 %649
      %vm651 = vcmask 1031168
      %v652 = vsel %vm651, %v628, %v630
      %v653 = vsel %vm651, %v630, %v632
      %v654 = vsel %vm651, %v634, %v636
      %v655 = vsel %vm651, %v636, %v638
      %v656 = vsel %vm651, %v640, %v642
      %v657 = vsel %vm651, %v642, %v644
      %v658 = vsel %vm651, %v646, %v648
      %v659 = vsel %vm651, %v648, %v650
      %v673 = vsel %vm249, %v623, 0
      %v676 = vsel %vm249, %v624, 0
      %v679 = vsel %vm249, %v625, 0
      %v682 = vsel %vm249, %v626, 0
      %684 = vmatprep.subr.mxu0 0.0
      %685 = vmatpush1.msra.mxu0 0.0
      %686 = vmatprep.subr.mxu0 0.0
      %687 = vmatpush1.msra.mxu0 0.0
      %688 = vmatprep.subr.mxu0 0.0
      %689 = vmatpush1.msra.mxu0 0.0
      %690 = vmatprep.subr.mxu0 0.0
      %691 = vmatpush1.msra.mxu0 0.0
      %692 = vmatprep.subr.mxu0 0.0
      %693 = vmatpush1.msra.mxu0 0.0
      %694 = vmatprep.subr.mxu0 0.0
      %695 = vmatpush1.msra.mxu0 0.0
      %696 = vmatprep.subr.mxu0 0.0
      %697 = vmatpush1.msra.mxu0 0.0
      %698 = vmatprep.subr.mxu0 0.0
      %699 = vmatpush1.msra.mxu0 0.0
      %700 = vmatprep.subr.mxu0 0.0
      %701 = vmatpush1.msra.mxu0 0.0
      %702 = vmatprep.subr.mxu0 0.0
      %703 = vmatpush1.msra.mxu0 0.0
      %704 = vmatprep.subr.mxu0 0.0
      %705 = vmatpush1.msra.mxu0 0.0
      %706 = vmatprep.subr.mxu0 0.0
      %707 = vmatpush1.msra.mxu0 0.0
      %708 = vmatprep.subr.mxu0 %v659
      %709 = vmatpush1.msra.mxu0 %v658
      %710 = vmatprep.subr.mxu0 %v657
      %711 = vmatpush1.msra.mxu0 %v656
      %712 = vmatprep.subr.mxu0 %v655
      %713 = vmatpush1.msra.mxu0 %v654
      %714 = vmatprep.subr.mxu0 %v653
      %715 = vmatpush1.msra.mxu0 %v652
      %716 = vmatprep.subr.mxu0 0.0
      %717 = vmatpush2.msra.mxu0 0.0
      %718 = vmatprep.subr.mxu0 0.0
      %719 = vmatpush2.msra.mxu0 0.0
      %720 = vmatprep.subr.mxu0 0.0
      %721 = vmatpush2.msra.mxu0 0.0
      %722 = vmatprep.subr.mxu0 0.0
      %723 = vmatpush2.msra.mxu0 0.0
      %724 = vmatprep.subr.mxu0 0.0
      %725 = vmatpush2.msra.mxu0 0.0
      %726 = vmatprep.subr.mxu0 0.0
      %727 = vmatpush2.msra.mxu0 0.0
      %728 = vmatprep.subr.mxu0 0.0
      %729 = vmatpush2.msra.mxu0 0.0
      %730 = vmatprep.subr.mxu0 0.0
      %731 = vmatpush2.msra.mxu0 0.0
      %732 = vmatprep.subr.mxu0 0.0
      %733 = vmatpush2.msra.mxu0 0.0
      %734 = vmatprep.subr.mxu0 0.0
      %735 = vmatpush2.msra.mxu0 0.0
      %736 = vmatprep.subr.mxu0 0.0
      %737 = vmatpush2.msra.mxu0 0.0
      %738 = vmatprep.subr.mxu0 0.0
      %739 = vmatpush2.msra.mxu0 0.0
      %740 = vmatprep.subr.mxu0 0.0
      %741 = vmatpush2.msra.mxu0 0.0
      %742 = vmatprep.subr.mxu0 0.0
      %743 = vmatpush2.msra.mxu0 0.0
      %744 = vmatprep.subr.mxu0 0.0
      %745 = vmatpush2.msra.mxu0 0.0
      %746 = vmatprep.subr.mxu0 0.0
      %747 = vmatpush2.msra.mxu0 0.0
      %748 = vmatprep.mubr.f32.mxu0 0.0
      %749 = vmatmul.mubr.f32.gmra.mxu0 %v673
      %v750 = vpop.f32.mrf.mxu0
      %v751 = vadd.f32 0.0, %v750
      %v752 = vpop.f32.mrf.mxu0
      %v753 = vadd.f32 0.0, %v752
      %754 = vmatprep.mubr.f32.mxu0 0.0
      %755 = vmatmul.mubr.f32.gmra.mxu0 %v676
      %v756 = vpop.f32.mrf.mxu0
      %v757 = vadd.f32 0.0, %v756
      %v758 = vpop.f32.mrf.mxu0
      %v759 = vadd.f32 0.0, %v758
      %760 = vmatprep.mubr.f32.mxu0 0.0
      %761 = vmatmul.mubr.f32.gmra.mxu0 %v679
      %v762 = vpop.f32.mrf.mxu0
      %v763 = vadd.f32 0.0, %v762
      %v764 = vpop.f32.mrf.mxu0
      %v765 = vadd.f32 0.0, %v764
      %766 = vmatprep.mubr.f32.mxu0 0.0
      %767 = vmatmul.mubr.f32.gmra.mxu0 %v682
      %v768 = vpop.f32.mrf.mxu0
      %v769 = vadd.f32 0.0, %v768
      %v770 = vpop.f32.mrf.mxu0
      %v771 = vadd.f32 0.0, %v770
      %772 = vdwg.mxu0
      %773 = vmatprep.subr.mxu0 0.0
      %774 = vmatpush1.msra.mxu0 0.0
      %775 = vmatprep.subr.mxu0 0.0
      %776 = vmatpush1.msra.mxu0 0.0
      %777 = vmatprep.subr.mxu0 0.0
      %778 = vmatpush1.msra.mxu0 0.0
      %779 = vmatprep.subr.mxu0 0.0
      %780 = vmatpush1.msra.mxu0 0.0
      %781 = vmatprep.subr.mxu0 0.0
      %782 = vmatpush1.msra.mxu0 0.0
      %783 = vmatprep.subr.mxu0 0.0
      %784 = vmatpush1.msra.mxu0 0.0
      %785 = vmatprep.subr.mxu0 0.0
      %786 = vmatpush1.msra.mxu0 0.0
      %787 = vmatprep.subr.mxu0 0.0
      %788 = vmatpush1.msra.mxu0 0.0
      %789 = vmatprep.subr.mxu0 0.0
      %790 = vmatpush1.msra.mxu0 0.0
      %791 = vmatprep.subr.mxu0 0.0
      %792 = vmatpush1.msra.mxu0 0.0
      %793 = vmatprep.subr.mxu0 0.0
      %794 = vmatpush1.msra.mxu0 0.0
      %795 = vmatprep.subr.mxu0 0.0
      %796 = vmatpush1.msra.mxu0 0.0
      %797 = vmatprep.subr.mxu0 0.0
      %798 = vmatpush1.msra.mxu0 %v650
      %799 = vmatprep.subr.mxu0 0.0
      %800 = vmatpush1.msra.mxu0 %v644
      %801 = vmatprep.subr.mxu0 0.0
      %802 = vmatpush1.msra.mxu0 %v638
      %803 = vmatprep.subr.mxu0 0.0
      %804 = vmatpush1.msra.mxu0 %v632
      %805 = vmatprep.subr.mxu0 0.0
      %806 = vmatpush2.msra.mxu0 0.0
      %807 = vmatprep.subr.mxu0 0.0
      %808 = vmatpush2.msra.mxu0 0.0
      %809 = vmatprep.subr.mxu0 0.0
      %810 = vmatpush2.msra.mxu0 0.0
      %811 = vmatprep.subr.mxu0 0.0
      %812 = vmatpush2.msra.mxu0 0.0
      %813 = vmatprep.subr.mxu0 0.0
      %814 = vmatpush2.msra.mxu0 0.0
      %815 = vmatprep.subr.mxu0 0.0
      %816 = vmatpush2.msra.mxu0 0.0
      %817 = vmatprep.subr.mxu0 0.0
      %818 = vmatpush2.msra.mxu0 0.0
      %819 = vmatprep.subr.mxu0 0.0
      %820 = vmatpush2.msra.mxu0 0.0
      %821 = vmatprep.subr.mxu0 0.0
      %822 = vmatpush2.msra.mxu0 0.0
      %823 = vmatprep.subr.mxu0 0.0
      %824 = vmatpush2.msra.mxu0 0.0
      %825 = vmatprep.subr.mxu0 0.0
      %826 = vmatpush2.msra.mxu0 0.0
      %827 = vmatprep.subr.mxu0 0.0
      %828 = vmatpush2.msra.mxu0 0.0
      %829 = vmatprep.subr.mxu0 0.0
      %830 = vmatpush2.msra.mxu0 0.0
      %831 = vmatprep.subr.mxu0 0.0
      %832 = vmatpush2.msra.mxu0 0.0
      %833 = vmatprep.subr.mxu0 0.0
      %834 = vmatpush2.msra.mxu0 0.0
      %835 = vmatprep.subr.mxu0 0.0
      %836 = vmatpush2.msra.mxu0 0.0
      %837 = vmatprep.mubr.f32.mxu0 0.0
      %838 = vmatmul.mubr.f32.gmra.mxu0 %v673
      %v839 = vpop.f32.mrf.mxu0
      %v840 = vadd.f32 0.0, %v839
      %v841 = vpop.f32.mrf.mxu0
      %842 = vmatprep.mubr.f32.mxu0 0.0
      %843 = vmatmul.mubr.f32.gmra.mxu0 %v676
      %v844 = vpop.f32.mrf.mxu0
      %v845 = vadd.f32 0.0, %v844
      %v846 = vpop.f32.mrf.mxu0
      %847 = vmatprep.mubr.f32.mxu0 0.0
      %848 = vmatmul.mubr.f32.gmra.mxu0 %v679
      %v849 = vpop.f32.mrf.mxu0
      %v850 = vadd.f32 0.0, %v849
      %v851 = vpop.f32.mrf.mxu0
      %852 = vmatprep.mubr.f32.mxu0 0.0
      %853 = vmatmul.mubr.f32.gmra.mxu0 %v682
      %v854 = vpop.f32.mrf.mxu0
      %v855 = vadd.f32 0.0, %v854
      %v856 = vpop.f32.mrf.mxu0
      %857 = vdwg.mxu0
      %v858 = vadd.f32 %v515, %v751
      %v859 = vadd.f32 %v517, %v753
      %v860 = vadd.f32 %v604, %v840
      %v861 = vadd.f32 %v521, %v757
      %v862 = vadd.f32 %v523, %v759
      %v863 = vadd.f32 %v609, %v845
      %v864 = vadd.f32 %v527, %v763
      %v865 = vadd.f32 %v529, %v765
      %v866 = vadd.f32 %v614, %v850
      %v867 = vadd.f32 %v533, %v769
      %v868 = vadd.f32 %v535, %v771
      %v869 = vadd.f32 %v619, %v855
      %s870 = scalar_lea.vmem %s1, 96
      %v871 = vld [vmem:[%s870] sm:$0xff]
      %v872 = vld [vmem:[%s870 + $0x8] sm:$0xff]
      %v873 = vld [vmem:[%s870 + $0x10] sm:$0xff]
      %v874 = vld [vmem:[%s870 + $0x18] sm:$0xff]
      %875 = vrot.lane.b32.xlu0 %v171, 110
      %v876 = vpop.permute.xlu0 %875
      %877 = vrot.lane.b32.xlu0 %v172, 110
      %v878 = vpop.permute.xlu0 %877
      %879 = vrot.lane.b32.xlu0 %v173, 110
      %v880 = vpop.permute.xlu0 %879
      %881 = vrot.lane.b32.xlu0 %v174, 110
      %v882 = vpop.permute.xlu0 %881
      %883 = vrot.lane.b32.xlu0 %v175, 110
      %v884 = vpop.permute.xlu0 %883
      %885 = vrot.lane.b32.xlu0 %v176, 110
      %v886 = vpop.permute.xlu0 %885
      %887 = vrot.lane.b32.xlu0 %v177, 110
      %v888 = vpop.permute.xlu0 %887
      %889 = vrot.lane.b32.xlu0 %v178, 110
      %v890 = vpop.permute.xlu0 %889
      %891 = vrot.lane.b32.xlu0 %v179, 110
      %v892 = vpop.permute.xlu0 %891
      %893 = vrot.lane.b32.xlu0 %v180, 110
      %v894 = vpop.permute.xlu0 %893
      %895 = vrot.lane.b32.xlu0 %v181, 110
      %v896 = vpop.permute.xlu0 %895
      %897 = vrot.lane.b32.xlu0 %v182, 110
      %v898 = vpop.permute.xlu0 %897
      %vm899 = vcmask 900096
      %v900 = vsel %vm899, %v876, %v878
      %v901 = vsel %vm899, %v878, %v880
      %v902 = vsel %vm899, %v882, %v884
      %v903 = vsel %vm899, %v884, %v886
      %v904 = vsel %vm899, %v888, %v890
      %v905 = vsel %vm899, %v890, %v892
      %v906 = vsel %vm899, %v894, %v896
      %v907 = vsel %vm899, %v896, %v898
      %v921 = vsel %vm249, %v871, 0
      %v924 = vsel %vm249, %v872, 0
      %v927 = vsel %vm249, %v873, 0
      %v930 = vsel %vm249, %v874, 0
      %932 = vmatprep.subr.mxu0 0.0
      %933 = vmatpush1.msra.mxu0 0.0
      %934 = vmatprep.subr.mxu0 0.0
      %935 = vmatpush1.msra.mxu0 0.0
      %936 = vmatprep.subr.mxu0 0.0
      %937 = vmatpush1.msra.mxu0 0.0
      %938 = vmatprep.subr.mxu0 0.0
      %939 = vmatpush1.msra.mxu0 0.0
      %940 = vmatprep.subr.mxu0 0.0
      %941 = vmatpush1.msra.mxu0 0.0
      %942 = vmatprep.subr.mxu0 0.0
      %943 = vmatpush1.msra.mxu0 0.0
      %944 = vmatprep.subr.mxu0 0.0
      %945 = vmatpush1.msra.mxu0 0.0
      %946 = vmatprep.subr.mxu0 0.0
      %947 = vmatpush1.msra.mxu0 0.0
      %948 = vmatprep.subr.mxu0 0.0
      %949 = vmatpush1.msra.mxu0 0.0
      %950 = vmatprep.subr.mxu0 0.0
      %951 = vmatpush1.msra.mxu0 0.0
      %952 = vmatprep.subr.mxu0 0.0
      %953 = vmatpush1.msra.mxu0 0.0
      %954 = vmatprep.subr.mxu0 0.0
      %955 = vmatpush1.msra.mxu0 0.0
      %956 = vmatprep.subr.mxu0 %v907
      %957 = vmatpush1.msra.mxu0 %v906
      %958 = vmatprep.subr.mxu0 %v905
      %959 = vmatpush1.msra.mxu0 %v904
      %960 = vmatprep.subr.mxu0 %v903
      %961 = vmatpush1.msra.mxu0 %v902
      %962 = vmatprep.subr.mxu0 %v901
      %963 = vmatpush1.msra.mxu0 %v900
      %964 = vmatprep.subr.mxu0 0.0
      %965 = vmatpush2.msra.mxu0 0.0
      %966 = vmatprep.subr.mxu0 0.0
      %967 = vmatpush2.msra.mxu0 0.0
      %968 = vmatprep.subr.mxu0 0.0
      %969 = vmatpush2.msra.mxu0 0.0
      %970 = vmatprep.subr.mxu0 0.0
      %971 = vmatpush2.msra.mxu0 0.0
      %972 = vmatprep.subr.mxu0 0.0
      %973 = vmatpush2.msra.mxu0 0.0
      %974 = vmatprep.subr.mxu0 0.0
      %975 = vmatpush2.msra.mxu0 0.0
      %976 = vmatprep.subr.mxu0 0.0
      %977 = vmatpush2.msra.mxu0 0.0
      %978 = vmatprep.subr.mxu0 0.0
      %979 = vmatpush2.msra.mxu0 0.0
      %980 = vmatprep.subr.mxu0 0.0
      %981 = vmatpush2.msra.mxu0 0.0
      %982 = vmatprep.subr.mxu0 0.0
      %983 = vmatpush2.msra.mxu0 0.0
      %984 = vmatprep.subr.mxu0 0.0
      %985 = vmatpush2.msra.mxu0 0.0
      %986 = vmatprep.subr.mxu0 0.0
      %987 = vmatpush2.msra.mxu0 0.0
      %988 = vmatprep.subr.mxu0 0.0
      %989 = vmatpush2.msra.mxu0 0.0
      %990 = vmatprep.subr.mxu0 0.0
      %991 = vmatpush2.msra.mxu0 0.0
      %992 = vmatprep.subr.mxu0 0.0
      %993 = vmatpush2.msra.mxu0 0.0
      %994 = vmatprep.subr.mxu0 0.0
      %995 = vmatpush2.msra.mxu0 0.0
      %996 = vmatprep.mubr.f32.mxu0 0.0
      %997 = vmatmul.mubr.f32.gmra.mxu0 %v921
      %v998 = vpop.f32.mrf.mxu0
      %v999 = vadd.f32 0.0, %v998
      %v1000 = vpop.f32.mrf.mxu0
      %v1001 = vadd.f32 0.0, %v1000
      %1002 = vmatprep.mubr.f32.mxu0 0.0
      %1003 = vmatmul.mubr.f32.gmra.mxu0 %v924
      %v1004 = vpop.f32.mrf.mxu0
      %v1005 = vadd.f32 0.0, %v1004
      %v1006 = vpop.f32.mrf.mxu0
      %v1007 = vadd.f32 0.0, %v1006
      %1008 = vmatprep.mubr.f32.mxu0 0.0
      %1009 = vmatmul.mubr.f32.gmra.mxu0 %v927
      %v1010 = vpop.f32.mrf.mxu0
      %v1011 = vadd.f32 0.0, %v1010
      %v1012 = vpop.f32.mrf.mxu0
      %v1013 = vadd.f32 0.0, %v1012
      %1014 = vmatprep.mubr.f32.mxu0 0.0
      %1015 = vmatmul.mubr.f32.gmra.mxu0 %v930
      %v1016 = vpop.f32.mrf.mxu0
      %v1017 = vadd.f32 0.0, %v1016
      %v1018 = vpop.f32.mrf.mxu0
      %v1019 = vadd.f32 0.0, %v1018
      %1020 = vdwg.mxu0
      %1021 = vmatprep.subr.mxu0 0.0
      %1022 = vmatpush1.msra.mxu0 0.0
      %1023 = vmatprep.subr.mxu0 0.0
      %1024 = vmatpush1.msra.mxu0 0.0
      %1025 = vmatprep.subr.mxu0 0.0
      %1026 = vmatpush1.msra.mxu0 0.0
      %1027 = vmatprep.subr.mxu0 0.0
      %1028 = vmatpush1.msra.mxu0 0.0
      %1029 = vmatprep.subr.mxu0 0.0
      %1030 = vmatpush1.msra.mxu0 0.0
      %1031 = vmatprep.subr.mxu0 0.0
      %1032 = vmatpush1.msra.mxu0 0.0
      %1033 = vmatprep.subr.mxu0 0.0
      %1034 = vmatpush1.msra.mxu0 0.0
      %1035 = vmatprep.subr.mxu0 0.0
      %1036 = vmatpush1.msra.mxu0 0.0
      %1037 = vmatprep.subr.mxu0 0.0
      %1038 = vmatpush1.msra.mxu0 0.0
      %1039 = vmatprep.subr.mxu0 0.0
      %1040 = vmatpush1.msra.mxu0 0.0
      %1041 = vmatprep.subr.mxu0 0.0
      %1042 = vmatpush1.msra.mxu0 0.0
      %1043 = vmatprep.subr.mxu0 0.0
      %1044 = vmatpush1.msra.mxu0 0.0
      %1045 = vmatprep.subr.mxu0 0.0
      %1046 = vmatpush1.msra.mxu0 %v898
      %1047 = vmatprep.subr.mxu0 0.0
      %1048 = vmatpush1.msra.mxu0 %v892
      %1049 = vmatprep.subr.mxu0 0.0
      %1050 = vmatpush1.msra.mxu0 %v886
      %1051 = vmatprep.subr.mxu0 0.0
      %1052 = vmatpush1.msra.mxu0 %v880
      %1053 = vmatprep.subr.mxu0 0.0
      %1054 = vmatpush2.msra.mxu0 0.0
      %1055 = vmatprep.subr.mxu0 0.0
      %1056 = vmatpush2.msra.mxu0 0.0
      %1057 = vmatprep.subr.mxu0 0.0
      %1058 = vmatpush2.msra.mxu0 0.0
      %1059 = vmatprep.subr.mxu0 0.0
      %1060 = vmatpush2.msra.mxu0 0.0
      %1061 = vmatprep.subr.mxu0 0.0
      %1062 = vmatpush2.msra.mxu0 0.0
      %1063 = vmatprep.subr.mxu0 0.0
      %1064 = vmatpush2.msra.mxu0 0.0
      %1065 = vmatprep.subr.mxu0 0.0
      %1066 = vmatpush2.msra.mxu0 0.0
      %1067 = vmatprep.subr.mxu0 0.0
      %1068 = vmatpush2.msra.mxu0 0.0
      %1069 = vmatprep.subr.mxu0 0.0
      %1070 = vmatpush2.msra.mxu0 0.0
      %1071 = vmatprep.subr.mxu0 0.0
      %1072 = vmatpush2.msra.mxu0 0.0
      %1073 = vmatprep.subr.mxu0 0.0
      %1074 = vmatpush2.msra.mxu0 0.0
      %1075 = vmatprep.subr.mxu0 0.0
      %1076 = vmatpush2.msra.mxu0 0.0
      %1077 = vmatprep.subr.mxu0 0.0
      %1078 = vmatpush2.msra.mxu0 0.0
      %1079 = vmatprep.subr.mxu0 0.0
      %1080 = vmatpush2.msra.mxu0 0.0
      %1081 = vmatprep.subr.mxu0 0.0
      %1082 = vmatpush2.msra.mxu0 0.0
      %1083 = vmatprep.subr.mxu0 0.0
      %1084 = vmatpush2.msra.mxu0 0.0
      %1085 = vmatprep.mubr.f32.mxu0 0.0
      %1086 = vmatmul.mubr.f32.gmra.mxu0 %v921
      %v1087 = vpop.f32.mrf.mxu0
      %v1088 = vadd.f32 0.0, %v1087
      %v1089 = vpop.f32.mrf.mxu0
      %1090 = vmatprep.mubr.f32.mxu0 0.0
      %1091 = vmatmul.mubr.f32.gmra.mxu0 %v924
      %v1092 = vpop.f32.mrf.mxu0
      %v1093 = vadd.f32 0.0, %v1092
      %v1094 = vpop.f32.mrf.mxu0
      %1095 = vmatprep.mubr.f32.mxu0 0.0
      %1096 = vmatmul.mubr.f32.gmra.mxu0 %v927
      %v1097 = vpop.f32.mrf.mxu0
      %v1098 = vadd.f32 0.0, %v1097
      %v1099 = vpop.f32.mrf.mxu0
      %1100 = vmatprep.mubr.f32.mxu0 0.0
      %1101 = vmatmul.mubr.f32.gmra.mxu0 %v930
      %v1102 = vpop.f32.mrf.mxu0
      %v1103 = vadd.f32 0.0, %v1102
      %v1104 = vpop.f32.mrf.mxu0
      %1105 = vdwg.mxu0
      %v1106 = vadd.f32 %v858, %v999
      %v1107 = vadd.f32 %v859, %v1001
      %v1108 = vadd.f32 %v860, %v1088
      %v1109 = vadd.f32 %v861, %v1005
      %v1110 = vadd.f32 %v862, %v1007
      %v1111 = vadd.f32 %v863, %v1093
      %v1112 = vadd.f32 %v864, %v1011
      %v1113 = vadd.f32 %v865, %v1013
      %v1114 = vadd.f32 %v866, %v1098
      %v1115 = vadd.f32 %v867, %v1017
      %v1116 = vadd.f32 %v868, %v1019
      %v1117 = vadd.f32 %v869, %v1103
      %s1118 = scalar_lea.vmem %s1, 128
      %v1119 = vld [vmem:[%s1118] sm:$0xff]
      %v1120 = vld [vmem:[%s1118 + $0x8] sm:$0xff]
      %v1121 = vld [vmem:[%s1118 + $0x10] sm:$0xff]
      %v1122 = vld [vmem:[%s1118 + $0x18] sm:$0xff]
      %1123 = vrot.lane.b32.xlu0 %v171, 109
      %v1124 = vpop.permute.xlu0 %1123
      %1125 = vrot.lane.b32.xlu0 %v172, 109
      %v1126 = vpop.permute.xlu0 %1125
      %1127 = vrot.lane.b32.xlu0 %v173, 109
      %v1128 = vpop.permute.xlu0 %1127
      %1129 = vrot.lane.b32.xlu0 %v174, 109
      %v1130 = vpop.permute.xlu0 %1129
      %1131 = vrot.lane.b32.xlu0 %v175, 109
      %v1132 = vpop.permute.xlu0 %1131
      %1133 = vrot.lane.b32.xlu0 %v176, 109
      %v1134 = vpop.permute.xlu0 %1133
      %1135 = vrot.lane.b32.xlu0 %v177, 109
      %v1136 = vpop.permute.xlu0 %1135
      %1137 = vrot.lane.b32.xlu0 %v178, 109
      %v1138 = vpop.permute.xlu0 %1137
      %1139 = vrot.lane.b32.xlu0 %v179, 109
      %v1140 = vpop.permute.xlu0 %1139
      %1141 = vrot.lane.b32.xlu0 %v180, 109
      %v1142 = vpop.permute.xlu0 %1141
      %1143 = vrot.lane.b32.xlu0 %v181, 109
      %v1144 = vpop.permute.xlu0 %1143
      %1145 = vrot.lane.b32.xlu0 %v182, 109
      %v1146 = vpop.permute.xlu0 %1145
      %vm1147 = vcmask 891904
      %v1148 = vsel %vm1147, %v1124, %v1126
      %v1149 = vsel %vm1147, %v1126, %v1128
      %v1150 = vsel %vm1147, %v1130, %v1132
      %v1151 = vsel %vm1147, %v1132, %v1134
      %v1152 = vsel %vm1147, %v1136, %v1138
      %v1153 = vsel %vm1147, %v1138, %v1140
      %v1154 = vsel %vm1147, %v1142, %v1144
      %v1155 = vsel %vm1147, %v1144, %v1146
      %v1169 = vsel %vm249, %v1119, 0
      %v1172 = vsel %vm249, %v1120, 0
      %v1175 = vsel %vm249, %v1121, 0
      %v1178 = vsel %vm249, %v1122, 0
      %1180 = vmatprep.subr.mxu0 0.0
      %1181 = vmatpush1.msra.mxu0 0.0
      %1182 = vmatprep.subr.mxu0 0.0
      %1183 = vmatpush1.msra.mxu0 0.0
      %1184 = vmatprep.subr.mxu0 0.0
      %1185 = vmatpush1.msra.mxu0 0.0
      %1186 = vmatprep.subr.mxu0 0.0
      %1187 = vmatpush1.msra.mxu0 0.0
      %1188 = vmatprep.subr.mxu0 0.0
      %1189 = vmatpush1.msra.mxu0 0.0
      %1190 = vmatprep.subr.mxu0 0.0
      %1191 = vmatpush1.msra.mxu0 0.0
      %1192 = vmatprep.subr.mxu0 0.0
      %1193 = vmatpush1.msra.mxu0 0.0
      %1194 = vmatprep.subr.mxu0 0.0
      %1195 = vmatpush1.msra.mxu0 0.0
      %1196 = vmatprep.subr.mxu0 0.0
      %1197 = vmatpush1.msra.mxu0 0.0
      %1198 = vmatprep.subr.mxu0 0.0
      %1199 = vmatpush1.msra.mxu0 0.0
      %1200 = vmatprep.subr.mxu0 0.0
      %1201 = vmatpush1.msra.mxu0 0.0
      %1202 = vmatprep.subr.mxu0 0.0
      %1203 = vmatpush1.msra.mxu0 0.0
      %1204 = vmatprep.subr.mxu0 %v1155
      %1205 = vmatpush1.msra.mxu0 %v1154
      %1206 = vmatprep.subr.mxu0 %v1153
      %1207 = vmatpush1.msra.mxu0 %v1152
      %1208 = vmatprep.subr.mxu0 %v1151
      %1209 = vmatpush1.msra.mxu0 %v1150
      %1210 = vmatprep.subr.mxu0 %v1149
      %1211 = vmatpush1.msra.mxu0 %v1148
      %1212 = vmatprep.subr.mxu0 0.0
      %1213 = vmatpush2.msra.mxu0 0.0
      %1214 = vmatprep.subr.mxu0 0.0
      %1215 = vmatpush2.msra.mxu0 0.0
      %1216 = vmatprep.subr.mxu0 0.0
      %1217 = vmatpush2.msra.mxu0 0.0
      %1218 = vmatprep.subr.mxu0 0.0
      %1219 = vmatpush2.msra.mxu0 0.0
      %1220 = vmatprep.subr.mxu0 0.0
      %1221 = vmatpush2.msra.mxu0 0.0
      %1222 = vmatprep.subr.mxu0 0.0
      %1223 = vmatpush2.msra.mxu0 0.0
      %1224 = vmatprep.subr.mxu0 0.0
      %1225 = vmatpush2.msra.mxu0 0.0
      %1226 = vmatprep.subr.mxu0 0.0
      %1227 = vmatpush2.msra.mxu0 0.0
      %1228 = vmatprep.subr.mxu0 0.0
      %1229 = vmatpush2.msra.mxu0 0.0
      %1230 = vmatprep.subr.mxu0 0.0
      %1231 = vmatpush2.msra.mxu0 0.0
      %1232 = vmatprep.subr.mxu0 0.0
      %1233 = vmatpush2.msra.mxu0 0.0
      %1234 = vmatprep.subr.mxu0 0.0
      %1235 = vmatpush2.msra.mxu0 0.0
      %1236 = vmatprep.subr.mxu0 0.0
      %1237 = vmatpush2.msra.mxu0 0.0
      %1238 = vmatprep.subr.mxu0 0.0
      %1239 = vmatpush2.msra.mxu0 0.0
      %1240 = vmatprep.subr.mxu0 0.0
      %1241 = vmatpush2.msra.mxu0 0.0
      %1242 = vmatprep.subr.mxu0 0.0
      %1243 = vmatpush2.msra.mxu0 0.0
      %1244 = vmatprep.mubr.f32.mxu0 0.0
      %1245 = vmatmul.mubr.f32.gmra.mxu0 %v1169
      %v1246 = vpop.f32.mrf.mxu0
      %v1247 = vadd.f32 0.0, %v1246
      %v1248 = vpop.f32.mrf.mxu0
      %v1249 = vadd.f32 0.0, %v1248
      %1250 = vmatprep.mubr.f32.mxu0 0.0
      %1251 = vmatmul.mubr.f32.gmra.mxu0 %v1172
      %v1252 = vpop.f32.mrf.mxu0
      %v1253 = vadd.f32 0.0, %v1252
      %v1254 = vpop.f32.mrf.mxu0
      %v1255 = vadd.f32 0.0, %v1254
      %1256 = vmatprep.mubr.f32.mxu0 0.0
      %1257 = vmatmul.mubr.f32.gmra.mxu0 %v1175
      %v1258 = vpop.f32.mrf.mxu0
      %v1259 = vadd.f32 0.0, %v1258
      %v1260 = vpop.f32.mrf.mxu0
      %v1261 = vadd.f32 0.0, %v1260
      %1262 = vmatprep.mubr.f32.mxu0 0.0
      %1263 = vmatmul.mubr.f32.gmra.mxu0 %v1178
      %v1264 = vpop.f32.mrf.mxu0
      %v1265 = vadd.f32 0.0, %v1264
      %v1266 = vpop.f32.mrf.mxu0
      %v1267 = vadd.f32 0.0, %v1266
      %1268 = vdwg.mxu0
      %1269 = vmatprep.subr.mxu0 0.0
      %1270 = vmatpush1.msra.mxu0 0.0
      %1271 = vmatprep.subr.mxu0 0.0
      %1272 = vmatpush1.msra.mxu0 0.0
      %1273 = vmatprep.subr.mxu0 0.0
      %1274 = vmatpush1.msra.mxu0 0.0
      %1275 = vmatprep.subr.mxu0 0.0
      %1276 = vmatpush1.msra.mxu0 0.0
      %1277 = vmatprep.subr.mxu0 0.0
      %1278 = vmatpush1.msra.mxu0 0.0
      %1279 = vmatprep.subr.mxu0 0.0
      %1280 = vmatpush1.msra.mxu0 0.0
      %1281 = vmatprep.subr.mxu0 0.0
      %1282 = vmatpush1.msra.mxu0 0.0
      %1283 = vmatprep.subr.mxu0 0.0
      %1284 = vmatpush1.msra.mxu0 0.0
      %1285 = vmatprep.subr.mxu0 0.0
      %1286 = vmatpush1.msra.mxu0 0.0
      %1287 = vmatprep.subr.mxu0 0.0
      %1288 = vmatpush1.msra.mxu0 0.0
      %1289 = vmatprep.subr.mxu0 0.0
      %1290 = vmatpush1.msra.mxu0 0.0
      %1291 = vmatprep.subr.mxu0 0.0
      %1292 = vmatpush1.msra.mxu0 0.0
      %1293 = vmatprep.subr.mxu0 0.0
      %1294 = vmatpush1.msra.mxu0 %v1146
      %1295 = vmatprep.subr.mxu0 0.0
      %1296 = vmatpush1.msra.mxu0 %v1140
      %1297 = vmatprep.subr.mxu0 0.0
      %1298 = vmatpush1.msra.mxu0 %v1134
      %1299 = vmatprep.subr.mxu0 0.0
      %1300 = vmatpush1.msra.mxu0 %v1128
      %1301 = vmatprep.subr.mxu0 0.0
      %1302 = vmatpush2.msra.mxu0 0.0
      %1303 = vmatprep.subr.mxu0 0.0
      %1304 = vmatpush2.msra.mxu0 0.0
      %1305 = vmatprep.subr.mxu0 0.0
      %1306 = vmatpush2.msra.mxu0 0.0
      %1307 = vmatprep.subr.mxu0 0.0
      %1308 = vmatpush2.msra.mxu0 0.0
      %1309 = vmatprep.subr.mxu0 0.0
      %1310 = vmatpush2.msra.mxu0 0.0
      %1311 = vmatprep.subr.mxu0 0.0
      %1312 = vmatpush2.msra.mxu0 0.0
      %1313 = vmatprep.subr.mxu0 0.0
      %1314 = vmatpush2.msra.mxu0 0.0
      %1315 = vmatprep.subr.mxu0 0.0
      %1316 = vmatpush2.msra.mxu0 0.0
      %1317 = vmatprep.subr.mxu0 0.0
      %1318 = vmatpush2.msra.mxu0 0.0
      %1319 = vmatprep.subr.mxu0 0.0
      %1320 = vmatpush2.msra.mxu0 0.0
      %1321 = vmatprep.subr.mxu0 0.0
      %1322 = vmatpush2.msra.mxu0 0.0
      %1323 = vmatprep.subr.mxu0 0.0
      %1324 = vmatpush2.msra.mxu0 0.0
      %1325 = vmatprep.subr.mxu0 0.0
      %1326 = vmatpush2.msra.mxu0 0.0
      %1327 = vmatprep.subr.mxu0 0.0
      %1328 = vmatpush2.msra.mxu0 0.0
      %1329 = vmatprep.subr.mxu0 0.0
      %1330 = vmatpush2.msra.mxu0 0.0
      %1331 = vmatprep.subr.mxu0 0.0
      %1332 = vmatpush2.msra.mxu0 0.0
      %1333 = vmatprep.mubr.f32.mxu0 0.0
      %1334 = vmatmul.mubr.f32.gmra.mxu0 %v1169
      %v1335 = vpop.f32.mrf.mxu0
      %v1336 = vadd.f32 0.0, %v1335
      %v1337 = vpop.f32.mrf.mxu0
      %1338 = vmatprep.mubr.f32.mxu0 0.0
      %1339 = vmatmul.mubr.f32.gmra.mxu0 %v1172
      %v1340 = vpop.f32.mrf.mxu0
      %v1341 = vadd.f32 0.0, %v1340
      %v1342 = vpop.f32.mrf.mxu0
      %1343 = vmatprep.mubr.f32.mxu0 0.0
      %1344 = vmatmul.mubr.f32.gmra.mxu0 %v1175
      %v1345 = vpop.f32.mrf.mxu0
      %v1346 = vadd.f32 0.0, %v1345
      %v1347 = vpop.f32.mrf.mxu0
      %1348 = vmatprep.mubr.f32.mxu0 0.0
      %1349 = vmatmul.mubr.f32.gmra.mxu0 %v1178
      %v1350 = vpop.f32.mrf.mxu0
      %v1351 = vadd.f32 0.0, %v1350
      %v1352 = vpop.f32.mrf.mxu0
      %1353 = vdwg.mxu0
      %v1354 = vadd.f32 %v1106, %v1247
      %v1355 = vadd.f32 %v1107, %v1249
      %v1356 = vadd.f32 %v1108, %v1336
      %v1357 = vadd.f32 %v1109, %v1253
      %v1358 = vadd.f32 %v1110, %v1255
      %v1359 = vadd.f32 %v1111, %v1341
      %v1360 = vadd.f32 %v1112, %v1259
      %v1361 = vadd.f32 %v1113, %v1261
      %v1362 = vadd.f32 %v1114, %v1346
      %v1363 = vadd.f32 %v1115, %v1265
      %v1364 = vadd.f32 %v1116, %v1267
      %v1365 = vadd.f32 %v1117, %v1351
      %s1366 = scalar_lea.vmem %s1, 160
      %v1367 = vld [vmem:[%s1366] sm:$0xff]
      %v1368 = vld [vmem:[%s1366 + $0x8] sm:$0xff]
      %v1369 = vld [vmem:[%s1366 + $0x10] sm:$0xff]
      %v1370 = vld [vmem:[%s1366 + $0x18] sm:$0xff]
      %1371 = vrot.lane.b32.xlu0 %v171, 108
      %v1372 = vpop.permute.xlu0 %1371
      %1373 = vrot.lane.b32.xlu0 %v172, 108
      %v1374 = vpop.permute.xlu0 %1373
      %1375 = vrot.lane.b32.xlu0 %v173, 108
      %v1376 = vpop.permute.xlu0 %1375
      %1377 = vrot.lane.b32.xlu0 %v174, 108
      %v1378 = vpop.permute.xlu0 %1377
      %1379 = vrot.lane.b32.xlu0 %v175, 108
      %v1380 = vpop.permute.xlu0 %1379
      %1381 = vrot.lane.b32.xlu0 %v176, 108
      %v1382 = vpop.permute.xlu0 %1381
      %1383 = vrot.lane.b32.xlu0 %v177, 108
      %v1384 = vpop.permute.xlu0 %1383
      %1385 = vrot.lane.b32.xlu0 %v178, 108
      %v1386 = vpop.permute.xlu0 %1385
      %1387 = vrot.lane.b32.xlu0 %v179, 108
      %v1388 = vpop.permute.xlu0 %1387
      %1389 = vrot.lane.b32.xlu0 %v180, 108
      %v1390 = vpop.permute.xlu0 %1389
      %1391 = vrot.lane.b32.xlu0 %v181, 108
      %v1392 = vpop.permute.xlu0 %1391
      %1393 = vrot.lane.b32.xlu0 %v182, 108
      %v1394 = vpop.permute.xlu0 %1393
      %vm1395 = vcmask 883712
      %v1396 = vsel %vm1395, %v1372, %v1374
      %v1397 = vsel %vm1395, %v1374, %v1376
      %v1398 = vsel %vm1395, %v1378, %v1380
      %v1399 = vsel %vm1395, %v1380, %v1382
      %v1400 = vsel %vm1395, %v1384, %v1386
      %v1401 = vsel %vm1395, %v1386, %v1388
      %v1402 = vsel %vm1395, %v1390, %v1392
      %v1403 = vsel %vm1395, %v1392, %v1394
      %v1417 = vsel %vm249, %v1367, 0
      %v1420 = vsel %vm249, %v1368, 0
      %v1423 = vsel %vm249, %v1369, 0
      %v1426 = vsel %vm249, %v1370, 0
      %1428 = vmatprep.subr.mxu0 0.0
      %1429 = vmatpush1.msra.mxu0 0.0
      %1430 = vmatprep.subr.mxu0 0.0
      %1431 = vmatpush1.msra.mxu0 0.0
      %1432 = vmatprep.subr.mxu0 0.0
      %1433 = vmatpush1.msra.mxu0 0.0
      %1434 = vmatprep.subr.mxu0 0.0
      %1435 = vmatpush1.msra.mxu0 0.0
      %1436 = vmatprep.subr.mxu0 0.0
      %1437 = vmatpush1.msra.mxu0 0.0
      %1438 = vmatprep.subr.mxu0 0.0
      %1439 = vmatpush1.msra.mxu0 0.0
      %1440 = vmatprep.subr.mxu0 0.0
      %1441 = vmatpush1.msra.mxu0 0.0
      %1442 = vmatprep.subr.mxu0 0.0
      %1443 = vmatpush1.msra.mxu0 0.0
      %1444 = vmatprep.subr.mxu0 0.0
      %1445 = vmatpush1.msra.mxu0 0.0
      %1446 = vmatprep.subr.mxu0 0.0
      %1447 = vmatpush1.msra.mxu0 0.0
      %1448 = vmatprep.subr.mxu0 0.0
      %1449 = vmatpush1.msra.mxu0 0.0
      %1450 = vmatprep.subr.mxu0 0.0
      %1451 = vmatpush1.msra.mxu0 0.0
      %1452 = vmatprep.subr.mxu0 %v1403
      %1453 = vmatpush1.msra.mxu0 %v1402
      %1454 = vmatprep.subr.mxu0 %v1401
      %1455 = vmatpush1.msra.mxu0 %v1400
      %1456 = vmatprep.subr.mxu0 %v1399
      %1457 = vmatpush1.msra.mxu0 %v1398
      %1458 = vmatprep.subr.mxu0 %v1397
      %1459 = vmatpush1.msra.mxu0 %v1396
      %1460 = vmatprep.subr.mxu0 0.0
      %1461 = vmatpush2.msra.mxu0 0.0
      %1462 = vmatprep.subr.mxu0 0.0
      %1463 = vmatpush2.msra.mxu0 0.0
      %1464 = vmatprep.subr.mxu0 0.0
      %1465 = vmatpush2.msra.mxu0 0.0
      %1466 = vmatprep.subr.mxu0 0.0
      %1467 = vmatpush2.msra.mxu0 0.0
      %1468 = vmatprep.subr.mxu0 0.0
      %1469 = vmatpush2.msra.mxu0 0.0
      %1470 = vmatprep.subr.mxu0 0.0
      %1471 = vmatpush2.msra.mxu0 0.0
      %1472 = vmatprep.subr.mxu0 0.0
      %1473 = vmatpush2.msra.mxu0 0.0
      %1474 = vmatprep.subr.mxu0 0.0
      %1475 = vmatpush2.msra.mxu0 0.0
      %1476 = vmatprep.subr.mxu0 0.0
      %1477 = vmatpush2.msra.mxu0 0.0
      %1478 = vmatprep.subr.mxu0 0.0
      %1479 = vmatpush2.msra.mxu0 0.0
      %1480 = vmatprep.subr.mxu0 0.0
      %1481 = vmatpush2.msra.mxu0 0.0
      %1482 = vmatprep.subr.mxu0 0.0
      %1483 = vmatpush2.msra.mxu0 0.0
      %1484 = vmatprep.subr.mxu0 0.0
      %1485 = vmatpush2.msra.mxu0 0.0
      %1486 = vmatprep.subr.mxu0 0.0
      %1487 = vmatpush2.msra.mxu0 0.0
      %1488 = vmatprep.subr.mxu0 0.0
      %1489 = vmatpush2.msra.mxu0 0.0
      %1490 = vmatprep.subr.mxu0 0.0
      %1491 = vmatpush2.msra.mxu0 0.0
      %1492 = vmatprep.mubr.f32.mxu0 0.0
      %1493 = vmatmul.mubr.f32.gmra.mxu0 %v1417
      %v1494 = vpop.f32.mrf.mxu0
      %v1495 = vadd.f32 0.0, %v1494
      %v1496 = vpop.f32.mrf.mxu0
      %v1497 = vadd.f32 0.0, %v1496
      %1498 = vmatprep.mubr.f32.mxu0 0.0
      %1499 = vmatmul.mubr.f32.gmra.mxu0 %v1420
      %v1500 = vpop.f32.mrf.mxu0
      %v1501 = vadd.f32 0.0, %v1500
      %v1502 = vpop.f32.mrf.mxu0
      %v1503 = vadd.f32 0.0, %v1502
      %1504 = vmatprep.mubr.f32.mxu0 0.0
      %1505 = vmatmul.mubr.f32.gmra.mxu0 %v1423
      %v1506 = vpop.f32.mrf.mxu0
      %v1507 = vadd.f32 0.0, %v1506
      %v1508 = vpop.f32.mrf.mxu0
      %v1509 = vadd.f32 0.0, %v1508
      %1510 = vmatprep.mubr.f32.mxu0 0.0
      %1511 = vmatmul.mubr.f32.gmra.mxu0 %v1426
      %v1512 = vpop.f32.mrf.mxu0
      %v1513 = vadd.f32 0.0, %v1512
      %v1514 = vpop.f32.mrf.mxu0
      %v1515 = vadd.f32 0.0, %v1514
      %1516 = vdwg.mxu0
      %1517 = vmatprep.subr.mxu0 0.0
      %1518 = vmatpush1.msra.mxu0 0.0
      %1519 = vmatprep.subr.mxu0 0.0
      %1520 = vmatpush1.msra.mxu0 0.0
      %1521 = vmatprep.subr.mxu0 0.0
      %1522 = vmatpush1.msra.mxu0 0.0
      %1523 = vmatprep.subr.mxu0 0.0
      %1524 = vmatpush1.msra.mxu0 0.0
      %1525 = vmatprep.subr.mxu0 0.0
      %1526 = vmatpush1.msra.mxu0 0.0
      %1527 = vmatprep.subr.mxu0 0.0
      %1528 = vmatpush1.msra.mxu0 0.0
      %1529 = vmatprep.subr.mxu0 0.0
      %1530 = vmatpush1.msra.mxu0 0.0
      %1531 = vmatprep.subr.mxu0 0.0
      %1532 = vmatpush1.msra.mxu0 0.0
      %1533 = vmatprep.subr.mxu0 0.0
      %1534 = vmatpush1.msra.mxu0 0.0
      %1535 = vmatprep.subr.mxu0 0.0
      %1536 = vmatpush1.msra.mxu0 0.0
      %1537 = vmatprep.subr.mxu0 0.0
      %1538 = vmatpush1.msra.mxu0 0.0
      %1539 = vmatprep.subr.mxu0 0.0
      %1540 = vmatpush1.msra.mxu0 0.0
      %1541 = vmatprep.subr.mxu0 0.0
      %1542 = vmatpush1.msra.mxu0 %v1394
      %1543 = vmatprep.subr.mxu0 0.0
      %1544 = vmatpush1.msra.mxu0 %v1388
      %1545 = vmatprep.subr.mxu0 0.0
      %1546 = vmatpush1.msra.mxu0 %v1382
      %1547 = vmatprep.subr.mxu0 0.0
      %1548 = vmatpush1.msra.mxu0 %v1376
      %1549 = vmatprep.subr.mxu0 0.0
      %1550 = vmatpush2.msra.mxu0 0.0
      %1551 = vmatprep.subr.mxu0 0.0
      %1552 = vmatpush2.msra.mxu0 0.0
      %1553 = vmatprep.subr.mxu0 0.0
      %1554 = vmatpush2.msra.mxu0 0.0
      %1555 = vmatprep.subr.mxu0 0.0
      %1556 = vmatpush2.msra.mxu0 0.0
      %1557 = vmatprep.subr.mxu0 0.0
      %1558 = vmatpush2.msra.mxu0 0.0
      %1559 = vmatprep.subr.mxu0 0.0
      %1560 = vmatpush2.msra.mxu0 0.0
      %1561 = vmatprep.subr.mxu0 0.0
      %1562 = vmatpush2.msra.mxu0 0.0
      %1563 = vmatprep.subr.mxu0 0.0
      %1564 = vmatpush2.msra.mxu0 0.0
      %1565 = vmatprep.subr.mxu0 0.0
      %1566 = vmatpush2.msra.mxu0 0.0
      %1567 = vmatprep.subr.mxu0 0.0
      %1568 = vmatpush2.msra.mxu0 0.0
      %1569 = vmatprep.subr.mxu0 0.0
      %1570 = vmatpush2.msra.mxu0 0.0
      %1571 = vmatprep.subr.mxu0 0.0
      %1572 = vmatpush2.msra.mxu0 0.0
      %1573 = vmatprep.subr.mxu0 0.0
      %1574 = vmatpush2.msra.mxu0 0.0
      %1575 = vmatprep.subr.mxu0 0.0
      %1576 = vmatpush2.msra.mxu0 0.0
      %1577 = vmatprep.subr.mxu0 0.0
      %1578 = vmatpush2.msra.mxu0 0.0
      %1579 = vmatprep.subr.mxu0 0.0
      %1580 = vmatpush2.msra.mxu0 0.0
      %1581 = vmatprep.mubr.f32.mxu0 0.0
      %1582 = vmatmul.mubr.f32.gmra.mxu0 %v1417
      %v1583 = vpop.f32.mrf.mxu0
      %v1584 = vadd.f32 0.0, %v1583
      %v1585 = vpop.f32.mrf.mxu0
      %1586 = vmatprep.mubr.f32.mxu0 0.0
      %1587 = vmatmul.mubr.f32.gmra.mxu0 %v1420
      %v1588 = vpop.f32.mrf.mxu0
      %v1589 = vadd.f32 0.0, %v1588
      %v1590 = vpop.f32.mrf.mxu0
      %1591 = vmatprep.mubr.f32.mxu0 0.0
      %1592 = vmatmul.mubr.f32.gmra.mxu0 %v1423
      %v1593 = vpop.f32.mrf.mxu0
      %v1594 = vadd.f32 0.0, %v1593
      %v1595 = vpop.f32.mrf.mxu0
      %1596 = vmatprep.mubr.f32.mxu0 0.0
      %1597 = vmatmul.mubr.f32.gmra.mxu0 %v1426
      %v1598 = vpop.f32.mrf.mxu0
      %v1599 = vadd.f32 0.0, %v1598
      %v1600 = vpop.f32.mrf.mxu0
      %1601 = vdwg.mxu0
      %v1602 = vadd.f32 %v1354, %v1495
      %v1603 = vadd.f32 %v1355, %v1497
      %v1604 = vadd.f32 %v1356, %v1584
      %v1605 = vadd.f32 %v1357, %v1501
      %v1606 = vadd.f32 %v1358, %v1503
      %v1607 = vadd.f32 %v1359, %v1589
      %v1608 = vadd.f32 %v1360, %v1507
      %v1609 = vadd.f32 %v1361, %v1509
      %v1610 = vadd.f32 %v1362, %v1594
      %v1611 = vadd.f32 %v1363, %v1513
      %v1612 = vadd.f32 %v1364, %v1515
      %v1613 = vadd.f32 %v1365, %v1599
      %s1614 = scalar_lea.vmem %s1, 192
      %v1615 = vld [vmem:[%s1614] sm:$0xff]
      %v1616 = vld [vmem:[%s1614 + $0x8] sm:$0xff]
      %v1617 = vld [vmem:[%s1614 + $0x10] sm:$0xff]
      %v1618 = vld [vmem:[%s1614 + $0x18] sm:$0xff]
      %1619 = vrot.lane.b32.xlu0 %v171, 92
      %v1620 = vpop.permute.xlu0 %1619
      %1621 = vrot.lane.b32.xlu0 %v172, 92
      %v1622 = vpop.permute.xlu0 %1621
      %1623 = vrot.lane.b32.xlu0 %v173, 92
      %v1624 = vpop.permute.xlu0 %1623
      %1625 = vrot.lane.b32.xlu0 %v174, 92
      %v1626 = vpop.permute.xlu0 %1625
      %1627 = vrot.lane.b32.xlu0 %v175, 92
      %v1628 = vpop.permute.xlu0 %1627
      %1629 = vrot.lane.b32.xlu0 %v176, 92
      %v1630 = vpop.permute.xlu0 %1629
      %1631 = vrot.lane.b32.xlu0 %v177, 92
      %v1632 = vpop.permute.xlu0 %1631
      %1633 = vrot.lane.b32.xlu0 %v178, 92
      %v1634 = vpop.permute.xlu0 %1633
      %1635 = vrot.lane.b32.xlu0 %v179, 92
      %v1636 = vpop.permute.xlu0 %1635
      %1637 = vrot.lane.b32.xlu0 %v180, 92
      %v1638 = vpop.permute.xlu0 %1637
      %1639 = vrot.lane.b32.xlu0 %v181, 92
      %v1640 = vpop.permute.xlu0 %1639
      %1641 = vrot.lane.b32.xlu0 %v182, 92
      %v1642 = vpop.permute.xlu0 %1641
      %vm1643 = vcmask 752640
      %v1644 = vsel %vm1643, %v1620, %v1622
      %v1645 = vsel %vm1643, %v1622, %v1624
      %v1646 = vsel %vm1643, %v1626, %v1628
      %v1647 = vsel %vm1643, %v1628, %v1630
      %v1648 = vsel %vm1643, %v1632, %v1634
      %v1649 = vsel %vm1643, %v1634, %v1636
      %v1650 = vsel %vm1643, %v1638, %v1640
      %v1651 = vsel %vm1643, %v1640, %v1642
      %v1665 = vsel %vm249, %v1615, 0
      %v1668 = vsel %vm249, %v1616, 0
      %v1671 = vsel %vm249, %v1617, 0
      %v1674 = vsel %vm249, %v1618, 0
      %1676 = vmatprep.subr.mxu0 0.0
      %1677 = vmatpush1.msra.mxu0 0.0
      %1678 = vmatprep.subr.mxu0 0.0
      %1679 = vmatpush1.msra.mxu0 0.0
      %1680 = vmatprep.subr.mxu0 0.0
      %1681 = vmatpush1.msra.mxu0 0.0
      %1682 = vmatprep.subr.mxu0 0.0
      %1683 = vmatpush1.msra.mxu0 0.0
      %1684 = vmatprep.subr.mxu0 0.0
      %1685 = vmatpush1.msra.mxu0 0.0
      %1686 = vmatprep.subr.mxu0 0.0
      %1687 = vmatpush1.msra.mxu0 0.0
      %1688 = vmatprep.subr.mxu0 0.0
      %1689 = vmatpush1.msra.mxu0 0.0
      %1690 = vmatprep.subr.mxu0 0.0
      %1691 = vmatpush1.msra.mxu0 0.0
      %1692 = vmatprep.subr.mxu0 0.0
      %1693 = vmatpush1.msra.mxu0 0.0
      %1694 = vmatprep.subr.mxu0 0.0
      %1695 = vmatpush1.msra.mxu0 0.0
      %1696 = vmatprep.subr.mxu0 0.0
      %1697 = vmatpush1.msra.mxu0 0.0
      %1698 = vmatprep.subr.mxu0 0.0
      %1699 = vmatpush1.msra.mxu0 0.0
      %1700 = vmatprep.subr.mxu0 %v1651
      %1701 = vmatpush1.msra.mxu0 %v1650
      %1702 = vmatprep.subr.mxu0 %v1649
      %1703 = vmatpush1.msra.mxu0 %v1648
      %1704 = vmatprep.subr.mxu0 %v1647
      %1705 = vmatpush1.msra.mxu0 %v1646
      %1706 = vmatprep.subr.mxu0 %v1645
      %1707 = vmatpush1.msra.mxu0 %v1644
      %1708 = vmatprep.subr.mxu0 0.0
      %1709 = vmatpush2.msra.mxu0 0.0
      %1710 = vmatprep.subr.mxu0 0.0
      %1711 = vmatpush2.msra.mxu0 0.0
      %1712 = vmatprep.subr.mxu0 0.0
      %1713 = vmatpush2.msra.mxu0 0.0
      %1714 = vmatprep.subr.mxu0 0.0
      %1715 = vmatpush2.msra.mxu0 0.0
      %1716 = vmatprep.subr.mxu0 0.0
      %1717 = vmatpush2.msra.mxu0 0.0
      %1718 = vmatprep.subr.mxu0 0.0
      %1719 = vmatpush2.msra.mxu0 0.0
      %1720 = vmatprep.subr.mxu0 0.0
      %1721 = vmatpush2.msra.mxu0 0.0
      %1722 = vmatprep.subr.mxu0 0.0
      %1723 = vmatpush2.msra.mxu0 0.0
      %1724 = vmatprep.subr.mxu0 0.0
      %1725 = vmatpush2.msra.mxu0 0.0
      %1726 = vmatprep.subr.mxu0 0.0
      %1727 = vmatpush2.msra.mxu0 0.0
      %1728 = vmatprep.subr.mxu0 0.0
      %1729 = vmatpush2.msra.mxu0 0.0
      %1730 = vmatprep.subr.mxu0 0.0
      %1731 = vmatpush2.msra.mxu0 0.0
      %1732 = vmatprep.subr.mxu0 0.0
      %1733 = vmatpush2.msra.mxu0 0.0
      %1734 = vmatprep.subr.mxu0 0.0
      %1735 = vmatpush2.msra.mxu0 0.0
      %1736 = vmatprep.subr.mxu0 0.0
      %1737 = vmatpush2.msra.mxu0 0.0
      %1738 = vmatprep.subr.mxu0 0.0
      %1739 = vmatpush2.msra.mxu0 0.0
      %1740 = vmatprep.mubr.f32.mxu0 0.0
      %1741 = vmatmul.mubr.f32.gmra.mxu0 %v1665
      %v1742 = vpop.f32.mrf.mxu0
      %v1743 = vadd.f32 0.0, %v1742
      %v1744 = vpop.f32.mrf.mxu0
      %v1745 = vadd.f32 0.0, %v1744
      %1746 = vmatprep.mubr.f32.mxu0 0.0
      %1747 = vmatmul.mubr.f32.gmra.mxu0 %v1668
      %v1748 = vpop.f32.mrf.mxu0
      %v1749 = vadd.f32 0.0, %v1748
      %v1750 = vpop.f32.mrf.mxu0
      %v1751 = vadd.f32 0.0, %v1750
      %1752 = vmatprep.mubr.f32.mxu0 0.0
      %1753 = vmatmul.mubr.f32.gmra.mxu0 %v1671
      %v1754 = vpop.f32.mrf.mxu0
      %v1755 = vadd.f32 0.0, %v1754
      %v1756 = vpop.f32.mrf.mxu0
      %v1757 = vadd.f32 0.0, %v1756
      %1758 = vmatprep.mubr.f32.mxu0 0.0
      %1759 = vmatmul.mubr.f32.gmra.mxu0 %v1674
      %v1760 = vpop.f32.mrf.mxu0
      %v1761 = vadd.f32 0.0, %v1760
      %v1762 = vpop.f32.mrf.mxu0
      %v1763 = vadd.f32 0.0, %v1762
      %1764 = vdwg.mxu0
      %1765 = vmatprep.subr.mxu0 0.0
      %1766 = vmatpush1.msra.mxu0 0.0
      %1767 = vmatprep.subr.mxu0 0.0
      %1768 = vmatpush1.msra.mxu0 0.0
      %1769 = vmatprep.subr.mxu0 0.0
      %1770 = vmatpush1.msra.mxu0 0.0
      %1771 = vmatprep.subr.mxu0 0.0
      %1772 = vmatpush1.msra.mxu0 0.0
      %1773 = vmatprep.subr.mxu0 0.0
      %1774 = vmatpush1.msra.mxu0 0.0
      %1775 = vmatprep.subr.mxu0 0.0
      %1776 = vmatpush1.msra.mxu0 0.0
      %1777 = vmatprep.subr.mxu0 0.0
      %1778 = vmatpush1.msra.mxu0 0.0
      %1779 = vmatprep.subr.mxu0 0.0
      %1780 = vmatpush1.msra.mxu0 0.0
      %1781 = vmatprep.subr.mxu0 0.0
      %1782 = vmatpush1.msra.mxu0 0.0
      %1783 = vmatprep.subr.mxu0 0.0
      %1784 = vmatpush1.msra.mxu0 0.0
      %1785 = vmatprep.subr.mxu0 0.0
      %1786 = vmatpush1.msra.mxu0 0.0
      %1787 = vmatprep.subr.mxu0 0.0
      %1788 = vmatpush1.msra.mxu0 0.0
      %1789 = vmatprep.subr.mxu0 0.0
      %1790 = vmatpush1.msra.mxu0 %v1642
      %1791 = vmatprep.subr.mxu0 0.0
      %1792 = vmatpush1.msra.mxu0 %v1636
      %1793 = vmatprep.subr.mxu0 0.0
      %1794 = vmatpush1.msra.mxu0 %v1630
      %1795 = vmatprep.subr.mxu0 0.0
      %1796 = vmatpush1.msra.mxu0 %v1624
      %1797 = vmatprep.subr.mxu0 0.0
      %1798 = vmatpush2.msra.mxu0 0.0
      %1799 = vmatprep.subr.mxu0 0.0
      %1800 = vmatpush2.msra.mxu0 0.0
      %1801 = vmatprep.subr.mxu0 0.0
      %1802 = vmatpush2.msra.mxu0 0.0
      %1803 = vmatprep.subr.mxu0 0.0
      %1804 = vmatpush2.msra.mxu0 0.0
      %1805 = vmatprep.subr.mxu0 0.0
      %1806 = vmatpush2.msra.mxu0 0.0
      %1807 = vmatprep.subr.mxu0 0.0
      %1808 = vmatpush2.msra.mxu0 0.0
      %1809 = vmatprep.subr.mxu0 0.0
      %1810 = vmatpush2.msra.mxu0 0.0
      %1811 = vmatprep.subr.mxu0 0.0
      %1812 = vmatpush2.msra.mxu0 0.0
      %1813 = vmatprep.subr.mxu0 0.0
      %1814 = vmatpush2.msra.mxu0 0.0
      %1815 = vmatprep.subr.mxu0 0.0
      %1816 = vmatpush2.msra.mxu0 0.0
      %1817 = vmatprep.subr.mxu0 0.0
      %1818 = vmatpush2.msra.mxu0 0.0
      %1819 = vmatprep.subr.mxu0 0.0
      %1820 = vmatpush2.msra.mxu0 0.0
      %1821 = vmatprep.subr.mxu0 0.0
      %1822 = vmatpush2.msra.mxu0 0.0
      %1823 = vmatprep.subr.mxu0 0.0
      %1824 = vmatpush2.msra.mxu0 0.0
      %1825 = vmatprep.subr.mxu0 0.0
      %1826 = vmatpush2.msra.mxu0 0.0
      %1827 = vmatprep.subr.mxu0 0.0
      %1828 = vmatpush2.msra.mxu0 0.0
      %1829 = vmatprep.mubr.f32.mxu0 0.0
      %1830 = vmatmul.mubr.f32.gmra.mxu0 %v1665
      %v1831 = vpop.f32.mrf.mxu0
      %v1832 = vadd.f32 0.0, %v1831
      %v1833 = vpop.f32.mrf.mxu0
      %1834 = vmatprep.mubr.f32.mxu0 0.0
      %1835 = vmatmul.mubr.f32.gmra.mxu0 %v1668
      %v1836 = vpop.f32.mrf.mxu0
      %v1837 = vadd.f32 0.0, %v1836
      %v1838 = vpop.f32.mrf.mxu0
      %1839 = vmatprep.mubr.f32.mxu0 0.0
      %1840 = vmatmul.mubr.f32.gmra.mxu0 %v1671
      %v1841 = vpop.f32.mrf.mxu0
      %v1842 = vadd.f32 0.0, %v1841
      %v1843 = vpop.f32.mrf.mxu0
      %1844 = vmatprep.mubr.f32.mxu0 0.0
      %1845 = vmatmul.mubr.f32.gmra.mxu0 %v1674
      %v1846 = vpop.f32.mrf.mxu0
      %v1847 = vadd.f32 0.0, %v1846
      %v1848 = vpop.f32.mrf.mxu0
      %1849 = vdwg.mxu0
      %v1850 = vadd.f32 %v1602, %v1743
      %v1851 = vadd.f32 %v1603, %v1745
      %v1852 = vadd.f32 %v1604, %v1832
      %v1853 = vadd.f32 %v1605, %v1749
      %v1854 = vadd.f32 %v1606, %v1751
      %v1855 = vadd.f32 %v1607, %v1837
      %v1856 = vadd.f32 %v1608, %v1755
      %v1857 = vadd.f32 %v1609, %v1757
      %v1858 = vadd.f32 %v1610, %v1842
      %v1859 = vadd.f32 %v1611, %v1761
      %v1860 = vadd.f32 %v1612, %v1763
      %v1861 = vadd.f32 %v1613, %v1847
      %s1862 = scalar_lea.vmem %s1, 224
      %v1863 = vld [vmem:[%s1862] sm:$0xff]
      %v1864 = vld [vmem:[%s1862 + $0x8] sm:$0xff]
      %v1865 = vld [vmem:[%s1862 + $0x10] sm:$0xff]
      %v1866 = vld [vmem:[%s1862 + $0x18] sm:$0xff]
      %1867 = vrot.lane.b32.xlu0 %v171, 91
      %v1868 = vpop.permute.xlu0 %1867
      %1869 = vrot.lane.b32.xlu0 %v172, 91
      %v1870 = vpop.permute.xlu0 %1869
      %1871 = vrot.lane.b32.xlu0 %v173, 91
      %v1872 = vpop.permute.xlu0 %1871
      %1873 = vrot.lane.b32.xlu0 %v174, 91
      %v1874 = vpop.permute.xlu0 %1873
      %1875 = vrot.lane.b32.xlu0 %v175, 91
      %v1876 = vpop.permute.xlu0 %1875
      %1877 = vrot.lane.b32.xlu0 %v176, 91
      %v1878 = vpop.permute.xlu0 %1877
      %1879 = vrot.lane.b32.xlu0 %v177, 91
      %v1880 = vpop.permute.xlu0 %1879
      %1881 = vrot.lane.b32.xlu0 %v178, 91
      %v1882 = vpop.permute.xlu0 %1881
      %1883 = vrot.lane.b32.xlu0 %v179, 91
      %v1884 = vpop.permute.xlu0 %1883
      %1885 = vrot.lane.b32.xlu0 %v180, 91
      %v1886 = vpop.permute.xlu0 %1885
      %1887 = vrot.lane.b32.xlu0 %v181, 91
      %v1888 = vpop.permute.xlu0 %1887
      %1889 = vrot.lane.b32.xlu0 %v182, 91
      %v1890 = vpop.permute.xlu0 %1889
      %vm1891 = vcmask 744448
      %v1892 = vsel %vm1891, %v1868, %v1870
      %v1893 = vsel %vm1891, %v1870, %v1872
      %v1894 = vsel %vm1891, %v1874, %v1876
      %v1895 = vsel %vm1891, %v1876, %v1878
      %v1896 = vsel %vm1891, %v1880, %v1882
      %v1897 = vsel %vm1891, %v1882, %v1884
      %v1898 = vsel %vm1891, %v1886, %v1888
      %v1899 = vsel %vm1891, %v1888, %v1890
      %v1913 = vsel %vm249, %v1863, 0
      %v1916 = vsel %vm249, %v1864, 0
      %v1919 = vsel %vm249, %v1865, 0
      %v1922 = vsel %vm249, %v1866, 0
      %1924 = vmatprep.subr.mxu0 0.0
      %1925 = vmatpush1.msra.mxu0 0.0
      %1926 = vmatprep.subr.mxu0 0.0
      %1927 = vmatpush1.msra.mxu0 0.0
      %1928 = vmatprep.subr.mxu0 0.0
      %1929 = vmatpush1.msra.mxu0 0.0
      %1930 = vmatprep.subr.mxu0 0.0
      %1931 = vmatpush1.msra.mxu0 0.0
      %1932 = vmatprep.subr.mxu0 0.0
      %1933 = vmatpush1.msra.mxu0 0.0
      %1934 = vmatprep.subr.mxu0 0.0
      %1935 = vmatpush1.msra.mxu0 0.0
      %1936 = vmatprep.subr.mxu0 0.0
      %1937 = vmatpush1.msra.mxu0 0.0
      %1938 = vmatprep.subr.mxu0 0.0
      %1939 = vmatpush1.msra.mxu0 0.0
      %1940 = vmatprep.subr.mxu0 0.0
      %1941 = vmatpush1.msra.mxu0 0.0
      %1942 = vmatprep.subr.mxu0 0.0
      %1943 = vmatpush1.msra.mxu0 0.0
      %1944 = vmatprep.subr.mxu0 0.0
      %1945 = vmatpush1.msra.mxu0 0.0
      %1946 = vmatprep.subr.mxu0 0.0
      %1947 = vmatpush1.msra.mxu0 0.0
      %1948 = vmatprep.subr.mxu0 %v1899
      %1949 = vmatpush1.msra.mxu0 %v1898
      %1950 = vmatprep.subr.mxu0 %v1897
      %1951 = vmatpush1.msra.mxu0 %v1896
      %1952 = vmatprep.subr.mxu0 %v1895
      %1953 = vmatpush1.msra.mxu0 %v1894
      %1954 = vmatprep.subr.mxu0 %v1893
      %1955 = vmatpush1.msra.mxu0 %v1892
      %1956 = vmatprep.subr.mxu0 0.0
      %1957 = vmatpush2.msra.mxu0 0.0
      %1958 = vmatprep.subr.mxu0 0.0
      %1959 = vmatpush2.msra.mxu0 0.0
      %1960 = vmatprep.subr.mxu0 0.0
      %1961 = vmatpush2.msra.mxu0 0.0
      %1962 = vmatprep.subr.mxu0 0.0
      %1963 = vmatpush2.msra.mxu0 0.0
      %1964 = vmatprep.subr.mxu0 0.0
      %1965 = vmatpush2.msra.mxu0 0.0
      %1966 = vmatprep.subr.mxu0 0.0
      %1967 = vmatpush2.msra.mxu0 0.0
      %1968 = vmatprep.subr.mxu0 0.0
      %1969 = vmatpush2.msra.mxu0 0.0
      %1970 = vmatprep.subr.mxu0 0.0
      %1971 = vmatpush2.msra.mxu0 0.0
      %1972 = vmatprep.subr.mxu0 0.0
      %1973 = vmatpush2.msra.mxu0 0.0
      %1974 = vmatprep.subr.mxu0 0.0
      %1975 = vmatpush2.msra.mxu0 0.0
      %1976 = vmatprep.subr.mxu0 0.0
      %1977 = vmatpush2.msra.mxu0 0.0
      %1978 = vmatprep.subr.mxu0 0.0
      %1979 = vmatpush2.msra.mxu0 0.0
      %1980 = vmatprep.subr.mxu0 0.0
      %1981 = vmatpush2.msra.mxu0 0.0
      %1982 = vmatprep.subr.mxu0 0.0
      %1983 = vmatpush2.msra.mxu0 0.0
      %1984 = vmatprep.subr.mxu0 0.0
      %1985 = vmatpush2.msra.mxu0 0.0
      %1986 = vmatprep.subr.mxu0 0.0
      %1987 = vmatpush2.msra.mxu0 0.0
      %1988 = vmatprep.mubr.f32.mxu0 0.0
      %1989 = vmatmul.mubr.f32.gmra.mxu0 %v1913
      %v1990 = vpop.f32.mrf.mxu0
      %v1991 = vadd.f32 0.0, %v1990
      %v1992 = vpop.f32.mrf.mxu0
      %v1993 = vadd.f32 0.0, %v1992
      %1994 = vmatprep.mubr.f32.mxu0 0.0
      %1995 = vmatmul.mubr.f32.gmra.mxu0 %v1916
      %v1996 = vpop.f32.mrf.mxu0
      %v1997 = vadd.f32 0.0, %v1996
      %v1998 = vpop.f32.mrf.mxu0
      %v1999 = vadd.f32 0.0, %v1998
      %2000 = vmatprep.mubr.f32.mxu0 0.0
      %2001 = vmatmul.mubr.f32.gmra.mxu0 %v1919
      %v2002 = vpop.f32.mrf.mxu0
      %v2003 = vadd.f32 0.0, %v2002
      %v2004 = vpop.f32.mrf.mxu0
      %v2005 = vadd.f32 0.0, %v2004
      %2006 = vmatprep.mubr.f32.mxu0 0.0
      %2007 = vmatmul.mubr.f32.gmra.mxu0 %v1922
      %v2008 = vpop.f32.mrf.mxu0
      %v2009 = vadd.f32 0.0, %v2008
      %v2010 = vpop.f32.mrf.mxu0
      %v2011 = vadd.f32 0.0, %v2010
      %2012 = vdwg.mxu0
      %2013 = vmatprep.subr.mxu0 0.0
      %2014 = vmatpush1.msra.mxu0 0.0
      %2015 = vmatprep.subr.mxu0 0.0
      %2016 = vmatpush1.msra.mxu0 0.0
      %2017 = vmatprep.subr.mxu0 0.0
      %2018 = vmatpush1.msra.mxu0 0.0
      %2019 = vmatprep.subr.mxu0 0.0
      %2020 = vmatpush1.msra.mxu0 0.0
      %2021 = vmatprep.subr.mxu0 0.0
      %2022 = vmatpush1.msra.mxu0 0.0
      %2023 = vmatprep.subr.mxu0 0.0
      %2024 = vmatpush1.msra.mxu0 0.0
      %2025 = vmatprep.subr.mxu0 0.0
      %2026 = vmatpush1.msra.mxu0 0.0
      %2027 = vmatprep.subr.mxu0 0.0
      %2028 = vmatpush1.msra.mxu0 0.0
      %2029 = vmatprep.subr.mxu0 0.0
      %2030 = vmatpush1.msra.mxu0 0.0
      %2031 = vmatprep.subr.mxu0 0.0
      %2032 = vmatpush1.msra.mxu0 0.0
      %2033 = vmatprep.subr.mxu0 0.0
      %2034 = vmatpush1.msra.mxu0 0.0
      %2035 = vmatprep.subr.mxu0 0.0
      %2036 = vmatpush1.msra.mxu0 0.0
      %2037 = vmatprep.subr.mxu0 0.0
      %2038 = vmatpush1.msra.mxu0 %v1890
      %2039 = vmatprep.subr.mxu0 0.0
      %2040 = vmatpush1.msra.mxu0 %v1884
      %2041 = vmatprep.subr.mxu0 0.0
      %2042 = vmatpush1.msra.mxu0 %v1878
      %2043 = vmatprep.subr.mxu0 0.0
      %2044 = vmatpush1.msra.mxu0 %v1872
      %2045 = vmatprep.subr.mxu0 0.0
      %2046 = vmatpush2.msra.mxu0 0.0
      %2047 = vmatprep.subr.mxu0 0.0
      %2048 = vmatpush2.msra.mxu0 0.0
      %2049 = vmatprep.subr.mxu0 0.0
      %2050 = vmatpush2.msra.mxu0 0.0
      %2051 = vmatprep.subr.mxu0 0.0
      %2052 = vmatpush2.msra.mxu0 0.0
      %2053 = vmatprep.subr.mxu0 0.0
      %2054 = vmatpush2.msra.mxu0 0.0
      %2055 = vmatprep.subr.mxu0 0.0
      %2056 = vmatpush2.msra.mxu0 0.0
      %2057 = vmatprep.subr.mxu0 0.0
      %2058 = vmatpush2.msra.mxu0 0.0
      %2059 = vmatprep.subr.mxu0 0.0
      %2060 = vmatpush2.msra.mxu0 0.0
      %2061 = vmatprep.subr.mxu0 0.0
      %2062 = vmatpush2.msra.mxu0 0.0
      %2063 = vmatprep.subr.mxu0 0.0
      %2064 = vmatpush2.msra.mxu0 0.0
      %2065 = vmatprep.subr.mxu0 0.0
      %2066 = vmatpush2.msra.mxu0 0.0
      %2067 = vmatprep.subr.mxu0 0.0
      %2068 = vmatpush2.msra.mxu0 0.0
      %2069 = vmatprep.subr.mxu0 0.0
      %2070 = vmatpush2.msra.mxu0 0.0
      %2071 = vmatprep.subr.mxu0 0.0
      %2072 = vmatpush2.msra.mxu0 0.0
      %2073 = vmatprep.subr.mxu0 0.0
      %2074 = vmatpush2.msra.mxu0 0.0
      %2075 = vmatprep.subr.mxu0 0.0
      %2076 = vmatpush2.msra.mxu0 0.0
      %2077 = vmatprep.mubr.f32.mxu0 0.0
      %2078 = vmatmul.mubr.f32.gmra.mxu0 %v1913
      %v2079 = vpop.f32.mrf.mxu0
      %v2080 = vadd.f32 0.0, %v2079
      %v2081 = vpop.f32.mrf.mxu0
      %2082 = vmatprep.mubr.f32.mxu0 0.0
      %2083 = vmatmul.mubr.f32.gmra.mxu0 %v1916
      %v2084 = vpop.f32.mrf.mxu0
      %v2085 = vadd.f32 0.0, %v2084
      %v2086 = vpop.f32.mrf.mxu0
      %2087 = vmatprep.mubr.f32.mxu0 0.0
      %2088 = vmatmul.mubr.f32.gmra.mxu0 %v1919
      %v2089 = vpop.f32.mrf.mxu0
      %v2090 = vadd.f32 0.0, %v2089
      %v2091 = vpop.f32.mrf.mxu0
      %2092 = vmatprep.mubr.f32.mxu0 0.0
      %2093 = vmatmul.mubr.f32.gmra.mxu0 %v1922
      %v2094 = vpop.f32.mrf.mxu0
      %v2095 = vadd.f32 0.0, %v2094
      %v2096 = vpop.f32.mrf.mxu0
      %2097 = vdwg.mxu0
      %v2098 = vadd.f32 %v1850, %v1991
      %v2099 = vadd.f32 %v1851, %v1993
      %v2100 = vadd.f32 %v1852, %v2080
      %v2101 = vadd.f32 %v1853, %v1997
      %v2102 = vadd.f32 %v1854, %v1999
      %v2103 = vadd.f32 %v1855, %v2085
      %v2104 = vadd.f32 %v1856, %v2003
      %v2105 = vadd.f32 %v1857, %v2005
      %v2106 = vadd.f32 %v1858, %v2090
      %v2107 = vadd.f32 %v1859, %v2009
      %v2108 = vadd.f32 %v1860, %v2011
      %v2109 = vadd.f32 %v1861, %v2095
      %s2110 = scalar_lea.vmem %s1, 256
      %v2111 = vld [vmem:[%s2110] sm:$0xff]
      %v2112 = vld [vmem:[%s2110 + $0x8] sm:$0xff]
      %v2113 = vld [vmem:[%s2110 + $0x10] sm:$0xff]
      %v2114 = vld [vmem:[%s2110 + $0x18] sm:$0xff]
      %2115 = vrot.lane.b32.xlu0 %v171, 90
      %v2116 = vpop.permute.xlu0 %2115
      %2117 = vrot.lane.b32.xlu0 %v172, 90
      %v2118 = vpop.permute.xlu0 %2117
      %2119 = vrot.lane.b32.xlu0 %v173, 90
      %v2120 = vpop.permute.xlu0 %2119
      %2121 = vrot.lane.b32.xlu0 %v174, 90
      %v2122 = vpop.permute.xlu0 %2121
      %2123 = vrot.lane.b32.xlu0 %v175, 90
      %v2124 = vpop.permute.xlu0 %2123
      %2125 = vrot.lane.b32.xlu0 %v176, 90
      %v2126 = vpop.permute.xlu0 %2125
      %2127 = vrot.lane.b32.xlu0 %v177, 90
      %v2128 = vpop.permute.xlu0 %2127
      %2129 = vrot.lane.b32.xlu0 %v178, 90
      %v2130 = vpop.permute.xlu0 %2129
      %2131 = vrot.lane.b32.xlu0 %v179, 90
      %v2132 = vpop.permute.xlu0 %2131
      %2133 = vrot.lane.b32.xlu0 %v180, 90
      %v2134 = vpop.permute.xlu0 %2133
      %2135 = vrot.lane.b32.xlu0 %v181, 90
      %v2136 = vpop.permute.xlu0 %2135
      %2137 = vrot.lane.b32.xlu0 %v182, 90
      %v2138 = vpop.permute.xlu0 %2137
      %vm2139 = vcmask 736256
      %v2140 = vsel %vm2139, %v2116, %v2118
      %v2141 = vsel %vm2139, %v2118, %v2120
      %v2142 = vsel %vm2139, %v2122, %v2124
      %v2143 = vsel %vm2139, %v2124, %v2126
      %v2144 = vsel %vm2139, %v2128, %v2130
      %v2145 = vsel %vm2139, %v2130, %v2132
      %v2146 = vsel %vm2139, %v2134, %v2136
      %v2147 = vsel %vm2139, %v2136, %v2138
      %v2161 = vsel %vm249, %v2111, 0
      %v2164 = vsel %vm249, %v2112, 0
      %v2167 = vsel %vm249, %v2113, 0
      %v2170 = vsel %vm249, %v2114, 0
      %2172 = vmatprep.subr.mxu0 0.0
      %2173 = vmatpush1.msra.mxu0 0.0
      %2174 = vmatprep.subr.mxu0 0.0
      %2175 = vmatpush1.msra.mxu0 0.0
      %2176 = vmatprep.subr.mxu0 0.0
      %2177 = vmatpush1.msra.mxu0 0.0
      %2178 = vmatprep.subr.mxu0 0.0
      %2179 = vmatpush1.msra.mxu0 0.0
      %2180 = vmatprep.subr.mxu0 0.0
      %2181 = vmatpush1.msra.mxu0 0.0
      %2182 = vmatprep.subr.mxu0 0.0
      %2183 = vmatpush1.msra.mxu0 0.0
      %2184 = vmatprep.subr.mxu0 0.0
      %2185 = vmatpush1.msra.mxu0 0.0
      %2186 = vmatprep.subr.mxu0 0.0
      %2187 = vmatpush1.msra.mxu0 0.0
      %2188 = vmatprep.subr.mxu0 0.0
      %2189 = vmatpush1.msra.mxu0 0.0
      %2190 = vmatprep.subr.mxu0 0.0
      %2191 = vmatpush1.msra.mxu0 0.0
      %2192 = vmatprep.subr.mxu0 0.0
      %2193 = vmatpush1.msra.mxu0 0.0
      %2194 = vmatprep.subr.mxu0 0.0
      %2195 = vmatpush1.msra.mxu0 0.0
      %2196 = vmatprep.subr.mxu0 %v2147
      %2197 = vmatpush1.msra.mxu0 %v2146
      %2198 = vmatprep.subr.mxu0 %v2145
      %2199 = vmatpush1.msra.mxu0 %v2144
      %2200 = vmatprep.subr.mxu0 %v2143
      %2201 = vmatpush1.msra.mxu0 %v2142
      %2202 = vmatprep.subr.mxu0 %v2141
      %2203 = vmatpush1.msra.mxu0 %v2140
      %2204 = vmatprep.subr.mxu0 0.0
      %2205 = vmatpush2.msra.mxu0 0.0
      %2206 = vmatprep.subr.mxu0 0.0
      %2207 = vmatpush2.msra.mxu0 0.0
      %2208 = vmatprep.subr.mxu0 0.0
      %2209 = vmatpush2.msra.mxu0 0.0
      %2210 = vmatprep.subr.mxu0 0.0
      %2211 = vmatpush2.msra.mxu0 0.0
      %2212 = vmatprep.subr.mxu0 0.0
      %2213 = vmatpush2.msra.mxu0 0.0
      %2214 = vmatprep.subr.mxu0 0.0
      %2215 = vmatpush2.msra.mxu0 0.0
      %2216 = vmatprep.subr.mxu0 0.0
      %2217 = vmatpush2.msra.mxu0 0.0
      %2218 = vmatprep.subr.mxu0 0.0
      %2219 = vmatpush2.msra.mxu0 0.0
      %2220 = vmatprep.subr.mxu0 0.0
      %2221 = vmatpush2.msra.mxu0 0.0
      %2222 = vmatprep.subr.mxu0 0.0
      %2223 = vmatpush2.msra.mxu0 0.0
      %2224 = vmatprep.subr.mxu0 0.0
      %2225 = vmatpush2.msra.mxu0 0.0
      %2226 = vmatprep.subr.mxu0 0.0
      %2227 = vmatpush2.msra.mxu0 0.0
      %2228 = vmatprep.subr.mxu0 0.0
      %2229 = vmatpush2.msra.mxu0 0.0
      %2230 = vmatprep.subr.mxu0 0.0
      %2231 = vmatpush2.msra.mxu0 0.0
      %2232 = vmatprep.subr.mxu0 0.0
      %2233 = vmatpush2.msra.mxu0 0.0
      %2234 = vmatprep.subr.mxu0 0.0
      %2235 = vmatpush2.msra.mxu0 0.0
      %2236 = vmatprep.mubr.f32.mxu0 0.0
      %2237 = vmatmul.mubr.f32.gmra.mxu0 %v2161
      %v2238 = vpop.f32.mrf.mxu0
      %v2239 = vadd.f32 0.0, %v2238
      %v2240 = vpop.f32.mrf.mxu0
      %v2241 = vadd.f32 0.0, %v2240
      %2242 = vmatprep.mubr.f32.mxu0 0.0
      %2243 = vmatmul.mubr.f32.gmra.mxu0 %v2164
      %v2244 = vpop.f32.mrf.mxu0
      %v2245 = vadd.f32 0.0, %v2244
      %v2246 = vpop.f32.mrf.mxu0
      %v2247 = vadd.f32 0.0, %v2246
      %2248 = vmatprep.mubr.f32.mxu0 0.0
      %2249 = vmatmul.mubr.f32.gmra.mxu0 %v2167
      %v2250 = vpop.f32.mrf.mxu0
      %v2251 = vadd.f32 0.0, %v2250
      %v2252 = vpop.f32.mrf.mxu0
      %v2253 = vadd.f32 0.0, %v2252
      %2254 = vmatprep.mubr.f32.mxu0 0.0
      %2255 = vmatmul.mubr.f32.gmra.mxu0 %v2170
      %v2256 = vpop.f32.mrf.mxu0
      %v2257 = vadd.f32 0.0, %v2256
      %v2258 = vpop.f32.mrf.mxu0
      %v2259 = vadd.f32 0.0, %v2258
      %2260 = vdwg.mxu0
      %2261 = vmatprep.subr.mxu0 0.0
      %2262 = vmatpush1.msra.mxu0 0.0
      %2263 = vmatprep.subr.mxu0 0.0
      %2264 = vmatpush1.msra.mxu0 0.0
      %2265 = vmatprep.subr.mxu0 0.0
      %2266 = vmatpush1.msra.mxu0 0.0
      %2267 = vmatprep.subr.mxu0 0.0
      %2268 = vmatpush1.msra.mxu0 0.0
      %2269 = vmatprep.subr.mxu0 0.0
      %2270 = vmatpush1.msra.mxu0 0.0
      %2271 = vmatprep.subr.mxu0 0.0
      %2272 = vmatpush1.msra.mxu0 0.0
      %2273 = vmatprep.subr.mxu0 0.0
      %2274 = vmatpush1.msra.mxu0 0.0
      %2275 = vmatprep.subr.mxu0 0.0
      %2276 = vmatpush1.msra.mxu0 0.0
      %2277 = vmatprep.subr.mxu0 0.0
      %2278 = vmatpush1.msra.mxu0 0.0
      %2279 = vmatprep.subr.mxu0 0.0
      %2280 = vmatpush1.msra.mxu0 0.0
      %2281 = vmatprep.subr.mxu0 0.0
      %2282 = vmatpush1.msra.mxu0 0.0
      %2283 = vmatprep.subr.mxu0 0.0
      %2284 = vmatpush1.msra.mxu0 0.0
      %2285 = vmatprep.subr.mxu0 0.0
      %2286 = vmatpush1.msra.mxu0 %v2138
      %2287 = vmatprep.subr.mxu0 0.0
      %2288 = vmatpush1.msra.mxu0 %v2132
      %2289 = vmatprep.subr.mxu0 0.0
      %2290 = vmatpush1.msra.mxu0 %v2126
      %2291 = vmatprep.subr.mxu0 0.0
      %2292 = vmatpush1.msra.mxu0 %v2120
      %2293 = vmatprep.subr.mxu0 0.0
      %2294 = vmatpush2.msra.mxu0 0.0
      %2295 = vmatprep.subr.mxu0 0.0
      %2296 = vmatpush2.msra.mxu0 0.0
      %2297 = vmatprep.subr.mxu0 0.0
      %2298 = vmatpush2.msra.mxu0 0.0
      %2299 = vmatprep.subr.mxu0 0.0
      %2300 = vmatpush2.msra.mxu0 0.0
      %2301 = vmatprep.subr.mxu0 0.0
      %2302 = vmatpush2.msra.mxu0 0.0
      %2303 = vmatprep.subr.mxu0 0.0
      %2304 = vmatpush2.msra.mxu0 0.0
      %2305 = vmatprep.subr.mxu0 0.0
      %2306 = vmatpush2.msra.mxu0 0.0
      %2307 = vmatprep.subr.mxu0 0.0
      %2308 = vmatpush2.msra.mxu0 0.0
      %2309 = vmatprep.subr.mxu0 0.0
      %2310 = vmatpush2.msra.mxu0 0.0
      %2311 = vmatprep.subr.mxu0 0.0
      %2312 = vmatpush2.msra.mxu0 0.0
      %2313 = vmatprep.subr.mxu0 0.0
      %2314 = vmatpush2.msra.mxu0 0.0
      %2315 = vmatprep.subr.mxu0 0.0
      %2316 = vmatpush2.msra.mxu0 0.0
      %2317 = vmatprep.subr.mxu0 0.0
      %2318 = vmatpush2.msra.mxu0 0.0
      %2319 = vmatprep.subr.mxu0 0.0
      %2320 = vmatpush2.msra.mxu0 0.0
      %2321 = vmatprep.subr.mxu0 0.0
      %2322 = vmatpush2.msra.mxu0 0.0
      %2323 = vmatprep.subr.mxu0 0.0
      %2324 = vmatpush2.msra.mxu0 0.0
      %2325 = vmatprep.mubr.f32.mxu0 0.0
      %2326 = vmatmul.mubr.f32.gmra.mxu0 %v2161
      %v2327 = vpop.f32.mrf.mxu0
      %v2328 = vadd.f32 0.0, %v2327
      %v2329 = vpop.f32.mrf.mxu0
      %2330 = vmatprep.mubr.f32.mxu0 0.0
      %2331 = vmatmul.mubr.f32.gmra.mxu0 %v2164
      %v2332 = vpop.f32.mrf.mxu0
      %v2333 = vadd.f32 0.0, %v2332
      %v2334 = vpop.f32.mrf.mxu0
      %2335 = vmatprep.mubr.f32.mxu0 0.0
      %2336 = vmatmul.mubr.f32.gmra.mxu0 %v2167
      %v2337 = vpop.f32.mrf.mxu0
      %v2338 = vadd.f32 0.0, %v2337
      %v2339 = vpop.f32.mrf.mxu0
      %2340 = vmatprep.mubr.f32.mxu0 0.0
      %2341 = vmatmul.mubr.f32.gmra.mxu0 %v2170
      %v2342 = vpop.f32.mrf.mxu0
      %v2343 = vadd.f32 0.0, %v2342
      %v2344 = vpop.f32.mrf.mxu0
      %2345 = vdwg.mxu0
      %v2346 = vadd.f32 %v2098, %v2239
      %v2347 = vadd.f32 %v2099, %v2241
      %v2348 = vadd.f32 %v2100, %v2328
      %v2349 = vadd.f32 %v2101, %v2245
      %v2350 = vadd.f32 %v2102, %v2247
      %v2351 = vadd.f32 %v2103, %v2333
      %v2352 = vadd.f32 %v2104, %v2251
      %v2353 = vadd.f32 %v2105, %v2253
      %v2354 = vadd.f32 %v2106, %v2338
      %v2355 = vadd.f32 %v2107, %v2257
      %v2356 = vadd.f32 %v2108, %v2259
      %v2357 = vadd.f32 %v2109, %v2343
      %v2358 = vld [vmem:[%s2] sm:$0xff]
      %v2359 = vld [vmem:[%s2 + $0x8] sm:$0xff]
      %v2360 = vld [vmem:[%s2 + $0x10] sm:$0xff]
      %v2361 = vld [vmem:[%s2 + $0x18] sm:$0xff]
      %2363 = vset.pattern.permute.xlu0 0
      %2364 = vperm.xlu0 %2363, %v2358
      %v2365 = vpop.permute.xlu0 %2364
      %2368 = vset.pattern.permute.xlu0 0
      %2369 = vperm.xlu0 %2368, %v2359
      %v2370 = vpop.permute.xlu0 %2369
      %2373 = vset.pattern.permute.xlu0 0
      %2374 = vperm.xlu0 %2373, %v2360
      %v2375 = vpop.permute.xlu0 %2374
      %2378 = vset.pattern.permute.xlu0 0
      %2379 = vperm.xlu0 %2378, %v2361
      %v2380 = vpop.permute.xlu0 %2379
      %v2382 = vadd.f32 %v2346, %v2365
      %v2383 = vadd.f32 %v2347, %v2365
      %v2384 = vadd.f32 %v2348, %v2365
      %v2385 = vadd.f32 %v2349, %v2370
      %v2386 = vadd.f32 %v2350, %v2370
      %v2387 = vadd.f32 %v2351, %v2370
      %v2388 = vadd.f32 %v2352, %v2375
      %v2389 = vadd.f32 %v2353, %v2375
      %v2390 = vadd.f32 %v2354, %v2375
      %v2391 = vadd.f32 %v2355, %v2380
      %v2392 = vadd.f32 %v2356, %v2380
      %v2393 = vadd.f32 %v2357, %v2380
      %2394 = vst [vmem:[%s170] sm:$0xff] %v2382
      %2395 = vst [vmem:[%s170 + $0x8] sm:$0xff] %v2383
      %2396 = vst.msk [vmem:[%s170 + $0x10] sm:$0xff] %vm249, %v2384
      %2397 = vst [vmem:[%s170 + $0x18] sm:$0xff] %v2385
      %2398 = vst [vmem:[%s170 + $0x20] sm:$0xff] %v2386
      %2399 = vst.msk [vmem:[%s170 + $0x28] sm:$0xff] %vm249, %v2387
      %2400 = vst [vmem:[%s170 + $0x30] sm:$0xff] %v2388
      %2401 = vst [vmem:[%s170 + $0x38] sm:$0xff] %v2389
      %2402 = vst.msk [vmem:[%s170 + $0x40] sm:$0xff] %vm249, %v2390
      %2403 = vst [vmem:[%s170 + $0x48] sm:$0xff] %v2391
      %2404 = vst [vmem:[%s170 + $0x50] sm:$0xff] %v2392
      %2405 = vst.msk [vmem:[%s170 + $0x58] sm:$0xff] %vm249, %v2393
      %p2406 = scmp.lt.s32.totalorder %s14, 1
      %s2407 = scalar_select %p2406, %s14, 1
      %s2408 = smul.addr %s2407, 12
      %s2409 = smul.addr %s2408, 8
      %s2410 = scalar_lea.vmem %s3, %s2409
      // Predicated region
      $region33: #{transform_forward.5} parent=31 // pred_check
        %p2411 = pneg %p100
      $region34: #{transform_forward.5} parent=31 // pred_check_branch
        %2413 = sbr.rel (%p2411) target = $region36
      $region35: #{transform_forward.5} parent=31 // pred_region
        _
      $region36: #{transform_forward.5} parent=31 // pred_fallthru
        _
    $region32: #{transform_forward.5} parent=5 // pred_fallthru
      _
    %p2414 = scmp.le.s32.totalorder 2, %s9
    // Predicated region
    $region37: #{transform_forward.5} parent=5 // pred_check
      %p2415 = pneg %p2414
    $region38: #{transform_forward.5} parent=5 // pred_check_branch
      %2417 = sbr.rel (%p2415) target = $region40
    $region39: #{transform_forward.5} parent=5 // pred_region
      %s2418 = ssub.s32 %s9, 2
      // Predicated region
      $region41: #{transform_forward.5} parent=39 // pred_check
        %p2419 = pneg %p106
      $region42: #{transform_forward.5} parent=39 // pred_check_branch
        %2421 = sbr.rel (%p2419) target = $region44
      $region43: #{transform_forward.5} parent=39 // pred_region
        %p2422 = scmp.lt.s32.totalorder %s15, 1
        %s2423 = scalar_select %p2422, %s15, 1
        %s2424 = smul.addr %s2423, 12
        %s2425 = smul.addr %s2424, 8
        %s2426 = scalar_lea.vmem %s3, %s2425
      $region44: #{transform_forward.5} parent=39 // pred_fallthru
        _
    $region40: #{transform_forward.5} parent=5 // pred_fallthru
      _
  $region6: #{transform_forward.5} parent=0 // loop_footer
    %s13 = sadd.s32 1, %s9
  $region7: #{transform_forward.5} parent=0 // loop_footer_branch
    %8 = sbr.rel target = $region3
  $region8: #{transform_forward.5} parent=0 // loop_exit
    _

</llo_original>
